<compile_context>
chip_gen: v6e
topology: v6e:2x2x1
jax: 0.10.0
libtpu: 0.0.40
codegen_flags: <defaults>
</compile_context>

<pallas_src>
import math
import functools

import jax
import jax.numpy as jnp
from jax.experimental import pallas as pl
from jax.experimental.pallas import tpu as pltpu

GN_GROUPS = 32
GN_EPS = 1e-5
# K per conv2 dot = TAPS_PER_DOT * Cout.  2 -> K=256 (v6e/v7x MXU depth).  Use 1 on v5e.
TAPS_PER_DOT = 2


# ----------------------------- in-kernel helpers (traced) ---------------------------------

def _group_norm_silu(h, M, MT, gamma, beta):
    """GroupNorm(32, C) + SiLU on a flat (HW, C) f32 tile.

    M: (C, G) and MT: (G, C) are host-precomputed group-membership matrices, gamma/beta: (1, C).
    Stats = one (2,C)@(C,G) dot of [row-sum; row-sum-of-squares], one (2,G)@(G,C) expansion;
    the affine is folded into one scale/shift pair.
    """
    HW, C = h.shape
    n_inv = 1.0 / float(HW * (C // GN_GROUPS))

    stats = jnp.concatenate(
        [jnp.sum(h, axis=0, keepdims=True),
         jnp.sum(h * h, axis=0, keepdims=True)], axis=0)                 # (2, C)
    sg = jnp.dot(stats, M, preferred_element_type=jnp.float32) * n_inv   # (2, G)
    mean_g = sg[0:1]
    var_g = sg[1:2] - mean_g * mean_g                                    # biased var (PyTorch GN)

    mv_c = jnp.dot(jnp.concatenate([mean_g, var_g], axis=0), MT,
                   preferred_element_type=jnp.float32)                   # (2, C)
    mean_c = mv_c[0:1]
    inv_c = jax.lax.rsqrt(mv_c[1:2] + GN_EPS)

    scale = inv_c * gamma
    shift = beta - mean_c * scale
    g = h * scale + shift
    return g * jax.nn.sigmoid(g)                                         # SiLU


def _conv3x3(h, masks, W, w_ref, bias, *, extra=None, chunks_per_dot, use_bf16):
    """3x3 'same' conv of a flat (HW, C) tile as accumulated im2col K-chunk matmuls.

    Each of the 9 taps = sublane roll of `h` (XLU) * hoisted boundary-mask column.  Taps are
    built lazily, optionally cast to bf16, grouped `chunks_per_dot` at a time and multiplied
    against the matching static row-slice of `w_ref` ((9*C [+ Ce], Cout), host-reshaped in
    (ky, kx, Ci) order).  `extra` (the residual input) is appended as the fused 1x1-shortcut
    K-chunk.  Nothing the size of the full im2col matrix is ever materialized.
    """
    HW, C = h.shape
    cdt = jnp.bfloat16 if use_bf16 else h.dtype
    sizes = [C] * 9 + ([extra.shape[1]] if extra is not None else [])
    n = len(sizes)

    def chunk(idx):
        if idx == 9:                                   # fused 1x1 shortcut chunk
            return extra.astype(cdt)
        dy, dx = idx // 3 - 1, idx % 3 - 1
        s = dy * W + dx
        t = h if s == 0 else pltpu.roll(h, shift=(-s) % HW, axis=0)
        if idx != 4:                                   # center tap needs no boundary mask
            t = t * masks[:, idx:idx + 1]
        return t.astype(cdt)

    acc = None
    off = 0
    for i in range(0, n, chunks_per_dot):
        idxs = list(range(i, min(i + chunks_per_dot, n)))
        parts = [chunk(j) for j in idxs]
        lhs = parts[0] if len(parts) == 1 else jnp.concatenate(parts, axis=1)
        klen = sum(sizes[j] for j in idxs)
        d = jnp.dot(lhs, w_ref[pl.ds(off, klen), :], preferred_element_type=jnp.float32)
        acc = d if acc is None else acc + d
        off += klen
    return acc + bias


# ----------------------------------- the Pallas kernel ------------------------------------

def resblock_encoder_kernel(x_ref, masks_ref,
                            m1_ref, mt1_ref, g1_ref, be1_ref, w1_ref, b1_ref,
                            m2_ref, mt2_ref, g2_ref, be2_ref, w2s_ref, b2s_ref,
                            o_ref, *, W, use_bf16, taps_per_dot):
    x = x_ref[0]                    # (HW, Cin) f32, one full image per grid step
    masks = masks_ref[...]          # (HW, 9) f32 hoisted boundary masks (shared by both convs)

    # block1: GroupNorm(32, Cin) -> SiLU -> Conv3x3(Cin -> Cout); Cin is small so one dot K=9*Cin.
    h = _group_norm_silu(x, m1_ref[...], mt1_ref[...], g1_ref[...], be1_ref[...])
    h = _conv3x3(h, masks, W, w1_ref, b1_ref[...],
                 chunks_per_dot=9, use_bf16=use_bf16)

    # block2: GroupNorm(32, Cout) -> SiLU -> Dropout(eval: identity) -> Conv3x3(Cout -> Cout),
    # with the 1x1 shortcut fused as the last K-chunk of the same accumulation.
    h = _group_norm_silu(h, m2_ref[...], mt2_ref[...], g2_ref[...], be2_ref[...])
    out = _conv3x3(h, masks, W, w2s_ref, b2s_ref[...], extra=x,
                   chunks_per_dot=taps_per_dot, use_bf16=use_bf16)

    # attn = Identity (attn=False)
    o_ref[0] = out.astype(o_ref.dtype)      # lane-dense (Cout % 128 == 0) unmasked store


# ------------------------------------ host-side wrapper -----------------------------------

def resblock_encoder_forward_nhwc(x_nhwc, params, *, use_bf16=True, taps_per_dot=TAPS_PER_DOT):
    """x_nhwc: (B, H, W, Cin) float32 -> (B, H, W, Cout)."""
    B, H, W, Cin = x_nhwc.shape
    Cout = params["b1"].shape[-1]
    HW = H * W
    G = GN_GROUPS
    x_flat = x_nhwc.reshape(B, HW, Cin)

    wdt = jnp.bfloat16 if use_bf16 else jnp.float32
    w1 = params["w1col"].astype(wdt)
    w2s = params["w2scol"].astype(wdt)

    # Constant index_maps: these blocks are DMA'd once and revisited across the batch grid.
    # TODO(synk): pipeline_mode=pl.Buffered(1) on these would reclaim the default double
    # buffer (~few hundred KB here); left at the default for compile safety.
    full = lambda r, c: pl.BlockSpec((r, c), lambda b: (0, 0))

    wbytes = 2 if use_bf16 else 4
    flops = 2 * B * HW * (9 * Cin * Cout + (9 * Cout + Cin) * Cout)
    transcendentals = B * HW * (Cin + Cout)                       # the two SiLU sigmoids
    bytes_accessed = (4 * B * HW * (Cin + Cout) + 4 * HW * 9
                      + wbytes * (9 * Cin * Cout + (9 * Cout + Cin) * Cout)
                      + 4 * ((Cin + Cout) * (2 * G + 2) + 2 * Cout))

    out_flat = pl.pallas_call(
        functools.partial(resblock_encoder_kernel, W=W,
                          use_bf16=use_bf16, taps_per_dot=taps_per_dot),
        out_shape=jax.ShapeDtypeStruct((B, HW, Cout), jnp.float32),
        grid=(B,),
        in_specs=[
            pl.BlockSpec((1, HW, Cin), lambda b: (b, 0, 0)),              # x: one image / step
            full(HW, 9),                                                   # hoisted tap masks
            full(Cin, G), full(G, Cin), full(1, Cin), full(1, Cin),        # GN1 M, MT, gamma, beta
            full(9 * Cin, Cout), full(1, Cout),                            # conv1 (9*Cin, Cout), bias
            full(Cout, G), full(G, Cout), full(1, Cout), full(1, Cout),    # GN2 M, MT, gamma, beta
            full(9 * Cout + Cin, Cout), full(1, Cout),                     # [conv2 ; shortcut], bias
        ],
        out_specs=pl.BlockSpec((1, HW, Cout), lambda b: (b, 0, 0)),
        compiler_params=pltpu.CompilerParams(
            # TODO(synk): v7x has 2 TCs -- if "parallel" does not shard the batch axis across
            # cores, switch this axis to pltpu.CORE_PARALLEL / core_map.
            dimension_semantics=("parallel",),
            vmem_limit_bytes=32 * 1024 * 1024),
        cost_estimate=pl.CostEstimate(flops=flops, transcendentals=transcendentals,
                                      bytes_accessed=bytes_accessed),
    )(x_flat, params["masks"],
      params["m1"], params["mt1"], params["g1"], params["be1"], w1, params["b1"],
      params["m2"], params["mt2"], params["g2"], params["be2"], w2s, params["b2s"])
    return out_flat.reshape(B, H, W, Cout)


@functools.partial(jax.jit, static_argnames=("use_bf16", "taps_per_dot"))
def resblock_encoder_forward(x_nchw, params, *, use_bf16=True, taps_per_dot=TAPS_PER_DOT):
    """PyTorch-layout entry point: (B, Cin, H, W) -> (B, Cout, H, W)."""
    out = resblock_encoder_forward_nhwc(jnp.transpose(x_nchw, (0, 2, 3, 1)), params,
                                        use_bf16=use_bf16, taps_per_dot=taps_per_dot)
    return jnp.transpose(out, (0, 3, 1, 2))


# ---------------------------- deterministic parameter construction ------------------------

def _xavier_uniform(key, shape, fan_in, fan_out):
    bound = math.sqrt(6.0 / (fan_in + fan_out))
    return jax.random.uniform(key, shape, jnp.float32, -bound, bound)


def _membership(C, G):
    """Group-membership matrices for GroupNorm: M (C, G) and its transpose (G, C)."""
    M = ((jnp.arange(C)[:, None] // (C // G)) == jnp.arange(G)[None, :]).astype(jnp.float32)
    return M, M.T


def _boundary_masks(H, W):
    """(HW, 9) f32: mask[p, tap] = 1.0 if the 3x3 tap at pixel p lands inside the image."""
    pos = jnp.arange(H * W)
    row = pos // W
    col = pos % W
    cols = []
    for dy in (-1, 0, 1):
        for dx in (-1, 0, 1):
            ok = jnp.ones((H * W,), bool)
            if dy == -1:
                ok = ok & (row >= 1)
            elif dy == 1:
                ok = ok & (row < H - 1)
            if dx == -1:
                ok = ok & (col >= 1)
            elif dx == 1:
                ok = ok & (col < W - 1)
            cols.append(ok.astype(jnp.float32))
    return jnp.stack(cols, axis=1)


def make_params(key, in_ch, out_ch, H, W):
    k1, k2, k3 = jax.random.split(key, 3)
    # PyTorch conv weights are OIHW; xavier fan = (Cin*kh*kw, Cout*kh*kw)
    w1_oihw = _xavier_uniform(k1, (out_ch, in_ch, 3, 3), in_ch * 9, out_ch * 9)
    w2_oihw = _xavier_uniform(k2, (out_ch, out_ch, 3, 3), out_ch * 9, out_ch * 9)
    if in_ch != out_ch:
        ws_oihw = _xavier_uniform(k3, (out_ch, in_ch, 1, 1), in_ch, out_ch)
        ws = jnp.transpose(ws_oihw.reshape(out_ch, in_ch))        # (Cin, Cout)
    else:
        ws_oihw = None                                            # nn.Identity shortcut
        ws = jnp.eye(in_ch, dtype=jnp.float32)

    # im2col weights: (ky, kx, Ci, Co) -> (9*Ci, Co); shortcut stacked under conv2.
    w1col = jnp.transpose(w1_oihw, (2, 3, 1, 0)).reshape(9 * in_ch, out_ch)
    w2col = jnp.transpose(w2_oihw, (2, 3, 1, 0)).reshape(9 * out_ch, out_ch)
    b1 = jnp.zeros((1, out_ch), jnp.float32)
    b2 = jnp.zeros((1, out_ch), jnp.float32)
    bs = jnp.zeros((1, out_ch), jnp.float32)

    m1, mt1 = _membership(in_ch, GN_GROUPS)
    m2, mt2 = _membership(out_ch, GN_GROUPS)

    params_kernel = {
        "masks": _boundary_masks(H, W),
        "m1": m1, "mt1": mt1,
        "g1": jnp.ones((1, in_ch), jnp.float32), "be1": jnp.zeros((1, in_ch), jnp.float32),
        "w1col": w1col, "b1": b1,
        "m2": m2, "mt2": mt2,
        "g2": jnp.ones((1, out_ch), jnp.float32), "be2": jnp.zeros((1, out_ch), jnp.float32),
        "w2scol": jnp.concatenate([w2col, ws], axis=0),           # (9*Cout + Cin, Cout)
        "b2s": b2 + bs,
    }
    params_ref = {
        "w1_oihw": w1_oihw, "w2_oihw": w2_oihw, "ws_oihw": ws_oihw,
        "b1": jnp.zeros((out_ch,), jnp.float32),
        "b2": jnp.zeros((out_ch,), jnp.float32),
        "bs": jnp.zeros((out_ch,), jnp.float32),
        "g1": jnp.ones((in_ch,), jnp.float32), "be1": jnp.zeros((in_ch,), jnp.float32),
        "g2": jnp.ones((out_ch,), jnp.float32), "be2": jnp.zeros((out_ch,), jnp.float32),
    }
    return params_kernel, params_ref


# -------------------------------- pure-JAX reference (NCHW) -------------------------------

def reference_forward(x, p):
    def gn(h, gamma, beta):
        B, C, H, W = h.shape
        hg = h.reshape(B, GN_GROUPS, C // GN_GROUPS, H, W)
        mean = hg.mean(axis=(2, 3, 4), keepdims=True)
        var = hg.var(axis=(2, 3, 4), keepdims=True)
        hg = (hg - mean) / jnp.sqrt(var + GN_EPS)
        h = hg.reshape(B, C, H, W)
        return h * gamma.reshape(1, C, 1, 1) + beta.reshape(1, C, 1, 1)

    def conv(h, w, b, pad):
        out = jax.lax.conv_general_dilated(
            h, w, (1, 1), [(pad, pad), (pad, pad)],
            dimension_numbers=("NCHW", "OIHW", "NCHW"))
        return out + b.reshape(1, -1, 1, 1)

    h = conv(jax.nn.silu(gn(x, p["g1"], p["be1"])), p["w1_oihw"], p["b1"], 1)
    h = conv(jax.nn.silu(gn(h, p["g2"], p["be2"])), p["w2_oihw"], p["b2"], 1)
    sc = x if p["ws_oihw"] is None else conv(x, p["ws_oihw"], p["bs"], 0)
    return h + sc


# ------------------------------------------- main ------------------------------------------

if __name__ == "__main__":
    # GroupNorm(32, .) requires channels % 32 == 0; Cout=128 keeps the output store lane-dense.
    B, Cin, Cout, H, W = 2, 32, 128, 16, 16
    key = jax.random.PRNGKey(0)
    kx, kp = jax.random.split(key)
    x = jax.random.normal(kx, (B, Cin, H, W), jnp.float32)   # PyTorch NCHW input

    params_kernel, params_ref = make_params(kp, Cin, Cout, H, W)
    ref = jax.block_until_ready(reference_forward(x, params_ref))

    # Exact-semantics path (f32 MXU operands): matches the PyTorch module numerics.
    out_f32 = jax.block_until_ready(resblock_encoder_forward(x, params_kernel, use_bf16=False))
    assert out_f32.shape == (B, Cout, H, W)
    err_f32 = float(jnp.max(jnp.abs(out_f32 - ref)))
    assert jnp.allclose(out_f32, ref, atol=1e-3, rtol=1e-3), err_f32

    # Perf path (bf16 MXU operands, f32 accumulation): intentionally relaxed numerics.
    out_bf16 = jax.block_until_ready(resblock_encoder_forward(x, params_kernel, use_bf16=True))
    err_bf16 = float(jnp.max(jnp.abs(out_bf16 - ref)))
    assert jnp.allclose(out_bf16, ref, atol=2e-2, rtol=2e-2), err_bf16

    print("KERNEL_OK")
</pallas_src>

<mosaic_0001>
module attributes {stable_mosaic.version = 11 : i64} {
  func.func @resblock_encoder_kernel(%arg0: i32, %arg1: memref<1x256x32xf32, #tpu.memory_space<vmem>>, %arg2: memref<256x9xf32, #tpu.memory_space<vmem>>, %arg3: memref<32x32xf32, #tpu.memory_space<vmem>>, %arg4: memref<32x32xf32, #tpu.memory_space<vmem>>, %arg5: memref<1x32xf32, #tpu.memory_space<vmem>>, %arg6: memref<1x32xf32, #tpu.memory_space<vmem>>, %arg7: memref<288x128xf32, #tpu.memory_space<vmem>>, %arg8: memref<1x128xf32, #tpu.memory_space<vmem>>, %arg9: memref<128x32xf32, #tpu.memory_space<vmem>>, %arg10: memref<32x128xf32, #tpu.memory_space<vmem>>, %arg11: memref<1x128xf32, #tpu.memory_space<vmem>>, %arg12: memref<1x128xf32, #tpu.memory_space<vmem>>, %arg13: memref<1184x128xf32, #tpu.memory_space<vmem>>, %arg14: memref<1x128xf32, #tpu.memory_space<vmem>>, %arg15: memref<1x256x128xf32, #tpu.memory_space<vmem>>) attributes {dimension_semantics = [#tpu.dimension_semantics<parallel>], iteration_bounds = array<i64: 2>, scalar_prefetch = 0 : i64, scratch_operands = 0 : i64, tpu.core_type = #tpu.core_type<tc>, window_params = [{transform_indices = @transform_0, window_bounds = array<i64: 1, 256, 32>}, {pipeline_mode = #tpu.pipeline_mode<synchronous>, transform_indices = @transform_1, window_bounds = array<i64: 256, 9>}, {pipeline_mode = #tpu.pipeline_mode<synchronous>, transform_indices = @transform_2, window_bounds = array<i64: 32, 32>}, {pipeline_mode = #tpu.pipeline_mode<synchronous>, transform_indices = @transform_3, window_bounds = array<i64: 32, 32>}, {pipeline_mode = #tpu.pipeline_mode<synchronous>, transform_indices = @transform_4, window_bounds = array<i64: 1, 32>}, {pipeline_mode = #tpu.pipeline_mode<synchronous>, transform_indices = @transform_5, window_bounds = array<i64: 1, 32>}, {pipeline_mode = #tpu.pipeline_mode<synchronous>, transform_indices = @transform_6, window_bounds = array<i64: 288, 128>}, {pipeline_mode = #tpu.pipeline_mode<synchronous>, transform_indices = @transform_7, window_bounds = array<i64: 1, 128>}, {pipeline_mode = #tpu.pipeline_mode<synchronous>, transform_indices = @transform_8, window_bounds = array<i64: 128, 32>}, {pipeline_mode = #tpu.pipeline_mode<synchronous>, transform_indices = @transform_9, window_bounds = array<i64: 32, 128>}, {pipeline_mode = #tpu.pipeline_mode<synchronous>, transform_indices = @transform_10, window_bounds = array<i64: 1, 128>}, {pipeline_mode = #tpu.pipeline_mode<synchronous>, transform_indices = @transform_11, window_bounds = array<i64: 1, 128>}, {pipeline_mode = #tpu.pipeline_mode<synchronous>, transform_indices = @transform_12, window_bounds = array<i64: 1184, 128>}, {pipeline_mode = #tpu.pipeline_mode<synchronous>, transform_indices = @transform_13, window_bounds = array<i64: 1, 128>}, {transform_indices = @transform_14, window_bounds = array<i64: 1, 256, 128>}]} {
    %c0 = arith.constant 0 : index
    %c0_0 = arith.constant 0 : index
    %c0_1 = arith.constant 0 : index
    %0 = vector.load %arg1[%c0, %c0_0, %c0_1] : memref<1x256x32xf32, #tpu.memory_space<vmem>>, vector<1x256x32xf32>
    %1 = vector.shape_cast %0 : vector<1x256x32xf32> to vector<256x32xf32>
    %c0_2 = arith.constant 0 : index
    %c0_3 = arith.constant 0 : index
    %2 = vector.load %arg2[%c0_2, %c0_3] : memref<256x9xf32, #tpu.memory_space<vmem>>, vector<256x9xf32>
    %c0_4 = arith.constant 0 : index
    %c0_5 = arith.constant 0 : index
    %3 = vector.load %arg3[%c0_4, %c0_5] : memref<32x32xf32, #tpu.memory_space<vmem>>, vector<32x32xf32>
    %c0_6 = arith.constant 0 : index
    %c0_7 = arith.constant 0 : index
    %4 = vector.load %arg4[%c0_6, %c0_7] : memref<32x32xf32, #tpu.memory_space<vmem>>, vector<32x32xf32>
    %c0_8 = arith.constant 0 : index
    %c0_9 = arith.constant 0 : index
    %5 = vector.load %arg5[%c0_8, %c0_9] : memref<1x32xf32, #tpu.memory_space<vmem>>, vector<1x32xf32>
    %c0_10 = arith.constant 0 : index
    %c0_11 = arith.constant 0 : index
    %6 = vector.load %arg6[%c0_10, %c0_11] : memref<1x32xf32, #tpu.memory_space<vmem>>, vector<1x32xf32>
    %cst = arith.constant dense<0.000000e+00> : vector<32xf32>
    %7 = vector.multi_reduction <add>, %1, %cst [0] : vector<256x32xf32> to vector<32xf32>
    %8 = vector.shape_cast %7 : vector<32xf32> to vector<1x32xf32>
    %9 = arith.mulf %1, %1 : vector<256x32xf32>
    %cst_12 = arith.constant dense<0.000000e+00> : vector<32xf32>
    %10 = vector.multi_reduction <add>, %9, %cst_12 [0] : vector<256x32xf32> to vector<32xf32>
    %11 = vector.shape_cast %10 : vector<32xf32> to vector<1x32xf32>
    %12 = tpu.concatenate %8, %11 in 0 : vector<1x32xf32>, vector<1x32xf32> -> vector<2x32xf32>
    %cst_13 = arith.constant dense<0.000000e+00> : vector<2x32xf32>
    %13 = tpu.matmul %12, %3, %cst_13 {dimension_numbers = #tpu.dot_dimension_numbers<[1], [0], [0], [1], [0, 0, 1, 1], [], []>} : vector<2x32xf32>, vector<32x32xf32>, vector<2x32xf32> -> vector<2x32xf32>
    %cst_14 = arith.constant 3.906250e-03 : f32
    %14 = vector.broadcast %cst_14 : f32 to vector<2x32xf32>
    %15 = arith.mulf %13, %14 : vector<2x32xf32>
    %16 = vector.extract_strided_slice %15 {offsets = [0, 0], sizes = [1, 32], strides = [1, 1]} : vector<2x32xf32> to vector<1x32xf32>
    %17 = vector.extract_strided_slice %15 {offsets = [1, 0], sizes = [1, 32], strides = [1, 1]} : vector<2x32xf32> to vector<1x32xf32>
    %18 = arith.mulf %16, %16 : vector<1x32xf32>
    %19 = arith.subf %17, %18 : vector<1x32xf32>
    %20 = tpu.concatenate %16, %19 in 0 : vector<1x32xf32>, vector<1x32xf32> -> vector<2x32xf32>
    %cst_15 = arith.constant dense<0.000000e+00> : vector<2x32xf32>
    %21 = tpu.matmul %20, %4, %cst_15 {dimension_numbers = #tpu.dot_dimension_numbers<[1], [0], [0], [1], [0, 0, 1, 1], [], []>} : vector<2x32xf32>, vector<32x32xf32>, vector<2x32xf32> -> vector<2x32xf32>
    %22 = vector.extract_strided_slice %21 {offsets = [0, 0], sizes = [1, 32], strides = [1, 1]} : vector<2x32xf32> to vector<1x32xf32>
    %23 = vector.extract_strided_slice %21 {offsets = [1, 0], sizes = [1, 32], strides = [1, 1]} : vector<2x32xf32> to vector<1x32xf32>
    %cst_16 = arith.constant 9.99999974E-6 : f32
    %24 = vector.broadcast %cst_16 : f32 to vector<1x32xf32>
    %25 = arith.addf %23, %24 : vector<1x32xf32>
    %26 = math.rsqrt %25 : vector<1x32xf32>
    %27 = arith.mulf %26, %5 : vector<1x32xf32>
    %28 = arith.mulf %22, %27 : vector<1x32xf32>
    %29 = arith.subf %6, %28 : vector<1x32xf32>
    %30 = vector.broadcast %27 : vector<1x32xf32> to vector<256x32xf32>
    %31 = arith.mulf %1, %30 : vector<256x32xf32>
    %32 = vector.broadcast %29 : vector<1x32xf32> to vector<256x32xf32>
    %33 = arith.addf %31, %32 : vector<256x32xf32>
    %34 = arith.negf %33 : vector<256x32xf32>
    %35 = math.exp %34 : vector<256x32xf32>
    %cst_17 = arith.constant 1.000000e+00 : f32
    %36 = vector.broadcast %cst_17 : f32 to vector<256x32xf32>
    %37 = arith.addf %36, %35 : vector<256x32xf32>
    %38 = arith.divf %36, %37 : vector<256x32xf32>
    %39 = arith.mulf %33, %38 : vector<256x32xf32>
    %c0_18 = arith.constant 0 : index
    %c0_19 = arith.constant 0 : index
    %40 = vector.load %arg8[%c0_18, %c0_19] : memref<1x128xf32, #tpu.memory_space<vmem>>, vector<1x128xf32>
    %c17_i32 = arith.constant 17 : i32
    %41 = tpu.dynamic_rotate %39 by %c17_i32 dim 0 : vector<256x32xf32>, i32 -> vector<256x32xf32>
    %42 = vector.extract_strided_slice %2 {offsets = [0, 0], sizes = [256, 1], strides = [1, 1]} : vector<256x9xf32> to vector<256x1xf32>
    %43 = vector.broadcast %42 : vector<256x1xf32> to vector<256x32xf32>
    %44 = arith.mulf %41, %43 : vector<256x32xf32>
    %c16_i32 = arith.constant 16 : i32
    %45 = tpu.dynamic_rotate %39 by %c16_i32 dim 0 : vector<256x32xf32>, i32 -> vector<256x32xf32>
    %46 = vector.extract_strided_slice %2 {offsets = [0, 1], sizes = [256, 1], strides = [1, 1]} : vector<256x9xf32> to vector<256x1xf32>
    %47 = vector.broadcast %46 : vector<256x1xf32> to vector<256x32xf32>
    %48 = arith.mulf %45, %47 : vector<256x32xf32>
    %c15_i32 = arith.constant 15 : i32
    %49 = tpu.dynamic_rotate %39 by %c15_i32 dim 0 : vector<256x32xf32>, i32 -> vector<256x32xf32>
    %50 = vector.extract_strided_slice %2 {offsets = [0, 2], sizes = [256, 1], strides = [1, 1]} : vector<256x9xf32> to vector<256x1xf32>
    %51 = vector.broadcast %50 : vector<256x1xf32> to vector<256x32xf32>
    %52 = arith.mulf %49, %51 : vector<256x32xf32>
    %c1_i32 = arith.constant 1 : i32
    %53 = tpu.dynamic_rotate %39 by %c1_i32 dim 0 : vector<256x32xf32>, i32 -> vector<256x32xf32>
    %54 = vector.extract_strided_slice %2 {offsets = [0, 3], sizes = [256, 1], strides = [1, 1]} : vector<256x9xf32> to vector<256x1xf32>
    %55 = vector.broadcast %54 : vector<256x1xf32> to vector<256x32xf32>
    %56 = arith.mulf %53, %55 : vector<256x32xf32>
    %c255_i32 = arith.constant 255 : i32
    %57 = tpu.dynamic_rotate %39 by %c255_i32 dim 0 : vector<256x32xf32>, i32 -> vector<256x32xf32>
    %58 = vector.extract_strided_slice %2 {offsets = [0, 5], sizes = [256, 1], strides = [1, 1]} : vector<256x9xf32> to vector<256x1xf32>
    %59 = vector.broadcast %58 : vector<256x1xf32> to vector<256x32xf32>
    %60 = arith.mulf %57, %59 : vector<256x32xf32>
    %c241_i32 = arith.constant 241 : i32
    %61 = tpu.dynamic_rotate %39 by %c241_i32 dim 0 : vector<256x32xf32>, i32 -> vector<256x32xf32>
    %62 = vector.extract_strided_slice %2 {offsets = [0, 6], sizes = [256, 1], strides = [1, 1]} : vector<256x9xf32> to vector<256x1xf32>
    %63 = vector.broadcast %62 : vector<256x1xf32> to vector<256x32xf32>
    %64 = arith.mulf %61, %63 : vector<256x32xf32>
    %c240_i32 = arith.constant 240 : i32
    %65 = tpu.dynamic_rotate %39 by %c240_i32 dim 0 : vector<256x32xf32>, i32 -> vector<256x32xf32>
    %66 = vector.extract_strided_slice %2 {offsets = [0, 7], sizes = [256, 1], strides = [1, 1]} : vector<256x9xf32> to vector<256x1xf32>
    %67 = vector.broadcast %66 : vector<256x1xf32> to vector<256x32xf32>
    %68 = arith.mulf %65, %67 : vector<256x32xf32>
    %c239_i32 = arith.constant 239 : i32
    %69 = tpu.dynamic_rotate %39 by %c239_i32 dim 0 : vector<256x32xf32>, i32 -> vector<256x32xf32>
    %70 = vector.extract_strided_slice %2 {offsets = [0, 8], sizes = [256, 1], strides = [1, 1]} : vector<256x9xf32> to vector<256x1xf32>
    %71 = vector.broadcast %70 : vector<256x1xf32> to vector<256x32xf32>
    %72 = arith.mulf %69, %71 : vector<256x32xf32>
    %73 = tpu.concatenate %44, %48, %52, %56, %39, %60, %64, %68, %72 in 1 : vector<256x32xf32>, vector<256x32xf32>, vector<256x32xf32>, vector<256x32xf32>, vector<256x32xf32>, vector<256x32xf32>, vector<256x32xf32>, vector<256x32xf32>, vector<256x32xf32> -> vector<256x288xf32>
    %c0_20 = arith.constant 0 : index
    %c0_21 = arith.constant 0 : index
    %74 = vector.load %arg7[%c0_20, %c0_21] : memref<288x128xf32, #tpu.memory_space<vmem>>, vector<288x128xf32>
    %cst_22 = arith.constant dense<0.000000e+00> : vector<256x128xf32>
    %75 = tpu.matmul %73, %74, %cst_22 {dimension_numbers = #tpu.dot_dimension_numbers<[1], [0], [0], [1], [0, 0, 1, 1], [], []>} : vector<256x288xf32>, vector<288x128xf32>, vector<256x128xf32> -> vector<256x128xf32>
    %76 = vector.broadcast %40 : vector<1x128xf32> to vector<256x128xf32>
    %77 = arith.addf %75, %76 : vector<256x128xf32>
    %c0_23 = arith.constant 0 : index
    %c0_24 = arith.constant 0 : index
    %78 = vector.load %arg9[%c0_23, %c0_24] : memref<128x32xf32, #tpu.memory_space<vmem>>, vector<128x32xf32>
    %c0_25 = arith.constant 0 : index
    %c0_26 = arith.constant 0 : index
    %79 = vector.load %arg10[%c0_25, %c0_26] : memref<32x128xf32, #tpu.memory_space<vmem>>, vector<32x128xf32>
    %c0_27 = arith.constant 0 : index
    %c0_28 = arith.constant 0 : index
    %80 = vector.load %arg11[%c0_27, %c0_28] : memref<1x128xf32, #tpu.memory_space<vmem>>, vector<1x128xf32>
    %c0_29 = arith.constant 0 : index
    %c0_30 = arith.constant 0 : index
    %81 = vector.load %arg12[%c0_29, %c0_30] : memref<1x128xf32, #tpu.memory_space<vmem>>, vector<1x128xf32>
    %cst_31 = arith.constant dense<0.000000e+00> : vector<128xf32>
    %82 = vector.multi_reduction <add>, %77, %cst_31 [0] : vector<256x128xf32> to vector<128xf32>
    %83 = vector.shape_cast %82 : vector<128xf32> to vector<1x128xf32>
    %84 = arith.mulf %77, %77 : vector<256x128xf32>
    %cst_32 = arith.constant dense<0.000000e+00> : vector<128xf32>
    %85 = vector.multi_reduction <add>, %84, %cst_32 [0] : vector<256x128xf32> to vector<128xf32>
    %86 = vector.shape_cast %85 : vector<128xf32> to vector<1x128xf32>
    %87 = tpu.concatenate %83, %86 in 0 : vector<1x128xf32>, vector<1x128xf32> -> vector<2x128xf32>
    %cst_33 = arith.constant dense<0.000000e+00> : vector<2x32xf32>
    %88 = tpu.matmul %87, %78, %cst_33 {dimension_numbers = #tpu.dot_dimension_numbers<[1], [0], [0], [1], [0, 0, 1, 1], [], []>} : vector<2x128xf32>, vector<128x32xf32>, vector<2x32xf32> -> vector<2x32xf32>
    %cst_34 = arith.constant 9.765625E-4 : f32
    %89 = vector.broadcast %cst_34 : f32 to vector<2x32xf32>
    %90 = arith.mulf %88, %89 : vector<2x32xf32>
    %91 = vector.extract_strided_slice %90 {offsets = [0, 0], sizes = [1, 32], strides = [1, 1]} : vector<2x32xf32> to vector<1x32xf32>
    %92 = vector.extract_strided_slice %90 {offsets = [1, 0], sizes = [1, 32], strides = [1, 1]} : vector<2x32xf32> to vector<1x32xf32>
    %93 = arith.mulf %91, %91 : vector<1x32xf32>
    %94 = arith.subf %92, %93 : vector<1x32xf32>
    %95 = tpu.concatenate %91, %94 in 0 : vector<1x32xf32>, vector<1x32xf32> -> vector<2x32xf32>
    %cst_35 = arith.constant dense<0.000000e+00> : vector<2x128xf32>
    %96 = tpu.matmul %95, %79, %cst_35 {dimension_numbers = #tpu.dot_dimension_numbers<[1], [0], [0], [1], [0, 0, 1, 1], [], []>} : vector<2x32xf32>, vector<32x128xf32>, vector<2x128xf32> -> vector<2x128xf32>
    %97 = vector.extract_strided_slice %96 {offsets = [0, 0], sizes = [1, 128], strides = [1, 1]} : vector<2x128xf32> to vector<1x128xf32>
    %98 = vector.extract_strided_slice %96 {offsets = [1, 0], sizes = [1, 128], strides = [1, 1]} : vector<2x128xf32> to vector<1x128xf32>
    %cst_36 = arith.constant 9.99999974E-6 : f32
    %99 = vector.broadcast %cst_36 : f32 to vector<1x128xf32>
    %100 = arith.addf %98, %99 : vector<1x128xf32>
    %101 = math.rsqrt %100 : vector<1x128xf32>
    %102 = arith.mulf %101, %80 : vector<1x128xf32>
    %103 = arith.mulf %97, %102 : vector<1x128xf32>
    %104 = arith.subf %81, %103 : vector<1x128xf32>
    %105 = vector.broadcast %102 : vector<1x128xf32> to vector<256x128xf32>
    %106 = arith.mulf %77, %105 : vector<256x128xf32>
    %107 = vector.broadcast %104 : vector<1x128xf32> to vector<256x128xf32>
    %108 = arith.addf %106, %107 : vector<256x128xf32>
    %109 = arith.negf %108 : vector<256x128xf32>
    %110 = math.exp %109 : vector<256x128xf32>
    %cst_37 = arith.constant 1.000000e+00 : f32
    %111 = vector.broadcast %cst_37 : f32 to vector<256x128xf32>
    %112 = arith.addf %111, %110 : vector<256x128xf32>
    %113 = arith.divf %111, %112 : vector<256x128xf32>
    %114 = arith.mulf %108, %113 : vector<256x128xf32>
    %c0_38 = arith.constant 0 : index
    %c0_39 = arith.constant 0 : index
    %115 = vector.load %arg14[%c0_38, %c0_39] : memref<1x128xf32, #tpu.memory_space<vmem>>, vector<1x128xf32>
    %c17_i32_40 = arith.constant 17 : i32
    %116 = tpu.dynamic_rotate %114 by %c17_i32_40 dim 0 : vector<256x128xf32>, i32 -> vector<256x128xf32>
    %117 = vector.extract_strided_slice %2 {offsets = [0, 0], sizes = [256, 1], strides = [1, 1]} : vector<256x9xf32> to vector<256x1xf32>
    %118 = vector.broadcast %117 : vector<256x1xf32> to vector<256x128xf32>
    %119 = arith.mulf %116, %118 : vector<256x128xf32>
    %c16_i32_41 = arith.constant 16 : i32
    %120 = tpu.dynamic_rotate %114 by %c16_i32_41 dim 0 : vector<256x128xf32>, i32 -> vector<256x128xf32>
    %121 = vector.extract_strided_slice %2 {offsets = [0, 1], sizes = [256, 1], strides = [1, 1]} : vector<256x9xf32> to vector<256x1xf32>
    %122 = vector.broadcast %121 : vector<256x1xf32> to vector<256x128xf32>
    %123 = arith.mulf %120, %122 : vector<256x128xf32>
    %124 = tpu.concatenate %119, %123 in 1 : vector<256x128xf32>, vector<256x128xf32> -> vector<256x256xf32>
    %c0_42 = arith.constant 0 : index
    %c0_43 = arith.constant 0 : index
    %125 = vector.load %arg13[%c0_42, %c0_43] : memref<1184x128xf32, #tpu.memory_space<vmem>>, vector<256x128xf32>
    %cst_44 = arith.constant dense<0.000000e+00> : vector<256x128xf32>
    %126 = tpu.matmul %124, %125, %cst_44 {dimension_numbers = #tpu.dot_dimension_numbers<[1], [0], [0], [1], [0, 0, 1, 1], [], []>} : vector<256x256xf32>, vector<256x128xf32>, vector<256x128xf32> -> vector<256x128xf32>
    %c15_i32_45 = arith.constant 15 : i32
    %127 = tpu.dynamic_rotate %114 by %c15_i32_45 dim 0 : vector<256x128xf32>, i32 -> vector<256x128xf32>
    %128 = vector.extract_strided_slice %2 {offsets = [0, 2], sizes = [256, 1], strides = [1, 1]} : vector<256x9xf32> to vector<256x1xf32>
    %129 = vector.broadcast %128 : vector<256x1xf32> to vector<256x128xf32>
    %130 = arith.mulf %127, %129 : vector<256x128xf32>
    %c1_i32_46 = arith.constant 1 : i32
    %131 = tpu.dynamic_rotate %114 by %c1_i32_46 dim 0 : vector<256x128xf32>, i32 -> vector<256x128xf32>
    %132 = vector.extract_strided_slice %2 {offsets = [0, 3], sizes = [256, 1], strides = [1, 1]} : vector<256x9xf32> to vector<256x1xf32>
    %133 = vector.broadcast %132 : vector<256x1xf32> to vector<256x128xf32>
    %134 = arith.mulf %131, %133 : vector<256x128xf32>
    %135 = tpu.concatenate %130, %134 in 1 : vector<256x128xf32>, vector<256x128xf32> -> vector<256x256xf32>
    %c256 = arith.constant 256 : index
    %c0_47 = arith.constant 0 : index
    %136 = vector.load %arg13[%c256, %c0_47] : memref<1184x128xf32, #tpu.memory_space<vmem>>, vector<256x128xf32>
    %cst_48 = arith.constant dense<0.000000e+00> : vector<256x128xf32>
    %137 = tpu.matmul %135, %136, %cst_48 {dimension_numbers = #tpu.dot_dimension_numbers<[1], [0], [0], [1], [0, 0, 1, 1], [], []>} : vector<256x256xf32>, vector<256x128xf32>, vector<256x128xf32> -> vector<256x128xf32>
    %138 = arith.addf %126, %137 : vector<256x128xf32>
    %c255_i32_49 = arith.constant 255 : i32
    %139 = tpu.dynamic_rotate %114 by %c255_i32_49 dim 0 : vector<256x128xf32>, i32 -> vector<256x128xf32>
    %140 = vector.extract_strided_slice %2 {offsets = [0, 5], sizes = [256, 1], strides = [1, 1]} : vector<256x9xf32> to vector<256x1xf32>
    %141 = vector.broadcast %140 : vector<256x1xf32> to vector<256x128xf32>
    %142 = arith.mulf %139, %141 : vector<256x128xf32>
    %143 = tpu.concatenate %114, %142 in 1 : vector<256x128xf32>, vector<256x128xf32> -> vector<256x256xf32>
    %c512 = arith.constant 512 : index
    %c0_50 = arith.constant 0 : index
    %144 = vector.load %arg13[%c512, %c0_50] : memref<1184x128xf32, #tpu.memory_space<vmem>>, vector<256x128xf32>
    %cst_51 = arith.constant dense<0.000000e+00> : vector<256x128xf32>
    %145 = tpu.matmul %143, %144, %cst_51 {dimension_numbers = #tpu.dot_dimension_numbers<[1], [0], [0], [1], [0, 0, 1, 1], [], []>} : vector<256x256xf32>, vector<256x128xf32>, vector<256x128xf32> -> vector<256x128xf32>
    %146 = arith.addf %138, %145 : vector<256x128xf32>
    %c241_i32_52 = arith.constant 241 : i32
    %147 = tpu.dynamic_rotate %114 by %c241_i32_52 dim 0 : vector<256x128xf32>, i32 -> vector<256x128xf32>
    %148 = vector.extract_strided_slice %2 {offsets = [0, 6], sizes = [256, 1], strides = [1, 1]} : vector<256x9xf32> to vector<256x1xf32>
    %149 = vector.broadcast %148 : vector<256x1xf32> to vector<256x128xf32>
    %150 = arith.mulf %147, %149 : vector<256x128xf32>
    %c240_i32_53 = arith.constant 240 : i32
    %151 = tpu.dynamic_rotate %114 by %c240_i32_53 dim 0 : vector<256x128xf32>, i32 -> vector<256x128xf32>
    %152 = vector.extract_strided_slice %2 {offsets = [0, 7], sizes = [256, 1], strides = [1, 1]} : vector<256x9xf32> to vector<256x1xf32>
    %153 = vector.broadcast %152 : vector<256x1xf32> to vector<256x128xf32>
    %154 = arith.mulf %151, %153 : vector<256x128xf32>
    %155 = tpu.concatenate %150, %154 in 1 : vector<256x128xf32>, vector<256x128xf32> -> vector<256x256xf32>
    %c768 = arith.constant 768 : index
    %c0_54 = arith.constant 0 : index
    %156 = vector.load %arg13[%c768, %c0_54] : memref<1184x128xf32, #tpu.memory_space<vmem>>, vector<256x128xf32>
    %cst_55 = arith.constant dense<0.000000e+00> : vector<256x128xf32>
    %157 = tpu.matmul %155, %156, %cst_55 {dimension_numbers = #tpu.dot_dimension_numbers<[1], [0], [0], [1], [0, 0, 1, 1], [], []>} : vector<256x256xf32>, vector<256x128xf32>, vector<256x128xf32> -> vector<256x128xf32>
    %158 = arith.addf %146, %157 : vector<256x128xf32>
    %c239_i32_56 = arith.constant 239 : i32
    %159 = tpu.dynamic_rotate %114 by %c239_i32_56 dim 0 : vector<256x128xf32>, i32 -> vector<256x128xf32>
    %160 = vector.extract_strided_slice %2 {offsets = [0, 8], sizes = [256, 1], strides = [1, 1]} : vector<256x9xf32> to vector<256x1xf32>
    %161 = vector.broadcast %160 : vector<256x1xf32> to vector<256x128xf32>
    %162 = arith.mulf %159, %161 : vector<256x128xf32>
    %163 = tpu.concatenate %162, %1 in 1 : vector<256x128xf32>, vector<256x32xf32> -> vector<256x160xf32>
    %c1024 = arith.constant 1024 : index
    %c0_57 = arith.constant 0 : index
    %164 = vector.load %arg13[%c1024, %c0_57] : memref<1184x128xf32, #tpu.memory_space<vmem>>, vector<160x128xf32>
    %cst_58 = arith.constant dense<0.000000e+00> : vector<256x128xf32>
    %165 = tpu.matmul %163, %164, %cst_58 {dimension_numbers = #tpu.dot_dimension_numbers<[1], [0], [0], [1], [0, 0, 1, 1], [], []>} : vector<256x160xf32>, vector<160x128xf32>, vector<256x128xf32> -> vector<256x128xf32>
    %166 = arith.addf %158, %165 : vector<256x128xf32>
    %167 = vector.broadcast %115 : vector<1x128xf32> to vector<256x128xf32>
    %168 = arith.addf %166, %167 : vector<256x128xf32>
    %c0_59 = arith.constant 0 : index
    %c0_60 = arith.constant 0 : index
    %c0_61 = arith.constant 0 : index
    %169 = vector.load %arg15[%c0_59, %c0_60, %c0_61] : memref<1x256x128xf32, #tpu.memory_space<vmem>>, vector<1x256x128xf32>
    %170 = vector.shape_cast %169 : vector<1x256x128xf32> to vector<256x128xf32>
    %171 = vector.shape_cast %168 : vector<256x128xf32> to vector<1x256x128xf32>
    tpu.vector_store %arg15[%c0_59, %c0_60, %c0_61], %171 {strides = array<i32>} : memref<1x256x128xf32, #tpu.memory_space<vmem>>, vector<1x256x128xf32>,
    return
  }
  func.func @transform_0(%arg0: i32) -> (i32, i32, i32) {
    %c0_i32 = arith.constant 0 : i32
    %c0_i32_0 = arith.constant 0 : i32
    %c0_i32_1 = arith.constant 0 : i32
    return %arg0, %c0_i32, %c0_i32_0 : i32, i32, i32
  }
  func.func @transform_1(%arg0: i32) -> (i32, i32) {
    %c0_i32 = arith.constant 0 : i32
    %c0_i32_0 = arith.constant 0 : i32
    %c0_i32_1 = arith.constant 0 : i32
    return %c0_i32, %c0_i32_0 : i32, i32
  }
  func.func @transform_2(%arg0: i32) -> (i32, i32) {
    %c0_i32 = arith.constant 0 : i32
    %c0_i32_0 = arith.constant 0 : i32
    %c0_i32_1 = arith.constant 0 : i32
    return %c0_i32, %c0_i32_0 : i32, i32
  }
  func.func @transform_3(%arg0: i32) -> (i32, i32) {
    %c0_i32 = arith.constant 0 : i32
    %c0_i32_0 = arith.constant 0 : i32
    %c0_i32_1 = arith.constant 0 : i32
    return %c0_i32, %c0_i32_0 : i32, i32
  }
  func.func @transform_4(%arg0: i32) -> (i32, i32) {
    %c0_i32 = arith.constant 0 : i32
    %c0_i32_0 = arith.constant 0 : i32
    %c0_i32_1 = arith.constant 0 : i32
    return %c0_i32, %c0_i32_0 : i32, i32
  }
  func.func @transform_5(%arg0: i32) -> (i32, i32) {
    %c0_i32 = arith.constant 0 : i32
    %c0_i32_0 = arith.constant 0 : i32
    %c0_i32_1 = arith.constant 0 : i32
    return %c0_i32, %c0_i32_0 : i32, i32
  }
  func.func @transform_6(%arg0: i32) -> (i32, i32) {
    %c0_i32 = arith.constant 0 : i32
    %c0_i32_0 = arith.constant 0 : i32
    %c0_i32_1 = arith.constant 0 : i32
    return %c0_i32, %c0_i32_0 : i32, i32
  }
  func.func @transform_7(%arg0: i32) -> (i32, i32) {
    %c0_i32 = arith.constant 0 : i32
    %c0_i32_0 = arith.constant 0 : i32
    %c0_i32_1 = arith.constant 0 : i32
    return %c0_i32, %c0_i32_0 : i32, i32
  }
  func.func @transform_8(%arg0: i32) -> (i32, i32) {
    %c0_i32 = arith.constant 0 : i32
    %c0_i32_0 = arith.constant 0 : i32
    %c0_i32_1 = arith.constant 0 : i32
    return %c0_i32, %c0_i32_0 : i32, i32
  }
  func.func @transform_9(%arg0: i32) -> (i32, i32) {
    %c0_i32 = arith.constant 0 : i32
    %c0_i32_0 = arith.constant 0 : i32
    %c0_i32_1 = arith.constant 0 : i32
    return %c0_i32, %c0_i32_0 : i32, i32
  }
  func.func @transform_10(%arg0: i32) -> (i32, i32) {
    %c0_i32 = arith.constant 0 : i32
    %c0_i32_0 = arith.constant 0 : i32
    %c0_i32_1 = arith.constant 0 : i32
    return %c0_i32, %c0_i32_0 : i32, i32
  }
  func.func @transform_11(%arg0: i32) -> (i32, i32) {
    %c0_i32 = arith.constant 0 : i32
    %c0_i32_0 = arith.constant 0 : i32
    %c0_i32_1 = arith.constant 0 : i32
    return %c0_i32, %c0_i32_0 : i32, i32
  }
  func.func @transform_12(%arg0: i32) -> (i32, i32) {
    %c0_i32 = arith.constant 0 : i32
    %c0_i32_0 = arith.constant 0 : i32
    %c0_i32_1 = arith.constant 0 : i32
    return %c0_i32, %c0_i32_0 : i32, i32
  }
  func.func @transform_13(%arg0: i32) -> (i32, i32) {
    %c0_i32 = arith.constant 0 : i32
    %c0_i32_0 = arith.constant 0 : i32
    %c0_i32_1 = arith.constant 0 : i32
    return %c0_i32, %c0_i32_0 : i32, i32
  }
  func.func @transform_14(%arg0: i32) -> (i32, i32, i32) {
    %c0_i32 = arith.constant 0 : i32
    %c0_i32_0 = arith.constant 0 : i32
    %c0_i32_1 = arith.constant 0 : i32
    return %arg0, %c0_i32, %c0_i32_0 : i32, i32, i32
  }
}

</mosaic_0001>

<llo_original>
// kernel: resblock_encoder_forward.1
$region0: #{resblock_encoder_forward.1}
  #allocation0 [shape = 'u32[]', space=smem, size = 0x4, offset = 0x4, fixed_abs, tag = 'smem constant byte address 0x4 - core index']
  #allocation1 [shape = 'u32[144,128]{1,0:T(1,128)}', space=vmem, size = 0x12000, scoped, tag = 'internal scratch']
  %s0 = inlined_call_operand.hbm [shape: f32[2,256,32], index: 0, kind: input, shape index: {}]
  %s1 = inlined_call_operand.vmem [shape: f32[256,9], index: 1, kind: input, shape index: {}]
  %s2 = inlined_call_operand.vmem [shape: f32[32,32], index: 2, kind: input, shape index: {}]
  %s3 = inlined_call_operand.vmem [shape: f32[32,32], index: 3, kind: input, shape index: {}]
  %s4 = inlined_call_operand.vmem [shape: f32[1,32], index: 4, kind: input, shape index: {}]
  %s5 = inlined_call_operand.vmem [shape: f32[1,32], index: 5, kind: input, shape index: {}]
  %s6 = inlined_call_operand.vmem [shape: f32[288,128], index: 6, kind: input, shape index: {}]
  %s7 = inlined_call_operand.vmem [shape: f32[1,128], index: 7, kind: input, shape index: {}]
  %s8 = inlined_call_operand.vmem [shape: f32[128,32], index: 8, kind: input, shape index: {}]
  %s9 = inlined_call_operand.vmem [shape: f32[32,128], index: 9, kind: input, shape index: {}]
  %s10 = inlined_call_operand.vmem [shape: f32[1,128], index: 10, kind: input, shape index: {}]
  %s11 = inlined_call_operand.vmem [shape: f32[1,128], index: 11, kind: input, shape index: {}]
  %s12 = inlined_call_operand.hbm [shape: f32[1184,128], index: 12, kind: input, shape index: {}]
  %s13 = inlined_call_operand.vmem [shape: f32[1,128], index: 13, kind: input, shape index: {}]
  %s14 = inlined_call_operand.hbm [shape: f32[2,256,128], index: 14, kind: output, shape index: {}]
  %s15 = sld [smem:[#allocation0]]
  $region97: #{resblock_encoder_forward.1} parent=0
    _
  %s17 = ssub.s32 1, %s15
  %s18 = scalar_select 0, %s17, %s15
  $region1: #{resblock_encoder_forward.1} parent=0
    #allocation2 [shape = 'u8[262144]{0}', space=vmem, size = 0x40000, scoped, tag = 'input window, operand 0']
    #allocation3 [shape = 's32[2]{0}', space=sflag, size = 0x8, scoped, tag = 'scoped memory for resblock_encoder_forward.1']
    #allocation4 [shape = 's32[2]{0}', space=sflag, size = 0x8, scoped, tag = 'scoped memory for resblock_encoder_forward.1']
    #allocation5 [shape = 'u8[606208]{0}', space=vmem, size = 0x94000, scoped, tag = 'input window, operand 12, single buffered']
    #allocation6 [shape = 's32[1]{0}', space=sflag, size = 0x4, scoped, tag = 'scoped memory for resblock_encoder_forward.1']
    #allocation7 [shape = 'u8[262144]{0}', space=vmem, size = 0x40000, scoped, tag = 'output window, operand 0']
    %19 = vsyncpa [#allocation3], 0
    %s20 = scalar_lea.sflag [#allocation3], 1
    %21 = vsyncpa %s20, 0
    %22 = vsyncpa [#allocation6], 0
    %23 = vsyncpa [#allocation4], 0
    %s24 = scalar_lea.sflag [#allocation4], 1
    %25 = vsyncpa %s24, 0
    loop: start=0, step=1, limit=4
    $region2: #{resblock_encoder_forward.1} parent=1 // loop_pre_header
      _
    $region3: #{resblock_encoder_forward.1} parent=1 // loop_header
      %s27 = sphi 0, %s31
      %p28 = scmp.ge.s32.totalorder %s27, 4
      %s37 = sphi 0, %s39
      %s40 = sphi 0, %s37
      %s41 = sphi 0, %s40
      %s57 = sphi 0, %s41
      %s61 = sphi 0, %s61
      %s63 = sphi 0, %s61
      %s64 = sphi 0, %s63
      %s78 = sphi 0, %s64
      %s82 = sphi 0, %s82
      %s84 = sphi 0, %s82
      %s85 = sphi 0, %s84
      %s99 = sphi 0, %s85
      %s103 = sphi 0, %s103
      %s105 = sphi 0, %s103
      %s106 = sphi 0, %s105
      %s120 = sphi 0, %s106
      %s124 = sphi 0, %s124
      %s126 = sphi 0, %s124
      %s127 = sphi 0, %s126
      %s141 = sphi 0, %s127
      %s145 = sphi 0, %s145
      %s147 = sphi 0, %s145
      %s148 = sphi 0, %s147
      %s162 = sphi 0, %s148
      %s166 = sphi 0, %s166
      %s168 = sphi 0, %s166
      %s169 = sphi 0, %s168
      %s183 = sphi 0, %s169
      %s187 = sphi 0, %s187
      %s189 = sphi 0, %s187
      %s190 = sphi 0, %s189
      %s204 = sphi 0, %s190
      %s208 = sphi 0, %s208
      %s210 = sphi 0, %s208
      %s211 = sphi 0, %s210
      %s225 = sphi 0, %s211
      %s229 = sphi 0, %s229
      %s231 = sphi 0, %s229
      %s232 = sphi 0, %s231
      %s246 = sphi 0, %s232
      %s250 = sphi 0, %s250
      %s252 = sphi 0, %s250
      %s253 = sphi 0, %s252
      %s267 = sphi 0, %s253
      %s271 = sphi 0, %s271
      %s273 = sphi 0, %s271
      %s274 = sphi 0, %s273
      %s288 = sphi 0, %s274
      %s292 = sphi 0, %s292
      %s294 = sphi 0, %s292
      %s295 = sphi 0, %s294
      %s309 = sphi 0, %s295
      %s313 = sphi 0, %s313
      %s315 = sphi 0, %s313
      %s316 = sphi 0, %s315
      %s330 = sphi 0, %s316
      %s336 = sphi 0, %s338
      %s339 = sphi 0, %s336
      %s340 = sphi 0, %s339
      %s356 = sphi 0, %s340
    $region4: #{resblock_encoder_forward.1} parent=1 // loop_header_branch
      %30 = sbr.rel (%p28) target = $region8
    $region5: #{resblock_encoder_forward.1} parent=1 // loop_body
      %s32 = ssub.s32 %s27, 1
      %s33 = ssub.s32 %s27, 2
      %s34 = sadd.s32 %s27, 1
      %s35 = ssub.s32 %s27, %s34
      %p36 = scmp.eq.s32.totalorder %s35, 0
      %s38 = sadd.s32 %s37, 1
      %s39 = scalar_select %p36, %s37, %s38
      %p42 = pneg %p36
      %p43 = scmp.eq.s32.totalorder %s27, 1
      %p44 = por %p42, %p43
      %p45 = scmp.ne.s32.totalorder %s37, %s40
      %p46 = scmp.eq.s32.totalorder %s27, 0
      %p47 = por %p45, %p46
      %p48 = scmp.ne.s32.totalorder %s37, %s40
      %p49 = scmp.eq.s32.totalorder %s32, 1
      %p50 = por %p48, %p49
      %p51 = scmp.ne.s32.totalorder %s40, %s41
      %p52 = scmp.eq.s32.totalorder %s32, 0
      %p53 = por %p51, %p52
      %p54 = scmp.ne.s32.totalorder %s40, %s41
      %p55 = scmp.eq.s32.totalorder %s33, 1
      %p56 = por %p54, %p55
      %p58 = scmp.ne.s32.totalorder %s41, %s57
      %p59 = scmp.eq.s32.totalorder %s33, 0
      %p60 = por %p58, %p59
      %s62 = sadd.s32 %s61, 1
      %p65 = scmp.eq.s32.totalorder %s27, 1
      %p66 = scmp.ne.s32.totalorder %s61, %s63
      %p67 = scmp.eq.s32.totalorder %s27, 0
      %p68 = por %p66, %p67
      %p69 = scmp.ne.s32.totalorder %s61, %s63
      %p70 = scmp.eq.s32.totalorder %s32, 1
      %p71 = por %p69, %p70
      %p72 = scmp.ne.s32.totalorder %s63, %s64
      %p73 = scmp.eq.s32.totalorder %s32, 0
      %p74 = por %p72, %p73
      %p75 = scmp.ne.s32.totalorder %s63, %s64
      %p76 = scmp.eq.s32.totalorder %s33, 1
      %p77 = por %p75, %p76
      %p79 = scmp.ne.s32.totalorder %s64, %s78
      %p80 = scmp.eq.s32.totalorder %s33, 0
      %p81 = por %p79, %p80
      %s83 = sadd.s32 %s82, 1
      %p86 = scmp.eq.s32.totalorder %s27, 1
      %p87 = scmp.ne.s32.totalorder %s82, %s84
      %p88 = scmp.eq.s32.totalorder %s27, 0
      %p89 = por %p87, %p88
      %p90 = scmp.ne.s32.totalorder %s82, %s84
      %p91 = scmp.eq.s32.totalorder %s32, 1
      %p92 = por %p90, %p91
      %p93 = scmp.ne.s32.totalorder %s84, %s85
      %p94 = scmp.eq.s32.totalorder %s32, 0
      %p95 = por %p93, %p94
      %p96 = scmp.ne.s32.totalorder %s84, %s85
      %p97 = scmp.eq.s32.totalorder %s33, 1
      %p98 = por %p96, %p97
      %p100 = scmp.ne.s32.totalorder %s85, %s99
      %p101 = scmp.eq.s32.totalorder %s33, 0
      %p102 = por %p100, %p101
      %s104 = sadd.s32 %s103, 1
      %p107 = scmp.eq.s32.totalorder %s27, 1
      %p108 = scmp.ne.s32.totalorder %s103, %s105
      %p109 = scmp.eq.s32.totalorder %s27, 0
      %p110 = por %p108, %p109
      %p111 = scmp.ne.s32.totalorder %s103, %s105
      %p112 = scmp.eq.s32.totalorder %s32, 1
      %p113 = por %p111, %p112
      %p114 = scmp.ne.s32.totalorder %s105, %s106
      %p115 = scmp.eq.s32.totalorder %s32, 0
      %p116 = por %p114, %p115
      %p117 = scmp.ne.s32.totalorder %s105, %s106
      %p118 = scmp.eq.s32.totalorder %s33, 1
      %p119 = por %p117, %p118
      %p121 = scmp.ne.s32.totalorder %s106, %s120
      %p122 = scmp.eq.s32.totalorder %s33, 0
      %p123 = por %p121, %p122
      %s125 = sadd.s32 %s124, 1
      %p128 = scmp.eq.s32.totalorder %s27, 1
      %p129 = scmp.ne.s32.totalorder %s124, %s126
      %p130 = scmp.eq.s32.totalorder %s27, 0
      %p131 = por %p129, %p130
      %p132 = scmp.ne.s32.totalorder %s124, %s126
      %p133 = scmp.eq.s32.totalorder %s32, 1
      %p134 = por %p132, %p133
      %p135 = scmp.ne.s32.totalorder %s126, %s127
      %p136 = scmp.eq.s32.totalorder %s32, 0
      %p137 = por %p135, %p136
      %p138 = scmp.ne.s32.totalorder %s126, %s127
      %p139 = scmp.eq.s32.totalorder %s33, 1
      %p140 = por %p138, %p139
      %p142 = scmp.ne.s32.totalorder %s127, %s141
      %p143 = scmp.eq.s32.totalorder %s33, 0
      %p144 = por %p142, %p143
      %s146 = sadd.s32 %s145, 1
      %p149 = scmp.eq.s32.totalorder %s27, 1
      %p150 = scmp.ne.s32.totalorder %s145, %s147
      %p151 = scmp.eq.s32.totalorder %s27, 0
      %p152 = por %p150, %p151
      %p153 = scmp.ne.s32.totalorder %s145, %s147
      %p154 = scmp.eq.s32.totalorder %s32, 1
      %p155 = por %p153, %p154
      %p156 = scmp.ne.s32.totalorder %s147, %s148
      %p157 = scmp.eq.s32.totalorder %s32, 0
      %p158 = por %p156, %p157
      %p159 = scmp.ne.s32.totalorder %s147, %s148
      %p160 = scmp.eq.s32.totalorder %s33, 1
      %p161 = por %p159, %p160
      %p163 = scmp.ne.s32.totalorder %s148, %s162
      %p164 = scmp.eq.s32.totalorder %s33, 0
      %p165 = por %p163, %p164
      %s167 = sadd.s32 %s166, 1
      %p170 = scmp.eq.s32.totalorder %s27, 1
      %p171 = scmp.ne.s32.totalorder %s166, %s168
      %p172 = scmp.eq.s32.totalorder %s27, 0
      %p173 = por %p171, %p172
      %p174 = scmp.ne.s32.totalorder %s166, %s168
      %p175 = scmp.eq.s32.totalorder %s32, 1
      %p176 = por %p174, %p175
      %p177 = scmp.ne.s32.totalorder %s168, %s169
      %p178 = scmp.eq.s32.totalorder %s32, 0
      %p179 = por %p177, %p178
      %p180 = scmp.ne.s32.totalorder %s168, %s169
      %p181 = scmp.eq.s32.totalorder %s33, 1
      %p182 = por %p180, %p181
      %p184 = scmp.ne.s32.totalorder %s169, %s183
      %p185 = scmp.eq.s32.totalorder %s33, 0
      %p186 = por %p184, %p185
      %s188 = sadd.s32 %s187, 1
      %p191 = scmp.eq.s32.totalorder %s27, 1
      %p192 = scmp.ne.s32.totalorder %s187, %s189
      %p193 = scmp.eq.s32.totalorder %s27, 0
      %p194 = por %p192, %p193
      %p195 = scmp.ne.s32.totalorder %s187, %s189
      %p196 = scmp.eq.s32.totalorder %s32, 1
      %p197 = por %p195, %p196
      %p198 = scmp.ne.s32.totalorder %s189, %s190
      %p199 = scmp.eq.s32.totalorder %s32, 0
      %p200 = por %p198, %p199
      %p201 = scmp.ne.s32.totalorder %s189, %s190
      %p202 = scmp.eq.s32.totalorder %s33, 1
      %p203 = por %p201, %p202
      %p205 = scmp.ne.s32.totalorder %s190, %s204
      %p206 = scmp.eq.s32.totalorder %s33, 0
      %p207 = por %p205, %p206
      %s209 = sadd.s32 %s208, 1
      %p212 = scmp.eq.s32.totalorder %s27, 1
      %p213 = scmp.ne.s32.totalorder %s208, %s210
      %p214 = scmp.eq.s32.totalorder %s27, 0
      %p215 = por %p213, %p214
      %p216 = scmp.ne.s32.totalorder %s208, %s210
      %p217 = scmp.eq.s32.totalorder %s32, 1
      %p218 = por %p216, %p217
      %p219 = scmp.ne.s32.totalorder %s210, %s211
      %p220 = scmp.eq.s32.totalorder %s32, 0
      %p221 = por %p219, %p220
      %p222 = scmp.ne.s32.totalorder %s210, %s211
      %p223 = scmp.eq.s32.totalorder %s33, 1
      %p224 = por %p222, %p223
      %p226 = scmp.ne.s32.totalorder %s211, %s225
      %p227 = scmp.eq.s32.totalorder %s33, 0
      %p228 = por %p226, %p227
      %s230 = sadd.s32 %s229, 1
      %p233 = scmp.eq.s32.totalorder %s27, 1
      %p234 = scmp.ne.s32.totalorder %s229, %s231
      %p235 = scmp.eq.s32.totalorder %s27, 0
      %p236 = por %p234, %p235
      %p237 = scmp.ne.s32.totalorder %s229, %s231
      %p238 = scmp.eq.s32.totalorder %s32, 1
      %p239 = por %p237, %p238
      %p240 = scmp.ne.s32.totalorder %s231, %s232
      %p241 = scmp.eq.s32.totalorder %s32, 0
      %p242 = por %p240, %p241
      %p243 = scmp.ne.s32.totalorder %s231, %s232
      %p244 = scmp.eq.s32.totalorder %s33, 1
      %p245 = por %p243, %p244
      %p247 = scmp.ne.s32.totalorder %s232, %s246
      %p248 = scmp.eq.s32.totalorder %s33, 0
      %p249 = por %p247, %p248
      %s251 = sadd.s32 %s250, 1
      %p254 = scmp.eq.s32.totalorder %s27, 1
      %p255 = scmp.ne.s32.totalorder %s250, %s252
      %p256 = scmp.eq.s32.totalorder %s27, 0
      %p257 = por %p255, %p256
      %p258 = scmp.ne.s32.totalorder %s250, %s252
      %p259 = scmp.eq.s32.totalorder %s32, 1
      %p260 = por %p258, %p259
      %p261 = scmp.ne.s32.totalorder %s252, %s253
      %p262 = scmp.eq.s32.totalorder %s32, 0
      %p263 = por %p261, %p262
      %p264 = scmp.ne.s32.totalorder %s252, %s253
      %p265 = scmp.eq.s32.totalorder %s33, 1
      %p266 = por %p264, %p265
      %p268 = scmp.ne.s32.totalorder %s253, %s267
      %p269 = scmp.eq.s32.totalorder %s33, 0
      %p270 = por %p268, %p269
      %s272 = sadd.s32 %s271, 1
      %p275 = scmp.eq.s32.totalorder %s27, 1
      %p276 = scmp.ne.s32.totalorder %s271, %s273
      %p277 = scmp.eq.s32.totalorder %s27, 0
      %p278 = por %p276, %p277
      %p279 = scmp.ne.s32.totalorder %s271, %s273
      %p280 = scmp.eq.s32.totalorder %s32, 1
      %p281 = por %p279, %p280
      %p282 = scmp.ne.s32.totalorder %s273, %s274
      %p283 = scmp.eq.s32.totalorder %s32, 0
      %p284 = por %p282, %p283
      %p285 = scmp.ne.s32.totalorder %s273, %s274
      %p286 = scmp.eq.s32.totalorder %s33, 1
      %p287 = por %p285, %p286
      %p289 = scmp.ne.s32.totalorder %s274, %s288
      %p290 = scmp.eq.s32.totalorder %s33, 0
      %p291 = por %p289, %p290
      %s293 = sadd.s32 %s292, 1
      %p296 = scmp.eq.s32.totalorder %s27, 1
      %p297 = scmp.ne.s32.totalorder %s292, %s294
      %p298 = scmp.eq.s32.totalorder %s27, 0
      %p299 = por %p297, %p298
      %p300 = scmp.ne.s32.totalorder %s292, %s294
      %p301 = scmp.eq.s32.totalorder %s32, 1
      %p302 = por %p300, %p301
      %p303 = scmp.ne.s32.totalorder %s294, %s295
      %p304 = scmp.eq.s32.totalorder %s32, 0
      %p305 = por %p303, %p304
      %p306 = scmp.ne.s32.totalorder %s294, %s295
      %p307 = scmp.eq.s32.totalorder %s33, 1
      %p308 = por %p306, %p307
      %p310 = scmp.ne.s32.totalorder %s295, %s309
      %p311 = scmp.eq.s32.totalorder %s33, 0
      %p312 = por %p310, %p311
      %s314 = sadd.s32 %s313, 1
      %p317 = scmp.eq.s32.totalorder %s27, 1
      %p318 = scmp.ne.s32.totalorder %s313, %s315
      %p319 = scmp.eq.s32.totalorder %s27, 0
      %p320 = por %p318, %p319
      %p321 = scmp.ne.s32.totalorder %s313, %s315
      %p322 = scmp.eq.s32.totalorder %s32, 1
      %p323 = por %p321, %p322
      %p324 = scmp.ne.s32.totalorder %s315, %s316
      %p325 = scmp.eq.s32.totalorder %s32, 0
      %p326 = por %p324, %p325
      %p327 = scmp.ne.s32.totalorder %s315, %s316
      %p328 = scmp.eq.s32.totalorder %s33, 1
      %p329 = por %p327, %p328
      %p331 = scmp.ne.s32.totalorder %s316, %s330
      %p332 = scmp.eq.s32.totalorder %s33, 0
      %p333 = por %p331, %p332
      %s334 = ssub.s32 %s27, %s34
      %p335 = scmp.eq.s32.totalorder %s334, 0
      %s337 = sadd.s32 %s336, 1
      %s338 = scalar_select %p335, %s336, %s337
      %p341 = pneg %p335
      %p342 = scmp.eq.s32.totalorder %s27, 1
      %p343 = por %p341, %p342
      %p344 = scmp.ne.s32.totalorder %s336, %s339
      %p345 = scmp.eq.s32.totalorder %s27, 0
      %p346 = por %p344, %p345
      %p347 = scmp.ne.s32.totalorder %s336, %s339
      %p348 = scmp.eq.s32.totalorder %s32, 1
      %p349 = por %p347, %p348
      %p350 = scmp.ne.s32.totalorder %s339, %s340
      %p351 = scmp.eq.s32.totalorder %s32, 0
      %p352 = por %p350, %p351
      %p353 = scmp.ne.s32.totalorder %s339, %s340
      %p354 = scmp.eq.s32.totalorder %s33, 1
      %p355 = por %p353, %p354
      %p357 = scmp.ne.s32.totalorder %s340, %s356
      %p358 = scmp.eq.s32.totalorder %s33, 0
      %p359 = por %p357, %p358
      %p360 = scmp.le.s32.totalorder 1, %s27
      %p361 = scmp.lt.s32.totalorder %s27, 3
      %p362 = pnand %p360, %p361
      %p363 = pneg %p362
      // Predicated region
      $region9: #{resblock_encoder_forward.1} parent=5 // pred_check
        _
      $region10: #{resblock_encoder_forward.1} parent=5 // pred_check_branch
        %365 = sbr.rel (%p362) target = $region12
      $region11: #{resblock_encoder_forward.1} parent=5 // pred_region
        %s366 = ssub.s32 %s27, 1
        // Predicated region
        $region13: #{resblock_encoder_forward.1} parent=11 // pred_check
          %p367 = pneg %p74
        $region14: #{resblock_encoder_forward.1} parent=11 // pred_check_branch
          %369 = sbr.rel (%p367) target = $region16
        $region15: #{resblock_encoder_forward.1} parent=11 // pred_region
          _
        $region16: #{resblock_encoder_forward.1} parent=11 // pred_fallthru
          _
        // Predicated region
        $region17: #{resblock_encoder_forward.1} parent=11 // pred_check
          %p370 = pneg %p95
        $region18: #{resblock_encoder_forward.1} parent=11 // pred_check_branch
          %372 = sbr.rel (%p370) target = $region20
        $region19: #{resblock_encoder_forward.1} parent=11 // pred_region
          _
        $region20: #{resblock_encoder_forward.1} parent=11 // pred_fallthru
          _
        // Predicated region
        $region21: #{resblock_encoder_forward.1} parent=11 // pred_check
          %p373 = pneg %p116
        $region22: #{resblock_encoder_forward.1} parent=11 // pred_check_branch
          %375 = sbr.rel (%p373) target = $region24
        $region23: #{resblock_encoder_forward.1} parent=11 // pred_region
          _
        $region24: #{resblock_encoder_forward.1} parent=11 // pred_fallthru
          _
        // Predicated region
        $region25: #{resblock_encoder_forward.1} parent=11 // pred_check
          %p376 = pneg %p137
        $region26: #{resblock_encoder_forward.1} parent=11 // pred_check_branch
          %378 = sbr.rel (%p376) target = $region28
        $region27: #{resblock_encoder_forward.1} parent=11 // pred_region
          _
        $region28: #{resblock_encoder_forward.1} parent=11 // pred_fallthru
          _
        // Predicated region
        $region29: #{resblock_encoder_forward.1} parent=11 // pred_check
          %p379 = pneg %p158
        $region30: #{resblock_encoder_forward.1} parent=11 // pred_check_branch
          %381 = sbr.rel (%p379) target = $region32
        $region31: #{resblock_encoder_forward.1} parent=11 // pred_region
          _
        $region32: #{resblock_encoder_forward.1} parent=11 // pred_fallthru
          _
        // Predicated region
        $region33: #{resblock_encoder_forward.1} parent=11 // pred_check
          %p382 = pneg %p179
        $region34: #{resblock_encoder_forward.1} parent=11 // pred_check_branch
          %384 = sbr.rel (%p382) target = $region36
        $region35: #{resblock_encoder_forward.1} parent=11 // pred_region
          _
        $region36: #{resblock_encoder_forward.1} parent=11 // pred_fallthru
          _
        // Predicated region
        $region37: #{resblock_encoder_forward.1} parent=11 // pred_check
          %p385 = pneg %p200
        $region38: #{resblock_encoder_forward.1} parent=11 // pred_check_branch
          %387 = sbr.rel (%p385) target = $region40
        $region39: #{resblock_encoder_forward.1} parent=11 // pred_region
          _
        $region40: #{resblock_encoder_forward.1} parent=11 // pred_fallthru
          _
        // Predicated region
        $region41: #{resblock_encoder_forward.1} parent=11 // pred_check
          %p388 = pneg %p221
        $region42: #{resblock_encoder_forward.1} parent=11 // pred_check_branch
          %390 = sbr.rel (%p388) target = $region44
        $region43: #{resblock_encoder_forward.1} parent=11 // pred_region
          _
        $region44: #{resblock_encoder_forward.1} parent=11 // pred_fallthru
          _
        // Predicated region
        $region45: #{resblock_encoder_forward.1} parent=11 // pred_check
          %p391 = pneg %p242
        $region46: #{resblock_encoder_forward.1} parent=11 // pred_check_branch
          %393 = sbr.rel (%p391) target = $region48
        $region47: #{resblock_encoder_forward.1} parent=11 // pred_region
          _
        $region48: #{resblock_encoder_forward.1} parent=11 // pred_fallthru
          _
        // Predicated region
        $region49: #{resblock_encoder_forward.1} parent=11 // pred_check
          %p394 = pneg %p263
        $region50: #{resblock_encoder_forward.1} parent=11 // pred_check_branch
          %396 = sbr.rel (%p394) target = $region52
        $region51: #{resblock_encoder_forward.1} parent=11 // pred_region
          _
        $region52: #{resblock_encoder_forward.1} parent=11 // pred_fallthru
          _
        // Predicated region
        $region53: #{resblock_encoder_forward.1} parent=11 // pred_check
          %p397 = pneg %p284
        $region54: #{resblock_encoder_forward.1} parent=11 // pred_check_branch
          %399 = sbr.rel (%p397) target = $region56
        $region55: #{resblock_encoder_forward.1} parent=11 // pred_region
          _
        $region56: #{resblock_encoder_forward.1} parent=11 // pred_fallthru
          _
        // Predicated region
        $region57: #{resblock_encoder_forward.1} parent=11 // pred_check
          %p400 = pneg %p305
        $region58: #{resblock_encoder_forward.1} parent=11 // pred_check_branch
          %402 = sbr.rel (%p400) target = $region60
        $region59: #{resblock_encoder_forward.1} parent=11 // pred_region
          %s404 = ssub.s32 18944, 18944
          %405 = vsyncadd [#allocation6], %s404
          %s406 = sshll.u32 [#allocation5], 4
          %s407 = int_to_ptr.vmem [resolvable:$true] %s406
          %412 = dma.hbm_to_vmem [thread:$0]  %s12, 18944, %s407, [#allocation6], 128, 128, 8
        $region60: #{resblock_encoder_forward.1} parent=11 // pred_fallthru
          _
        // Predicated region
        $region61: #{resblock_encoder_forward.1} parent=11 // pred_check
          %p413 = pneg %p326
        $region62: #{resblock_encoder_forward.1} parent=11 // pred_check_branch
          %415 = sbr.rel (%p413) target = $region64
        $region63: #{resblock_encoder_forward.1} parent=11 // pred_region
          _
        $region64: #{resblock_encoder_forward.1} parent=11 // pred_fallthru
          _
      $region12: #{resblock_encoder_forward.1} parent=5 // pred_fallthru
        _
      %p416 = scmp.lt.s32.totalorder %s27, 2
      // Predicated region
      $region65: #{resblock_encoder_forward.1} parent=5 // pred_check
        %p417 = pneg %p416
      $region66: #{resblock_encoder_forward.1} parent=5 // pred_check_branch
        %419 = sbr.rel (%p417) target = $region68
      $region67: #{resblock_encoder_forward.1} parent=5 // pred_region
        // Predicated region
        $region69: #{resblock_encoder_forward.1} parent=67 // pred_check
          %p420 = pneg %p47
        $region70: #{resblock_encoder_forward.1} parent=67 // pred_check_branch
          %422 = sbr.rel (%p420) target = $region72
        $region71: #{resblock_encoder_forward.1} parent=67 // pred_region
          %s423 = sand.u32 %s37, 1
          %s424 = scalar_lea.sflag [#allocation3], %s423
          %s425 = sand.u32 %s37, 1
          %s426 = smul.addr %s425, 256
          %s427 = scalar_lea.vmem [#allocation2], %s426
          %s429 = ssub.s32 4096, 4096
          %430 = vsyncadd %s424, %s429
          %s431 = smul.addr %s27, 32
          %s432 = smul.addr %s431, 128
          %s433 = scalar_lea.hbm %s0, %s432
          %s434 = sshll.u32 %s427, 4
          %s435 = int_to_ptr.vmem [resolvable:$true] %s434
          %440 = dma.hbm_to_vmem [thread:$0]  %s433, 4096, %s435, %s424, 128, 128, 8
        $region72: #{resblock_encoder_forward.1} parent=67 // pred_fallthru
          _
      $region68: #{resblock_encoder_forward.1} parent=5 // pred_fallthru
        _
      %p441 = scmp.le.s32.totalorder 1, %s27
      %p442 = scmp.lt.s32.totalorder %s27, 3
      %p443 = pnand %p441, %p442
      %p444 = pneg %p443
      // Predicated region
      $region73: #{resblock_encoder_forward.1} parent=5 // pred_check
        _
      $region74: #{resblock_encoder_forward.1} parent=5 // pred_check_branch
        %446 = sbr.rel (%p443) target = $region76
      $region75: #{resblock_encoder_forward.1} parent=5 // pred_region
        %s447 = ssub.s32 %s27, 1
        %s448 = sand.u32 %s40, 1
        %s449 = scalar_lea.sflag [#allocation3], %s448
        %s450 = sand.u32 %s40, 1
        %s451 = smul.addr %s450, 256
        %s452 = scalar_lea.vmem [#allocation2], %s451
        // Predicated region
        $region77: #{resblock_encoder_forward.1} parent=75 // pred_check
          %p453 = pneg %p53
        $region78: #{resblock_encoder_forward.1} parent=75 // pred_check_branch
          %455 = sbr.rel (%p453) target = $region80
        $region79: #{resblock_encoder_forward.1} parent=75 // pred_region
          %456 = dma.done %s449, 4096
        $region80: #{resblock_encoder_forward.1} parent=75 // pred_fallthru
          _
        // Predicated region
        $region81: #{resblock_encoder_forward.1} parent=75 // pred_check
          %p457 = pneg %p305
        $region82: #{resblock_encoder_forward.1} parent=75 // pred_check_branch
          %459 = sbr.rel (%p457) target = $region84
        $region83: #{resblock_encoder_forward.1} parent=75 // pred_region
          %460 = dma.done [#allocation6], 18944
        $region84: #{resblock_encoder_forward.1} parent=75 // pred_fallthru
          _
        %s461 = sand.u32 %s40, 1
        %s462 = scalar_lea.sflag [#allocation3], %s461
        %s463 = sand.u32 %s40, 1
        %s464 = smul.addr %s463, 256
        %s465 = scalar_lea.vmem [#allocation2], %s464
        %p466 = pneg %p53
        %p467 = pneg %p50
        %p468 = pneg %p74
        %p469 = pneg %p71
        %p470 = pneg %p95
        %p471 = pneg %p92
        %p472 = pneg %p116
        %p473 = pneg %p113
        %p474 = pneg %p137
        %p475 = pneg %p134
        %p476 = pneg %p158
        %p477 = pneg %p155
        %p478 = pneg %p179
        %p479 = pneg %p176
        %p480 = pneg %p200
        %p481 = pneg %p197
        %p482 = pneg %p221
        %p483 = pneg %p218
        %p484 = pneg %p242
        %p485 = pneg %p239
        %p486 = pneg %p263
        %p487 = pneg %p260
        %p488 = pneg %p284
        %p489 = pneg %p281
        %p490 = pneg %p305
        %p491 = pneg %p302
        %p492 = pneg %p326
        %p493 = pneg %p323
        %p494 = pneg %p352
        %p495 = pneg %p349
        %s496 = sand.u32 %s339, 1
        %s497 = scalar_lea.sflag [#allocation4], %s496
        %s498 = sand.u32 %s339, 1
        %s499 = smul.addr %s498, 256
        %s500 = scalar_lea.vmem [#allocation7], %s499
        %v501 = vld [vmem:[%s452] sm:$0xff]
        %v502 = vld [vmem:[%s452 + $0x8] sm:$0xff]
        %v503 = vld [vmem:[%s452 + $0x10] sm:$0xff]
        %v504 = vld [vmem:[%s452 + $0x18] sm:$0xff]
        %v505 = vld [vmem:[%s452 + $0x20] sm:$0xff]
        %v506 = vld [vmem:[%s452 + $0x28] sm:$0xff]
        %v507 = vld [vmem:[%s452 + $0x30] sm:$0xff]
        %v508 = vld [vmem:[%s452 + $0x38] sm:$0xff]
        %v509 = vld [vmem:[%s452 + $0x40] sm:$0xff]
        %v510 = vld [vmem:[%s452 + $0x48] sm:$0xff]
        %v511 = vld [vmem:[%s452 + $0x50] sm:$0xff]
        %v512 = vld [vmem:[%s452 + $0x58] sm:$0xff]
        %v513 = vld [vmem:[%s452 + $0x60] sm:$0xff]
        %v514 = vld [vmem:[%s452 + $0x68] sm:$0xff]
        %v515 = vld [vmem:[%s452 + $0x70] sm:$0xff]
        %v516 = vld [vmem:[%s452 + $0x78] sm:$0xff]
        %v517 = vld [vmem:[%s452 + $0x80] sm:$0xff]
        %v518 = vld [vmem:[%s452 + $0x88] sm:$0xff]
        %v519 = vld [vmem:[%s452 + $0x90] sm:$0xff]
        %v520 = vld [vmem:[%s452 + $0x98] sm:$0xff]
        %v521 = vld [vmem:[%s452 + $0xa0] sm:$0xff]
        %v522 = vld [vmem:[%s452 + $0xa8] sm:$0xff]
        %v523 = vld [vmem:[%s452 + $0xb0] sm:$0xff]
        %v524 = vld [vmem:[%s452 + $0xb8] sm:$0xff]
        %v525 = vld [vmem:[%s452 + $0xc0] sm:$0xff]
        %v526 = vld [vmem:[%s452 + $0xc8] sm:$0xff]
        %v527 = vld [vmem:[%s452 + $0xd0] sm:$0xff]
        %v528 = vld [vmem:[%s452 + $0xd8] sm:$0xff]
        %v529 = vld [vmem:[%s452 + $0xe0] sm:$0xff]
        %v530 = vld [vmem:[%s452 + $0xe8] sm:$0xff]
        %v531 = vld [vmem:[%s452 + $0xf0] sm:$0xff]
        %v532 = vld [vmem:[%s452 + $0xf8] sm:$0xff]
        %v533 = vld [vmem:[%s1] sm:$0xff]
        %v534 = vld [vmem:[%s1 + $0x8] sm:$0xff]
        %v535 = vld [vmem:[%s1 + $0x10] sm:$0xff]
        %v536 = vld [vmem:[%s1 + $0x18] sm:$0xff]
        %v537 = vld [vmem:[%s1 + $0x20] sm:$0xff]
        %v538 = vld [vmem:[%s1 + $0x28] sm:$0xff]
        %v539 = vld [vmem:[%s1 + $0x30] sm:$0xff]
        %v540 = vld [vmem:[%s1 + $0x38] sm:$0xff]
        %v541 = vld [vmem:[%s1 + $0x40] sm:$0xff]
        %v542 = vld [vmem:[%s1 + $0x48] sm:$0xff]
        %v543 = vld [vmem:[%s1 + $0x50] sm:$0xff]
        %v544 = vld [vmem:[%s1 + $0x58] sm:$0xff]
        %v545 = vld [vmem:[%s1 + $0x60] sm:$0xff]
        %v546 = vld [vmem:[%s1 + $0x68] sm:$0xff]
        %v547 = vld [vmem:[%s1 + $0x70] sm:$0xff]
        %v548 = vld [vmem:[%s1 + $0x78] sm:$0xff]
        %v549 = vld [vmem:[%s1 + $0x80] sm:$0xff]
        %v550 = vld [vmem:[%s1 + $0x88] sm:$0xff]
        %v551 = vld [vmem:[%s1 + $0x90] sm:$0xff]
        %v552 = vld [vmem:[%s1 + $0x98] sm:$0xff]
        %v553 = vld [vmem:[%s1 + $0xa0] sm:$0xff]
        %v554 = vld [vmem:[%s1 + $0xa8] sm:$0xff]
        %v555 = vld [vmem:[%s1 + $0xb0] sm:$0xff]
        %v556 = vld [vmem:[%s1 + $0xb8] sm:$0xff]
        %v557 = vld [vmem:[%s1 + $0xc0] sm:$0xff]
        %v558 = vld [vmem:[%s1 + $0xc8] sm:$0xff]
        %v559 = vld [vmem:[%s1 + $0xd0] sm:$0xff]
        %v560 = vld [vmem:[%s1 + $0xd8] sm:$0xff]
        %v561 = vld [vmem:[%s1 + $0xe0] sm:$0xff]
        %v562 = vld [vmem:[%s1 + $0xe8] sm:$0xff]
        %v563 = vld [vmem:[%s1 + $0xf0] sm:$0xff]
        %v564 = vld [vmem:[%s1 + $0xf8] sm:$0xff]
        %v565 = vld [vmem:[%s2] sm:$0xff]
        %v566 = vld [vmem:[%s2 + $0x8] sm:$0xff]
        %v567 = vld [vmem:[%s2 + $0x10] sm:$0xff]
        %v568 = vld [vmem:[%s2 + $0x18] sm:$0xff]
        %v569 = vld [vmem:[%s3] sm:$0xff]
        %v570 = vld [vmem:[%s3 + $0x8] sm:$0xff]
        %v571 = vld [vmem:[%s3 + $0x10] sm:$0xff]
        %v572 = vld [vmem:[%s3 + $0x18] sm:$0xff]
        %v573 = vld [vmem:[%s4] sm:$0x1]
        %v574 = vld [vmem:[%s5] sm:$0x1]
        %vm575 = vcmask 261120
        %v576 = vsel %vm575, %v501, 0.0
        %v577 = vsel %vm575, %v502, 0.0
        %v578 = vadd.f32 %v576, %v577
        %v579 = vsel %vm575, %v503, 0.0
        %v580 = vadd.f32 %v578, %v579
        %v581 = vsel %vm575, %v504, 0.0
        %v582 = vadd.f32 %v580, %v581
        %v583 = vsel %vm575, %v505, 0.0
        %v584 = vadd.f32 %v582, %v583
        %v585 = vsel %vm575, %v506, 0.0
        %v586 = vadd.f32 %v584, %v585
        %v587 = vsel %vm575, %v507, 0.0
        %v588 = vadd.f32 %v586, %v587
        %v589 = vsel %vm575, %v508, 0.0
        %v590 = vadd.f32 %v588, %v589
        %v591 = vsel %vm575, %v509, 0.0
        %v592 = vadd.f32 %v590, %v591
        %v593 = vsel %vm575, %v510, 0.0
        %v594 = vadd.f32 %v592, %v593
        %v595 = vsel %vm575, %v511, 0.0
        %v596 = vadd.f32 %v594, %v595
        %v597 = vsel %vm575, %v512, 0.0
        %v598 = vadd.f32 %v596, %v597
        %v599 = vsel %vm575, %v513, 0.0
        %v600 = vadd.f32 %v598, %v599
        %v601 = vsel %vm575, %v514, 0.0
        %v602 = vadd.f32 %v600, %v601
        %v603 = vsel %vm575, %v515, 0.0
        %v604 = vadd.f32 %v602, %v603
        %v605 = vsel %vm575, %v516, 0.0
        %v606 = vadd.f32 %v604, %v605
        %v607 = vsel %vm575, %v517, 0.0
        %v608 = vadd.f32 %v606, %v607
        %v609 = vsel %vm575, %v518, 0.0
        %v610 = vadd.f32 %v608, %v609
        %v611 = vsel %vm575, %v519, 0.0
        %v612 = vadd.f32 %v610, %v611
        %v613 = vsel %vm575, %v520, 0.0
        %v614 = vadd.f32 %v612, %v613
        %v615 = vsel %vm575, %v521, 0.0
        %v616 = vadd.f32 %v614, %v615
        %v617 = vsel %vm575, %v522, 0.0
        %v618 = vadd.f32 %v616, %v617
        %v619 = vsel %vm575, %v523, 0.0
        %v620 = vadd.f32 %v618, %v619
        %v621 = vsel %vm575, %v524, 0.0
        %v622 = vadd.f32 %v620, %v621
        %v623 = vsel %vm575, %v525, 0.0
        %v624 = vadd.f32 %v622, %v623
        %v625 = vsel %vm575, %v526, 0.0
        %v626 = vadd.f32 %v624, %v625
        %v627 = vsel %vm575, %v527, 0.0
        %v628 = vadd.f32 %v626, %v627
        %v629 = vsel %vm575, %v528, 0.0
        %v630 = vadd.f32 %v628, %v629
        %v631 = vsel %vm575, %v529, 0.0
        %v632 = vadd.f32 %v630, %v631
        %v633 = vsel %vm575, %v530, 0.0
        %v634 = vadd.f32 %v632, %v633
        %v635 = vsel %vm575, %v531, 0.0
        %v636 = vadd.f32 %v634, %v635
        %v637 = vsel %vm575, %v532, 0.0
        %v638 = vadd.f32 %v636, %v637
        %v639 = vrot.slane %v638, 4
        %v640 = vadd.f32 %v638, %v639
        %v641 = vrot.slane %v640, 2
        %v642 = vadd.f32 %v640, %v641
        %v643 = vrot.slane %v642, 1
        %v644 = vadd.f32 %v642, %v643
        %v645 = vmul.f32 %v501, %v501
        %v646 = vmul.f32 %v502, %v502
        %v647 = vmul.f32 %v503, %v503
        %v648 = vmul.f32 %v504, %v504
        %v649 = vmul.f32 %v505, %v505
        %v650 = vmul.f32 %v506, %v506
        %v651 = vmul.f32 %v507, %v507
        %v652 = vmul.f32 %v508, %v508
        %v653 = vmul.f32 %v509, %v509
        %v654 = vmul.f32 %v510, %v510
        %v655 = vmul.f32 %v511, %v511
        %v656 = vmul.f32 %v512, %v512
        %v657 = vmul.f32 %v513, %v513
        %v658 = vmul.f32 %v514, %v514
        %v659 = vmul.f32 %v515, %v515
        %v660 = vmul.f32 %v516, %v516
        %v661 = vmul.f32 %v517, %v517
        %v662 = vmul.f32 %v518, %v518
        %v663 = vmul.f32 %v519, %v519
        %v664 = vmul.f32 %v520, %v520
        %v665 = vmul.f32 %v521, %v521
        %v666 = vmul.f32 %v522, %v522
        %v667 = vmul.f32 %v523, %v523
        %v668 = vmul.f32 %v524, %v524
        %v669 = vmul.f32 %v525, %v525
        %v670 = vmul.f32 %v526, %v526
        %v671 = vmul.f32 %v527, %v527
        %v672 = vmul.f32 %v528, %v528
        %v673 = vmul.f32 %v529, %v529
        %v674 = vmul.f32 %v530, %v530
        %v675 = vmul.f32 %v531, %v531
        %v676 = vmul.f32 %v532, %v532
        %v677 = vsel %vm575, %v645, 0.0
        %v678 = vsel %vm575, %v646, 0.0
        %v679 = vadd.f32 %v677, %v678
        %v680 = vsel %vm575, %v647, 0.0
        %v681 = vadd.f32 %v679, %v680
        %v682 = vsel %vm575, %v648, 0.0
        %v683 = vadd.f32 %v681, %v682
        %v684 = vsel %vm575, %v649, 0.0
        %v685 = vadd.f32 %v683, %v684
        %v686 = vsel %vm575, %v650, 0.0
        %v687 = vadd.f32 %v685, %v686
        %v688 = vsel %vm575, %v651, 0.0
        %v689 = vadd.f32 %v687, %v688
        %v690 = vsel %vm575, %v652, 0.0
        %v691 = vadd.f32 %v689, %v690
        %v692 = vsel %vm575, %v653, 0.0
        %v693 = vadd.f32 %v691, %v692
        %v694 = vsel %vm575, %v654, 0.0
        %v695 = vadd.f32 %v693, %v694
        %v696 = vsel %vm575, %v655, 0.0
        %v697 = vadd.f32 %v695, %v696
        %v698 = vsel %vm575, %v656, 0.0
        %v699 = vadd.f32 %v697, %v698
        %v700 = vsel %vm575, %v657, 0.0
        %v701 = vadd.f32 %v699, %v700
        %v702 = vsel %vm575, %v658, 0.0
        %v703 = vadd.f32 %v701, %v702
        %v704 = vsel %vm575, %v659, 0.0
        %v705 = vadd.f32 %v703, %v704
        %v706 = vsel %vm575, %v660, 0.0
        %v707 = vadd.f32 %v705, %v706
        %v708 = vsel %vm575, %v661, 0.0
        %v709 = vadd.f32 %v707, %v708
        %v710 = vsel %vm575, %v662, 0.0
        %v711 = vadd.f32 %v709, %v710
        %v712 = vsel %vm575, %v663, 0.0
        %v713 = vadd.f32 %v711, %v712
        %v714 = vsel %vm575, %v664, 0.0
        %v715 = vadd.f32 %v713, %v714
        %v716 = vsel %vm575, %v665, 0.0
        %v717 = vadd.f32 %v715, %v716
        %v718 = vsel %vm575, %v666, 0.0
        %v719 = vadd.f32 %v717, %v718
        %v720 = vsel %vm575, %v667, 0.0
        %v721 = vadd.f32 %v719, %v720
        %v722 = vsel %vm575, %v668, 0.0
        %v723 = vadd.f32 %v721, %v722
        %v724 = vsel %vm575, %v669, 0.0
        %v725 = vadd.f32 %v723, %v724
        %v726 = vsel %vm575, %v670, 0.0
        %v727 = vadd.f32 %v725, %v726
        %v728 = vsel %vm575, %v671, 0.0
        %v729 = vadd.f32 %v727, %v728
        %v730 = vsel %vm575, %v672, 0.0
        %v731 = vadd.f32 %v729, %v730
        %v732 = vsel %vm575, %v673, 0.0
        %v733 = vadd.f32 %v731, %v732
        %v734 = vsel %vm575, %v674, 0.0
        %v735 = vadd.f32 %v733, %v734
        %v736 = vsel %vm575, %v675, 0.0
        %v737 = vadd.f32 %v735, %v736
        %v738 = vsel %vm575, %v676, 0.0
        %v739 = vadd.f32 %v737, %v738
        %v740 = vrot.slane %v739, 4
        %v741 = vadd.f32 %v739, %v740
        %v742 = vrot.slane %v741, 2
        %v743 = vadd.f32 %v741, %v742
        %v744 = vrot.slane %v743, 1
        %v745 = vadd.f32 %v743, %v744
        %vm746 = vcmask 1040384
        %v747 = vsel %vm746, %v644, %v745
        %v749 = vsel %vm575, %v747, 0
        %751 = vmatprep.subr.mxu0 0.0
        %752 = vmatpush1.msra.mxu0 0.0
        %753 = vmatprep.subr.mxu0 0.0
        %754 = vmatpush1.msra.mxu0 0.0
        %755 = vmatprep.subr.mxu0 0.0
        %756 = vmatpush1.msra.mxu0 0.0
        %757 = vmatprep.subr.mxu0 0.0
        %758 = vmatpush1.msra.mxu0 0.0
        %759 = vmatprep.subr.mxu0 0.0
        %760 = vmatpush1.msra.mxu0 0.0
        %761 = vmatprep.subr.mxu0 0.0
        %762 = vmatpush1.msra.mxu0 0.0
        %763 = vmatprep.subr.mxu0 0.0
        %764 = vmatpush1.msra.mxu0 0.0
        %765 = vmatprep.subr.mxu0 0.0
        %766 = vmatpush1.msra.mxu0 0.0
        %767 = vmatprep.subr.mxu0 0.0
        %768 = vmatpush1.msra.mxu0 0.0
        %769 = vmatprep.subr.mxu0 0.0
        %770 = vmatpush1.msra.mxu0 0.0
        %771 = vmatprep.subr.mxu0 0.0
        %772 = vmatpush1.msra.mxu0 0.0
        %773 = vmatprep.subr.mxu0 0.0
        %774 = vmatpush1.msra.mxu0 0.0
        %775 = vmatprep.subr.mxu0 0.0
        %776 = vmatpush1.msra.mxu0 %v568
        %777 = vmatprep.subr.mxu0 0.0
        %778 = vmatpush1.msra.mxu0 %v567
        %779 = vmatprep.subr.mxu0 0.0
        %780 = vmatpush1.msra.mxu0 %v566
        %781 = vmatprep.subr.mxu0 0.0
        %782 = vmatpush1.msra.mxu0 %v565
        %783 = vmatprep.subr.mxu0 0.0
        %784 = vmatpush2.msra.mxu0 0.0
        %785 = vmatprep.subr.mxu0 0.0
        %786 = vmatpush2.msra.mxu0 0.0
        %787 = vmatprep.subr.mxu0 0.0
        %788 = vmatpush2.msra.mxu0 0.0
        %789 = vmatprep.subr.mxu0 0.0
        %790 = vmatpush2.msra.mxu0 0.0
        %791 = vmatprep.subr.mxu0 0.0
        %792 = vmatpush2.msra.mxu0 0.0
        %793 = vmatprep.subr.mxu0 0.0
        %794 = vmatpush2.msra.mxu0 0.0
        %795 = vmatprep.subr.mxu0 0.0
        %796 = vmatpush2.msra.mxu0 0.0
        %797 = vmatprep.subr.mxu0 0.0
        %798 = vmatpush2.msra.mxu0 0.0
        %799 = vmatprep.subr.mxu0 0.0
        %800 = vmatpush2.msra.mxu0 0.0
        %801 = vmatprep.subr.mxu0 0.0
        %802 = vmatpush2.msra.mxu0 0.0
        %803 = vmatprep.subr.mxu0 0.0
        %804 = vmatpush2.msra.mxu0 0.0
        %805 = vmatprep.subr.mxu0 0.0
        %806 = vmatpush2.msra.mxu0 0.0
        %807 = vmatprep.subr.mxu0 0.0
        %808 = vmatpush2.msra.mxu0 0.0
        %809 = vmatprep.subr.mxu0 0.0
        %810 = vmatpush2.msra.mxu0 0.0
        %811 = vmatprep.subr.mxu0 0.0
        %812 = vmatpush2.msra.mxu0 0.0
        %813 = vmatprep.subr.mxu0 0.0
        %814 = vmatpush2.msra.mxu0 0.0
        %815 = vmatprep.mubr.f32.mxu0 0.0
        %816 = vmatmul.mubr.f32.gmra.mxu0 %v749
        %v817 = vpop.f32.mrf.mxu0
        %v818 = vadd.f32 0.0, %v817
        %v819 = vpop.f32.mrf.mxu0
        %820 = vdwg.mxu0
        %v821 = vmul.f32 %v818, 0.00390625
        %v822 = vmul.f32 %v821, %v821
        %v824 = vrot.slane %v822, 7
        %v826 = vsub.f32 %v821, %v824
        %v827 = vsel %vm746, %v821, %v826
        %v829 = vsel %vm575, %v827, 0
        %831 = vmatprep.subr.mxu0 0.0
        %832 = vmatpush1.msra.mxu0 0.0
        %833 = vmatprep.subr.mxu0 0.0
        %834 = vmatpush1.msra.mxu0 0.0
        %835 = vmatprep.subr.mxu0 0.0
        %836 = vmatpush1.msra.mxu0 0.0
        %837 = vmatprep.subr.mxu0 0.0
        %838 = vmatpush1.msra.mxu0 0.0
        %839 = vmatprep.subr.mxu0 0.0
        %840 = vmatpush1.msra.mxu0 0.0
        %841 = vmatprep.subr.mxu0 0.0
        %842 = vmatpush1.msra.mxu0 0.0
        %843 = vmatprep.subr.mxu0 0.0
        %844 = vmatpush1.msra.mxu0 0.0
        %845 = vmatprep.subr.mxu0 0.0
        %846 = vmatpush1.msra.mxu0 0.0
        %847 = vmatprep.subr.mxu0 0.0
        %848 = vmatpush1.msra.mxu0 0.0
        %849 = vmatprep.subr.mxu0 0.0
        %850 = vmatpush1.msra.mxu0 0.0
        %851 = vmatprep.subr.mxu0 0.0
        %852 = vmatpush1.msra.mxu0 0.0
        %853 = vmatprep.subr.mxu0 0.0
        %854 = vmatpush1.msra.mxu0 0.0
        %855 = vmatprep.subr.mxu0 0.0
        %856 = vmatpush1.msra.mxu0 %v572
        %857 = vmatprep.subr.mxu0 0.0
        %858 = vmatpush1.msra.mxu0 %v571
        %859 = vmatprep.subr.mxu0 0.0
        %860 = vmatpush1.msra.mxu0 %v570
        %861 = vmatprep.subr.mxu0 0.0
        %862 = vmatpush1.msra.mxu0 %v569
        %863 = vmatprep.subr.mxu0 0.0
        %864 = vmatpush2.msra.mxu0 0.0
        %865 = vmatprep.subr.mxu0 0.0
        %866 = vmatpush2.msra.mxu0 0.0
        %867 = vmatprep.subr.mxu0 0.0
        %868 = vmatpush2.msra.mxu0 0.0
        %869 = vmatprep.subr.mxu0 0.0
        %870 = vmatpush2.msra.mxu0 0.0
        %871 = vmatprep.subr.mxu0 0.0
        %872 = vmatpush2.msra.mxu0 0.0
        %873 = vmatprep.subr.mxu0 0.0
        %874 = vmatpush2.msra.mxu0 0.0
        %875 = vmatprep.subr.mxu0 0.0
        %876 = vmatpush2.msra.mxu0 0.0
        %877 = vmatprep.subr.mxu0 0.0
        %878 = vmatpush2.msra.mxu0 0.0
        %879 = vmatprep.subr.mxu0 0.0
        %880 = vmatpush2.msra.mxu0 0.0
        %881 = vmatprep.subr.mxu0 0.0
        %882 = vmatpush2.msra.mxu0 0.0
        %883 = vmatprep.subr.mxu0 0.0
        %884 = vmatpush2.msra.mxu0 0.0
        %885 = vmatprep.subr.mxu0 0.0
        %886 = vmatpush2.msra.mxu0 0.0
        %887 = vmatprep.subr.mxu0 0.0
        %888 = vmatpush2.msra.mxu0 0.0
        %889 = vmatprep.subr.mxu0 0.0
        %890 = vmatpush2.msra.mxu0 0.0
        %891 = vmatprep.subr.mxu0 0.0
        %892 = vmatpush2.msra.mxu0 0.0
        %893 = vmatprep.subr.mxu0 0.0
        %894 = vmatpush2.msra.mxu0 0.0
        %895 = vmatprep.mubr.f32.mxu0 0.0
        %896 = vmatmul.mubr.f32.gmra.mxu0 %v829
        %v897 = vpop.f32.mrf.mxu0
        %v898 = vadd.f32 0.0, %v897
        %v899 = vpop.f32.mrf.mxu0
        %900 = vdwg.mxu0
        %v901 = vadd.f32 %v898, 1e-05
        %v902 = vrsqrt.pop %v901
        %v904 = vlaneseq
        %v905 = vshrl.u32 %v904, 7
        %v906 = vsub.s32 0, %v905
        %v907 = vrot.slane %v573, %v906
        %v909 = vmul.f32 %v902, %v907
        %v911 = vrot.slane %v909, 1
        %v913 = vmul.f32 %v898, %v911
        %v914 = vsub.f32 %v574, %v913
        %v915 = vlaneseq
        %v916 = vshrl.u32 %v915, 7
        %v917 = vsub.s32 1, %v916
        %v918 = vrot.slane %v909, %v917
        %v919 = vmul.f32 %v501, %v918
        %v920 = vmul.f32 %v502, %v918
        %v921 = vmul.f32 %v503, %v918
        %v922 = vmul.f32 %v504, %v918
        %v923 = vmul.f32 %v505, %v918
        %v924 = vmul.f32 %v506, %v918
        %v925 = vmul.f32 %v507, %v918
        %v926 = vmul.f32 %v508, %v918
        %v927 = vmul.f32 %v509, %v918
        %v928 = vmul.f32 %v510, %v918
        %v929 = vmul.f32 %v511, %v918
        %v930 = vmul.f32 %v512, %v918
        %v931 = vmul.f32 %v513, %v918
        %v932 = vmul.f32 %v514, %v918
        %v933 = vmul.f32 %v515, %v918
        %v934 = vmul.f32 %v516, %v918
        %v935 = vmul.f32 %v517, %v918
        %v936 = vmul.f32 %v518, %v918
        %v937 = vmul.f32 %v519, %v918
        %v938 = vmul.f32 %v520, %v918
        %v939 = vmul.f32 %v521, %v918
        %v940 = vmul.f32 %v522, %v918
        %v941 = vmul.f32 %v523, %v918
        %v942 = vmul.f32 %v524, %v918
        %v943 = vmul.f32 %v525, %v918
        %v944 = vmul.f32 %v526, %v918
        %v945 = vmul.f32 %v527, %v918
        %v946 = vmul.f32 %v528, %v918
        %v947 = vmul.f32 %v529, %v918
        %v948 = vmul.f32 %v530, %v918
        %v949 = vmul.f32 %v531, %v918
        %v950 = vmul.f32 %v532, %v918
        %v952 = vlaneseq
        %v953 = vshrl.u32 %v952, 7
        %v954 = vsub.s32 0, %v953
        %v955 = vrot.slane %v914, %v954
        %v957 = vadd.f32 %v919, %v955
        %v958 = vadd.f32 %v920, %v955
        %v959 = vadd.f32 %v921, %v955
        %v960 = vadd.f32 %v922, %v955
        %v961 = vadd.f32 %v923, %v955
        %v962 = vadd.f32 %v924, %v955
        %v963 = vadd.f32 %v925, %v955
        %v964 = vadd.f32 %v926, %v955
        %v965 = vadd.f32 %v927, %v955
        %v966 = vadd.f32 %v928, %v955
        %v967 = vadd.f32 %v929, %v955
        %v968 = vadd.f32 %v930, %v955
        %v969 = vadd.f32 %v931, %v955
        %v970 = vadd.f32 %v932, %v955
        %v971 = vadd.f32 %v933, %v955
        %v972 = vadd.f32 %v934, %v955
        %v973 = vadd.f32 %v935, %v955
        %v974 = vadd.f32 %v936, %v955
        %v975 = vadd.f32 %v937, %v955
        %v976 = vadd.f32 %v938, %v955
        %v977 = vadd.f32 %v939, %v955
        %v978 = vadd.f32 %v940, %v955
        %v979 = vadd.f32 %v941, %v955
        %v980 = vadd.f32 %v942, %v955
        %v981 = vadd.f32 %v943, %v955
        %v982 = vadd.f32 %v944, %v955
        %v983 = vadd.f32 %v945, %v955
        %v984 = vadd.f32 %v946, %v955
        %v985 = vadd.f32 %v947, %v955
        %v986 = vadd.f32 %v948, %v955
        %v987 = vadd.f32 %v949, %v955
        %v988 = vadd.f32 %v950, %v955
        %v989 = vxor.u32 %v957, 2147483648
        %v990 = vxor.u32 %v958, 2147483648
        %v991 = vxor.u32 %v959, 2147483648
        %v992 = vxor.u32 %v960, 2147483648
        %v993 = vxor.u32 %v961, 2147483648
        %v994 = vxor.u32 %v962, 2147483648
        %v995 = vxor.u32 %v963, 2147483648
        %v996 = vxor.u32 %v964, 2147483648
        %v997 = vxor.u32 %v965, 2147483648
        %v998 = vxor.u32 %v966, 2147483648
        %v999 = vxor.u32 %v967, 2147483648
        %v1000 = vxor.u32 %v968, 2147483648
        %v1001 = vxor.u32 %v969, 2147483648
        %v1002 = vxor.u32 %v970, 2147483648
        %v1003 = vxor.u32 %v971, 2147483648
        %v1004 = vxor.u32 %v972, 2147483648
        %v1005 = vxor.u32 %v973, 2147483648
        %v1006 = vxor.u32 %v974, 2147483648
        %v1007 = vxor.u32 %v975, 2147483648
        %v1008 = vxor.u32 %v976, 2147483648
        %v1009 = vxor.u32 %v977, 2147483648
        %v1010 = vxor.u32 %v978, 2147483648
        %v1011 = vxor.u32 %v979, 2147483648
        %v1012 = vxor.u32 %v980, 2147483648
        %v1013 = vxor.u32 %v981, 2147483648
        %v1014 = vxor.u32 %v982, 2147483648
        %v1015 = vxor.u32 %v983, 2147483648
        %v1016 = vxor.u32 %v984, 2147483648
        %v1017 = vxor.u32 %v985, 2147483648
        %v1018 = vxor.u32 %v986, 2147483648
        %v1019 = vxor.u32 %v987, 2147483648
        %v1020 = vxor.u32 %v988, 2147483648
        %v1021 = vmul.f32 %v989, 1.442695
        %v1022 = vpow.pop %v1021
        %v1023 = vmul.f32 %v990, 1.442695
        %v1024 = vpow.pop %v1023
        %v1025 = vmul.f32 %v991, 1.442695
        %v1026 = vpow.pop %v1025
        %v1027 = vmul.f32 %v992, 1.442695
        %v1028 = vpow.pop %v1027
        %v1029 = vmul.f32 %v993, 1.442695
        %v1030 = vpow.pop %v1029
        %v1031 = vmul.f32 %v994, 1.442695
        %v1032 = vpow.pop %v1031
        %v1033 = vmul.f32 %v995, 1.442695
        %v1034 = vpow.pop %v1033
        %v1035 = vmul.f32 %v996, 1.442695
        %v1036 = vpow.pop %v1035
        %v1037 = vmul.f32 %v997, 1.442695
        %v1038 = vpow.pop %v1037
        %v1039 = vmul.f32 %v998, 1.442695
        %v1040 = vpow.pop %v1039
        %v1041 = vmul.f32 %v999, 1.442695
        %v1042 = vpow.pop %v1041
        %v1043 = vmul.f32 %v1000, 1.442695
        %v1044 = vpow.pop %v1043
        %v1045 = vmul.f32 %v1001, 1.442695
        %v1046 = vpow.pop %v1045
        %v1047 = vmul.f32 %v1002, 1.442695
        %v1048 = vpow.pop %v1047
        %v1049 = vmul.f32 %v1003, 1.442695
        %v1050 = vpow.pop %v1049
        %v1051 = vmul.f32 %v1004, 1.442695
        %v1052 = vpow.pop %v1051
        %v1053 = vmul.f32 %v1005, 1.442695
        %v1054 = vpow.pop %v1053
        %v1055 = vmul.f32 %v1006, 1.442695
        %v1056 = vpow.pop %v1055
        %v1057 = vmul.f32 %v1007, 1.442695
        %v1058 = vpow.pop %v1057
        %v1059 = vmul.f32 %v1008, 1.442695
        %v1060 = vpow.pop %v1059
        %v1061 = vmul.f32 %v1009, 1.442695
        %v1062 = vpow.pop %v1061
        %v1063 = vmul.f32 %v1010, 1.442695
        %v1064 = vpow.pop %v1063
        %v1065 = vmul.f32 %v1011, 1.442695
        %v1066 = vpow.pop %v1065
        %v1067 = vmul.f32 %v1012, 1.442695
        %v1068 = vpow.pop %v1067
        %v1069 = vmul.f32 %v1013, 1.442695
        %v1070 = vpow.pop %v1069
        %v1071 = vmul.f32 %v1014, 1.442695
        %v1072 = vpow.pop %v1071
        %v1073 = vmul.f32 %v1015, 1.442695
        %v1074 = vpow.pop %v1073
        %v1075 = vmul.f32 %v1016, 1.442695
        %v1076 = vpow.pop %v1075
        %v1077 = vmul.f32 %v1017, 1.442695
        %v1078 = vpow.pop %v1077
        %v1079 = vmul.f32 %v1018, 1.442695
        %v1080 = vpow.pop %v1079
        %v1081 = vmul.f32 %v1019, 1.442695
        %v1082 = vpow.pop %v1081
        %v1083 = vmul.f32 %v1020, 1.442695
        %v1084 = vpow.pop %v1083
        %v1085 = vadd.f32 %v1022, 1.0
        %v1086 = vadd.f32 %v1024, 1.0
        %v1087 = vadd.f32 %v1026, 1.0
        %v1088 = vadd.f32 %v1028, 1.0
        %v1089 = vadd.f32 %v1030, 1.0
        %v1090 = vadd.f32 %v1032, 1.0
        %v1091 = vadd.f32 %v1034, 1.0
        %v1092 = vadd.f32 %v1036, 1.0
        %v1093 = vadd.f32 %v1038, 1.0
        %v1094 = vadd.f32 %v1040, 1.0
        %v1095 = vadd.f32 %v1042, 1.0
        %v1096 = vadd.f32 %v1044, 1.0
        %v1097 = vadd.f32 %v1046, 1.0
        %v1098 = vadd.f32 %v1048, 1.0
        %v1099 = vadd.f32 %v1050, 1.0
        %v1100 = vadd.f32 %v1052, 1.0
        %v1101 = vadd.f32 %v1054, 1.0
        %v1102 = vadd.f32 %v1056, 1.0
        %v1103 = vadd.f32 %v1058, 1.0
        %v1104 = vadd.f32 %v1060, 1.0
        %v1105 = vadd.f32 %v1062, 1.0
        %v1106 = vadd.f32 %v1064, 1.0
        %v1107 = vadd.f32 %v1066, 1.0
        %v1108 = vadd.f32 %v1068, 1.0
        %v1109 = vadd.f32 %v1070, 1.0
        %v1110 = vadd.f32 %v1072, 1.0
        %v1111 = vadd.f32 %v1074, 1.0
        %v1112 = vadd.f32 %v1076, 1.0
        %v1113 = vadd.f32 %v1078, 1.0
        %v1114 = vadd.f32 %v1080, 1.0
        %v1115 = vadd.f32 %v1082, 1.0
        %v1116 = vadd.f32 %v1084, 1.0
        %v1117 = vrcp.pop %v1085
        %v1118 = vmul.f32 1.0, %v1117
        %v1119 = vrcp.pop %v1086
        %v1120 = vmul.f32 1.0, %v1119
        %v1121 = vrcp.pop %v1087
        %v1122 = vmul.f32 1.0, %v1121
        %v1123 = vrcp.pop %v1088
        %v1124 = vmul.f32 1.0, %v1123
        %v1125 = vrcp.pop %v1089
        %v1126 = vmul.f32 1.0, %v1125
        %v1127 = vrcp.pop %v1090
        %v1128 = vmul.f32 1.0, %v1127
        %v1129 = vrcp.pop %v1091
        %v1130 = vmul.f32 1.0, %v1129
        %v1131 = vrcp.pop %v1092
        %v1132 = vmul.f32 1.0, %v1131
        %v1133 = vrcp.pop %v1093
        %v1134 = vmul.f32 1.0, %v1133
        %v1135 = vrcp.pop %v1094
        %v1136 = vmul.f32 1.0, %v1135
        %v1137 = vrcp.pop %v1095
        %v1138 = vmul.f32 1.0, %v1137
        %v1139 = vrcp.pop %v1096
        %v1140 = vmul.f32 1.0, %v1139
        %v1141 = vrcp.pop %v1097
        %v1142 = vmul.f32 1.0, %v1141
        %v1143 = vrcp.pop %v1098
        %v1144 = vmul.f32 1.0, %v1143
        %v1145 = vrcp.pop %v1099
        %v1146 = vmul.f32 1.0, %v1145
        %v1147 = vrcp.pop %v1100
        %v1148 = vmul.f32 1.0, %v1147
        %v1149 = vrcp.pop %v1101
        %v1150 = vmul.f32 1.0, %v1149
        %v1151 = vrcp.pop %v1102
        %v1152 = vmul.f32 1.0, %v1151
        %v1153 = vrcp.pop %v1103
        %v1154 = vmul.f32 1.0, %v1153
        %v1155 = vrcp.pop %v1104
        %v1156 = vmul.f32 1.0, %v1155
        %v1157 = vrcp.pop %v1105
        %v1158 = vmul.f32 1.0, %v1157
        %v1159 = vrcp.pop %v1106
        %v1160 = vmul.f32 1.0, %v1159
        %v1161 = vrcp.pop %v1107
        %v1162 = vmul.f32 1.0, %v1161
        %v1163 = vrcp.pop %v1108
        %v1164 = vmul.f32 1.0, %v1163
        %v1165 = vrcp.pop %v1109
        %v1166 = vmul.f32 1.0, %v1165
        %v1167 = vrcp.pop %v1110
        %v1168 = vmul.f32 1.0, %v1167
        %v1169 = vrcp.pop %v1111
        %v1170 = vmul.f32 1.0, %v1169
        %v1171 = vrcp.pop %v1112
        %v1172 = vmul.f32 1.0, %v1171
        %v1173 = vrcp.pop %v1113
        %v1174 = vmul.f32 1.0, %v1173
        %v1175 = vrcp.pop %v1114
        %v1176 = vmul.f32 1.0, %v1175
        %v1177 = vrcp.pop %v1115
        %v1178 = vmul.f32 1.0, %v1177
        %v1179 = vrcp.pop %v1116
        %v1180 = vmul.f32 1.0, %v1179
        %v1181 = vmul.f32 %v957, %v1118
        %v1182 = vmul.f32 %v958, %v1120
        %v1183 = vmul.f32 %v959, %v1122
        %v1184 = vmul.f32 %v960, %v1124
        %v1185 = vmul.f32 %v961, %v1126
        %v1186 = vmul.f32 %v962, %v1128
        %v1187 = vmul.f32 %v963, %v1130
        %v1188 = vmul.f32 %v964, %v1132
        %v1189 = vmul.f32 %v965, %v1134
        %v1190 = vmul.f32 %v966, %v1136
        %v1191 = vmul.f32 %v967, %v1138
        %v1192 = vmul.f32 %v968, %v1140
        %v1193 = vmul.f32 %v969, %v1142
        %v1194 = vmul.f32 %v970, %v1144
        %v1195 = vmul.f32 %v971, %v1146
        %v1196 = vmul.f32 %v972, %v1148
        %v1197 = vmul.f32 %v973, %v1150
        %v1198 = vmul.f32 %v974, %v1152
        %v1199 = vmul.f32 %v975, %v1154
        %v1200 = vmul.f32 %v976, %v1156
        %v1201 = vmul.f32 %v977, %v1158
        %v1202 = vmul.f32 %v978, %v1160
        %v1203 = vmul.f32 %v979, %v1162
        %v1204 = vmul.f32 %v980, %v1164
        %v1205 = vmul.f32 %v981, %v1166
        %v1206 = vmul.f32 %v982, %v1168
        %v1207 = vmul.f32 %v983, %v1170
        %v1208 = vmul.f32 %v984, %v1172
        %v1209 = vmul.f32 %v985, %v1174
        %v1210 = vmul.f32 %v986, %v1176
        %v1211 = vmul.f32 %v987, %v1178
        %v1212 = vmul.f32 %v988, %v1180
        %v1213 = vld [vmem:[%s7] sm:$0x1]
        %v1214 = vrot.slane %v1181, 7
        %v1215 = vrot.slane %v1182, 7
        %v1216 = vrot.slane %v1183, 7
        %v1217 = vrot.slane %v1184, 7
        %v1218 = vrot.slane %v1185, 7
        %v1219 = vrot.slane %v1186, 7
        %v1220 = vrot.slane %v1187, 7
        %v1221 = vrot.slane %v1188, 7
        %v1222 = vrot.slane %v1189, 7
        %v1223 = vrot.slane %v1190, 7
        %v1224 = vrot.slane %v1191, 7
        %v1225 = vrot.slane %v1192, 7
        %v1226 = vrot.slane %v1193, 7
        %v1227 = vrot.slane %v1194, 7
        %v1228 = vrot.slane %v1195, 7
        %v1229 = vrot.slane %v1196, 7
        %v1230 = vrot.slane %v1197, 7
        %v1231 = vrot.slane %v1198, 7
        %v1232 = vrot.slane %v1199, 7
        %v1233 = vrot.slane %v1200, 7
        %v1234 = vrot.slane %v1201, 7
        %v1235 = vrot.slane %v1202, 7
        %v1236 = vrot.slane %v1203, 7
        %v1237 = vrot.slane %v1204, 7
        %v1238 = vrot.slane %v1205, 7
        %v1239 = vrot.slane %v1206, 7
        %v1240 = vrot.slane %v1207, 7
        %v1241 = vrot.slane %v1208, 7
        %v1242 = vrot.slane %v1209, 7
        %v1243 = vrot.slane %v1210, 7
        %v1244 = vrot.slane %v1211, 7
        %v1245 = vrot.slane %v1212, 7
        %v1246 = vlaneseq
        %v1247 = vshrl.u32 %v1246, 7
        %vm1248 = vcmp.lt.s32.totalorder %v1247, 1
        %v1249 = vsel %vm1248, %v1244, %v1245
        %v1250 = vsel %vm1248, %v1243, %v1244
        %v1251 = vsel %vm1248, %v1242, %v1243
        %v1252 = vsel %vm1248, %v1241, %v1242
        %v1253 = vsel %vm1248, %v1240, %v1241
        %v1254 = vsel %vm1248, %v1239, %v1240
        %v1255 = vsel %vm1248, %v1238, %v1239
        %v1256 = vsel %vm1248, %v1237, %v1238
        %v1257 = vsel %vm1248, %v1236, %v1237
        %v1258 = vsel %vm1248, %v1235, %v1236
        %v1259 = vsel %vm1248, %v1234, %v1235
        %v1260 = vsel %vm1248, %v1233, %v1234
        %v1261 = vsel %vm1248, %v1232, %v1233
        %v1262 = vsel %vm1248, %v1231, %v1232
        %v1263 = vsel %vm1248, %v1230, %v1231
        %v1264 = vsel %vm1248, %v1229, %v1230
        %v1265 = vsel %vm1248, %v1228, %v1229
        %v1266 = vsel %vm1248, %v1227, %v1228
        %v1267 = vsel %vm1248, %v1226, %v1227
        %v1268 = vsel %vm1248, %v1225, %v1226
        %v1269 = vsel %vm1248, %v1224, %v1225
        %v1270 = vsel %vm1248, %v1223, %v1224
        %v1271 = vsel %vm1248, %v1222, %v1223
        %v1272 = vsel %vm1248, %v1221, %v1222
        %v1273 = vsel %vm1248, %v1220, %v1221
        %v1274 = vsel %vm1248, %v1219, %v1220
        %v1275 = vsel %vm1248, %v1218, %v1219
        %v1276 = vsel %vm1248, %v1217, %v1218
        %v1277 = vsel %vm1248, %v1216, %v1217
        %v1278 = vsel %vm1248, %v1215, %v1216
        %v1279 = vsel %vm1248, %v1214, %v1215
        %v1280 = vsel %vm1248, %v1245, %v1214
        %1282 = vset.pattern.permute.xlu0 0
        %1283 = vperm.xlu0 %1282, %v533
        %v1284 = vpop.permute.xlu0 %1283
        %1287 = vset.pattern.permute.xlu0 0
        %1288 = vperm.xlu0 %1287, %v534
        %v1289 = vpop.permute.xlu0 %1288
        %1292 = vset.pattern.permute.xlu0 0
        %1293 = vperm.xlu0 %1292, %v535
        %v1294 = vpop.permute.xlu0 %1293
        %1297 = vset.pattern.permute.xlu0 0
        %1298 = vperm.xlu0 %1297, %v536
        %v1299 = vpop.permute.xlu0 %1298
        %1302 = vset.pattern.permute.xlu0 0
        %1303 = vperm.xlu0 %1302, %v537
        %v1304 = vpop.permute.xlu0 %1303
        %1307 = vset.pattern.permute.xlu0 0
        %1308 = vperm.xlu0 %1307, %v538
        %v1309 = vpop.permute.xlu0 %1308
        %1312 = vset.pattern.permute.xlu0 0
        %1313 = vperm.xlu0 %1312, %v539
        %v1314 = vpop.permute.xlu0 %1313
        %1317 = vset.pattern.permute.xlu0 0
        %1318 = vperm.xlu0 %1317, %v540
        %v1319 = vpop.permute.xlu0 %1318
        %1322 = vset.pattern.permute.xlu0 0
        %1323 = vperm.xlu0 %1322, %v541
        %v1324 = vpop.permute.xlu0 %1323
        %1327 = vset.pattern.permute.xlu0 0
        %1328 = vperm.xlu0 %1327, %v542
        %v1329 = vpop.permute.xlu0 %1328
        %1332 = vset.pattern.permute.xlu0 0
        %1333 = vperm.xlu0 %1332, %v543
        %v1334 = vpop.permute.xlu0 %1333
        %1337 = vset.pattern.permute.xlu0 0
        %1338 = vperm.xlu0 %1337, %v544
        %v1339 = vpop.permute.xlu0 %1338
        %1342 = vset.pattern.permute.xlu0 0
        %1343 = vperm.xlu0 %1342, %v545
        %v1344 = vpop.permute.xlu0 %1343
        %1347 = vset.pattern.permute.xlu0 0
        %1348 = vperm.xlu0 %1347, %v546
        %v1349 = vpop.permute.xlu0 %1348
        %1352 = vset.pattern.permute.xlu0 0
        %1353 = vperm.xlu0 %1352, %v547
        %v1354 = vpop.permute.xlu0 %1353
        %1357 = vset.pattern.permute.xlu0 0
        %1358 = vperm.xlu0 %1357, %v548
        %v1359 = vpop.permute.xlu0 %1358
        %1362 = vset.pattern.permute.xlu0 0
        %1363 = vperm.xlu0 %1362, %v549
        %v1364 = vpop.permute.xlu0 %1363
        %1367 = vset.pattern.permute.xlu0 0
        %1368 = vperm.xlu0 %1367, %v550
        %v1369 = vpop.permute.xlu0 %1368
        %1372 = vset.pattern.permute.xlu0 0
        %1373 = vperm.xlu0 %1372, %v551
        %v1374 = vpop.permute.xlu0 %1373
        %1377 = vset.pattern.permute.xlu0 0
        %1378 = vperm.xlu0 %1377, %v552
        %v1379 = vpop.permute.xlu0 %1378
        %1382 = vset.pattern.permute.xlu0 0
        %1383 = vperm.xlu0 %1382, %v553
        %v1384 = vpop.permute.xlu0 %1383
        %1387 = vset.pattern.permute.xlu0 0
        %1388 = vperm.xlu0 %1387, %v554
        %v1389 = vpop.permute.xlu0 %1388
        %1392 = vset.pattern.permute.xlu0 0
        %1393 = vperm.xlu0 %1392, %v555
        %v1394 = vpop.permute.xlu0 %1393
        %1397 = vset.pattern.permute.xlu0 0
        %1398 = vperm.xlu0 %1397, %v556
        %v1399 = vpop.permute.xlu0 %1398
        %1402 = vset.pattern.permute.xlu0 0
        %1403 = vperm.xlu0 %1402, %v557
        %v1404 = vpop.permute.xlu0 %1403
        %1407 = vset.pattern.permute.xlu0 0
        %1408 = vperm.xlu0 %1407, %v558
        %v1409 = vpop.permute.xlu0 %1408
        %1412 = vset.pattern.permute.xlu0 0
        %1413 = vperm.xlu0 %1412, %v559
        %v1414 = vpop.permute.xlu0 %1413
        %1417 = vset.pattern.permute.xlu0 0
        %1418 = vperm.xlu0 %1417, %v560
        %v1419 = vpop.permute.xlu0 %1418
        %1422 = vset.pattern.permute.xlu0 0
        %1423 = vperm.xlu0 %1422, %v561
        %v1424 = vpop.permute.xlu0 %1423
        %1427 = vset.pattern.permute.xlu0 0
        %1428 = vperm.xlu0 %1427, %v562
        %v1429 = vpop.permute.xlu0 %1428
        %1432 = vset.pattern.permute.xlu0 0
        %1433 = vperm.xlu0 %1432, %v563
        %v1434 = vpop.permute.xlu0 %1433
        %1437 = vset.pattern.permute.xlu0 0
        %1438 = vperm.xlu0 %1437, %v564
        %v1439 = vpop.permute.xlu0 %1438
        %v1441 = vmul.f32 %v1250, %v1284
        %v1442 = vmul.f32 %v1249, %v1289
        %v1443 = vmul.f32 %v1280, %v1294
        %v1444 = vmul.f32 %v1279, %v1299
        %v1445 = vmul.f32 %v1278, %v1304
        %v1446 = vmul.f32 %v1277, %v1309
        %v1447 = vmul.f32 %v1276, %v1314
        %v1448 = vmul.f32 %v1275, %v1319
        %v1449 = vmul.f32 %v1274, %v1324
        %v1450 = vmul.f32 %v1273, %v1329
        %v1451 = vmul.f32 %v1272, %v1334
        %v1452 = vmul.f32 %v1271, %v1339
        %v1453 = vmul.f32 %v1270, %v1344
        %v1454 = vmul.f32 %v1269, %v1349
        %v1455 = vmul.f32 %v1268, %v1354
        %v1456 = vmul.f32 %v1267, %v1359
        %v1457 = vmul.f32 %v1266, %v1364
        %v1458 = vmul.f32 %v1265, %v1369
        %v1459 = vmul.f32 %v1264, %v1374
        %v1460 = vmul.f32 %v1263, %v1379
        %v1461 = vmul.f32 %v1262, %v1384
        %v1462 = vmul.f32 %v1261, %v1389
        %v1463 = vmul.f32 %v1260, %v1394
        %v1464 = vmul.f32 %v1259, %v1399
        %v1465 = vmul.f32 %v1258, %v1404
        %v1466 = vmul.f32 %v1257, %v1409
        %v1467 = vmul.f32 %v1256, %v1414
        %v1468 = vmul.f32 %v1255, %v1419
        %v1469 = vmul.f32 %v1254, %v1424
        %v1470 = vmul.f32 %v1253, %v1429
        %v1471 = vmul.f32 %v1252, %v1434
        %v1472 = vmul.f32 %v1251, %v1439
        %1473 = vset.pattern.permute.xlu0 1
        %1474 = vperm.xlu0 %1473, %v533
        %v1475 = vpop.permute.xlu0 %1474
        %1477 = vset.pattern.permute.xlu0 1
        %1478 = vperm.xlu0 %1477, %v534
        %v1479 = vpop.permute.xlu0 %1478
        %1481 = vset.pattern.permute.xlu0 1
        %1482 = vperm.xlu0 %1481, %v535
        %v1483 = vpop.permute.xlu0 %1482
        %1485 = vset.pattern.permute.xlu0 1
        %1486 = vperm.xlu0 %1485, %v536
        %v1487 = vpop.permute.xlu0 %1486
        %1489 = vset.pattern.permute.xlu0 1
        %1490 = vperm.xlu0 %1489, %v537
        %v1491 = vpop.permute.xlu0 %1490
        %1493 = vset.pattern.permute.xlu0 1
        %1494 = vperm.xlu0 %1493, %v538
        %v1495 = vpop.permute.xlu0 %1494
        %1497 = vset.pattern.permute.xlu0 1
        %1498 = vperm.xlu0 %1497, %v539
        %v1499 = vpop.permute.xlu0 %1498
        %1501 = vset.pattern.permute.xlu0 1
        %1502 = vperm.xlu0 %1501, %v540
        %v1503 = vpop.permute.xlu0 %1502
        %1505 = vset.pattern.permute.xlu0 1
        %1506 = vperm.xlu0 %1505, %v541
        %v1507 = vpop.permute.xlu0 %1506
        %1509 = vset.pattern.permute.xlu0 1
        %1510 = vperm.xlu0 %1509, %v542
        %v1511 = vpop.permute.xlu0 %1510
        %1513 = vset.pattern.permute.xlu0 1
        %1514 = vperm.xlu0 %1513, %v543
        %v1515 = vpop.permute.xlu0 %1514
        %1517 = vset.pattern.permute.xlu0 1
        %1518 = vperm.xlu0 %1517, %v544
        %v1519 = vpop.permute.xlu0 %1518
        %1521 = vset.pattern.permute.xlu0 1
        %1522 = vperm.xlu0 %1521, %v545
        %v1523 = vpop.permute.xlu0 %1522
        %1525 = vset.pattern.permute.xlu0 1
        %1526 = vperm.xlu0 %1525, %v546
        %v1527 = vpop.permute.xlu0 %1526
        %1529 = vset.pattern.permute.xlu0 1
        %1530 = vperm.xlu0 %1529, %v547
        %v1531 = vpop.permute.xlu0 %1530
        %1533 = vset.pattern.permute.xlu0 1
        %1534 = vperm.xlu0 %1533, %v548
        %v1535 = vpop.permute.xlu0 %1534
        %1537 = vset.pattern.permute.xlu0 1
        %1538 = vperm.xlu0 %1537, %v549
        %v1539 = vpop.permute.xlu0 %1538
        %1541 = vset.pattern.permute.xlu0 1
        %1542 = vperm.xlu0 %1541, %v550
        %v1543 = vpop.permute.xlu0 %1542
        %1545 = vset.pattern.permute.xlu0 1
        %1546 = vperm.xlu0 %1545, %v551
        %v1547 = vpop.permute.xlu0 %1546
        %1549 = vset.pattern.permute.xlu0 1
        %1550 = vperm.xlu0 %1549, %v552
        %v1551 = vpop.permute.xlu0 %1550
        %1553 = vset.pattern.permute.xlu0 1
        %1554 = vperm.xlu0 %1553, %v553
        %v1555 = vpop.permute.xlu0 %1554
        %1557 = vset.pattern.permute.xlu0 1
        %1558 = vperm.xlu0 %1557, %v554
        %v1559 = vpop.permute.xlu0 %1558
        %1561 = vset.pattern.permute.xlu0 1
        %1562 = vperm.xlu0 %1561, %v555
        %v1563 = vpop.permute.xlu0 %1562
        %1565 = vset.pattern.permute.xlu0 1
        %1566 = vperm.xlu0 %1565, %v556
        %v1567 = vpop.permute.xlu0 %1566
        %1569 = vset.pattern.permute.xlu0 1
        %1570 = vperm.xlu0 %1569, %v557
        %v1571 = vpop.permute.xlu0 %1570
        %1573 = vset.pattern.permute.xlu0 1
        %1574 = vperm.xlu0 %1573, %v558
        %v1575 = vpop.permute.xlu0 %1574
        %1577 = vset.pattern.permute.xlu0 1
        %1578 = vperm.xlu0 %1577, %v559
        %v1579 = vpop.permute.xlu0 %1578
        %1581 = vset.pattern.permute.xlu0 1
        %1582 = vperm.xlu0 %1581, %v560
        %v1583 = vpop.permute.xlu0 %1582
        %1585 = vset.pattern.permute.xlu0 1
        %1586 = vperm.xlu0 %1585, %v561
        %v1587 = vpop.permute.xlu0 %1586
        %1589 = vset.pattern.permute.xlu0 1
        %1590 = vperm.xlu0 %1589, %v562
        %v1591 = vpop.permute.xlu0 %1590
        %1593 = vset.pattern.permute.xlu0 1
        %1594 = vperm.xlu0 %1593, %v563
        %v1595 = vpop.permute.xlu0 %1594
        %1597 = vset.pattern.permute.xlu0 1
        %1598 = vperm.xlu0 %1597, %v564
        %v1599 = vpop.permute.xlu0 %1598
        %v1601 = vmul.f32 %v1211, %v1475
        %v1602 = vmul.f32 %v1212, %v1479
        %v1603 = vmul.f32 %v1181, %v1483
        %v1604 = vmul.f32 %v1182, %v1487
        %v1605 = vmul.f32 %v1183, %v1491
        %v1606 = vmul.f32 %v1184, %v1495
        %v1607 = vmul.f32 %v1185, %v1499
        %v1608 = vmul.f32 %v1186, %v1503
        %v1609 = vmul.f32 %v1187, %v1507
        %v1610 = vmul.f32 %v1188, %v1511
        %v1611 = vmul.f32 %v1189, %v1515
        %v1612 = vmul.f32 %v1190, %v1519
        %v1613 = vmul.f32 %v1191, %v1523
        %v1614 = vmul.f32 %v1192, %v1527
        %v1615 = vmul.f32 %v1193, %v1531
        %v1616 = vmul.f32 %v1194, %v1535
        %v1617 = vmul.f32 %v1195, %v1539
        %v1618 = vmul.f32 %v1196, %v1543
        %v1619 = vmul.f32 %v1197, %v1547
        %v1620 = vmul.f32 %v1198, %v1551
        %v1621 = vmul.f32 %v1199, %v1555
        %v1622 = vmul.f32 %v1200, %v1559
        %v1623 = vmul.f32 %v1201, %v1563
        %v1624 = vmul.f32 %v1202, %v1567
        %v1625 = vmul.f32 %v1203, %v1571
        %v1626 = vmul.f32 %v1204, %v1575
        %v1627 = vmul.f32 %v1205, %v1579
        %v1628 = vmul.f32 %v1206, %v1583
        %v1629 = vmul.f32 %v1207, %v1587
        %v1630 = vmul.f32 %v1208, %v1591
        %v1631 = vmul.f32 %v1209, %v1595
        %v1632 = vmul.f32 %v1210, %v1599
        %v1633 = vrot.slane %v1181, 1
        %v1634 = vrot.slane %v1182, 1
        %v1635 = vrot.slane %v1183, 1
        %v1636 = vrot.slane %v1184, 1
        %v1637 = vrot.slane %v1185, 1
        %v1638 = vrot.slane %v1186, 1
        %v1639 = vrot.slane %v1187, 1
        %v1640 = vrot.slane %v1188, 1
        %v1641 = vrot.slane %v1189, 1
        %v1642 = vrot.slane %v1190, 1
        %v1643 = vrot.slane %v1191, 1
        %v1644 = vrot.slane %v1192, 1
        %v1645 = vrot.slane %v1193, 1
        %v1646 = vrot.slane %v1194, 1
        %v1647 = vrot.slane %v1195, 1
        %v1648 = vrot.slane %v1196, 1
        %v1649 = vrot.slane %v1197, 1
        %v1650 = vrot.slane %v1198, 1
        %v1651 = vrot.slane %v1199, 1
        %v1652 = vrot.slane %v1200, 1
        %v1653 = vrot.slane %v1201, 1
        %v1654 = vrot.slane %v1202, 1
        %v1655 = vrot.slane %v1203, 1
        %v1656 = vrot.slane %v1204, 1
        %v1657 = vrot.slane %v1205, 1
        %v1658 = vrot.slane %v1206, 1
        %v1659 = vrot.slane %v1207, 1
        %v1660 = vrot.slane %v1208, 1
        %v1661 = vrot.slane %v1209, 1
        %v1662 = vrot.slane %v1210, 1
        %v1663 = vrot.slane %v1211, 1
        %v1664 = vrot.slane %v1212, 1
        %vm1665 = vcmp.lt.s32.totalorder %v1247, 7
        %v1666 = vsel %vm1665, %v1663, %v1664
        %v1667 = vsel %vm1665, %v1662, %v1663
        %v1668 = vsel %vm1665, %v1661, %v1662
        %v1669 = vsel %vm1665, %v1660, %v1661
        %v1670 = vsel %vm1665, %v1659, %v1660
        %v1671 = vsel %vm1665, %v1658, %v1659
        %v1672 = vsel %vm1665, %v1657, %v1658
        %v1673 = vsel %vm1665, %v1656, %v1657
        %v1674 = vsel %vm1665, %v1655, %v1656
        %v1675 = vsel %vm1665, %v1654, %v1655
        %v1676 = vsel %vm1665, %v1653, %v1654
        %v1677 = vsel %vm1665, %v1652, %v1653
        %v1678 = vsel %vm1665, %v1651, %v1652
        %v1679 = vsel %vm1665, %v1650, %v1651
        %v1680 = vsel %vm1665, %v1649, %v1650
        %v1681 = vsel %vm1665, %v1648, %v1649
        %v1682 = vsel %vm1665, %v1647, %v1648
        %v1683 = vsel %vm1665, %v1646, %v1647
        %v1684 = vsel %vm1665, %v1645, %v1646
        %v1685 = vsel %vm1665, %v1644, %v1645
        %v1686 = vsel %vm1665, %v1643, %v1644
        %v1687 = vsel %vm1665, %v1642, %v1643
        %v1688 = vsel %vm1665, %v1641, %v1642
        %v1689 = vsel %vm1665, %v1640, %v1641
        %v1690 = vsel %vm1665, %v1639, %v1640
        %v1691 = vsel %vm1665, %v1638, %v1639
        %v1692 = vsel %vm1665, %v1637, %v1638
        %v1693 = vsel %vm1665, %v1636, %v1637
        %v1694 = vsel %vm1665, %v1635, %v1636
        %v1695 = vsel %vm1665, %v1634, %v1635
        %v1696 = vsel %vm1665, %v1633, %v1634
        %v1697 = vsel %vm1665, %v1664, %v1633
        %1698 = vset.pattern.permute.xlu0 2
        %1699 = vperm.xlu0 %1698, %v533
        %v1700 = vpop.permute.xlu0 %1699
        %1702 = vset.pattern.permute.xlu0 2
        %1703 = vperm.xlu0 %1702, %v534
        %v1704 = vpop.permute.xlu0 %1703
        %1706 = vset.pattern.permute.xlu0 2
        %1707 = vperm.xlu0 %1706, %v535
        %v1708 = vpop.permute.xlu0 %1707
        %1710 = vset.pattern.permute.xlu0 2
        %1711 = vperm.xlu0 %1710, %v536
        %v1712 = vpop.permute.xlu0 %1711
        %1714 = vset.pattern.permute.xlu0 2
        %1715 = vperm.xlu0 %1714, %v537
        %v1716 = vpop.permute.xlu0 %1715
        %1718 = vset.pattern.permute.xlu0 2
        %1719 = vperm.xlu0 %1718, %v538
        %v1720 = vpop.permute.xlu0 %1719
        %1722 = vset.pattern.permute.xlu0 2
        %1723 = vperm.xlu0 %1722, %v539
        %v1724 = vpop.permute.xlu0 %1723
        %1726 = vset.pattern.permute.xlu0 2
        %1727 = vperm.xlu0 %1726, %v540
        %v1728 = vpop.permute.xlu0 %1727
        %1730 = vset.pattern.permute.xlu0 2
        %1731 = vperm.xlu0 %1730, %v541
        %v1732 = vpop.permute.xlu0 %1731
        %1734 = vset.pattern.permute.xlu0 2
        %1735 = vperm.xlu0 %1734, %v542
        %v1736 = vpop.permute.xlu0 %1735
        %1738 = vset.pattern.permute.xlu0 2
        %1739 = vperm.xlu0 %1738, %v543
        %v1740 = vpop.permute.xlu0 %1739
        %1742 = vset.pattern.permute.xlu0 2
        %1743 = vperm.xlu0 %1742, %v544
        %v1744 = vpop.permute.xlu0 %1743
        %1746 = vset.pattern.permute.xlu0 2
        %1747 = vperm.xlu0 %1746, %v545
        %v1748 = vpop.permute.xlu0 %1747
        %1750 = vset.pattern.permute.xlu0 2
        %1751 = vperm.xlu0 %1750, %v546
        %v1752 = vpop.permute.xlu0 %1751
        %1754 = vset.pattern.permute.xlu0 2
        %1755 = vperm.xlu0 %1754, %v547
        %v1756 = vpop.permute.xlu0 %1755
        %1758 = vset.pattern.permute.xlu0 2
        %1759 = vperm.xlu0 %1758, %v548
        %v1760 = vpop.permute.xlu0 %1759
        %1762 = vset.pattern.permute.xlu0 2
        %1763 = vperm.xlu0 %1762, %v549
        %v1764 = vpop.permute.xlu0 %1763
        %1766 = vset.pattern.permute.xlu0 2
        %1767 = vperm.xlu0 %1766, %v550
        %v1768 = vpop.permute.xlu0 %1767
        %1770 = vset.pattern.permute.xlu0 2
        %1771 = vperm.xlu0 %1770, %v551
        %v1772 = vpop.permute.xlu0 %1771
        %1774 = vset.pattern.permute.xlu0 2
        %1775 = vperm.xlu0 %1774, %v552
        %v1776 = vpop.permute.xlu0 %1775
        %1778 = vset.pattern.permute.xlu0 2
        %1779 = vperm.xlu0 %1778, %v553
        %v1780 = vpop.permute.xlu0 %1779
        %1782 = vset.pattern.permute.xlu0 2
        %1783 = vperm.xlu0 %1782, %v554
        %v1784 = vpop.permute.xlu0 %1783
        %1786 = vset.pattern.permute.xlu0 2
        %1787 = vperm.xlu0 %1786, %v555
        %v1788 = vpop.permute.xlu0 %1787
        %1790 = vset.pattern.permute.xlu0 2
        %1791 = vperm.xlu0 %1790, %v556
        %v1792 = vpop.permute.xlu0 %1791
        %1794 = vset.pattern.permute.xlu0 2
        %1795 = vperm.xlu0 %1794, %v557
        %v1796 = vpop.permute.xlu0 %1795
        %1798 = vset.pattern.permute.xlu0 2
        %1799 = vperm.xlu0 %1798, %v558
        %v1800 = vpop.permute.xlu0 %1799
        %1802 = vset.pattern.permute.xlu0 2
        %1803 = vperm.xlu0 %1802, %v559
        %v1804 = vpop.permute.xlu0 %1803
        %1806 = vset.pattern.permute.xlu0 2
        %1807 = vperm.xlu0 %1806, %v560
        %v1808 = vpop.permute.xlu0 %1807
        %1810 = vset.pattern.permute.xlu0 2
        %1811 = vperm.xlu0 %1810, %v561
        %v1812 = vpop.permute.xlu0 %1811
        %1814 = vset.pattern.permute.xlu0 2
        %1815 = vperm.xlu0 %1814, %v562
        %v1816 = vpop.permute.xlu0 %1815
        %1818 = vset.pattern.permute.xlu0 2
        %1819 = vperm.xlu0 %1818, %v563
        %v1820 = vpop.permute.xlu0 %1819
        %1822 = vset.pattern.permute.xlu0 2
        %1823 = vperm.xlu0 %1822, %v564
        %v1824 = vpop.permute.xlu0 %1823
        %v1826 = vmul.f32 %v1666, %v1700
        %v1827 = vmul.f32 %v1697, %v1704
        %v1828 = vmul.f32 %v1696, %v1708
        %v1829 = vmul.f32 %v1695, %v1712
        %v1830 = vmul.f32 %v1694, %v1716
        %v1831 = vmul.f32 %v1693, %v1720
        %v1832 = vmul.f32 %v1692, %v1724
        %v1833 = vmul.f32 %v1691, %v1728
        %v1834 = vmul.f32 %v1690, %v1732
        %v1835 = vmul.f32 %v1689, %v1736
        %v1836 = vmul.f32 %v1688, %v1740
        %v1837 = vmul.f32 %v1687, %v1744
        %v1838 = vmul.f32 %v1686, %v1748
        %v1839 = vmul.f32 %v1685, %v1752
        %v1840 = vmul.f32 %v1684, %v1756
        %v1841 = vmul.f32 %v1683, %v1760
        %v1842 = vmul.f32 %v1682, %v1764
        %v1843 = vmul.f32 %v1681, %v1768
        %v1844 = vmul.f32 %v1680, %v1772
        %v1845 = vmul.f32 %v1679, %v1776
        %v1846 = vmul.f32 %v1678, %v1780
        %v1847 = vmul.f32 %v1677, %v1784
        %v1848 = vmul.f32 %v1676, %v1788
        %v1849 = vmul.f32 %v1675, %v1792
        %v1850 = vmul.f32 %v1674, %v1796
        %v1851 = vmul.f32 %v1673, %v1800
        %v1852 = vmul.f32 %v1672, %v1804
        %v1853 = vmul.f32 %v1671, %v1808
        %v1854 = vmul.f32 %v1670, %v1812
        %v1855 = vmul.f32 %v1669, %v1816
        %v1856 = vmul.f32 %v1668, %v1820
        %v1857 = vmul.f32 %v1667, %v1824
        %1858 = vset.pattern.permute.xlu0 3
        %1859 = vperm.xlu0 %1858, %v533
        %v1860 = vpop.permute.xlu0 %1859
        %1862 = vset.pattern.permute.xlu0 3
        %1863 = vperm.xlu0 %1862, %v534
        %v1864 = vpop.permute.xlu0 %1863
        %1866 = vset.pattern.permute.xlu0 3
        %1867 = vperm.xlu0 %1866, %v535
        %v1868 = vpop.permute.xlu0 %1867
        %1870 = vset.pattern.permute.xlu0 3
        %1871 = vperm.xlu0 %1870, %v536
        %v1872 = vpop.permute.xlu0 %1871
        %1874 = vset.pattern.permute.xlu0 3
        %1875 = vperm.xlu0 %1874, %v537
        %v1876 = vpop.permute.xlu0 %1875
        %1878 = vset.pattern.permute.xlu0 3
        %1879 = vperm.xlu0 %1878, %v538
        %v1880 = vpop.permute.xlu0 %1879
        %1882 = vset.pattern.permute.xlu0 3
        %1883 = vperm.xlu0 %1882, %v539
        %v1884 = vpop.permute.xlu0 %1883
        %1886 = vset.pattern.permute.xlu0 3
        %1887 = vperm.xlu0 %1886, %v540
        %v1888 = vpop.permute.xlu0 %1887
        %1890 = vset.pattern.permute.xlu0 3
        %1891 = vperm.xlu0 %1890, %v541
        %v1892 = vpop.permute.xlu0 %1891
        %1894 = vset.pattern.permute.xlu0 3
        %1895 = vperm.xlu0 %1894, %v542
        %v1896 = vpop.permute.xlu0 %1895
        %1898 = vset.pattern.permute.xlu0 3
        %1899 = vperm.xlu0 %1898, %v543
        %v1900 = vpop.permute.xlu0 %1899
        %1902 = vset.pattern.permute.xlu0 3
        %1903 = vperm.xlu0 %1902, %v544
        %v1904 = vpop.permute.xlu0 %1903
        %1906 = vset.pattern.permute.xlu0 3
        %1907 = vperm.xlu0 %1906, %v545
        %v1908 = vpop.permute.xlu0 %1907
        %1910 = vset.pattern.permute.xlu0 3
        %1911 = vperm.xlu0 %1910, %v546
        %v1912 = vpop.permute.xlu0 %1911
        %1914 = vset.pattern.permute.xlu0 3
        %1915 = vperm.xlu0 %1914, %v547
        %v1916 = vpop.permute.xlu0 %1915
        %1918 = vset.pattern.permute.xlu0 3
        %1919 = vperm.xlu0 %1918, %v548
        %v1920 = vpop.permute.xlu0 %1919
        %1922 = vset.pattern.permute.xlu0 3
        %1923 = vperm.xlu0 %1922, %v549
        %v1924 = vpop.permute.xlu0 %1923
        %1926 = vset.pattern.permute.xlu0 3
        %1927 = vperm.xlu0 %1926, %v550
        %v1928 = vpop.permute.xlu0 %1927
        %1930 = vset.pattern.permute.xlu0 3
        %1931 = vperm.xlu0 %1930, %v551
        %v1932 = vpop.permute.xlu0 %1931
        %1934 = vset.pattern.permute.xlu0 3
        %1935 = vperm.xlu0 %1934, %v552
        %v1936 = vpop.permute.xlu0 %1935
        %1938 = vset.pattern.permute.xlu0 3
        %1939 = vperm.xlu0 %1938, %v553
        %v1940 = vpop.permute.xlu0 %1939
        %1942 = vset.pattern.permute.xlu0 3
        %1943 = vperm.xlu0 %1942, %v554
        %v1944 = vpop.permute.xlu0 %1943
        %1946 = vset.pattern.permute.xlu0 3
        %1947 = vperm.xlu0 %1946, %v555
        %v1948 = vpop.permute.xlu0 %1947
        %1950 = vset.pattern.permute.xlu0 3
        %1951 = vperm.xlu0 %1950, %v556
        %v1952 = vpop.permute.xlu0 %1951
        %1954 = vset.pattern.permute.xlu0 3
        %1955 = vperm.xlu0 %1954, %v557
        %v1956 = vpop.permute.xlu0 %1955
        %1958 = vset.pattern.permute.xlu0 3
        %1959 = vperm.xlu0 %1958, %v558
        %v1960 = vpop.permute.xlu0 %1959
        %1962 = vset.pattern.permute.xlu0 3
        %1963 = vperm.xlu0 %1962, %v559
        %v1964 = vpop.permute.xlu0 %1963
        %1966 = vset.pattern.permute.xlu0 3
        %1967 = vperm.xlu0 %1966, %v560
        %v1968 = vpop.permute.xlu0 %1967
        %1970 = vset.pattern.permute.xlu0 3
        %1971 = vperm.xlu0 %1970, %v561
        %v1972 = vpop.permute.xlu0 %1971
        %1974 = vset.pattern.permute.xlu0 3
        %1975 = vperm.xlu0 %1974, %v562
        %v1976 = vpop.permute.xlu0 %1975
        %1978 = vset.pattern.permute.xlu0 3
        %1979 = vperm.xlu0 %1978, %v563
        %v1980 = vpop.permute.xlu0 %1979
        %1982 = vset.pattern.permute.xlu0 3
        %1983 = vperm.xlu0 %1982, %v564
        %v1984 = vpop.permute.xlu0 %1983
        %v1986 = vmul.f32 %v1280, %v1860
        %v1987 = vmul.f32 %v1279, %v1864
        %v1988 = vmul.f32 %v1278, %v1868
        %v1989 = vmul.f32 %v1277, %v1872
        %v1990 = vmul.f32 %v1276, %v1876
        %v1991 = vmul.f32 %v1275, %v1880
        %v1992 = vmul.f32 %v1274, %v1884
        %v1993 = vmul.f32 %v1273, %v1888
        %v1994 = vmul.f32 %v1272, %v1892
        %v1995 = vmul.f32 %v1271, %v1896
        %v1996 = vmul.f32 %v1270, %v1900
        %v1997 = vmul.f32 %v1269, %v1904
        %v1998 = vmul.f32 %v1268, %v1908
        %v1999 = vmul.f32 %v1267, %v1912
        %v2000 = vmul.f32 %v1266, %v1916
        %v2001 = vmul.f32 %v1265, %v1920
        %v2002 = vmul.f32 %v1264, %v1924
        %v2003 = vmul.f32 %v1263, %v1928
        %v2004 = vmul.f32 %v1262, %v1932
        %v2005 = vmul.f32 %v1261, %v1936
        %v2006 = vmul.f32 %v1260, %v1940
        %v2007 = vmul.f32 %v1259, %v1944
        %v2008 = vmul.f32 %v1258, %v1948
        %v2009 = vmul.f32 %v1257, %v1952
        %v2010 = vmul.f32 %v1256, %v1956
        %v2011 = vmul.f32 %v1255, %v1960
        %v2012 = vmul.f32 %v1254, %v1964
        %v2013 = vmul.f32 %v1253, %v1968
        %v2014 = vmul.f32 %v1252, %v1972
        %v2015 = vmul.f32 %v1251, %v1976
        %v2016 = vmul.f32 %v1250, %v1980
        %v2017 = vmul.f32 %v1249, %v1984
        %2018 = vset.pattern.permute.xlu0 5
        %2019 = vperm.xlu0 %2018, %v533
        %v2020 = vpop.permute.xlu0 %2019
        %2022 = vset.pattern.permute.xlu0 5
        %2023 = vperm.xlu0 %2022, %v534
        %v2024 = vpop.permute.xlu0 %2023
        %2026 = vset.pattern.permute.xlu0 5
        %2027 = vperm.xlu0 %2026, %v535
        %v2028 = vpop.permute.xlu0 %2027
        %2030 = vset.pattern.permute.xlu0 5
        %2031 = vperm.xlu0 %2030, %v536
        %v2032 = vpop.permute.xlu0 %2031
        %2034 = vset.pattern.permute.xlu0 5
        %2035 = vperm.xlu0 %2034, %v537
        %v2036 = vpop.permute.xlu0 %2035
        %2038 = vset.pattern.permute.xlu0 5
        %2039 = vperm.xlu0 %2038, %v538
        %v2040 = vpop.permute.xlu0 %2039
        %2042 = vset.pattern.permute.xlu0 5
        %2043 = vperm.xlu0 %2042, %v539
        %v2044 = vpop.permute.xlu0 %2043
        %2046 = vset.pattern.permute.xlu0 5
        %2047 = vperm.xlu0 %2046, %v540
        %v2048 = vpop.permute.xlu0 %2047
        %2050 = vset.pattern.permute.xlu0 5
        %2051 = vperm.xlu0 %2050, %v541
        %v2052 = vpop.permute.xlu0 %2051
        %2054 = vset.pattern.permute.xlu0 5
        %2055 = vperm.xlu0 %2054, %v542
        %v2056 = vpop.permute.xlu0 %2055
        %2058 = vset.pattern.permute.xlu0 5
        %2059 = vperm.xlu0 %2058, %v543
        %v2060 = vpop.permute.xlu0 %2059
        %2062 = vset.pattern.permute.xlu0 5
        %2063 = vperm.xlu0 %2062, %v544
        %v2064 = vpop.permute.xlu0 %2063
        %2066 = vset.pattern.permute.xlu0 5
        %2067 = vperm.xlu0 %2066, %v545
        %v2068 = vpop.permute.xlu0 %2067
        %2070 = vset.pattern.permute.xlu0 5
        %2071 = vperm.xlu0 %2070, %v546
        %v2072 = vpop.permute.xlu0 %2071
        %2074 = vset.pattern.permute.xlu0 5
        %2075 = vperm.xlu0 %2074, %v547
        %v2076 = vpop.permute.xlu0 %2075
        %2078 = vset.pattern.permute.xlu0 5
        %2079 = vperm.xlu0 %2078, %v548
        %v2080 = vpop.permute.xlu0 %2079
        %2082 = vset.pattern.permute.xlu0 5
        %2083 = vperm.xlu0 %2082, %v549
        %v2084 = vpop.permute.xlu0 %2083
        %2086 = vset.pattern.permute.xlu0 5
        %2087 = vperm.xlu0 %2086, %v550
        %v2088 = vpop.permute.xlu0 %2087
        %2090 = vset.pattern.permute.xlu0 5
        %2091 = vperm.xlu0 %2090, %v551
        %v2092 = vpop.permute.xlu0 %2091
        %2094 = vset.pattern.permute.xlu0 5
        %2095 = vperm.xlu0 %2094, %v552
        %v2096 = vpop.permute.xlu0 %2095
        %2098 = vset.pattern.permute.xlu0 5
        %2099 = vperm.xlu0 %2098, %v553
        %v2100 = vpop.permute.xlu0 %2099
        %2102 = vset.pattern.permute.xlu0 5
        %2103 = vperm.xlu0 %2102, %v554
        %v2104 = vpop.permute.xlu0 %2103
        %2106 = vset.pattern.permute.xlu0 5
        %2107 = vperm.xlu0 %2106, %v555
        %v2108 = vpop.permute.xlu0 %2107
        %2110 = vset.pattern.permute.xlu0 5
        %2111 = vperm.xlu0 %2110, %v556
        %v2112 = vpop.permute.xlu0 %2111
        %2114 = vset.pattern.permute.xlu0 5
        %2115 = vperm.xlu0 %2114, %v557
        %v2116 = vpop.permute.xlu0 %2115
        %2118 = vset.pattern.permute.xlu0 5
        %2119 = vperm.xlu0 %2118, %v558
        %v2120 = vpop.permute.xlu0 %2119
        %2122 = vset.pattern.permute.xlu0 5
        %2123 = vperm.xlu0 %2122, %v559
        %v2124 = vpop.permute.xlu0 %2123
        %2126 = vset.pattern.permute.xlu0 5
        %2127 = vperm.xlu0 %2126, %v560
        %v2128 = vpop.permute.xlu0 %2127
        %2130 = vset.pattern.permute.xlu0 5
        %2131 = vperm.xlu0 %2130, %v561
        %v2132 = vpop.permute.xlu0 %2131
        %2134 = vset.pattern.permute.xlu0 5
        %2135 = vperm.xlu0 %2134, %v562
        %v2136 = vpop.permute.xlu0 %2135
        %2138 = vset.pattern.permute.xlu0 5
        %2139 = vperm.xlu0 %2138, %v563
        %v2140 = vpop.permute.xlu0 %2139
        %2142 = vset.pattern.permute.xlu0 5
        %2143 = vperm.xlu0 %2142, %v564
        %v2144 = vpop.permute.xlu0 %2143
        %v2146 = vmul.f32 %v1696, %v2020
        %v2147 = vmul.f32 %v1695, %v2024
        %v2148 = vmul.f32 %v1694, %v2028
        %v2149 = vmul.f32 %v1693, %v2032
        %v2150 = vmul.f32 %v1692, %v2036
        %v2151 = vmul.f32 %v1691, %v2040
        %v2152 = vmul.f32 %v1690, %v2044
        %v2153 = vmul.f32 %v1689, %v2048
        %v2154 = vmul.f32 %v1688, %v2052
        %v2155 = vmul.f32 %v1687, %v2056
        %v2156 = vmul.f32 %v1686, %v2060
        %v2157 = vmul.f32 %v1685, %v2064
        %v2158 = vmul.f32 %v1684, %v2068
        %v2159 = vmul.f32 %v1683, %v2072
        %v2160 = vmul.f32 %v1682, %v2076
        %v2161 = vmul.f32 %v1681, %v2080
        %v2162 = vmul.f32 %v1680, %v2084
        %v2163 = vmul.f32 %v1679, %v2088
        %v2164 = vmul.f32 %v1678, %v2092
        %v2165 = vmul.f32 %v1677, %v2096
        %v2166 = vmul.f32 %v1676, %v2100
        %v2167 = vmul.f32 %v1675, %v2104
        %v2168 = vmul.f32 %v1674, %v2108
        %v2169 = vmul.f32 %v1673, %v2112
        %v2170 = vmul.f32 %v1672, %v2116
        %v2171 = vmul.f32 %v1671, %v2120
        %v2172 = vmul.f32 %v1670, %v2124
        %v2173 = vmul.f32 %v1669, %v2128
        %v2174 = vmul.f32 %v1668, %v2132
        %v2175 = vmul.f32 %v1667, %v2136
        %v2176 = vmul.f32 %v1666, %v2140
        %v2177 = vmul.f32 %v1697, %v2144
        %2178 = vset.pattern.permute.xlu0 6
        %2179 = vperm.xlu0 %2178, %v533
        %v2180 = vpop.permute.xlu0 %2179
        %2182 = vset.pattern.permute.xlu0 6
        %2183 = vperm.xlu0 %2182, %v534
        %v2184 = vpop.permute.xlu0 %2183
        %2186 = vset.pattern.permute.xlu0 6
        %2187 = vperm.xlu0 %2186, %v535
        %v2188 = vpop.permute.xlu0 %2187
        %2190 = vset.pattern.permute.xlu0 6
        %2191 = vperm.xlu0 %2190, %v536
        %v2192 = vpop.permute.xlu0 %2191
        %2194 = vset.pattern.permute.xlu0 6
        %2195 = vperm.xlu0 %2194, %v537
        %v2196 = vpop.permute.xlu0 %2195
        %2198 = vset.pattern.permute.xlu0 6
        %2199 = vperm.xlu0 %2198, %v538
        %v2200 = vpop.permute.xlu0 %2199
        %2202 = vset.pattern.permute.xlu0 6
        %2203 = vperm.xlu0 %2202, %v539
        %v2204 = vpop.permute.xlu0 %2203
        %2206 = vset.pattern.permute.xlu0 6
        %2207 = vperm.xlu0 %2206, %v540
        %v2208 = vpop.permute.xlu0 %2207
        %2210 = vset.pattern.permute.xlu0 6
        %2211 = vperm.xlu0 %2210, %v541
        %v2212 = vpop.permute.xlu0 %2211
        %2214 = vset.pattern.permute.xlu0 6
        %2215 = vperm.xlu0 %2214, %v542
        %v2216 = vpop.permute.xlu0 %2215
        %2218 = vset.pattern.permute.xlu0 6
        %2219 = vperm.xlu0 %2218, %v543
        %v2220 = vpop.permute.xlu0 %2219
        %2222 = vset.pattern.permute.xlu0 6
        %2223 = vperm.xlu0 %2222, %v544
        %v2224 = vpop.permute.xlu0 %2223
        %2226 = vset.pattern.permute.xlu0 6
        %2227 = vperm.xlu0 %2226, %v545
        %v2228 = vpop.permute.xlu0 %2227
        %2230 = vset.pattern.permute.xlu0 6
        %2231 = vperm.xlu0 %2230, %v546
        %v2232 = vpop.permute.xlu0 %2231
        %2234 = vset.pattern.permute.xlu0 6
        %2235 = vperm.xlu0 %2234, %v547
        %v2236 = vpop.permute.xlu0 %2235
        %2238 = vset.pattern.permute.xlu0 6
        %2239 = vperm.xlu0 %2238, %v548
        %v2240 = vpop.permute.xlu0 %2239
        %2242 = vset.pattern.permute.xlu0 6
        %2243 = vperm.xlu0 %2242, %v549
        %v2244 = vpop.permute.xlu0 %2243
        %2246 = vset.pattern.permute.xlu0 6
        %2247 = vperm.xlu0 %2246, %v550
        %v2248 = vpop.permute.xlu0 %2247
        %2250 = vset.pattern.permute.xlu0 6
        %2251 = vperm.xlu0 %2250, %v551
        %v2252 = vpop.permute.xlu0 %2251
        %2254 = vset.pattern.permute.xlu0 6
        %2255 = vperm.xlu0 %2254, %v552
        %v2256 = vpop.permute.xlu0 %2255
        %2258 = vset.pattern.permute.xlu0 6
        %2259 = vperm.xlu0 %2258, %v553
        %v2260 = vpop.permute.xlu0 %2259
        %2262 = vset.pattern.permute.xlu0 6
        %2263 = vperm.xlu0 %2262, %v554
        %v2264 = vpop.permute.xlu0 %2263
        %2266 = vset.pattern.permute.xlu0 6
        %2267 = vperm.xlu0 %2266, %v555
        %v2268 = vpop.permute.xlu0 %2267
        %2270 = vset.pattern.permute.xlu0 6
        %2271 = vperm.xlu0 %2270, %v556
        %v2272 = vpop.permute.xlu0 %2271
        %2274 = vset.pattern.permute.xlu0 6
        %2275 = vperm.xlu0 %2274, %v557
        %v2276 = vpop.permute.xlu0 %2275
        %2278 = vset.pattern.permute.xlu0 6
        %2279 = vperm.xlu0 %2278, %v558
        %v2280 = vpop.permute.xlu0 %2279
        %2282 = vset.pattern.permute.xlu0 6
        %2283 = vperm.xlu0 %2282, %v559
        %v2284 = vpop.permute.xlu0 %2283
        %2286 = vset.pattern.permute.xlu0 6
        %2287 = vperm.xlu0 %2286, %v560
        %v2288 = vpop.permute.xlu0 %2287
        %2290 = vset.pattern.permute.xlu0 6
        %2291 = vperm.xlu0 %2290, %v561
        %v2292 = vpop.permute.xlu0 %2291
        %2294 = vset.pattern.permute.xlu0 6
        %2295 = vperm.xlu0 %2294, %v562
        %v2296 = vpop.permute.xlu0 %2295
        %2298 = vset.pattern.permute.xlu0 6
        %2299 = vperm.xlu0 %2298, %v563
        %v2300 = vpop.permute.xlu0 %2299
        %2302 = vset.pattern.permute.xlu0 6
        %2303 = vperm.xlu0 %2302, %v564
        %v2304 = vpop.permute.xlu0 %2303
        %v2306 = vmul.f32 %v1278, %v2180
        %v2307 = vmul.f32 %v1277, %v2184
        %v2308 = vmul.f32 %v1276, %v2188
        %v2309 = vmul.f32 %v1275, %v2192
        %v2310 = vmul.f32 %v1274, %v2196
        %v2311 = vmul.f32 %v1273, %v2200
        %v2312 = vmul.f32 %v1272, %v2204
        %v2313 = vmul.f32 %v1271, %v2208
        %v2314 = vmul.f32 %v1270, %v2212
        %v2315 = vmul.f32 %v1269, %v2216
        %v2316 = vmul.f32 %v1268, %v2220
        %v2317 = vmul.f32 %v1267, %v2224
        %v2318 = vmul.f32 %v1266, %v2228
        %v2319 = vmul.f32 %v1265, %v2232
        %v2320 = vmul.f32 %v1264, %v2236
        %v2321 = vmul.f32 %v1263, %v2240
        %v2322 = vmul.f32 %v1262, %v2244
        %v2323 = vmul.f32 %v1261, %v2248
        %v2324 = vmul.f32 %v1260, %v2252
        %v2325 = vmul.f32 %v1259, %v2256
        %v2326 = vmul.f32 %v1258, %v2260
        %v2327 = vmul.f32 %v1257, %v2264
        %v2328 = vmul.f32 %v1256, %v2268
        %v2329 = vmul.f32 %v1255, %v2272
        %v2330 = vmul.f32 %v1254, %v2276
        %v2331 = vmul.f32 %v1253, %v2280
        %v2332 = vmul.f32 %v1252, %v2284
        %v2333 = vmul.f32 %v1251, %v2288
        %v2334 = vmul.f32 %v1250, %v2292
        %v2335 = vmul.f32 %v1249, %v2296
        %v2336 = vmul.f32 %v1280, %v2300
        %v2337 = vmul.f32 %v1279, %v2304
        %2338 = vset.pattern.permute.xlu0 7
        %2339 = vperm.xlu0 %2338, %v533
        %v2340 = vpop.permute.xlu0 %2339
        %2342 = vset.pattern.permute.xlu0 7
        %2343 = vperm.xlu0 %2342, %v534
        %v2344 = vpop.permute.xlu0 %2343
        %2346 = vset.pattern.permute.xlu0 7
        %2347 = vperm.xlu0 %2346, %v535
        %v2348 = vpop.permute.xlu0 %2347
        %2350 = vset.pattern.permute.xlu0 7
        %2351 = vperm.xlu0 %2350, %v536
        %v2352 = vpop.permute.xlu0 %2351
        %2354 = vset.pattern.permute.xlu0 7
        %2355 = vperm.xlu0 %2354, %v537
        %v2356 = vpop.permute.xlu0 %2355
        %2358 = vset.pattern.permute.xlu0 7
        %2359 = vperm.xlu0 %2358, %v538
        %v2360 = vpop.permute.xlu0 %2359
        %2362 = vset.pattern.permute.xlu0 7
        %2363 = vperm.xlu0 %2362, %v539
        %v2364 = vpop.permute.xlu0 %2363
        %2366 = vset.pattern.permute.xlu0 7
        %2367 = vperm.xlu0 %2366, %v540
        %v2368 = vpop.permute.xlu0 %2367
        %2370 = vset.pattern.permute.xlu0 7
        %2371 = vperm.xlu0 %2370, %v541
        %v2372 = vpop.permute.xlu0 %2371
        %2374 = vset.pattern.permute.xlu0 7
        %2375 = vperm.xlu0 %2374, %v542
        %v2376 = vpop.permute.xlu0 %2375
        %2378 = vset.pattern.permute.xlu0 7
        %2379 = vperm.xlu0 %2378, %v543
        %v2380 = vpop.permute.xlu0 %2379
        %2382 = vset.pattern.permute.xlu0 7
        %2383 = vperm.xlu0 %2382, %v544
        %v2384 = vpop.permute.xlu0 %2383
        %2386 = vset.pattern.permute.xlu0 7
        %2387 = vperm.xlu0 %2386, %v545
        %v2388 = vpop.permute.xlu0 %2387
        %2390 = vset.pattern.permute.xlu0 7
        %2391 = vperm.xlu0 %2390, %v546
        %v2392 = vpop.permute.xlu0 %2391
        %2394 = vset.pattern.permute.xlu0 7
        %2395 = vperm.xlu0 %2394, %v547
        %v2396 = vpop.permute.xlu0 %2395
        %2398 = vset.pattern.permute.xlu0 7
        %2399 = vperm.xlu0 %2398, %v548
        %v2400 = vpop.permute.xlu0 %2399
        %2402 = vset.pattern.permute.xlu0 7
        %2403 = vperm.xlu0 %2402, %v549
        %v2404 = vpop.permute.xlu0 %2403
        %2406 = vset.pattern.permute.xlu0 7
        %2407 = vperm.xlu0 %2406, %v550
        %v2408 = vpop.permute.xlu0 %2407
        %2410 = vset.pattern.permute.xlu0 7
        %2411 = vperm.xlu0 %2410, %v551
        %v2412 = vpop.permute.xlu0 %2411
        %2414 = vset.pattern.permute.xlu0 7
        %2415 = vperm.xlu0 %2414, %v552
        %v2416 = vpop.permute.xlu0 %2415
        %2418 = vset.pattern.permute.xlu0 7
        %2419 = vperm.xlu0 %2418, %v553
        %v2420 = vpop.permute.xlu0 %2419
        %2422 = vset.pattern.permute.xlu0 7
        %2423 = vperm.xlu0 %2422, %v554
        %v2424 = vpop.permute.xlu0 %2423
        %2426 = vset.pattern.permute.xlu0 7
        %2427 = vperm.xlu0 %2426, %v555
        %v2428 = vpop.permute.xlu0 %2427
        %2430 = vset.pattern.permute.xlu0 7
        %2431 = vperm.xlu0 %2430, %v556
        %v2432 = vpop.permute.xlu0 %2431
        %2434 = vset.pattern.permute.xlu0 7
        %2435 = vperm.xlu0 %2434, %v557
        %v2436 = vpop.permute.xlu0 %2435
        %2438 = vset.pattern.permute.xlu0 7
        %2439 = vperm.xlu0 %2438, %v558
        %v2440 = vpop.permute.xlu0 %2439
        %2442 = vset.pattern.permute.xlu0 7
        %2443 = vperm.xlu0 %2442, %v559
        %v2444 = vpop.permute.xlu0 %2443
        %2446 = vset.pattern.permute.xlu0 7
        %2447 = vperm.xlu0 %2446, %v560
        %v2448 = vpop.permute.xlu0 %2447
        %2450 = vset.pattern.permute.xlu0 7
        %2451 = vperm.xlu0 %2450, %v561
        %v2452 = vpop.permute.xlu0 %2451
        %2454 = vset.pattern.permute.xlu0 7
        %2455 = vperm.xlu0 %2454, %v562
        %v2456 = vpop.permute.xlu0 %2455
        %2458 = vset.pattern.permute.xlu0 7
        %2459 = vperm.xlu0 %2458, %v563
        %v2460 = vpop.permute.xlu0 %2459
        %2462 = vset.pattern.permute.xlu0 7
        %2463 = vperm.xlu0 %2462, %v564
        %v2464 = vpop.permute.xlu0 %2463
        %v2466 = vmul.f32 %v1183, %v2340
        %v2467 = vmul.f32 %v1184, %v2344
        %v2468 = vmul.f32 %v1185, %v2348
        %v2469 = vmul.f32 %v1186, %v2352
        %v2470 = vmul.f32 %v1187, %v2356
        %v2471 = vmul.f32 %v1188, %v2360
        %v2472 = vmul.f32 %v1189, %v2364
        %v2473 = vmul.f32 %v1190, %v2368
        %v2474 = vmul.f32 %v1191, %v2372
        %v2475 = vmul.f32 %v1192, %v2376
        %v2476 = vmul.f32 %v1193, %v2380
        %v2477 = vmul.f32 %v1194, %v2384
        %v2478 = vmul.f32 %v1195, %v2388
        %v2479 = vmul.f32 %v1196, %v2392
        %v2480 = vmul.f32 %v1197, %v2396
        %v2481 = vmul.f32 %v1198, %v2400
        %v2482 = vmul.f32 %v1199, %v2404
        %v2483 = vmul.f32 %v1200, %v2408
        %v2484 = vmul.f32 %v1201, %v2412
        %v2485 = vmul.f32 %v1202, %v2416
        %v2486 = vmul.f32 %v1203, %v2420
        %v2487 = vmul.f32 %v1204, %v2424
        %v2488 = vmul.f32 %v1205, %v2428
        %v2489 = vmul.f32 %v1206, %v2432
        %v2490 = vmul.f32 %v1207, %v2436
        %v2491 = vmul.f32 %v1208, %v2440
        %v2492 = vmul.f32 %v1209, %v2444
        %v2493 = vmul.f32 %v1210, %v2448
        %v2494 = vmul.f32 %v1211, %v2452
        %v2495 = vmul.f32 %v1212, %v2456
        %v2496 = vmul.f32 %v1181, %v2460
        %v2497 = vmul.f32 %v1182, %v2464
        %2498 = vset.pattern.permute.xlu0 8
        %2499 = vperm.xlu0 %2498, %v533
        %v2500 = vpop.permute.xlu0 %2499
        %2502 = vset.pattern.permute.xlu0 8
        %2503 = vperm.xlu0 %2502, %v534
        %v2504 = vpop.permute.xlu0 %2503
        %2506 = vset.pattern.permute.xlu0 8
        %2507 = vperm.xlu0 %2506, %v535
        %v2508 = vpop.permute.xlu0 %2507
        %2510 = vset.pattern.permute.xlu0 8
        %2511 = vperm.xlu0 %2510, %v536
        %v2512 = vpop.permute.xlu0 %2511
        %2514 = vset.pattern.permute.xlu0 8
        %2515 = vperm.xlu0 %2514, %v537
        %v2516 = vpop.permute.xlu0 %2515
        %2518 = vset.pattern.permute.xlu0 8
        %2519 = vperm.xlu0 %2518, %v538
        %v2520 = vpop.permute.xlu0 %2519
        %2522 = vset.pattern.permute.xlu0 8
        %2523 = vperm.xlu0 %2522, %v539
        %v2524 = vpop.permute.xlu0 %2523
        %2526 = vset.pattern.permute.xlu0 8
        %2527 = vperm.xlu0 %2526, %v540
        %v2528 = vpop.permute.xlu0 %2527
        %2530 = vset.pattern.permute.xlu0 8
        %2531 = vperm.xlu0 %2530, %v541
        %v2532 = vpop.permute.xlu0 %2531
        %2534 = vset.pattern.permute.xlu0 8
        %2535 = vperm.xlu0 %2534, %v542
        %v2536 = vpop.permute.xlu0 %2535
        %2538 = vset.pattern.permute.xlu0 8
        %2539 = vperm.xlu0 %2538, %v543
        %v2540 = vpop.permute.xlu0 %2539
        %2542 = vset.pattern.permute.xlu0 8
        %2543 = vperm.xlu0 %2542, %v544
        %v2544 = vpop.permute.xlu0 %2543
        %2546 = vset.pattern.permute.xlu0 8
        %2547 = vperm.xlu0 %2546, %v545
        %v2548 = vpop.permute.xlu0 %2547
        %2550 = vset.pattern.permute.xlu0 8
        %2551 = vperm.xlu0 %2550, %v546
        %v2552 = vpop.permute.xlu0 %2551
        %2554 = vset.pattern.permute.xlu0 8
        %2555 = vperm.xlu0 %2554, %v547
        %v2556 = vpop.permute.xlu0 %2555
        %2558 = vset.pattern.permute.xlu0 8
        %2559 = vperm.xlu0 %2558, %v548
        %v2560 = vpop.permute.xlu0 %2559
        %2562 = vset.pattern.permute.xlu0 8
        %2563 = vperm.xlu0 %2562, %v549
        %v2564 = vpop.permute.xlu0 %2563
        %2566 = vset.pattern.permute.xlu0 8
        %2567 = vperm.xlu0 %2566, %v550
        %v2568 = vpop.permute.xlu0 %2567
        %2570 = vset.pattern.permute.xlu0 8
        %2571 = vperm.xlu0 %2570, %v551
        %v2572 = vpop.permute.xlu0 %2571
        %2574 = vset.pattern.permute.xlu0 8
        %2575 = vperm.xlu0 %2574, %v552
        %v2576 = vpop.permute.xlu0 %2575
        %2578 = vset.pattern.permute.xlu0 8
        %2579 = vperm.xlu0 %2578, %v553
        %v2580 = vpop.permute.xlu0 %2579
        %2582 = vset.pattern.permute.xlu0 8
        %2583 = vperm.xlu0 %2582, %v554
        %v2584 = vpop.permute.xlu0 %2583
        %2586 = vset.pattern.permute.xlu0 8
        %2587 = vperm.xlu0 %2586, %v555
        %v2588 = vpop.permute.xlu0 %2587
        %2590 = vset.pattern.permute.xlu0 8
        %2591 = vperm.xlu0 %2590, %v556
        %v2592 = vpop.permute.xlu0 %2591
        %2594 = vset.pattern.permute.xlu0 8
        %2595 = vperm.xlu0 %2594, %v557
        %v2596 = vpop.permute.xlu0 %2595
        %2598 = vset.pattern.permute.xlu0 8
        %2599 = vperm.xlu0 %2598, %v558
        %v2600 = vpop.permute.xlu0 %2599
        %2602 = vset.pattern.permute.xlu0 8
        %2603 = vperm.xlu0 %2602, %v559
        %v2604 = vpop.permute.xlu0 %2603
        %2606 = vset.pattern.permute.xlu0 8
        %2607 = vperm.xlu0 %2606, %v560
        %v2608 = vpop.permute.xlu0 %2607
        %2610 = vset.pattern.permute.xlu0 8
        %2611 = vperm.xlu0 %2610, %v561
        %v2612 = vpop.permute.xlu0 %2611
        %2614 = vset.pattern.permute.xlu0 8
        %2615 = vperm.xlu0 %2614, %v562
        %v2616 = vpop.permute.xlu0 %2615
        %2618 = vset.pattern.permute.xlu0 8
        %2619 = vperm.xlu0 %2618, %v563
        %v2620 = vpop.permute.xlu0 %2619
        %2622 = vset.pattern.permute.xlu0 8
        %2623 = vperm.xlu0 %2622, %v564
        %v2624 = vpop.permute.xlu0 %2623
        %v2626 = vmul.f32 %v1694, %v2500
        %v2627 = vmul.f32 %v1693, %v2504
        %v2628 = vmul.f32 %v1692, %v2508
        %v2629 = vmul.f32 %v1691, %v2512
        %v2630 = vmul.f32 %v1690, %v2516
        %v2631 = vmul.f32 %v1689, %v2520
        %v2632 = vmul.f32 %v1688, %v2524
        %v2633 = vmul.f32 %v1687, %v2528
        %v2634 = vmul.f32 %v1686, %v2532
        %v2635 = vmul.f32 %v1685, %v2536
        %v2636 = vmul.f32 %v1684, %v2540
        %v2637 = vmul.f32 %v1683, %v2544
        %v2638 = vmul.f32 %v1682, %v2548
        %v2639 = vmul.f32 %v1681, %v2552
        %v2640 = vmul.f32 %v1680, %v2556
        %v2641 = vmul.f32 %v1679, %v2560
        %v2642 = vmul.f32 %v1678, %v2564
        %v2643 = vmul.f32 %v1677, %v2568
        %v2644 = vmul.f32 %v1676, %v2572
        %v2645 = vmul.f32 %v1675, %v2576
        %v2646 = vmul.f32 %v1674, %v2580
        %v2647 = vmul.f32 %v1673, %v2584
        %v2648 = vmul.f32 %v1672, %v2588
        %v2649 = vmul.f32 %v1671, %v2592
        %v2650 = vmul.f32 %v1670, %v2596
        %v2651 = vmul.f32 %v1669, %v2600
        %v2652 = vmul.f32 %v1668, %v2604
        %v2653 = vmul.f32 %v1667, %v2608
        %v2654 = vmul.f32 %v1666, %v2612
        %v2655 = vmul.f32 %v1697, %v2616
        %v2656 = vmul.f32 %v1696, %v2620
        %v2657 = vmul.f32 %v1695, %v2624
        %2690 = vrot.lane.b32.xlu0 %v1601, 32
        %v2691 = vpop.permute.xlu0 %2690
        %2692 = vrot.lane.b32.xlu0 %v1602, 32
        %v2693 = vpop.permute.xlu0 %2692
        %2694 = vrot.lane.b32.xlu0 %v1603, 32
        %v2695 = vpop.permute.xlu0 %2694
        %2696 = vrot.lane.b32.xlu0 %v1604, 32
        %v2697 = vpop.permute.xlu0 %2696
        %2698 = vrot.lane.b32.xlu0 %v1605, 32
        %v2699 = vpop.permute.xlu0 %2698
        %2700 = vrot.lane.b32.xlu0 %v1606, 32
        %v2701 = vpop.permute.xlu0 %2700
        %2702 = vrot.lane.b32.xlu0 %v1607, 32
        %v2703 = vpop.permute.xlu0 %2702
        %2704 = vrot.lane.b32.xlu0 %v1608, 32
        %v2705 = vpop.permute.xlu0 %2704
        %2706 = vrot.lane.b32.xlu0 %v1609, 32
        %v2707 = vpop.permute.xlu0 %2706
        %2708 = vrot.lane.b32.xlu0 %v1610, 32
        %v2709 = vpop.permute.xlu0 %2708
        %2710 = vrot.lane.b32.xlu0 %v1611, 32
        %v2711 = vpop.permute.xlu0 %2710
        %2712 = vrot.lane.b32.xlu0 %v1612, 32
        %v2713 = vpop.permute.xlu0 %2712
        %2714 = vrot.lane.b32.xlu0 %v1613, 32
        %v2715 = vpop.permute.xlu0 %2714
        %2716 = vrot.lane.b32.xlu0 %v1614, 32
        %v2717 = vpop.permute.xlu0 %2716
        %2718 = vrot.lane.b32.xlu0 %v1615, 32
        %v2719 = vpop.permute.xlu0 %2718
        %2720 = vrot.lane.b32.xlu0 %v1616, 32
        %v2721 = vpop.permute.xlu0 %2720
        %2722 = vrot.lane.b32.xlu0 %v1617, 32
        %v2723 = vpop.permute.xlu0 %2722
        %2724 = vrot.lane.b32.xlu0 %v1618, 32
        %v2725 = vpop.permute.xlu0 %2724
        %2726 = vrot.lane.b32.xlu0 %v1619, 32
        %v2727 = vpop.permute.xlu0 %2726
        %2728 = vrot.lane.b32.xlu0 %v1620, 32
        %v2729 = vpop.permute.xlu0 %2728
        %2730 = vrot.lane.b32.xlu0 %v1621, 32
        %v2731 = vpop.permute.xlu0 %2730
        %2732 = vrot.lane.b32.xlu0 %v1622, 32
        %v2733 = vpop.permute.xlu0 %2732
        %2734 = vrot.lane.b32.xlu0 %v1623, 32
        %v2735 = vpop.permute.xlu0 %2734
        %2736 = vrot.lane.b32.xlu0 %v1624, 32
        %v2737 = vpop.permute.xlu0 %2736
        %2738 = vrot.lane.b32.xlu0 %v1625, 32
        %v2739 = vpop.permute.xlu0 %2738
        %2740 = vrot.lane.b32.xlu0 %v1626, 32
        %v2741 = vpop.permute.xlu0 %2740
        %2742 = vrot.lane.b32.xlu0 %v1627, 32
        %v2743 = vpop.permute.xlu0 %2742
        %2744 = vrot.lane.b32.xlu0 %v1628, 32
        %v2745 = vpop.permute.xlu0 %2744
        %2746 = vrot.lane.b32.xlu0 %v1629, 32
        %v2747 = vpop.permute.xlu0 %2746
        %2748 = vrot.lane.b32.xlu0 %v1630, 32
        %v2749 = vpop.permute.xlu0 %2748
        %2750 = vrot.lane.b32.xlu0 %v1631, 32
        %v2751 = vpop.permute.xlu0 %2750
        %2752 = vrot.lane.b32.xlu0 %v1632, 32
        %v2753 = vpop.permute.xlu0 %2752
        %2818 = vrot.lane.b32.xlu0 %v1826, 64
        %v2819 = vpop.permute.xlu0 %2818
        %2820 = vrot.lane.b32.xlu0 %v1827, 64
        %v2821 = vpop.permute.xlu0 %2820
        %2822 = vrot.lane.b32.xlu0 %v1828, 64
        %v2823 = vpop.permute.xlu0 %2822
        %2824 = vrot.lane.b32.xlu0 %v1829, 64
        %v2825 = vpop.permute.xlu0 %2824
        %2826 = vrot.lane.b32.xlu0 %v1830, 64
        %v2827 = vpop.permute.xlu0 %2826
        %2828 = vrot.lane.b32.xlu0 %v1831, 64
        %v2829 = vpop.permute.xlu0 %2828
        %2830 = vrot.lane.b32.xlu0 %v1832, 64
        %v2831 = vpop.permute.xlu0 %2830
        %2832 = vrot.lane.b32.xlu0 %v1833, 64
        %v2833 = vpop.permute.xlu0 %2832
        %2834 = vrot.lane.b32.xlu0 %v1834, 64
        %v2835 = vpop.permute.xlu0 %2834
        %2836 = vrot.lane.b32.xlu0 %v1835, 64
        %v2837 = vpop.permute.xlu0 %2836
        %2838 = vrot.lane.b32.xlu0 %v1836, 64
        %v2839 = vpop.permute.xlu0 %2838
        %2840 = vrot.lane.b32.xlu0 %v1837, 64
        %v2841 = vpop.permute.xlu0 %2840
        %2842 = vrot.lane.b32.xlu0 %v1838, 64
        %v2843 = vpop.permute.xlu0 %2842
        %2844 = vrot.lane.b32.xlu0 %v1839, 64
        %v2845 = vpop.permute.xlu0 %2844
        %2846 = vrot.lane.b32.xlu0 %v1840, 64
        %v2847 = vpop.permute.xlu0 %2846
        %2848 = vrot.lane.b32.xlu0 %v1841, 64
        %v2849 = vpop.permute.xlu0 %2848
        %2850 = vrot.lane.b32.xlu0 %v1842, 64
        %v2851 = vpop.permute.xlu0 %2850
        %2852 = vrot.lane.b32.xlu0 %v1843, 64
        %v2853 = vpop.permute.xlu0 %2852
        %2854 = vrot.lane.b32.xlu0 %v1844, 64
        %v2855 = vpop.permute.xlu0 %2854
        %2856 = vrot.lane.b32.xlu0 %v1845, 64
        %v2857 = vpop.permute.xlu0 %2856
        %2858 = vrot.lane.b32.xlu0 %v1846, 64
        %v2859 = vpop.permute.xlu0 %2858
        %2860 = vrot.lane.b32.xlu0 %v1847, 64
        %v2861 = vpop.permute.xlu0 %2860
        %2862 = vrot.lane.b32.xlu0 %v1848, 64
        %v2863 = vpop.permute.xlu0 %2862
        %2864 = vrot.lane.b32.xlu0 %v1849, 64
        %v2865 = vpop.permute.xlu0 %2864
        %2866 = vrot.lane.b32.xlu0 %v1850, 64
        %v2867 = vpop.permute.xlu0 %2866
        %2868 = vrot.lane.b32.xlu0 %v1851, 64
        %v2869 = vpop.permute.xlu0 %2868
        %2870 = vrot.lane.b32.xlu0 %v1852, 64
        %v2871 = vpop.permute.xlu0 %2870
        %2872 = vrot.lane.b32.xlu0 %v1853, 64
        %v2873 = vpop.permute.xlu0 %2872
        %2874 = vrot.lane.b32.xlu0 %v1854, 64
        %v2875 = vpop.permute.xlu0 %2874
        %2876 = vrot.lane.b32.xlu0 %v1855, 64
        %v2877 = vpop.permute.xlu0 %2876
        %2878 = vrot.lane.b32.xlu0 %v1856, 64
        %v2879 = vpop.permute.xlu0 %2878
        %2880 = vrot.lane.b32.xlu0 %v1857, 64
        %v2881 = vpop.permute.xlu0 %2880
        %2946 = vrot.lane.b32.xlu0 %v1986, 96
        %v2947 = vpop.permute.xlu0 %2946
        %2948 = vrot.lane.b32.xlu0 %v1987, 96
        %v2949 = vpop.permute.xlu0 %2948
        %2950 = vrot.lane.b32.xlu0 %v1988, 96
        %v2951 = vpop.permute.xlu0 %2950
        %2952 = vrot.lane.b32.xlu0 %v1989, 96
        %v2953 = vpop.permute.xlu0 %2952
        %2954 = vrot.lane.b32.xlu0 %v1990, 96
        %v2955 = vpop.permute.xlu0 %2954
        %2956 = vrot.lane.b32.xlu0 %v1991, 96
        %v2957 = vpop.permute.xlu0 %2956
        %2958 = vrot.lane.b32.xlu0 %v1992, 96
        %v2959 = vpop.permute.xlu0 %2958
        %2960 = vrot.lane.b32.xlu0 %v1993, 96
        %v2961 = vpop.permute.xlu0 %2960
        %2962 = vrot.lane.b32.xlu0 %v1994, 96
        %v2963 = vpop.permute.xlu0 %2962
        %2964 = vrot.lane.b32.xlu0 %v1995, 96
        %v2965 = vpop.permute.xlu0 %2964
        %2966 = vrot.lane.b32.xlu0 %v1996, 96
        %v2967 = vpop.permute.xlu0 %2966
        %2968 = vrot.lane.b32.xlu0 %v1997, 96
        %v2969 = vpop.permute.xlu0 %2968
        %2970 = vrot.lane.b32.xlu0 %v1998, 96
        %v2971 = vpop.permute.xlu0 %2970
        %2972 = vrot.lane.b32.xlu0 %v1999, 96
        %v2973 = vpop.permute.xlu0 %2972
        %2974 = vrot.lane.b32.xlu0 %v2000, 96
        %v2975 = vpop.permute.xlu0 %2974
        %2976 = vrot.lane.b32.xlu0 %v2001, 96
        %v2977 = vpop.permute.xlu0 %2976
        %2978 = vrot.lane.b32.xlu0 %v2002, 96
        %v2979 = vpop.permute.xlu0 %2978
        %2980 = vrot.lane.b32.xlu0 %v2003, 96
        %v2981 = vpop.permute.xlu0 %2980
        %2982 = vrot.lane.b32.xlu0 %v2004, 96
        %v2983 = vpop.permute.xlu0 %2982
        %2984 = vrot.lane.b32.xlu0 %v2005, 96
        %v2985 = vpop.permute.xlu0 %2984
        %2986 = vrot.lane.b32.xlu0 %v2006, 96
        %v2987 = vpop.permute.xlu0 %2986
        %2988 = vrot.lane.b32.xlu0 %v2007, 96
        %v2989 = vpop.permute.xlu0 %2988
        %2990 = vrot.lane.b32.xlu0 %v2008, 96
        %v2991 = vpop.permute.xlu0 %2990
        %2992 = vrot.lane.b32.xlu0 %v2009, 96
        %v2993 = vpop.permute.xlu0 %2992
        %2994 = vrot.lane.b32.xlu0 %v2010, 96
        %v2995 = vpop.permute.xlu0 %2994
        %2996 = vrot.lane.b32.xlu0 %v2011, 96
        %v2997 = vpop.permute.xlu0 %2996
        %2998 = vrot.lane.b32.xlu0 %v2012, 96
        %v2999 = vpop.permute.xlu0 %2998
        %3000 = vrot.lane.b32.xlu0 %v2013, 96
        %v3001 = vpop.permute.xlu0 %3000
        %3002 = vrot.lane.b32.xlu0 %v2014, 96
        %v3003 = vpop.permute.xlu0 %3002
        %3004 = vrot.lane.b32.xlu0 %v2015, 96
        %v3005 = vpop.permute.xlu0 %3004
        %3006 = vrot.lane.b32.xlu0 %v2016, 96
        %v3007 = vpop.permute.xlu0 %3006
        %3008 = vrot.lane.b32.xlu0 %v2017, 96
        %v3009 = vpop.permute.xlu0 %3008
        %3074 = vrot.lane.b32.xlu0 %v2146, 32
        %v3075 = vpop.permute.xlu0 %3074
        %3076 = vrot.lane.b32.xlu0 %v2147, 32
        %v3077 = vpop.permute.xlu0 %3076
        %3078 = vrot.lane.b32.xlu0 %v2148, 32
        %v3079 = vpop.permute.xlu0 %3078
        %3080 = vrot.lane.b32.xlu0 %v2149, 32
        %v3081 = vpop.permute.xlu0 %3080
        %3082 = vrot.lane.b32.xlu0 %v2150, 32
        %v3083 = vpop.permute.xlu0 %3082
        %3084 = vrot.lane.b32.xlu0 %v2151, 32
        %v3085 = vpop.permute.xlu0 %3084
        %3086 = vrot.lane.b32.xlu0 %v2152, 32
        %v3087 = vpop.permute.xlu0 %3086
        %3088 = vrot.lane.b32.xlu0 %v2153, 32
        %v3089 = vpop.permute.xlu0 %3088
        %3090 = vrot.lane.b32.xlu0 %v2154, 32
        %v3091 = vpop.permute.xlu0 %3090
        %3092 = vrot.lane.b32.xlu0 %v2155, 32
        %v3093 = vpop.permute.xlu0 %3092
        %3094 = vrot.lane.b32.xlu0 %v2156, 32
        %v3095 = vpop.permute.xlu0 %3094
        %3096 = vrot.lane.b32.xlu0 %v2157, 32
        %v3097 = vpop.permute.xlu0 %3096
        %3098 = vrot.lane.b32.xlu0 %v2158, 32
        %v3099 = vpop.permute.xlu0 %3098
        %3100 = vrot.lane.b32.xlu0 %v2159, 32
        %v3101 = vpop.permute.xlu0 %3100
        %3102 = vrot.lane.b32.xlu0 %v2160, 32
        %v3103 = vpop.permute.xlu0 %3102
        %3104 = vrot.lane.b32.xlu0 %v2161, 32
        %v3105 = vpop.permute.xlu0 %3104
        %3106 = vrot.lane.b32.xlu0 %v2162, 32
        %v3107 = vpop.permute.xlu0 %3106
        %3108 = vrot.lane.b32.xlu0 %v2163, 32
        %v3109 = vpop.permute.xlu0 %3108
        %3110 = vrot.lane.b32.xlu0 %v2164, 32
        %v3111 = vpop.permute.xlu0 %3110
        %3112 = vrot.lane.b32.xlu0 %v2165, 32
        %v3113 = vpop.permute.xlu0 %3112
        %3114 = vrot.lane.b32.xlu0 %v2166, 32
        %v3115 = vpop.permute.xlu0 %3114
        %3116 = vrot.lane.b32.xlu0 %v2167, 32
        %v3117 = vpop.permute.xlu0 %3116
        %3118 = vrot.lane.b32.xlu0 %v2168, 32
        %v3119 = vpop.permute.xlu0 %3118
        %3120 = vrot.lane.b32.xlu0 %v2169, 32
        %v3121 = vpop.permute.xlu0 %3120
        %3122 = vrot.lane.b32.xlu0 %v2170, 32
        %v3123 = vpop.permute.xlu0 %3122
        %3124 = vrot.lane.b32.xlu0 %v2171, 32
        %v3125 = vpop.permute.xlu0 %3124
        %3126 = vrot.lane.b32.xlu0 %v2172, 32
        %v3127 = vpop.permute.xlu0 %3126
        %3128 = vrot.lane.b32.xlu0 %v2173, 32
        %v3129 = vpop.permute.xlu0 %3128
        %3130 = vrot.lane.b32.xlu0 %v2174, 32
        %v3131 = vpop.permute.xlu0 %3130
        %3132 = vrot.lane.b32.xlu0 %v2175, 32
        %v3133 = vpop.permute.xlu0 %3132
        %3134 = vrot.lane.b32.xlu0 %v2176, 32
        %v3135 = vpop.permute.xlu0 %3134
        %3136 = vrot.lane.b32.xlu0 %v2177, 32
        %v3137 = vpop.permute.xlu0 %3136
        %3202 = vrot.lane.b32.xlu0 %v2306, 64
        %v3203 = vpop.permute.xlu0 %3202
        %3204 = vrot.lane.b32.xlu0 %v2307, 64
        %v3205 = vpop.permute.xlu0 %3204
        %3206 = vrot.lane.b32.xlu0 %v2308, 64
        %v3207 = vpop.permute.xlu0 %3206
        %3208 = vrot.lane.b32.xlu0 %v2309, 64
        %v3209 = vpop.permute.xlu0 %3208
        %3210 = vrot.lane.b32.xlu0 %v2310, 64
        %v3211 = vpop.permute.xlu0 %3210
        %3212 = vrot.lane.b32.xlu0 %v2311, 64
        %v3213 = vpop.permute.xlu0 %3212
        %3214 = vrot.lane.b32.xlu0 %v2312, 64
        %v3215 = vpop.permute.xlu0 %3214
        %3216 = vrot.lane.b32.xlu0 %v2313, 64
        %v3217 = vpop.permute.xlu0 %3216
        %3218 = vrot.lane.b32.xlu0 %v2314, 64
        %v3219 = vpop.permute.xlu0 %3218
        %3220 = vrot.lane.b32.xlu0 %v2315, 64
        %v3221 = vpop.permute.xlu0 %3220
        %3222 = vrot.lane.b32.xlu0 %v2316, 64
        %v3223 = vpop.permute.xlu0 %3222
        %3224 = vrot.lane.b32.xlu0 %v2317, 64
        %v3225 = vpop.permute.xlu0 %3224
        %3226 = vrot.lane.b32.xlu0 %v2318, 64
        %v3227 = vpop.permute.xlu0 %3226
        %3228 = vrot.lane.b32.xlu0 %v2319, 64
        %v3229 = vpop.permute.xlu0 %3228
        %3230 = vrot.lane.b32.xlu0 %v2320, 64
        %v3231 = vpop.permute.xlu0 %3230
        %3232 = vrot.lane.b32.xlu0 %v2321, 64
        %v3233 = vpop.permute.xlu0 %3232
        %3234 = vrot.lane.b32.xlu0 %v2322, 64
        %v3235 = vpop.permute.xlu0 %3234
        %3236 = vrot.lane.b32.xlu0 %v2323, 64
        %v3237 = vpop.permute.xlu0 %3236
        %3238 = vrot.lane.b32.xlu0 %v2324, 64
        %v3239 = vpop.permute.xlu0 %3238
        %3240 = vrot.lane.b32.xlu0 %v2325, 64
        %v3241 = vpop.permute.xlu0 %3240
        %3242 = vrot.lane.b32.xlu0 %v2326, 64
        %v3243 = vpop.permute.xlu0 %3242
        %3244 = vrot.lane.b32.xlu0 %v2327, 64
        %v3245 = vpop.permute.xlu0 %3244
        %3246 = vrot.lane.b32.xlu0 %v2328, 64
        %v3247 = vpop.permute.xlu0 %3246
        %3248 = vrot.lane.b32.xlu0 %v2329, 64
        %v3249 = vpop.permute.xlu0 %3248
        %3250 = vrot.lane.b32.xlu0 %v2330, 64
        %v3251 = vpop.permute.xlu0 %3250
        %3252 = vrot.lane.b32.xlu0 %v2331, 64
        %v3253 = vpop.permute.xlu0 %3252
        %3254 = vrot.lane.b32.xlu0 %v2332, 64
        %v3255 = vpop.permute.xlu0 %3254
        %3256 = vrot.lane.b32.xlu0 %v2333, 64
        %v3257 = vpop.permute.xlu0 %3256
        %3258 = vrot.lane.b32.xlu0 %v2334, 64
        %v3259 = vpop.permute.xlu0 %3258
        %3260 = vrot.lane.b32.xlu0 %v2335, 64
        %v3261 = vpop.permute.xlu0 %3260
        %3262 = vrot.lane.b32.xlu0 %v2336, 64
        %v3263 = vpop.permute.xlu0 %3262
        %3264 = vrot.lane.b32.xlu0 %v2337, 64
        %v3265 = vpop.permute.xlu0 %3264
        %3330 = vrot.lane.b32.xlu0 %v2466, 96
        %v3331 = vpop.permute.xlu0 %3330
        %3332 = vrot.lane.b32.xlu0 %v2467, 96
        %v3333 = vpop.permute.xlu0 %3332
        %3334 = vrot.lane.b32.xlu0 %v2468, 96
        %v3335 = vpop.permute.xlu0 %3334
        %3336 = vrot.lane.b32.xlu0 %v2469, 96
        %v3337 = vpop.permute.xlu0 %3336
        %3338 = vrot.lane.b32.xlu0 %v2470, 96
        %v3339 = vpop.permute.xlu0 %3338
        %3340 = vrot.lane.b32.xlu0 %v2471, 96
        %v3341 = vpop.permute.xlu0 %3340
        %3342 = vrot.lane.b32.xlu0 %v2472, 96
        %v3343 = vpop.permute.xlu0 %3342
        %3344 = vrot.lane.b32.xlu0 %v2473, 96
        %v3345 = vpop.permute.xlu0 %3344
        %3346 = vrot.lane.b32.xlu0 %v2474, 96
        %v3347 = vpop.permute.xlu0 %3346
        %3348 = vrot.lane.b32.xlu0 %v2475, 96
        %v3349 = vpop.permute.xlu0 %3348
        %3350 = vrot.lane.b32.xlu0 %v2476, 96
        %v3351 = vpop.permute.xlu0 %3350
        %3352 = vrot.lane.b32.xlu0 %v2477, 96
        %v3353 = vpop.permute.xlu0 %3352
        %3354 = vrot.lane.b32.xlu0 %v2478, 96
        %v3355 = vpop.permute.xlu0 %3354
        %3356 = vrot.lane.b32.xlu0 %v2479, 96
        %v3357 = vpop.permute.xlu0 %3356
        %3358 = vrot.lane.b32.xlu0 %v2480, 96
        %v3359 = vpop.permute.xlu0 %3358
        %3360 = vrot.lane.b32.xlu0 %v2481, 96
        %v3361 = vpop.permute.xlu0 %3360
        %3362 = vrot.lane.b32.xlu0 %v2482, 96
        %v3363 = vpop.permute.xlu0 %3362
        %3364 = vrot.lane.b32.xlu0 %v2483, 96
        %v3365 = vpop.permute.xlu0 %3364
        %3366 = vrot.lane.b32.xlu0 %v2484, 96
        %v3367 = vpop.permute.xlu0 %3366
        %3368 = vrot.lane.b32.xlu0 %v2485, 96
        %v3369 = vpop.permute.xlu0 %3368
        %3370 = vrot.lane.b32.xlu0 %v2486, 96
        %v3371 = vpop.permute.xlu0 %3370
        %3372 = vrot.lane.b32.xlu0 %v2487, 96
        %v3373 = vpop.permute.xlu0 %3372
        %3374 = vrot.lane.b32.xlu0 %v2488, 96
        %v3375 = vpop.permute.xlu0 %3374
        %3376 = vrot.lane.b32.xlu0 %v2489, 96
        %v3377 = vpop.permute.xlu0 %3376
        %3378 = vrot.lane.b32.xlu0 %v2490, 96
        %v3379 = vpop.permute.xlu0 %3378
        %3380 = vrot.lane.b32.xlu0 %v2491, 96
        %v3381 = vpop.permute.xlu0 %3380
        %3382 = vrot.lane.b32.xlu0 %v2492, 96
        %v3383 = vpop.permute.xlu0 %3382
        %3384 = vrot.lane.b32.xlu0 %v2493, 96
        %v3385 = vpop.permute.xlu0 %3384
        %3386 = vrot.lane.b32.xlu0 %v2494, 96
        %v3387 = vpop.permute.xlu0 %3386
        %3388 = vrot.lane.b32.xlu0 %v2495, 96
        %v3389 = vpop.permute.xlu0 %3388
        %3390 = vrot.lane.b32.xlu0 %v2496, 96
        %v3391 = vpop.permute.xlu0 %3390
        %3392 = vrot.lane.b32.xlu0 %v2497, 96
        %v3393 = vpop.permute.xlu0 %3392
        %v3426 = vsel %vm575, %v1441, %v2691
        %v3427 = vsel %vm575, %v1442, %v2693
        %v3428 = vsel %vm575, %v1443, %v2695
        %v3429 = vsel %vm575, %v1444, %v2697
        %v3430 = vsel %vm575, %v1445, %v2699
        %v3431 = vsel %vm575, %v1446, %v2701
        %v3432 = vsel %vm575, %v1447, %v2703
        %v3433 = vsel %vm575, %v1448, %v2705
        %v3434 = vsel %vm575, %v1449, %v2707
        %v3435 = vsel %vm575, %v1450, %v2709
        %v3436 = vsel %vm575, %v1451, %v2711
        %v3437 = vsel %vm575, %v1452, %v2713
        %v3438 = vsel %vm575, %v1453, %v2715
        %v3439 = vsel %vm575, %v1454, %v2717
        %v3440 = vsel %vm575, %v1455, %v2719
        %v3441 = vsel %vm575, %v1456, %v2721
        %v3442 = vsel %vm575, %v1457, %v2723
        %v3443 = vsel %vm575, %v1458, %v2725
        %v3444 = vsel %vm575, %v1459, %v2727
        %v3445 = vsel %vm575, %v1460, %v2729
        %v3446 = vsel %vm575, %v1461, %v2731
        %v3447 = vsel %vm575, %v1462, %v2733
        %v3448 = vsel %vm575, %v1463, %v2735
        %v3449 = vsel %vm575, %v1464, %v2737
        %v3450 = vsel %vm575, %v1465, %v2739
        %v3451 = vsel %vm575, %v1466, %v2741
        %v3452 = vsel %vm575, %v1467, %v2743
        %v3453 = vsel %vm575, %v1468, %v2745
        %v3454 = vsel %vm575, %v1469, %v2747
        %v3455 = vsel %vm575, %v1470, %v2749
        %v3456 = vsel %vm575, %v1471, %v2751
        %v3457 = vsel %vm575, %v1472, %v2753
        %vm3458 = vcmask 523264
        %v3459 = vsel %vm3458, %v3426, %v2819
        %v3460 = vsel %vm3458, %v3427, %v2821
        %v3461 = vsel %vm3458, %v3428, %v2823
        %v3462 = vsel %vm3458, %v3429, %v2825
        %v3463 = vsel %vm3458, %v3430, %v2827
        %v3464 = vsel %vm3458, %v3431, %v2829
        %v3465 = vsel %vm3458, %v3432, %v2831
        %v3466 = vsel %vm3458, %v3433, %v2833
        %v3467 = vsel %vm3458, %v3434, %v2835
        %v3468 = vsel %vm3458, %v3435, %v2837
        %v3469 = vsel %vm3458, %v3436, %v2839
        %v3470 = vsel %vm3458, %v3437, %v2841
        %v3471 = vsel %vm3458, %v3438, %v2843
        %v3472 = vsel %vm3458, %v3439, %v2845
        %v3473 = vsel %vm3458, %v3440, %v2847
        %v3474 = vsel %vm3458, %v3441, %v2849
        %v3475 = vsel %vm3458, %v3442, %v2851
        %v3476 = vsel %vm3458, %v3443, %v2853
        %v3477 = vsel %vm3458, %v3444, %v2855
        %v3478 = vsel %vm3458, %v3445, %v2857
        %v3479 = vsel %vm3458, %v3446, %v2859
        %v3480 = vsel %vm3458, %v3447, %v2861
        %v3481 = vsel %vm3458, %v3448, %v2863
        %v3482 = vsel %vm3458, %v3449, %v2865
        %v3483 = vsel %vm3458, %v3450, %v2867
        %v3484 = vsel %vm3458, %v3451, %v2869
        %v3485 = vsel %vm3458, %v3452, %v2871
        %v3486 = vsel %vm3458, %v3453, %v2873
        %v3487 = vsel %vm3458, %v3454, %v2875
        %v3488 = vsel %vm3458, %v3455, %v2877
        %v3489 = vsel %vm3458, %v3456, %v2879
        %v3490 = vsel %vm3458, %v3457, %v2881
        %vm3491 = vcmask 785408
        %v3492 = vsel %vm3491, %v3459, %v2947
        %v3493 = vsel %vm3491, %v3460, %v2949
        %v3494 = vsel %vm3491, %v3461, %v2951
        %v3495 = vsel %vm3491, %v3462, %v2953
        %v3496 = vsel %vm3491, %v3463, %v2955
        %v3497 = vsel %vm3491, %v3464, %v2957
        %v3498 = vsel %vm3491, %v3465, %v2959
        %v3499 = vsel %vm3491, %v3466, %v2961
        %v3500 = vsel %vm3491, %v3467, %v2963
        %v3501 = vsel %vm3491, %v3468, %v2965
        %v3502 = vsel %vm3491, %v3469, %v2967
        %v3503 = vsel %vm3491, %v3470, %v2969
        %v3504 = vsel %vm3491, %v3471, %v2971
        %v3505 = vsel %vm3491, %v3472, %v2973
        %v3506 = vsel %vm3491, %v3473, %v2975
        %v3507 = vsel %vm3491, %v3474, %v2977
        %v3508 = vsel %vm3491, %v3475, %v2979
        %v3509 = vsel %vm3491, %v3476, %v2981
        %v3510 = vsel %vm3491, %v3477, %v2983
        %v3511 = vsel %vm3491, %v3478, %v2985
        %v3512 = vsel %vm3491, %v3479, %v2987
        %v3513 = vsel %vm3491, %v3480, %v2989
        %v3514 = vsel %vm3491, %v3481, %v2991
        %v3515 = vsel %vm3491, %v3482, %v2993
        %v3516 = vsel %vm3491, %v3483, %v2995
        %v3517 = vsel %vm3491, %v3484, %v2997
        %v3518 = vsel %vm3491, %v3485, %v2999
        %v3519 = vsel %vm3491, %v3486, %v3001
        %v3520 = vsel %vm3491, %v3487, %v3003
        %v3521 = vsel %vm3491, %v3488, %v3005
        %v3522 = vsel %vm3491, %v3489, %v3007
        %v3523 = vsel %vm3491, %v3490, %v3009
        %v3524 = vsel %vm575, %v1181, %v3075
        %v3525 = vsel %vm575, %v1182, %v3077
        %v3526 = vsel %vm575, %v1183, %v3079
        %v3527 = vsel %vm575, %v1184, %v3081
        %v3528 = vsel %vm575, %v1185, %v3083
        %v3529 = vsel %vm575, %v1186, %v3085
        %v3530 = vsel %vm575, %v1187, %v3087
        %v3531 = vsel %vm575, %v1188, %v3089
        %v3532 = vsel %vm575, %v1189, %v3091
        %v3533 = vsel %vm575, %v1190, %v3093
        %v3534 = vsel %vm575, %v1191, %v3095
        %v3535 = vsel %vm575, %v1192, %v3097
        %v3536 = vsel %vm575, %v1193, %v3099
        %v3537 = vsel %vm575, %v1194, %v3101
        %v3538 = vsel %vm575, %v1195, %v3103
        %v3539 = vsel %vm575, %v1196, %v3105
        %v3540 = vsel %vm575, %v1197, %v3107
        %v3541 = vsel %vm575, %v1198, %v3109
        %v3542 = vsel %vm575, %v1199, %v3111
        %v3543 = vsel %vm575, %v1200, %v3113
        %v3544 = vsel %vm575, %v1201, %v3115
        %v3545 = vsel %vm575, %v1202, %v3117
        %v3546 = vsel %vm575, %v1203, %v3119
        %v3547 = vsel %vm575, %v1204, %v3121
        %v3548 = vsel %vm575, %v1205, %v3123
        %v3549 = vsel %vm575, %v1206, %v3125
        %v3550 = vsel %vm575, %v1207, %v3127
        %v3551 = vsel %vm575, %v1208, %v3129
        %v3552 = vsel %vm575, %v1209, %v3131
        %v3553 = vsel %vm575, %v1210, %v3133
        %v3554 = vsel %vm575, %v1211, %v3135
        %v3555 = vsel %vm575, %v1212, %v3137
        %v3556 = vsel %vm3458, %v3524, %v3203
        %v3557 = vsel %vm3458, %v3525, %v3205
        %v3558 = vsel %vm3458, %v3526, %v3207
        %v3559 = vsel %vm3458, %v3527, %v3209
        %v3560 = vsel %vm3458, %v3528, %v3211
        %v3561 = vsel %vm3458, %v3529, %v3213
        %v3562 = vsel %vm3458, %v3530, %v3215
        %v3563 = vsel %vm3458, %v3531, %v3217
        %v3564 = vsel %vm3458, %v3532, %v3219
        %v3565 = vsel %vm3458, %v3533, %v3221
        %v3566 = vsel %vm3458, %v3534, %v3223
        %v3567 = vsel %vm3458, %v3535, %v3225
        %v3568 = vsel %vm3458, %v3536, %v3227
        %v3569 = vsel %vm3458, %v3537, %v3229
        %v3570 = vsel %vm3458, %v3538, %v3231
        %v3571 = vsel %vm3458, %v3539, %v3233
        %v3572 = vsel %vm3458, %v3540, %v3235
        %v3573 = vsel %vm3458, %v3541, %v3237
        %v3574 = vsel %vm3458, %v3542, %v3239
        %v3575 = vsel %vm3458, %v3543, %v3241
        %v3576 = vsel %vm3458, %v3544, %v3243
        %v3577 = vsel %vm3458, %v3545, %v3245
        %v3578 = vsel %vm3458, %v3546, %v3247
        %v3579 = vsel %vm3458, %v3547, %v3249
        %v3580 = vsel %vm3458, %v3548, %v3251
        %v3581 = vsel %vm3458, %v3549, %v3253
        %v3582 = vsel %vm3458, %v3550, %v3255
        %v3583 = vsel %vm3458, %v3551, %v3257
        %v3584 = vsel %vm3458, %v3552, %v3259
        %v3585 = vsel %vm3458, %v3553, %v3261
        %v3586 = vsel %vm3458, %v3554, %v3263
        %v3587 = vsel %vm3458, %v3555, %v3265
        %v3588 = vsel %vm3491, %v3556, %v3331
        %v3589 = vsel %vm3491, %v3557, %v3333
        %v3590 = vsel %vm3491, %v3558, %v3335
        %v3591 = vsel %vm3491, %v3559, %v3337
        %v3592 = vsel %vm3491, %v3560, %v3339
        %v3593 = vsel %vm3491, %v3561, %v3341
        %v3594 = vsel %vm3491, %v3562, %v3343
        %v3595 = vsel %vm3491, %v3563, %v3345
        %v3596 = vsel %vm3491, %v3564, %v3347
        %v3597 = vsel %vm3491, %v3565, %v3349
        %v3598 = vsel %vm3491, %v3566, %v3351
        %v3599 = vsel %vm3491, %v3567, %v3353
        %v3600 = vsel %vm3491, %v3568, %v3355
        %v3601 = vsel %vm3491, %v3569, %v3357
        %v3602 = vsel %vm3491, %v3570, %v3359
        %v3603 = vsel %vm3491, %v3571, %v3361
        %v3604 = vsel %vm3491, %v3572, %v3363
        %v3605 = vsel %vm3491, %v3573, %v3365
        %v3606 = vsel %vm3491, %v3574, %v3367
        %v3607 = vsel %vm3491, %v3575, %v3369
        %v3608 = vsel %vm3491, %v3576, %v3371
        %v3609 = vsel %vm3491, %v3577, %v3373
        %v3610 = vsel %vm3491, %v3578, %v3375
        %v3611 = vsel %vm3491, %v3579, %v3377
        %v3612 = vsel %vm3491, %v3580, %v3379
        %v3613 = vsel %vm3491, %v3581, %v3381
        %v3614 = vsel %vm3491, %v3582, %v3383
        %v3615 = vsel %vm3491, %v3583, %v3385
        %v3616 = vsel %vm3491, %v3584, %v3387
        %v3617 = vsel %vm3491, %v3585, %v3389
        %v3618 = vsel %vm3491, %v3586, %v3391
        %v3619 = vsel %vm3491, %v3587, %v3393
        %v3620 = vld [vmem:[%s6] sm:$0xff]
        %v3621 = vld [vmem:[%s6 + $0x8] sm:$0xff]
        %v3622 = vld [vmem:[%s6 + $0x10] sm:$0xff]
        %v3623 = vld [vmem:[%s6 + $0x18] sm:$0xff]
        %v3624 = vld [vmem:[%s6 + $0x20] sm:$0xff]
        %v3625 = vld [vmem:[%s6 + $0x28] sm:$0xff]
        %v3626 = vld [vmem:[%s6 + $0x30] sm:$0xff]
        %v3627 = vld [vmem:[%s6 + $0x38] sm:$0xff]
        %v3628 = vld [vmem:[%s6 + $0x40] sm:$0xff]
        %v3629 = vld [vmem:[%s6 + $0x48] sm:$0xff]
        %v3630 = vld [vmem:[%s6 + $0x50] sm:$0xff]
        %v3631 = vld [vmem:[%s6 + $0x58] sm:$0xff]
        %v3632 = vld [vmem:[%s6 + $0x60] sm:$0xff]
        %v3633 = vld [vmem:[%s6 + $0x68] sm:$0xff]
        %v3634 = vld [vmem:[%s6 + $0x70] sm:$0xff]
        %v3635 = vld [vmem:[%s6 + $0x78] sm:$0xff]
        %v3636 = vld [vmem:[%s6 + $0x80] sm:$0xff]
        %v3637 = vld [vmem:[%s6 + $0x88] sm:$0xff]
        %v3638 = vld [vmem:[%s6 + $0x90] sm:$0xff]
        %v3639 = vld [vmem:[%s6 + $0x98] sm:$0xff]
        %v3640 = vld [vmem:[%s6 + $0xa0] sm:$0xff]
        %v3641 = vld [vmem:[%s6 + $0xa8] sm:$0xff]
        %v3642 = vld [vmem:[%s6 + $0xb0] sm:$0xff]
        %v3643 = vld [vmem:[%s6 + $0xb8] sm:$0xff]
        %v3644 = vld [vmem:[%s6 + $0xc0] sm:$0xff]
        %v3645 = vld [vmem:[%s6 + $0xc8] sm:$0xff]
        %v3646 = vld [vmem:[%s6 + $0xd0] sm:$0xff]
        %v3647 = vld [vmem:[%s6 + $0xd8] sm:$0xff]
        %v3648 = vld [vmem:[%s6 + $0xe0] sm:$0xff]
        %v3649 = vld [vmem:[%s6 + $0xe8] sm:$0xff]
        %v3650 = vld [vmem:[%s6 + $0xf0] sm:$0xff]
        %v3651 = vld [vmem:[%s6 + $0xf8] sm:$0xff]
        %v3652 = vld [vmem:[%s6 + $0x100] sm:$0xff]
        %v3653 = vld [vmem:[%s6 + $0x108] sm:$0xff]
        %v3654 = vld [vmem:[%s6 + $0x110] sm:$0xff]
        %v3655 = vld [vmem:[%s6 + $0x118] sm:$0xff]
        %v3657 = vlaneseq
        %v3658 = vshrl.u32 %v3657, 7
        %v3659 = vsub.s32 0, %v3658
        %v3660 = vrot.slane %v1213, %v3659
        %v3663 = vsel %vm575, %v2626, 0
        %v3666 = vsel %vm575, %v2627, 0
        %v3669 = vsel %vm575, %v2628, 0
        %v3672 = vsel %vm575, %v2629, 0
        %v3675 = vsel %vm575, %v2630, 0
        %v3678 = vsel %vm575, %v2631, 0
        %v3681 = vsel %vm575, %v2632, 0
        %v3684 = vsel %vm575, %v2633, 0
        %v3687 = vsel %vm575, %v2634, 0
        %v3690 = vsel %vm575, %v2635, 0
        %v3693 = vsel %vm575, %v2636, 0
        %v3696 = vsel %vm575, %v2637, 0
        %v3699 = vsel %vm575, %v2638, 0
        %v3702 = vsel %vm575, %v2639, 0
        %v3705 = vsel %vm575, %v2640, 0
        %v3708 = vsel %vm575, %v2641, 0
        %v3711 = vsel %vm575, %v2642, 0
        %v3714 = vsel %vm575, %v2643, 0
        %v3717 = vsel %vm575, %v2644, 0
        %v3720 = vsel %vm575, %v2645, 0
        %v3723 = vsel %vm575, %v2646, 0
        %v3726 = vsel %vm575, %v2647, 0
        %v3729 = vsel %vm575, %v2648, 0
        %v3732 = vsel %vm575, %v2649, 0
        %v3735 = vsel %vm575, %v2650, 0
        %v3738 = vsel %vm575, %v2651, 0
        %v3741 = vsel %vm575, %v2652, 0
        %v3744 = vsel %vm575, %v2653, 0
        %v3747 = vsel %vm575, %v2654, 0
        %v3750 = vsel %vm575, %v2655, 0
        %v3753 = vsel %vm575, %v2656, 0
        %v3756 = vsel %vm575, %v2657, 0
        %3758 = vmatprep.subr.mxu0 0.0
        %3759 = vmatpush1.msra.mxu0 %v3635
        %3760 = vmatprep.subr.mxu0 0.0
        %3761 = vmatpush1.msra.mxu0 %v3634
        %3762 = vmatprep.subr.mxu0 0.0
        %3763 = vmatpush1.msra.mxu0 %v3633
        %3764 = vmatprep.subr.mxu0 0.0
        %3765 = vmatpush1.msra.mxu0 %v3632
        %3766 = vmatprep.subr.mxu0 0.0
        %3767 = vmatpush1.msra.mxu0 %v3631
        %3768 = vmatprep.subr.mxu0 0.0
        %3769 = vmatpush1.msra.mxu0 %v3630
        %3770 = vmatprep.subr.mxu0 0.0
        %3771 = vmatpush1.msra.mxu0 %v3629
        %3772 = vmatprep.subr.mxu0 0.0
        %3773 = vmatpush1.msra.mxu0 %v3628
        %3774 = vmatprep.subr.mxu0 0.0
        %3775 = vmatpush1.msra.mxu0 %v3627
        %3776 = vmatprep.subr.mxu0 0.0
        %3777 = vmatpush1.msra.mxu0 %v3626
        %3778 = vmatprep.subr.mxu0 0.0
        %3779 = vmatpush1.msra.mxu0 %v3625
        %3780 = vmatprep.subr.mxu0 0.0
        %3781 = vmatpush1.msra.mxu0 %v3624
        %3782 = vmatprep.subr.mxu0 0.0
        %3783 = vmatpush1.msra.mxu0 %v3623
        %3784 = vmatprep.subr.mxu0 0.0
        %3785 = vmatpush1.msra.mxu0 %v3622
        %3786 = vmatprep.subr.mxu0 0.0
        %3787 = vmatpush1.msra.mxu0 %v3621
        %3788 = vmatprep.subr.mxu0 0.0
        %3789 = vmatpush1.msra.mxu0 %v3620
        %3790 = vmatprep.subr.mxu0 0.0
        %3791 = vmatpush2.msra.mxu0 %v3651
        %3792 = vmatprep.subr.mxu0 0.0
        %3793 = vmatpush2.msra.mxu0 %v3650
        %3794 = vmatprep.subr.mxu0 0.0
        %3795 = vmatpush2.msra.mxu0 %v3649
        %3796 = vmatprep.subr.mxu0 0.0
        %3797 = vmatpush2.msra.mxu0 %v3648
        %3798 = vmatprep.subr.mxu0 0.0
        %3799 = vmatpush2.msra.mxu0 %v3647
        %3800 = vmatprep.subr.mxu0 0.0
        %3801 = vmatpush2.msra.mxu0 %v3646
        %3802 = vmatprep.subr.mxu0 0.0
        %3803 = vmatpush2.msra.mxu0 %v3645
        %3804 = vmatprep.subr.mxu0 0.0
        %3805 = vmatpush2.msra.mxu0 %v3644
        %3806 = vmatprep.subr.mxu0 0.0
        %3807 = vmatpush2.msra.mxu0 %v3643
        %3808 = vmatprep.subr.mxu0 0.0
        %3809 = vmatpush2.msra.mxu0 %v3642
        %3810 = vmatprep.subr.mxu0 0.0
        %3811 = vmatpush2.msra.mxu0 %v3641
        %3812 = vmatprep.subr.mxu0 0.0
        %3813 = vmatpush2.msra.mxu0 %v3640
        %3814 = vmatprep.subr.mxu0 0.0
        %3815 = vmatpush2.msra.mxu0 %v3639
        %3816 = vmatprep.subr.mxu0 0.0
        %3817 = vmatpush2.msra.mxu0 %v3638
        %3818 = vmatprep.subr.mxu0 0.0
        %3819 = vmatpush2.msra.mxu0 %v3637
        %3820 = vmatprep.subr.mxu0 0.0
        %3821 = vmatpush2.msra.mxu0 %v3636
        %3822 = vmatprep.mubr.f32.mxu0 %v3588
        %3823 = vmatmul.mubr.f32.gmra.mxu0 %v3492
        %v3824 = vpop.f32.mrf.mxu0
        %v3825 = vadd.f32 %v3660, %v3824
        %v3826 = vpop.f32.mrf.mxu0
        %3827 = vmatprep.mubr.f32.mxu0 %v3589
        %3828 = vmatmul.mubr.f32.gmra.mxu0 %v3493
        %v3829 = vpop.f32.mrf.mxu0
        %v3830 = vadd.f32 %v3660, %v3829
        %v3831 = vpop.f32.mrf.mxu0
        %3832 = vmatprep.mubr.f32.mxu0 %v3590
        %3833 = vmatmul.mubr.f32.gmra.mxu0 %v3494
        %v3834 = vpop.f32.mrf.mxu0
        %v3835 = vadd.f32 %v3660, %v3834
        %v3836 = vpop.f32.mrf.mxu0
        %3837 = vmatprep.mubr.f32.mxu0 %v3591
        %3838 = vmatmul.mubr.f32.gmra.mxu0 %v3495
        %v3839 = vpop.f32.mrf.mxu0
        %v3840 = vadd.f32 %v3660, %v3839
        %v3841 = vpop.f32.mrf.mxu0
        %3842 = vmatprep.mubr.f32.mxu0 %v3592
        %3843 = vmatmul.mubr.f32.gmra.mxu0 %v3496
        %v3844 = vpop.f32.mrf.mxu0
        %v3845 = vadd.f32 %v3660, %v3844
        %v3846 = vpop.f32.mrf.mxu0
        %3847 = vmatprep.mubr.f32.mxu0 %v3593
        %3848 = vmatmul.mubr.f32.gmra.mxu0 %v3497
        %v3849 = vpop.f32.mrf.mxu0
        %v3850 = vadd.f32 %v3660, %v3849
        %v3851 = vpop.f32.mrf.mxu0
        %3852 = vmatprep.mubr.f32.mxu0 %v3594
        %3853 = vmatmul.mubr.f32.gmra.mxu0 %v3498
        %v3854 = vpop.f32.mrf.mxu0
        %v3855 = vadd.f32 %v3660, %v3854
        %v3856 = vpop.f32.mrf.mxu0
        %3857 = vmatprep.mubr.f32.mxu0 %v3595
        %3858 = vmatmul.mubr.f32.gmra.mxu0 %v3499
        %v3859 = vpop.f32.mrf.mxu0
        %v3860 = vadd.f32 %v3660, %v3859
        %v3861 = vpop.f32.mrf.mxu0
        %3862 = vmatprep.mubr.f32.mxu0 %v3596
        %3863 = vmatmul.mubr.f32.gmra.mxu0 %v3500
        %v3864 = vpop.f32.mrf.mxu0
        %v3865 = vadd.f32 %v3660, %v3864
        %v3866 = vpop.f32.mrf.mxu0
        %3867 = vmatprep.mubr.f32.mxu0 %v3597
        %3868 = vmatmul.mubr.f32.gmra.mxu0 %v3501
        %v3869 = vpop.f32.mrf.mxu0
        %v3870 = vadd.f32 %v3660, %v3869
        %v3871 = vpop.f32.mrf.mxu0
        %3872 = vmatprep.mubr.f32.mxu0 %v3598
        %3873 = vmatmul.mubr.f32.gmra.mxu0 %v3502
        %v3874 = vpop.f32.mrf.mxu0
        %v3875 = vadd.f32 %v3660, %v3874
        %v3876 = vpop.f32.mrf.mxu0
        %3877 = vmatprep.mubr.f32.mxu0 %v3599
        %3878 = vmatmul.mubr.f32.gmra.mxu0 %v3503
        %v3879 = vpop.f32.mrf.mxu0
        %v3880 = vadd.f32 %v3660, %v3879
        %v3881 = vpop.f32.mrf.mxu0
        %3882 = vmatprep.mubr.f32.mxu0 %v3600
        %3883 = vmatmul.mubr.f32.gmra.mxu0 %v3504
        %v3884 = vpop.f32.mrf.mxu0
        %v3885 = vadd.f32 %v3660, %v3884
        %v3886 = vpop.f32.mrf.mxu0
        %3887 = vmatprep.mubr.f32.mxu0 %v3601
        %3888 = vmatmul.mubr.f32.gmra.mxu0 %v3505
        %v3889 = vpop.f32.mrf.mxu0
        %v3890 = vadd.f32 %v3660, %v3889
        %v3891 = vpop.f32.mrf.mxu0
        %3892 = vmatprep.mubr.f32.mxu0 %v3602
        %3893 = vmatmul.mubr.f32.gmra.mxu0 %v3506
        %v3894 = vpop.f32.mrf.mxu0
        %v3895 = vadd.f32 %v3660, %v3894
        %v3896 = vpop.f32.mrf.mxu0
        %3897 = vmatprep.mubr.f32.mxu0 %v3603
        %3898 = vmatmul.mubr.f32.gmra.mxu0 %v3507
        %v3899 = vpop.f32.mrf.mxu0
        %v3900 = vadd.f32 %v3660, %v3899
        %v3901 = vpop.f32.mrf.mxu0
        %3902 = vmatprep.mubr.f32.mxu0 %v3604
        %3903 = vmatmul.mubr.f32.gmra.mxu0 %v3508
        %v3904 = vpop.f32.mrf.mxu0
        %v3905 = vadd.f32 %v3660, %v3904
        %v3906 = vpop.f32.mrf.mxu0
        %3907 = vmatprep.mubr.f32.mxu0 %v3605
        %3908 = vmatmul.mubr.f32.gmra.mxu0 %v3509
        %v3909 = vpop.f32.mrf.mxu0
        %v3910 = vadd.f32 %v3660, %v3909
        %v3911 = vpop.f32.mrf.mxu0
        %3912 = vmatprep.mubr.f32.mxu0 %v3606
        %3913 = vmatmul.mubr.f32.gmra.mxu0 %v3510
        %v3914 = vpop.f32.mrf.mxu0
        %v3915 = vadd.f32 %v3660, %v3914
        %v3916 = vpop.f32.mrf.mxu0
        %3917 = vmatprep.mubr.f32.mxu0 %v3607
        %3918 = vmatmul.mubr.f32.gmra.mxu0 %v3511
        %v3919 = vpop.f32.mrf.mxu0
        %v3920 = vadd.f32 %v3660, %v3919
        %v3921 = vpop.f32.mrf.mxu0
        %3922 = vmatprep.mubr.f32.mxu0 %v3608
        %3923 = vmatmul.mubr.f32.gmra.mxu0 %v3512
        %v3924 = vpop.f32.mrf.mxu0
        %v3925 = vadd.f32 %v3660, %v3924
        %v3926 = vpop.f32.mrf.mxu0
        %3927 = vmatprep.mubr.f32.mxu0 %v3609
        %3928 = vmatmul.mubr.f32.gmra.mxu0 %v3513
        %v3929 = vpop.f32.mrf.mxu0
        %v3930 = vadd.f32 %v3660, %v3929
        %v3931 = vpop.f32.mrf.mxu0
        %3932 = vmatprep.mubr.f32.mxu0 %v3610
        %3933 = vmatmul.mubr.f32.gmra.mxu0 %v3514
        %v3934 = vpop.f32.mrf.mxu0
        %v3935 = vadd.f32 %v3660, %v3934
        %v3936 = vpop.f32.mrf.mxu0
        %3937 = vmatprep.mubr.f32.mxu0 %v3611
        %3938 = vmatmul.mubr.f32.gmra.mxu0 %v3515
        %v3939 = vpop.f32.mrf.mxu0
        %v3940 = vadd.f32 %v3660, %v3939
        %v3941 = vpop.f32.mrf.mxu0
        %3942 = vmatprep.mubr.f32.mxu0 %v3612
        %3943 = vmatmul.mubr.f32.gmra.mxu0 %v3516
        %v3944 = vpop.f32.mrf.mxu0
        %v3945 = vadd.f32 %v3660, %v3944
        %v3946 = vpop.f32.mrf.mxu0
        %3947 = vmatprep.mubr.f32.mxu0 %v3613
        %3948 = vmatmul.mubr.f32.gmra.mxu0 %v3517
        %v3949 = vpop.f32.mrf.mxu0
        %v3950 = vadd.f32 %v3660, %v3949
        %v3951 = vpop.f32.mrf.mxu0
        %3952 = vmatprep.mubr.f32.mxu0 %v3614
        %3953 = vmatmul.mubr.f32.gmra.mxu0 %v3518
        %v3954 = vpop.f32.mrf.mxu0
        %v3955 = vadd.f32 %v3660, %v3954
        %v3956 = vpop.f32.mrf.mxu0
        %3957 = vmatprep.mubr.f32.mxu0 %v3615
        %3958 = vmatmul.mubr.f32.gmra.mxu0 %v3519
        %v3959 = vpop.f32.mrf.mxu0
        %v3960 = vadd.f32 %v3660, %v3959
        %v3961 = vpop.f32.mrf.mxu0
        %3962 = vmatprep.mubr.f32.mxu0 %v3616
        %3963 = vmatmul.mubr.f32.gmra.mxu0 %v3520
        %v3964 = vpop.f32.mrf.mxu0
        %v3965 = vadd.f32 %v3660, %v3964
        %v3966 = vpop.f32.mrf.mxu0
        %3967 = vmatprep.mubr.f32.mxu0 %v3617
        %3968 = vmatmul.mubr.f32.gmra.mxu0 %v3521
        %v3969 = vpop.f32.mrf.mxu0
        %v3970 = vadd.f32 %v3660, %v3969
        %v3971 = vpop.f32.mrf.mxu0
        %3972 = vmatprep.mubr.f32.mxu0 %v3618
        %3973 = vmatmul.mubr.f32.gmra.mxu0 %v3522
        %v3974 = vpop.f32.mrf.mxu0
        %v3975 = vadd.f32 %v3660, %v3974
        %v3976 = vpop.f32.mrf.mxu0
        %3977 = vmatprep.mubr.f32.mxu0 %v3619
        %3978 = vmatmul.mubr.f32.gmra.mxu0 %v3523
        %v3979 = vpop.f32.mrf.mxu0
        %v3980 = vadd.f32 %v3660, %v3979
        %v3981 = vpop.f32.mrf.mxu0
        %3982 = vdwg.mxu0
        %3983 = vmatprep.subr.mxu0 0.0
        %3984 = vmatpush1.msra.mxu0 0.0
        %3985 = vmatprep.subr.mxu0 0.0
        %3986 = vmatpush1.msra.mxu0 0.0
        %3987 = vmatprep.subr.mxu0 0.0
        %3988 = vmatpush1.msra.mxu0 0.0
        %3989 = vmatprep.subr.mxu0 0.0
        %3990 = vmatpush1.msra.mxu0 0.0
        %3991 = vmatprep.subr.mxu0 0.0
        %3992 = vmatpush1.msra.mxu0 0.0
        %3993 = vmatprep.subr.mxu0 0.0
        %3994 = vmatpush1.msra.mxu0 0.0
        %3995 = vmatprep.subr.mxu0 0.0
        %3996 = vmatpush1.msra.mxu0 0.0
        %3997 = vmatprep.subr.mxu0 0.0
        %3998 = vmatpush1.msra.mxu0 0.0
        %3999 = vmatprep.subr.mxu0 0.0
        %4000 = vmatpush1.msra.mxu0 0.0
        %4001 = vmatprep.subr.mxu0 0.0
        %4002 = vmatpush1.msra.mxu0 0.0
        %4003 = vmatprep.subr.mxu0 0.0
        %4004 = vmatpush1.msra.mxu0 0.0
        %4005 = vmatprep.subr.mxu0 0.0
        %4006 = vmatpush1.msra.mxu0 0.0
        %4007 = vmatprep.subr.mxu0 0.0
        %4008 = vmatpush1.msra.mxu0 %v3655
        %4009 = vmatprep.subr.mxu0 0.0
        %4010 = vmatpush1.msra.mxu0 %v3654
        %4011 = vmatprep.subr.mxu0 0.0
        %4012 = vmatpush1.msra.mxu0 %v3653
        %4013 = vmatprep.subr.mxu0 0.0
        %4014 = vmatpush1.msra.mxu0 %v3652
        %4015 = vmatprep.subr.mxu0 0.0
        %4016 = vmatpush2.msra.mxu0 0.0
        %4017 = vmatprep.subr.mxu0 0.0
        %4018 = vmatpush2.msra.mxu0 0.0
        %4019 = vmatprep.subr.mxu0 0.0
        %4020 = vmatpush2.msra.mxu0 0.0
        %4021 = vmatprep.subr.mxu0 0.0
        %4022 = vmatpush2.msra.mxu0 0.0
        %4023 = vmatprep.subr.mxu0 0.0
        %4024 = vmatpush2.msra.mxu0 0.0
        %4025 = vmatprep.subr.mxu0 0.0
        %4026 = vmatpush2.msra.mxu0 0.0
        %4027 = vmatprep.subr.mxu0 0.0
        %4028 = vmatpush2.msra.mxu0 0.0
        %4029 = vmatprep.subr.mxu0 0.0
        %4030 = vmatpush2.msra.mxu0 0.0
        %4031 = vmatprep.subr.mxu0 0.0
        %4032 = vmatpush2.msra.mxu0 0.0
        %4033 = vmatprep.subr.mxu0 0.0
        %4034 = vmatpush2.msra.mxu0 0.0
        %4035 = vmatprep.subr.mxu0 0.0
        %4036 = vmatpush2.msra.mxu0 0.0
        %4037 = vmatprep.subr.mxu0 0.0
        %4038 = vmatpush2.msra.mxu0 0.0
        %4039 = vmatprep.subr.mxu0 0.0
        %4040 = vmatpush2.msra.mxu0 0.0
        %4041 = vmatprep.subr.mxu0 0.0
        %4042 = vmatpush2.msra.mxu0 0.0
        %4043 = vmatprep.subr.mxu0 0.0
        %4044 = vmatpush2.msra.mxu0 0.0
        %4045 = vmatprep.subr.mxu0 0.0
        %4046 = vmatpush2.msra.mxu0 0.0
        %4047 = vmatprep.mubr.f32.mxu0 0.0
        %4048 = vmatmul.mubr.f32.gmra.mxu0 %v3663
        %v4049 = vpop.f32.mrf.mxu0
        %v4050 = vadd.f32 %v3825, %v4049
        %v4051 = vpop.f32.mrf.mxu0
        %4052 = vmatprep.mubr.f32.mxu0 0.0
        %4053 = vmatmul.mubr.f32.gmra.mxu0 %v3666
        %v4054 = vpop.f32.mrf.mxu0
        %v4055 = vadd.f32 %v3830, %v4054
        %v4056 = vpop.f32.mrf.mxu0
        %4057 = vmatprep.mubr.f32.mxu0 0.0
        %4058 = vmatmul.mubr.f32.gmra.mxu0 %v3669
        %v4059 = vpop.f32.mrf.mxu0
        %v4060 = vadd.f32 %v3835, %v4059
        %v4061 = vpop.f32.mrf.mxu0
        %4062 = vmatprep.mubr.f32.mxu0 0.0
        %4063 = vmatmul.mubr.f32.gmra.mxu0 %v3672
        %v4064 = vpop.f32.mrf.mxu0
        %v4065 = vadd.f32 %v3840, %v4064
        %v4066 = vpop.f32.mrf.mxu0
        %4067 = vmatprep.mubr.f32.mxu0 0.0
        %4068 = vmatmul.mubr.f32.gmra.mxu0 %v3675
        %v4069 = vpop.f32.mrf.mxu0
        %v4070 = vadd.f32 %v3845, %v4069
        %v4071 = vpop.f32.mrf.mxu0
        %4072 = vmatprep.mubr.f32.mxu0 0.0
        %4073 = vmatmul.mubr.f32.gmra.mxu0 %v3678
        %v4074 = vpop.f32.mrf.mxu0
        %v4075 = vadd.f32 %v3850, %v4074
        %v4076 = vpop.f32.mrf.mxu0
        %4077 = vmatprep.mubr.f32.mxu0 0.0
        %4078 = vmatmul.mubr.f32.gmra.mxu0 %v3681
        %v4079 = vpop.f32.mrf.mxu0
        %v4080 = vadd.f32 %v3855, %v4079
        %v4081 = vpop.f32.mrf.mxu0
        %4082 = vmatprep.mubr.f32.mxu0 0.0
        %4083 = vmatmul.mubr.f32.gmra.mxu0 %v3684
        %v4084 = vpop.f32.mrf.mxu0
        %v4085 = vadd.f32 %v3860, %v4084
        %v4086 = vpop.f32.mrf.mxu0
        %4087 = vmatprep.mubr.f32.mxu0 0.0
        %4088 = vmatmul.mubr.f32.gmra.mxu0 %v3687
        %v4089 = vpop.f32.mrf.mxu0
        %v4090 = vadd.f32 %v3865, %v4089
        %v4091 = vpop.f32.mrf.mxu0
        %4092 = vmatprep.mubr.f32.mxu0 0.0
        %4093 = vmatmul.mubr.f32.gmra.mxu0 %v3690
        %v4094 = vpop.f32.mrf.mxu0
        %v4095 = vadd.f32 %v3870, %v4094
        %v4096 = vpop.f32.mrf.mxu0
        %4097 = vmatprep.mubr.f32.mxu0 0.0
        %4098 = vmatmul.mubr.f32.gmra.mxu0 %v3693
        %v4099 = vpop.f32.mrf.mxu0
        %v4100 = vadd.f32 %v3875, %v4099
        %v4101 = vpop.f32.mrf.mxu0
        %4102 = vmatprep.mubr.f32.mxu0 0.0
        %4103 = vmatmul.mubr.f32.gmra.mxu0 %v3696
        %v4104 = vpop.f32.mrf.mxu0
        %v4105 = vadd.f32 %v3880, %v4104
        %v4106 = vpop.f32.mrf.mxu0
        %4107 = vmatprep.mubr.f32.mxu0 0.0
        %4108 = vmatmul.mubr.f32.gmra.mxu0 %v3699
        %v4109 = vpop.f32.mrf.mxu0
        %v4110 = vadd.f32 %v3885, %v4109
        %v4111 = vpop.f32.mrf.mxu0
        %4112 = vmatprep.mubr.f32.mxu0 0.0
        %4113 = vmatmul.mubr.f32.gmra.mxu0 %v3702
        %v4114 = vpop.f32.mrf.mxu0
        %v4115 = vadd.f32 %v3890, %v4114
        %v4116 = vpop.f32.mrf.mxu0
        %4117 = vmatprep.mubr.f32.mxu0 0.0
        %4118 = vmatmul.mubr.f32.gmra.mxu0 %v3705
        %v4119 = vpop.f32.mrf.mxu0
        %v4120 = vadd.f32 %v3895, %v4119
        %v4121 = vpop.f32.mrf.mxu0
        %4122 = vmatprep.mubr.f32.mxu0 0.0
        %4123 = vmatmul.mubr.f32.gmra.mxu0 %v3708
        %v4124 = vpop.f32.mrf.mxu0
        %v4125 = vadd.f32 %v3900, %v4124
        %v4126 = vpop.f32.mrf.mxu0
        %4127 = vmatprep.mubr.f32.mxu0 0.0
        %4128 = vmatmul.mubr.f32.gmra.mxu0 %v3711
        %v4129 = vpop.f32.mrf.mxu0
        %v4130 = vadd.f32 %v3905, %v4129
        %v4131 = vpop.f32.mrf.mxu0
        %4132 = vmatprep.mubr.f32.mxu0 0.0
        %4133 = vmatmul.mubr.f32.gmra.mxu0 %v3714
        %v4134 = vpop.f32.mrf.mxu0
        %v4135 = vadd.f32 %v3910, %v4134
        %v4136 = vpop.f32.mrf.mxu0
        %4137 = vmatprep.mubr.f32.mxu0 0.0
        %4138 = vmatmul.mubr.f32.gmra.mxu0 %v3717
        %v4139 = vpop.f32.mrf.mxu0
        %v4140 = vadd.f32 %v3915, %v4139
        %v4141 = vpop.f32.mrf.mxu0
        %4142 = vmatprep.mubr.f32.mxu0 0.0
        %4143 = vmatmul.mubr.f32.gmra.mxu0 %v3720
        %v4144 = vpop.f32.mrf.mxu0
        %v4145 = vadd.f32 %v3920, %v4144
        %v4146 = vpop.f32.mrf.mxu0
        %4147 = vmatprep.mubr.f32.mxu0 0.0
        %4148 = vmatmul.mubr.f32.gmra.mxu0 %v3723
        %v4149 = vpop.f32.mrf.mxu0
        %v4150 = vadd.f32 %v3925, %v4149
        %v4151 = vpop.f32.mrf.mxu0
        %4152 = vmatprep.mubr.f32.mxu0 0.0
        %4153 = vmatmul.mubr.f32.gmra.mxu0 %v3726
        %v4154 = vpop.f32.mrf.mxu0
        %v4155 = vadd.f32 %v3930, %v4154
        %v4156 = vpop.f32.mrf.mxu0
        %4157 = vmatprep.mubr.f32.mxu0 0.0
        %4158 = vmatmul.mubr.f32.gmra.mxu0 %v3729
        %v4159 = vpop.f32.mrf.mxu0
        %v4160 = vadd.f32 %v3935, %v4159
        %v4161 = vpop.f32.mrf.mxu0
        %4162 = vmatprep.mubr.f32.mxu0 0.0
        %4163 = vmatmul.mubr.f32.gmra.mxu0 %v3732
        %v4164 = vpop.f32.mrf.mxu0
        %v4165 = vadd.f32 %v3940, %v4164
        %v4166 = vpop.f32.mrf.mxu0
        %4167 = vmatprep.mubr.f32.mxu0 0.0
        %4168 = vmatmul.mubr.f32.gmra.mxu0 %v3735
        %v4169 = vpop.f32.mrf.mxu0
        %v4170 = vadd.f32 %v3945, %v4169
        %v4171 = vpop.f32.mrf.mxu0
        %4172 = vmatprep.mubr.f32.mxu0 0.0
        %4173 = vmatmul.mubr.f32.gmra.mxu0 %v3738
        %v4174 = vpop.f32.mrf.mxu0
        %v4175 = vadd.f32 %v3950, %v4174
        %v4176 = vpop.f32.mrf.mxu0
        %4177 = vmatprep.mubr.f32.mxu0 0.0
        %4178 = vmatmul.mubr.f32.gmra.mxu0 %v3741
        %v4179 = vpop.f32.mrf.mxu0
        %v4180 = vadd.f32 %v3955, %v4179
        %v4181 = vpop.f32.mrf.mxu0
        %4182 = vmatprep.mubr.f32.mxu0 0.0
        %4183 = vmatmul.mubr.f32.gmra.mxu0 %v3744
        %v4184 = vpop.f32.mrf.mxu0
        %v4185 = vadd.f32 %v3960, %v4184
        %v4186 = vpop.f32.mrf.mxu0
        %4187 = vmatprep.mubr.f32.mxu0 0.0
        %4188 = vmatmul.mubr.f32.gmra.mxu0 %v3747
        %v4189 = vpop.f32.mrf.mxu0
        %v4190 = vadd.f32 %v3965, %v4189
        %v4191 = vpop.f32.mrf.mxu0
        %4192 = vmatprep.mubr.f32.mxu0 0.0
        %4193 = vmatmul.mubr.f32.gmra.mxu0 %v3750
        %v4194 = vpop.f32.mrf.mxu0
        %v4195 = vadd.f32 %v3970, %v4194
        %v4196 = vpop.f32.mrf.mxu0
        %4197 = vmatprep.mubr.f32.mxu0 0.0
        %4198 = vmatmul.mubr.f32.gmra.mxu0 %v3753
        %v4199 = vpop.f32.mrf.mxu0
        %v4200 = vadd.f32 %v3975, %v4199
        %v4201 = vpop.f32.mrf.mxu0
        %4202 = vmatprep.mubr.f32.mxu0 0.0
        %4203 = vmatmul.mubr.f32.gmra.mxu0 %v3756
        %v4204 = vpop.f32.mrf.mxu0
        %v4205 = vadd.f32 %v3980, %v4204
        %v4206 = vpop.f32.mrf.mxu0
        %4207 = vdwg.mxu0
        %v4208 = vld [vmem:[%s8] sm:$0xff]
        %v4209 = vld [vmem:[%s8 + $0x8] sm:$0xff]
        %v4210 = vld [vmem:[%s8 + $0x10] sm:$0xff]
        %v4211 = vld [vmem:[%s8 + $0x18] sm:$0xff]
        %v4212 = vld [vmem:[%s8 + $0x20] sm:$0xff]
        %v4213 = vld [vmem:[%s8 + $0x28] sm:$0xff]
        %v4214 = vld [vmem:[%s8 + $0x30] sm:$0xff]
        %v4215 = vld [vmem:[%s8 + $0x38] sm:$0xff]
        %v4216 = vld [vmem:[%s8 + $0x40] sm:$0xff]
        %v4217 = vld [vmem:[%s8 + $0x48] sm:$0xff]
        %v4218 = vld [vmem:[%s8 + $0x50] sm:$0xff]
        %v4219 = vld [vmem:[%s8 + $0x58] sm:$0xff]
        %v4220 = vld [vmem:[%s8 + $0x60] sm:$0xff]
        %v4221 = vld [vmem:[%s8 + $0x68] sm:$0xff]
        %v4222 = vld [vmem:[%s8 + $0x70] sm:$0xff]
        %v4223 = vld [vmem:[%s8 + $0x78] sm:$0xff]
        %v4224 = vld [vmem:[%s9] sm:$0xff]
        %v4225 = vld [vmem:[%s9 + $0x8] sm:$0xff]
        %v4226 = vld [vmem:[%s9 + $0x10] sm:$0xff]
        %v4227 = vld [vmem:[%s9 + $0x18] sm:$0xff]
        %v4228 = vld [vmem:[%s10] sm:$0x1]
        %v4229 = vld [vmem:[%s11] sm:$0x1]
        %v4230 = vadd.f32 %v4050, %v4055
        %v4231 = vadd.f32 %v4230, %v4060
        %v4232 = vadd.f32 %v4231, %v4065
        %v4233 = vadd.f32 %v4232, %v4070
        %v4234 = vadd.f32 %v4233, %v4075
        %v4235 = vadd.f32 %v4234, %v4080
        %v4236 = vadd.f32 %v4235, %v4085
        %v4237 = vadd.f32 %v4236, %v4090
        %v4238 = vadd.f32 %v4237, %v4095
        %v4239 = vadd.f32 %v4238, %v4100
        %v4240 = vadd.f32 %v4239, %v4105
        %v4241 = vadd.f32 %v4240, %v4110
        %v4242 = vadd.f32 %v4241, %v4115
        %v4243 = vadd.f32 %v4242, %v4120
        %v4244 = vadd.f32 %v4243, %v4125
        %v4245 = vadd.f32 %v4244, %v4130
        %v4246 = vadd.f32 %v4245, %v4135
        %v4247 = vadd.f32 %v4246, %v4140
        %v4248 = vadd.f32 %v4247, %v4145
        %v4249 = vadd.f32 %v4248, %v4150
        %v4250 = vadd.f32 %v4249, %v4155
        %v4251 = vadd.f32 %v4250, %v4160
        %v4252 = vadd.f32 %v4251, %v4165
        %v4253 = vadd.f32 %v4252, %v4170
        %v4254 = vadd.f32 %v4253, %v4175
        %v4255 = vadd.f32 %v4254, %v4180
        %v4256 = vadd.f32 %v4255, %v4185
        %v4257 = vadd.f32 %v4256, %v4190
        %v4258 = vadd.f32 %v4257, %v4195
        %v4259 = vadd.f32 %v4258, %v4200
        %v4260 = vadd.f32 %v4259, %v4205
        %v4261 = vrot.slane %v4260, 4
        %v4262 = vadd.f32 %v4260, %v4261
        %v4263 = vrot.slane %v4262, 2
        %v4264 = vadd.f32 %v4262, %v4263
        %v4265 = vrot.slane %v4264, 1
        %v4266 = vadd.f32 %v4264, %v4265
        %v4267 = vmul.f32 %v4050, %v4050
        %v4268 = vmul.f32 %v4055, %v4055
        %v4269 = vmul.f32 %v4060, %v4060
        %v4270 = vmul.f32 %v4065, %v4065
        %v4271 = vmul.f32 %v4070, %v4070
        %v4272 = vmul.f32 %v4075, %v4075
        %v4273 = vmul.f32 %v4080, %v4080
        %v4274 = vmul.f32 %v4085, %v4085
        %v4275 = vmul.f32 %v4090, %v4090
        %v4276 = vmul.f32 %v4095, %v4095
        %v4277 = vmul.f32 %v4100, %v4100
        %v4278 = vmul.f32 %v4105, %v4105
        %v4279 = vmul.f32 %v4110, %v4110
        %v4280 = vmul.f32 %v4115, %v4115
        %v4281 = vmul.f32 %v4120, %v4120
        %v4282 = vmul.f32 %v4125, %v4125
        %v4283 = vmul.f32 %v4130, %v4130
        %v4284 = vmul.f32 %v4135, %v4135
        %v4285 = vmul.f32 %v4140, %v4140
        %v4286 = vmul.f32 %v4145, %v4145
        %v4287 = vmul.f32 %v4150, %v4150
        %v4288 = vmul.f32 %v4155, %v4155
        %v4289 = vmul.f32 %v4160, %v4160
        %v4290 = vmul.f32 %v4165, %v4165
        %v4291 = vmul.f32 %v4170, %v4170
        %v4292 = vmul.f32 %v4175, %v4175
        %v4293 = vmul.f32 %v4180, %v4180
        %v4294 = vmul.f32 %v4185, %v4185
        %v4295 = vmul.f32 %v4190, %v4190
        %v4296 = vmul.f32 %v4195, %v4195
        %v4297 = vmul.f32 %v4200, %v4200
        %v4298 = vmul.f32 %v4205, %v4205
        %v4299 = vadd.f32 %v4267, %v4268
        %v4300 = vadd.f32 %v4299, %v4269
        %v4301 = vadd.f32 %v4300, %v4270
        %v4302 = vadd.f32 %v4301, %v4271
        %v4303 = vadd.f32 %v4302, %v4272
        %v4304 = vadd.f32 %v4303, %v4273
        %v4305 = vadd.f32 %v4304, %v4274
        %v4306 = vadd.f32 %v4305, %v4275
        %v4307 = vadd.f32 %v4306, %v4276
        %v4308 = vadd.f32 %v4307, %v4277
        %v4309 = vadd.f32 %v4308, %v4278
        %v4310 = vadd.f32 %v4309, %v4279
        %v4311 = vadd.f32 %v4310, %v4280
        %v4312 = vadd.f32 %v4311, %v4281
        %v4313 = vadd.f32 %v4312, %v4282
        %v4314 = vadd.f32 %v4313, %v4283
        %v4315 = vadd.f32 %v4314, %v4284
        %v4316 = vadd.f32 %v4315, %v4285
        %v4317 = vadd.f32 %v4316, %v4286
        %v4318 = vadd.f32 %v4317, %v4287
        %v4319 = vadd.f32 %v4318, %v4288
        %v4320 = vadd.f32 %v4319, %v4289
        %v4321 = vadd.f32 %v4320, %v4290
        %v4322 = vadd.f32 %v4321, %v4291
        %v4323 = vadd.f32 %v4322, %v4292
        %v4324 = vadd.f32 %v4323, %v4293
        %v4325 = vadd.f32 %v4324, %v4294
        %v4326 = vadd.f32 %v4325, %v4295
        %v4327 = vadd.f32 %v4326, %v4296
        %v4328 = vadd.f32 %v4327, %v4297
        %v4329 = vadd.f32 %v4328, %v4298
        %v4330 = vrot.slane %v4329, 4
        %v4331 = vadd.f32 %v4329, %v4330
        %v4332 = vrot.slane %v4331, 2
        %v4333 = vadd.f32 %v4331, %v4332
        %v4334 = vrot.slane %v4333, 1
        %v4335 = vadd.f32 %v4333, %v4334
        %v4336 = vsel %vm746, %v4266, %v4335
        %4337 = vmatprep.subr.mxu0 0.0
        %4338 = vmatpush1.msra.mxu0 %v4223
        %4339 = vmatprep.subr.mxu0 0.0
        %4340 = vmatpush1.msra.mxu0 %v4222
        %4341 = vmatprep.subr.mxu0 0.0
        %4342 = vmatpush1.msra.mxu0 %v4221
        %4343 = vmatprep.subr.mxu0 0.0
        %4344 = vmatpush1.msra.mxu0 %v4220
        %4345 = vmatprep.subr.mxu0 0.0
        %4346 = vmatpush1.msra.mxu0 %v4219
        %4347 = vmatprep.subr.mxu0 0.0
        %4348 = vmatpush1.msra.mxu0 %v4218
        %4349 = vmatprep.subr.mxu0 0.0
        %4350 = vmatpush1.msra.mxu0 %v4217
        %4351 = vmatprep.subr.mxu0 0.0
        %4352 = vmatpush1.msra.mxu0 %v4216
        %4353 = vmatprep.subr.mxu0 0.0
        %4354 = vmatpush1.msra.mxu0 %v4215
        %4355 = vmatprep.subr.mxu0 0.0
        %4356 = vmatpush1.msra.mxu0 %v4214
        %4357 = vmatprep.subr.mxu0 0.0
        %4358 = vmatpush1.msra.mxu0 %v4213
        %4359 = vmatprep.subr.mxu0 0.0
        %4360 = vmatpush1.msra.mxu0 %v4212
        %4361 = vmatprep.subr.mxu0 0.0
        %4362 = vmatpush1.msra.mxu0 %v4211
        %4363 = vmatprep.subr.mxu0 0.0
        %4364 = vmatpush1.msra.mxu0 %v4210
        %4365 = vmatprep.subr.mxu0 0.0
        %4366 = vmatpush1.msra.mxu0 %v4209
        %4367 = vmatprep.subr.mxu0 0.0
        %4368 = vmatpush1.msra.mxu0 %v4208
        %4369 = vmatprep.subr.mxu0 0.0
        %4370 = vmatpush2.msra.mxu0 0.0
        %4371 = vmatprep.subr.mxu0 0.0
        %4372 = vmatpush2.msra.mxu0 0.0
        %4373 = vmatprep.subr.mxu0 0.0
        %4374 = vmatpush2.msra.mxu0 0.0
        %4375 = vmatprep.subr.mxu0 0.0
        %4376 = vmatpush2.msra.mxu0 0.0
        %4377 = vmatprep.subr.mxu0 0.0
        %4378 = vmatpush2.msra.mxu0 0.0
        %4379 = vmatprep.subr.mxu0 0.0
        %4380 = vmatpush2.msra.mxu0 0.0
        %4381 = vmatprep.subr.mxu0 0.0
        %4382 = vmatpush2.msra.mxu0 0.0
        %4383 = vmatprep.subr.mxu0 0.0
        %4384 = vmatpush2.msra.mxu0 0.0
        %4385 = vmatprep.subr.mxu0 0.0
        %4386 = vmatpush2.msra.mxu0 0.0
        %4387 = vmatprep.subr.mxu0 0.0
        %4388 = vmatpush2.msra.mxu0 0.0
        %4389 = vmatprep.subr.mxu0 0.0
        %4390 = vmatpush2.msra.mxu0 0.0
        %4391 = vmatprep.subr.mxu0 0.0
        %4392 = vmatpush2.msra.mxu0 0.0
        %4393 = vmatprep.subr.mxu0 0.0
        %4394 = vmatpush2.msra.mxu0 0.0
        %4395 = vmatprep.subr.mxu0 0.0
        %4396 = vmatpush2.msra.mxu0 0.0
        %4397 = vmatprep.subr.mxu0 0.0
        %4398 = vmatpush2.msra.mxu0 0.0
        %4399 = vmatprep.subr.mxu0 0.0
        %4400 = vmatpush2.msra.mxu0 0.0
        %4401 = vmatprep.mubr.f32.mxu0 0.0
        %4402 = vmatmul.mubr.f32.gmra.mxu0 %v4336
        %v4403 = vpop.f32.mrf.mxu0
        %v4404 = vadd.f32 0.0, %v4403
        %v4405 = vpop.f32.mrf.mxu0
        %4406 = vdwg.mxu0
        %v4407 = vmul.f32 %v4404, 0.0009765625
        %v4408 = vmul.f32 %v4407, %v4407
        %v4410 = vrot.slane %v4408, 7
        %v4412 = vsub.f32 %v4407, %v4410
        %v4413 = vsel %vm746, %v4407, %v4412
        %v4415 = vsel %vm575, %v4413, 0
        %4417 = vmatprep.subr.mxu0 0.0
        %4418 = vmatpush1.msra.mxu0 0.0
        %4419 = vmatprep.subr.mxu0 0.0
        %4420 = vmatpush1.msra.mxu0 0.0
        %4421 = vmatprep.subr.mxu0 0.0
        %4422 = vmatpush1.msra.mxu0 0.0
        %4423 = vmatprep.subr.mxu0 0.0
        %4424 = vmatpush1.msra.mxu0 0.0
        %4425 = vmatprep.subr.mxu0 0.0
        %4426 = vmatpush1.msra.mxu0 0.0
        %4427 = vmatprep.subr.mxu0 0.0
        %4428 = vmatpush1.msra.mxu0 0.0
        %4429 = vmatprep.subr.mxu0 0.0
        %4430 = vmatpush1.msra.mxu0 0.0
        %4431 = vmatprep.subr.mxu0 0.0
        %4432 = vmatpush1.msra.mxu0 0.0
        %4433 = vmatprep.subr.mxu0 0.0
        %4434 = vmatpush1.msra.mxu0 0.0
        %4435 = vmatprep.subr.mxu0 0.0
        %4436 = vmatpush1.msra.mxu0 0.0
        %4437 = vmatprep.subr.mxu0 0.0
        %4438 = vmatpush1.msra.mxu0 0.0
        %4439 = vmatprep.subr.mxu0 0.0
        %4440 = vmatpush1.msra.mxu0 0.0
        %4441 = vmatprep.subr.mxu0 0.0
        %4442 = vmatpush1.msra.mxu0 %v4227
        %4443 = vmatprep.subr.mxu0 0.0
        %4444 = vmatpush1.msra.mxu0 %v4226
        %4445 = vmatprep.subr.mxu0 0.0
        %4446 = vmatpush1.msra.mxu0 %v4225
        %4447 = vmatprep.subr.mxu0 0.0
        %4448 = vmatpush1.msra.mxu0 %v4224
        %4449 = vmatprep.subr.mxu0 0.0
        %4450 = vmatpush2.msra.mxu0 0.0
        %4451 = vmatprep.subr.mxu0 0.0
        %4452 = vmatpush2.msra.mxu0 0.0
        %4453 = vmatprep.subr.mxu0 0.0
        %4454 = vmatpush2.msra.mxu0 0.0
        %4455 = vmatprep.subr.mxu0 0.0
        %4456 = vmatpush2.msra.mxu0 0.0
        %4457 = vmatprep.subr.mxu0 0.0
        %4458 = vmatpush2.msra.mxu0 0.0
        %4459 = vmatprep.subr.mxu0 0.0
        %4460 = vmatpush2.msra.mxu0 0.0
        %4461 = vmatprep.subr.mxu0 0.0
        %4462 = vmatpush2.msra.mxu0 0.0
        %4463 = vmatprep.subr.mxu0 0.0
        %4464 = vmatpush2.msra.mxu0 0.0
        %4465 = vmatprep.subr.mxu0 0.0
        %4466 = vmatpush2.msra.mxu0 0.0
        %4467 = vmatprep.subr.mxu0 0.0
        %4468 = vmatpush2.msra.mxu0 0.0
        %4469 = vmatprep.subr.mxu0 0.0
        %4470 = vmatpush2.msra.mxu0 0.0
        %4471 = vmatprep.subr.mxu0 0.0
        %4472 = vmatpush2.msra.mxu0 0.0
        %4473 = vmatprep.subr.mxu0 0.0
        %4474 = vmatpush2.msra.mxu0 0.0
        %4475 = vmatprep.subr.mxu0 0.0
        %4476 = vmatpush2.msra.mxu0 0.0
        %4477 = vmatprep.subr.mxu0 0.0
        %4478 = vmatpush2.msra.mxu0 0.0
        %4479 = vmatprep.subr.mxu0 0.0
        %4480 = vmatpush2.msra.mxu0 0.0
        %4481 = vmatprep.mubr.f32.mxu0 0.0
        %4482 = vmatmul.mubr.f32.gmra.mxu0 %v4415
        %v4483 = vpop.f32.mrf.mxu0
        %v4484 = vadd.f32 0.0, %v4483
        %v4485 = vpop.f32.mrf.mxu0
        %4486 = vdwg.mxu0
        %v4487 = vadd.f32 %v4484, 1e-05
        %v4488 = vrsqrt.pop %v4487
        %v4490 = vlaneseq
        %v4491 = vshrl.u32 %v4490, 7
        %v4492 = vsub.s32 0, %v4491
        %v4493 = vrot.slane %v4228, %v4492
        %v4495 = vmul.f32 %v4488, %v4493
        %v4497 = vrot.slane %v4495, 1
        %v4499 = vmul.f32 %v4484, %v4497
        %v4500 = vsub.f32 %v4229, %v4499
        %v4501 = vlaneseq
        %v4502 = vshrl.u32 %v4501, 7
        %v4503 = vsub.s32 1, %v4502
        %v4504 = vrot.slane %v4495, %v4503
        %v4505 = vmul.f32 %v4050, %v4504
        %v4506 = vmul.f32 %v4055, %v4504
        %v4507 = vmul.f32 %v4060, %v4504
        %v4508 = vmul.f32 %v4065, %v4504
        %v4509 = vmul.f32 %v4070, %v4504
        %v4510 = vmul.f32 %v4075, %v4504
        %v4511 = vmul.f32 %v4080, %v4504
        %v4512 = vmul.f32 %v4085, %v4504
        %v4513 = vmul.f32 %v4090, %v4504
        %v4514 = vmul.f32 %v4095, %v4504
        %v4515 = vmul.f32 %v4100, %v4504
        %v4516 = vmul.f32 %v4105, %v4504
        %v4517 = vmul.f32 %v4110, %v4504
        %v4518 = vmul.f32 %v4115, %v4504
        %v4519 = vmul.f32 %v4120, %v4504
        %v4520 = vmul.f32 %v4125, %v4504
        %v4521 = vmul.f32 %v4130, %v4504
        %v4522 = vmul.f32 %v4135, %v4504
        %v4523 = vmul.f32 %v4140, %v4504
        %v4524 = vmul.f32 %v4145, %v4504
        %v4525 = vmul.f32 %v4150, %v4504
        %v4526 = vmul.f32 %v4155, %v4504
        %v4527 = vmul.f32 %v4160, %v4504
        %v4528 = vmul.f32 %v4165, %v4504
        %v4529 = vmul.f32 %v4170, %v4504
        %v4530 = vmul.f32 %v4175, %v4504
        %v4531 = vmul.f32 %v4180, %v4504
        %v4532 = vmul.f32 %v4185, %v4504
        %v4533 = vmul.f32 %v4190, %v4504
        %v4534 = vmul.f32 %v4195, %v4504
        %v4535 = vmul.f32 %v4200, %v4504
        %v4536 = vmul.f32 %v4205, %v4504
        %v4538 = vlaneseq
        %v4539 = vshrl.u32 %v4538, 7
        %v4540 = vsub.s32 0, %v4539
        %v4541 = vrot.slane %v4500, %v4540
        %v4543 = vadd.f32 %v4505, %v4541
        %v4544 = vadd.f32 %v4506, %v4541
        %v4545 = vadd.f32 %v4507, %v4541
        %v4546 = vadd.f32 %v4508, %v4541
        %v4547 = vadd.f32 %v4509, %v4541
        %v4548 = vadd.f32 %v4510, %v4541
        %v4549 = vadd.f32 %v4511, %v4541
        %v4550 = vadd.f32 %v4512, %v4541
        %v4551 = vadd.f32 %v4513, %v4541
        %v4552 = vadd.f32 %v4514, %v4541
        %v4553 = vadd.f32 %v4515, %v4541
        %v4554 = vadd.f32 %v4516, %v4541
        %v4555 = vadd.f32 %v4517, %v4541
        %v4556 = vadd.f32 %v4518, %v4541
        %v4557 = vadd.f32 %v4519, %v4541
        %v4558 = vadd.f32 %v4520, %v4541
        %v4559 = vadd.f32 %v4521, %v4541
        %v4560 = vadd.f32 %v4522, %v4541
        %v4561 = vadd.f32 %v4523, %v4541
        %v4562 = vadd.f32 %v4524, %v4541
        %v4563 = vadd.f32 %v4525, %v4541
        %v4564 = vadd.f32 %v4526, %v4541
        %v4565 = vadd.f32 %v4527, %v4541
        %v4566 = vadd.f32 %v4528, %v4541
        %v4567 = vadd.f32 %v4529, %v4541
        %v4568 = vadd.f32 %v4530, %v4541
        %v4569 = vadd.f32 %v4531, %v4541
        %v4570 = vadd.f32 %v4532, %v4541
        %v4571 = vadd.f32 %v4533, %v4541
        %v4572 = vadd.f32 %v4534, %v4541
        %v4573 = vadd.f32 %v4535, %v4541
        %v4574 = vadd.f32 %v4536, %v4541
        %v4575 = vxor.u32 %v4543, 2147483648
        %v4576 = vxor.u32 %v4544, 2147483648
        %v4577 = vxor.u32 %v4545, 2147483648
        %v4578 = vxor.u32 %v4546, 2147483648
        %v4579 = vxor.u32 %v4547, 2147483648
        %v4580 = vxor.u32 %v4548, 2147483648
        %v4581 = vxor.u32 %v4549, 2147483648
        %v4582 = vxor.u32 %v4550, 2147483648
        %v4583 = vxor.u32 %v4551, 2147483648
        %v4584 = vxor.u32 %v4552, 2147483648
        %v4585 = vxor.u32 %v4553, 2147483648
        %v4586 = vxor.u32 %v4554, 2147483648
        %v4587 = vxor.u32 %v4555, 2147483648
        %v4588 = vxor.u32 %v4556, 2147483648
        %v4589 = vxor.u32 %v4557, 2147483648
        %v4590 = vxor.u32 %v4558, 2147483648
        %v4591 = vxor.u32 %v4559, 2147483648
        %v4592 = vxor.u32 %v4560, 2147483648
        %v4593 = vxor.u32 %v4561, 2147483648
        %v4594 = vxor.u32 %v4562, 2147483648
        %v4595 = vxor.u32 %v4563, 2147483648
        %v4596 = vxor.u32 %v4564, 2147483648
        %v4597 = vxor.u32 %v4565, 2147483648
        %v4598 = vxor.u32 %v4566, 2147483648
        %v4599 = vxor.u32 %v4567, 2147483648
        %v4600 = vxor.u32 %v4568, 2147483648
        %v4601 = vxor.u32 %v4569, 2147483648
        %v4602 = vxor.u32 %v4570, 2147483648
        %v4603 = vxor.u32 %v4571, 2147483648
        %v4604 = vxor.u32 %v4572, 2147483648
        %v4605 = vxor.u32 %v4573, 2147483648
        %v4606 = vxor.u32 %v4574, 2147483648
        %v4607 = vmul.f32 %v4575, 1.442695
        %v4608 = vpow.pop %v4607
        %v4609 = vmul.f32 %v4576, 1.442695
        %v4610 = vpow.pop %v4609
        %v4611 = vmul.f32 %v4577, 1.442695
        %v4612 = vpow.pop %v4611
        %v4613 = vmul.f32 %v4578, 1.442695
        %v4614 = vpow.pop %v4613
        %v4615 = vmul.f32 %v4579, 1.442695
        %v4616 = vpow.pop %v4615
        %v4617 = vmul.f32 %v4580, 1.442695
        %v4618 = vpow.pop %v4617
        %v4619 = vmul.f32 %v4581, 1.442695
        %v4620 = vpow.pop %v4619
        %v4621 = vmul.f32 %v4582, 1.442695
        %v4622 = vpow.pop %v4621
        %v4623 = vmul.f32 %v4583, 1.442695
        %v4624 = vpow.pop %v4623
        %v4625 = vmul.f32 %v4584, 1.442695
        %v4626 = vpow.pop %v4625
        %v4627 = vmul.f32 %v4585, 1.442695
        %v4628 = vpow.pop %v4627
        %v4629 = vmul.f32 %v4586, 1.442695
        %v4630 = vpow.pop %v4629
        %v4631 = vmul.f32 %v4587, 1.442695
        %v4632 = vpow.pop %v4631
        %v4633 = vmul.f32 %v4588, 1.442695
        %v4634 = vpow.pop %v4633
        %v4635 = vmul.f32 %v4589, 1.442695
        %v4636 = vpow.pop %v4635
        %v4637 = vmul.f32 %v4590, 1.442695
        %v4638 = vpow.pop %v4637
        %v4639 = vmul.f32 %v4591, 1.442695
        %v4640 = vpow.pop %v4639
        %v4641 = vmul.f32 %v4592, 1.442695
        %v4642 = vpow.pop %v4641
        %v4643 = vmul.f32 %v4593, 1.442695
        %v4644 = vpow.pop %v4643
        %v4645 = vmul.f32 %v4594, 1.442695
        %v4646 = vpow.pop %v4645
        %v4647 = vmul.f32 %v4595, 1.442695
        %v4648 = vpow.pop %v4647
        %v4649 = vmul.f32 %v4596, 1.442695
        %v4650 = vpow.pop %v4649
        %v4651 = vmul.f32 %v4597, 1.442695
        %v4652 = vpow.pop %v4651
        %v4653 = vmul.f32 %v4598, 1.442695
        %v4654 = vpow.pop %v4653
        %v4655 = vmul.f32 %v4599, 1.442695
        %v4656 = vpow.pop %v4655
        %v4657 = vmul.f32 %v4600, 1.442695
        %v4658 = vpow.pop %v4657
        %v4659 = vmul.f32 %v4601, 1.442695
        %v4660 = vpow.pop %v4659
        %v4661 = vmul.f32 %v4602, 1.442695
        %v4662 = vpow.pop %v4661
        %v4663 = vmul.f32 %v4603, 1.442695
        %v4664 = vpow.pop %v4663
        %v4665 = vmul.f32 %v4604, 1.442695
        %v4666 = vpow.pop %v4665
        %v4667 = vmul.f32 %v4605, 1.442695
        %v4668 = vpow.pop %v4667
        %v4669 = vmul.f32 %v4606, 1.442695
        %v4670 = vpow.pop %v4669
        %v4671 = vadd.f32 %v4608, 1.0
        %v4672 = vadd.f32 %v4610, 1.0
        %v4673 = vadd.f32 %v4612, 1.0
        %v4674 = vadd.f32 %v4614, 1.0
        %v4675 = vadd.f32 %v4616, 1.0
        %v4676 = vadd.f32 %v4618, 1.0
        %v4677 = vadd.f32 %v4620, 1.0
        %v4678 = vadd.f32 %v4622, 1.0
        %v4679 = vadd.f32 %v4624, 1.0
        %v4680 = vadd.f32 %v4626, 1.0
        %v4681 = vadd.f32 %v4628, 1.0
        %v4682 = vadd.f32 %v4630, 1.0
        %v4683 = vadd.f32 %v4632, 1.0
        %v4684 = vadd.f32 %v4634, 1.0
        %v4685 = vadd.f32 %v4636, 1.0
        %v4686 = vadd.f32 %v4638, 1.0
        %v4687 = vadd.f32 %v4640, 1.0
        %v4688 = vadd.f32 %v4642, 1.0
        %v4689 = vadd.f32 %v4644, 1.0
        %v4690 = vadd.f32 %v4646, 1.0
        %v4691 = vadd.f32 %v4648, 1.0
        %v4692 = vadd.f32 %v4650, 1.0
        %v4693 = vadd.f32 %v4652, 1.0
        %v4694 = vadd.f32 %v4654, 1.0
        %v4695 = vadd.f32 %v4656, 1.0
        %v4696 = vadd.f32 %v4658, 1.0
        %v4697 = vadd.f32 %v4660, 1.0
        %v4698 = vadd.f32 %v4662, 1.0
        %v4699 = vadd.f32 %v4664, 1.0
        %v4700 = vadd.f32 %v4666, 1.0
        %v4701 = vadd.f32 %v4668, 1.0
        %v4702 = vadd.f32 %v4670, 1.0
        %v4703 = vrcp.pop %v4671
        %v4704 = vmul.f32 1.0, %v4703
        %v4705 = vrcp.pop %v4672
        %v4706 = vmul.f32 1.0, %v4705
        %v4707 = vrcp.pop %v4673
        %v4708 = vmul.f32 1.0, %v4707
        %v4709 = vrcp.pop %v4674
        %v4710 = vmul.f32 1.0, %v4709
        %v4711 = vrcp.pop %v4675
        %v4712 = vmul.f32 1.0, %v4711
        %v4713 = vrcp.pop %v4676
        %v4714 = vmul.f32 1.0, %v4713
        %v4715 = vrcp.pop %v4677
        %v4716 = vmul.f32 1.0, %v4715
        %v4717 = vrcp.pop %v4678
        %v4718 = vmul.f32 1.0, %v4717
        %v4719 = vrcp.pop %v4679
        %v4720 = vmul.f32 1.0, %v4719
        %v4721 = vrcp.pop %v4680
        %v4722 = vmul.f32 1.0, %v4721
        %v4723 = vrcp.pop %v4681
        %v4724 = vmul.f32 1.0, %v4723
        %v4725 = vrcp.pop %v4682
        %v4726 = vmul.f32 1.0, %v4725
        %v4727 = vrcp.pop %v4683
        %v4728 = vmul.f32 1.0, %v4727
        %v4729 = vrcp.pop %v4684
        %v4730 = vmul.f32 1.0, %v4729
        %v4731 = vrcp.pop %v4685
        %v4732 = vmul.f32 1.0, %v4731
        %v4733 = vrcp.pop %v4686
        %v4734 = vmul.f32 1.0, %v4733
        %v4735 = vrcp.pop %v4687
        %v4736 = vmul.f32 1.0, %v4735
        %v4737 = vrcp.pop %v4688
        %v4738 = vmul.f32 1.0, %v4737
        %v4739 = vrcp.pop %v4689
        %v4740 = vmul.f32 1.0, %v4739
        %v4741 = vrcp.pop %v4690
        %v4742 = vmul.f32 1.0, %v4741
        %v4743 = vrcp.pop %v4691
        %v4744 = vmul.f32 1.0, %v4743
        %v4745 = vrcp.pop %v4692
        %v4746 = vmul.f32 1.0, %v4745
        %v4747 = vrcp.pop %v4693
        %v4748 = vmul.f32 1.0, %v4747
        %v4749 = vrcp.pop %v4694
        %v4750 = vmul.f32 1.0, %v4749
        %v4751 = vrcp.pop %v4695
        %v4752 = vmul.f32 1.0, %v4751
        %v4753 = vrcp.pop %v4696
        %v4754 = vmul.f32 1.0, %v4753
        %v4755 = vrcp.pop %v4697
        %v4756 = vmul.f32 1.0, %v4755
        %v4757 = vrcp.pop %v4698
        %v4758 = vmul.f32 1.0, %v4757
        %v4759 = vrcp.pop %v4699
        %v4760 = vmul.f32 1.0, %v4759
        %v4761 = vrcp.pop %v4700
        %v4762 = vmul.f32 1.0, %v4761
        %v4763 = vrcp.pop %v4701
        %v4764 = vmul.f32 1.0, %v4763
        %v4765 = vrcp.pop %v4702
        %v4766 = vmul.f32 1.0, %v4765
        %v4767 = vmul.f32 %v4543, %v4704
        %v4768 = vmul.f32 %v4544, %v4706
        %v4769 = vmul.f32 %v4545, %v4708
        %v4770 = vmul.f32 %v4546, %v4710
        %v4771 = vmul.f32 %v4547, %v4712
        %v4772 = vmul.f32 %v4548, %v4714
        %v4773 = vmul.f32 %v4549, %v4716
        %v4774 = vmul.f32 %v4550, %v4718
        %v4775 = vmul.f32 %v4551, %v4720
        %v4776 = vmul.f32 %v4552, %v4722
        %v4777 = vmul.f32 %v4553, %v4724
        %v4778 = vmul.f32 %v4554, %v4726
        %v4779 = vmul.f32 %v4555, %v4728
        %v4780 = vmul.f32 %v4556, %v4730
        %v4781 = vmul.f32 %v4557, %v4732
        %v4782 = vmul.f32 %v4558, %v4734
        %v4783 = vmul.f32 %v4559, %v4736
        %v4784 = vmul.f32 %v4560, %v4738
        %v4785 = vmul.f32 %v4561, %v4740
        %v4786 = vmul.f32 %v4562, %v4742
        %v4787 = vmul.f32 %v4563, %v4744
        %v4788 = vmul.f32 %v4564, %v4746
        %v4789 = vmul.f32 %v4565, %v4748
        %v4790 = vmul.f32 %v4566, %v4750
        %v4791 = vmul.f32 %v4567, %v4752
        %v4792 = vmul.f32 %v4568, %v4754
        %v4793 = vmul.f32 %v4569, %v4756
        %v4794 = vmul.f32 %v4570, %v4758
        %v4795 = vmul.f32 %v4571, %v4760
        %v4796 = vmul.f32 %v4572, %v4762
        %v4797 = vmul.f32 %v4573, %v4764
        %v4798 = vmul.f32 %v4574, %v4766
        %v4799 = vld [vmem:[%s13] sm:$0x1]
        %v4800 = vrot.slane %v4767, 7
        %v4801 = vrot.slane %v4768, 7
        %v4802 = vrot.slane %v4769, 7
        %v4803 = vrot.slane %v4770, 7
        %v4804 = vrot.slane %v4771, 7
        %v4805 = vrot.slane %v4772, 7
        %v4806 = vrot.slane %v4773, 7
        %v4807 = vrot.slane %v4774, 7
        %v4808 = vrot.slane %v4775, 7
        %v4809 = vrot.slane %v4776, 7
        %v4810 = vrot.slane %v4777, 7
        %v4811 = vrot.slane %v4778, 7
        %v4812 = vrot.slane %v4779, 7
        %v4813 = vrot.slane %v4780, 7
        %v4814 = vrot.slane %v4781, 7
        %v4815 = vrot.slane %v4782, 7
        %v4816 = vrot.slane %v4783, 7
        %v4817 = vrot.slane %v4784, 7
        %v4818 = vrot.slane %v4785, 7
        %v4819 = vrot.slane %v4786, 7
        %v4820 = vrot.slane %v4787, 7
        %v4821 = vrot.slane %v4788, 7
        %v4822 = vrot.slane %v4789, 7
        %v4823 = vrot.slane %v4790, 7
        %v4824 = vrot.slane %v4791, 7
        %v4825 = vrot.slane %v4792, 7
        %v4826 = vrot.slane %v4793, 7
        %v4827 = vrot.slane %v4794, 7
        %v4828 = vrot.slane %v4795, 7
        %v4829 = vrot.slane %v4796, 7
        %v4830 = vrot.slane %v4797, 7
        %v4831 = vrot.slane %v4798, 7
        %v4832 = vsel %vm1248, %v4830, %v4831
        %v4833 = vsel %vm1248, %v4829, %v4830
        %v4834 = vsel %vm1248, %v4828, %v4829
        %v4835 = vsel %vm1248, %v4827, %v4828
        %v4836 = vsel %vm1248, %v4826, %v4827
        %v4837 = vsel %vm1248, %v4825, %v4826
        %v4838 = vsel %vm1248, %v4824, %v4825
        %v4839 = vsel %vm1248, %v4823, %v4824
        %v4840 = vsel %vm1248, %v4822, %v4823
        %v4841 = vsel %vm1248, %v4821, %v4822
        %v4842 = vsel %vm1248, %v4820, %v4821
        %v4843 = vsel %vm1248, %v4819, %v4820
        %v4844 = vsel %vm1248, %v4818, %v4819
        %v4845 = vsel %vm1248, %v4817, %v4818
        %v4846 = vsel %vm1248, %v4816, %v4817
        %v4847 = vsel %vm1248, %v4815, %v4816
        %v4848 = vsel %vm1248, %v4814, %v4815
        %v4849 = vsel %vm1248, %v4813, %v4814
        %v4850 = vsel %vm1248, %v4812, %v4813
        %v4851 = vsel %vm1248, %v4811, %v4812
        %v4852 = vsel %vm1248, %v4810, %v4811
        %v4853 = vsel %vm1248, %v4809, %v4810
        %v4854 = vsel %vm1248, %v4808, %v4809
        %v4855 = vsel %vm1248, %v4807, %v4808
        %v4856 = vsel %vm1248, %v4806, %v4807
        %v4857 = vsel %vm1248, %v4805, %v4806
        %v4858 = vsel %vm1248, %v4804, %v4805
        %v4859 = vsel %vm1248, %v4803, %v4804
        %v4860 = vsel %vm1248, %v4802, %v4803
        %v4861 = vsel %vm1248, %v4801, %v4802
        %v4862 = vsel %vm1248, %v4800, %v4801
        %v4863 = vsel %vm1248, %v4831, %v4800
        %v4864 = vmul.f32 %v4833, %v1284
        %v4865 = vmul.f32 %v4832, %v1289
        %v4866 = vmul.f32 %v4863, %v1294
        %v4867 = vmul.f32 %v4862, %v1299
        %v4868 = vmul.f32 %v4861, %v1304
        %v4869 = vmul.f32 %v4860, %v1309
        %v4870 = vmul.f32 %v4859, %v1314
        %v4871 = vmul.f32 %v4858, %v1319
        %v4872 = vmul.f32 %v4857, %v1324
        %v4873 = vmul.f32 %v4856, %v1329
        %v4874 = vmul.f32 %v4855, %v1334
        %v4875 = vmul.f32 %v4854, %v1339
        %v4876 = vmul.f32 %v4853, %v1344
        %v4877 = vmul.f32 %v4852, %v1349
        %v4878 = vmul.f32 %v4851, %v1354
        %v4879 = vmul.f32 %v4850, %v1359
        %v4880 = vmul.f32 %v4849, %v1364
        %v4881 = vmul.f32 %v4848, %v1369
        %v4882 = vmul.f32 %v4847, %v1374
        %v4883 = vmul.f32 %v4846, %v1379
        %v4884 = vmul.f32 %v4845, %v1384
        %v4885 = vmul.f32 %v4844, %v1389
        %v4886 = vmul.f32 %v4843, %v1394
        %v4887 = vmul.f32 %v4842, %v1399
        %v4888 = vmul.f32 %v4841, %v1404
        %v4889 = vmul.f32 %v4840, %v1409
        %v4890 = vmul.f32 %v4839, %v1414
        %v4891 = vmul.f32 %v4838, %v1419
        %v4892 = vmul.f32 %v4837, %v1424
        %v4893 = vmul.f32 %v4836, %v1429
        %v4894 = vmul.f32 %v4835, %v1434
        %v4895 = vmul.f32 %v4834, %v1439
        %v4896 = vmul.f32 %v4797, %v1475
        %v4897 = vmul.f32 %v4798, %v1479
        %v4898 = vmul.f32 %v4767, %v1483
        %v4899 = vmul.f32 %v4768, %v1487
        %v4900 = vmul.f32 %v4769, %v1491
        %v4901 = vmul.f32 %v4770, %v1495
        %v4902 = vmul.f32 %v4771, %v1499
        %v4903 = vmul.f32 %v4772, %v1503
        %v4904 = vmul.f32 %v4773, %v1507
        %v4905 = vmul.f32 %v4774, %v1511
        %v4906 = vmul.f32 %v4775, %v1515
        %v4907 = vmul.f32 %v4776, %v1519
        %v4908 = vmul.f32 %v4777, %v1523
        %v4909 = vmul.f32 %v4778, %v1527
        %v4910 = vmul.f32 %v4779, %v1531
        %v4911 = vmul.f32 %v4780, %v1535
        %v4912 = vmul.f32 %v4781, %v1539
        %v4913 = vmul.f32 %v4782, %v1543
        %v4914 = vmul.f32 %v4783, %v1547
        %v4915 = vmul.f32 %v4784, %v1551
        %v4916 = vmul.f32 %v4785, %v1555
        %v4917 = vmul.f32 %v4786, %v1559
        %v4918 = vmul.f32 %v4787, %v1563
        %v4919 = vmul.f32 %v4788, %v1567
        %v4920 = vmul.f32 %v4789, %v1571
        %v4921 = vmul.f32 %v4790, %v1575
        %v4922 = vmul.f32 %v4791, %v1579
        %v4923 = vmul.f32 %v4792, %v1583
        %v4924 = vmul.f32 %v4793, %v1587
        %v4925 = vmul.f32 %v4794, %v1591
        %v4926 = vmul.f32 %v4795, %v1595
        %v4927 = vmul.f32 %v4796, %v1599
        %v4928 = vld [vmem:[#allocation5] sm:$0xff]
        %v4929 = vld [vmem:[#allocation5 + $0x8] sm:$0xff]
        %v4930 = vld [vmem:[#allocation5 + $0x10] sm:$0xff]
        %v4931 = vld [vmem:[#allocation5 + $0x18] sm:$0xff]
        %v4932 = vld [vmem:[#allocation5 + $0x20] sm:$0xff]
        %v4933 = vld [vmem:[#allocation5 + $0x28] sm:$0xff]
        %v4934 = vld [vmem:[#allocation5 + $0x30] sm:$0xff]
        %v4935 = vld [vmem:[#allocation5 + $0x38] sm:$0xff]
        %v4936 = vld [vmem:[#allocation5 + $0x40] sm:$0xff]
        %v4937 = vld [vmem:[#allocation5 + $0x48] sm:$0xff]
        %v4938 = vld [vmem:[#allocation5 + $0x50] sm:$0xff]
        %v4939 = vld [vmem:[#allocation5 + $0x58] sm:$0xff]
        %v4940 = vld [vmem:[#allocation5 + $0x60] sm:$0xff]
        %v4941 = vld [vmem:[#allocation5 + $0x68] sm:$0xff]
        %v4942 = vld [vmem:[#allocation5 + $0x70] sm:$0xff]
        %v4943 = vld [vmem:[#allocation5 + $0x78] sm:$0xff]
        %v4944 = vld [vmem:[#allocation5 + $0x80] sm:$0xff]
        %v4945 = vld [vmem:[#allocation5 + $0x88] sm:$0xff]
        %v4946 = vld [vmem:[#allocation5 + $0x90] sm:$0xff]
        %v4947 = vld [vmem:[#allocation5 + $0x98] sm:$0xff]
        %v4948 = vld [vmem:[#allocation5 + $0xa0] sm:$0xff]
        %v4949 = vld [vmem:[#allocation5 + $0xa8] sm:$0xff]
        %v4950 = vld [vmem:[#allocation5 + $0xb0] sm:$0xff]
        %v4951 = vld [vmem:[#allocation5 + $0xb8] sm:$0xff]
        %v4952 = vld [vmem:[#allocation5 + $0xc0] sm:$0xff]
        %v4953 = vld [vmem:[#allocation5 + $0xc8] sm:$0xff]
        %v4954 = vld [vmem:[#allocation5 + $0xd0] sm:$0xff]
        %v4955 = vld [vmem:[#allocation5 + $0xd8] sm:$0xff]
        %v4956 = vld [vmem:[#allocation5 + $0xe0] sm:$0xff]
        %v4957 = vld [vmem:[#allocation5 + $0xe8] sm:$0xff]
        %v4958 = vld [vmem:[#allocation5 + $0xf0] sm:$0xff]
        %v4959 = vld [vmem:[#allocation5 + $0xf8] sm:$0xff]
        %v4960 = vrot.slane %v4767, 1
        %v4961 = vrot.slane %v4768, 1
        %v4962 = vrot.slane %v4769, 1
        %v4963 = vrot.slane %v4770, 1
        %v4964 = vrot.slane %v4771, 1
        %v4965 = vrot.slane %v4772, 1
        %v4966 = vrot.slane %v4773, 1
        %v4967 = vrot.slane %v4774, 1
        %v4968 = vrot.slane %v4775, 1
        %v4969 = vrot.slane %v4776, 1
        %v4970 = vrot.slane %v4777, 1
        %v4971 = vrot.slane %v4778, 1
        %v4972 = vrot.slane %v4779, 1
        %v4973 = vrot.slane %v4780, 1
        %v4974 = vrot.slane %v4781, 1
        %v4975 = vrot.slane %v4782, 1
        %v4976 = vrot.slane %v4783, 1
        %v4977 = vrot.slane %v4784, 1
        %v4978 = vrot.slane %v4785, 1
        %v4979 = vrot.slane %v4786, 1
        %v4980 = vrot.slane %v4787, 1
        %v4981 = vrot.slane %v4788, 1
        %v4982 = vrot.slane %v4789, 1
        %v4983 = vrot.slane %v4790, 1
        %v4984 = vrot.slane %v4791, 1
        %v4985 = vrot.slane %v4792, 1
        %v4986 = vrot.slane %v4793, 1
        %v4987 = vrot.slane %v4794, 1
        %v4988 = vrot.slane %v4795, 1
        %v4989 = vrot.slane %v4796, 1
        %v4990 = vrot.slane %v4797, 1
        %v4991 = vrot.slane %v4798, 1
        %v4992 = vsel %vm1665, %v4990, %v4991
        %v4993 = vsel %vm1665, %v4989, %v4990
        %v4994 = vsel %vm1665, %v4988, %v4989
        %v4995 = vsel %vm1665, %v4987, %v4988
        %v4996 = vsel %vm1665, %v4986, %v4987
        %v4997 = vsel %vm1665, %v4985, %v4986
        %v4998 = vsel %vm1665, %v4984, %v4985
        %v4999 = vsel %vm1665, %v4983, %v4984
        %v5000 = vsel %vm1665, %v4982, %v4983
        %v5001 = vsel %vm1665, %v4981, %v4982
        %v5002 = vsel %vm1665, %v4980, %v4981
        %v5003 = vsel %vm1665, %v4979, %v4980
        %v5004 = vsel %vm1665, %v4978, %v4979
        %v5005 = vsel %vm1665, %v4977, %v4978
        %v5006 = vsel %vm1665, %v4976, %v4977
        %v5007 = vsel %vm1665, %v4975, %v4976
        %v5008 = vsel %vm1665, %v4974, %v4975
        %v5009 = vsel %vm1665, %v4973, %v4974
        %v5010 = vsel %vm1665, %v4972, %v4973
        %v5011 = vsel %vm1665, %v4971, %v4972
        %v5012 = vsel %vm1665, %v4970, %v4971
        %v5013 = vsel %vm1665, %v4969, %v4970
        %v5014 = vsel %vm1665, %v4968, %v4969
        %v5015 = vsel %vm1665, %v4967, %v4968
        %v5016 = vsel %vm1665, %v4966, %v4967
        %v5017 = vsel %vm1665, %v4965, %v4966
        %v5018 = vsel %vm1665, %v4964, %v4965
        %v5019 = vsel %vm1665, %v4963, %v4964
        %v5020 = vsel %vm1665, %v4962, %v4963
        %v5021 = vsel %vm1665, %v4961, %v4962
        %v5022 = vsel %vm1665, %v4960, %v4961
        %v5023 = vsel %vm1665, %v4991, %v4960
        %v5024 = vmul.f32 %v4992, %v1700
        %v5025 = vmul.f32 %v5023, %v1704
        %v5026 = vmul.f32 %v5022, %v1708
        %v5027 = vmul.f32 %v5021, %v1712
        %v5028 = vmul.f32 %v5020, %v1716
        %v5029 = vmul.f32 %v5019, %v1720
        %v5030 = vmul.f32 %v5018, %v1724
        %v5031 = vmul.f32 %v5017, %v1728
        %v5032 = vmul.f32 %v5016, %v1732
        %v5033 = vmul.f32 %v5015, %v1736
        %v5034 = vmul.f32 %v5014, %v1740
        %v5035 = vmul.f32 %v5013, %v1744
        %v5036 = vmul.f32 %v5012, %v1748
        %v5037 = vmul.f32 %v5011, %v1752
        %v5038 = vmul.f32 %v5010, %v1756
        %v5039 = vmul.f32 %v5009, %v1760
        %v5040 = vmul.f32 %v5008, %v1764
        %v5041 = vmul.f32 %v5007, %v1768
        %v5042 = vmul.f32 %v5006, %v1772
        %v5043 = vmul.f32 %v5005, %v1776
        %v5044 = vmul.f32 %v5004, %v1780
        %v5045 = vmul.f32 %v5003, %v1784
        %v5046 = vmul.f32 %v5002, %v1788
        %v5047 = vmul.f32 %v5001, %v1792
        %v5048 = vmul.f32 %v5000, %v1796
        %v5049 = vmul.f32 %v4999, %v1800
        %v5050 = vmul.f32 %v4998, %v1804
        %v5051 = vmul.f32 %v4997, %v1808
        %v5052 = vmul.f32 %v4996, %v1812
        %v5053 = vmul.f32 %v4995, %v1816
        %v5054 = vmul.f32 %v4994, %v1820
        %v5055 = vmul.f32 %v4993, %v1824
        %v5056 = vmul.f32 %v4863, %v1860
        %v5057 = vmul.f32 %v4862, %v1864
        %v5058 = vmul.f32 %v4861, %v1868
        %v5059 = vmul.f32 %v4860, %v1872
        %v5060 = vmul.f32 %v4859, %v1876
        %v5061 = vmul.f32 %v4858, %v1880
        %v5062 = vmul.f32 %v4857, %v1884
        %v5063 = vmul.f32 %v4856, %v1888
        %v5064 = vmul.f32 %v4855, %v1892
        %v5065 = vmul.f32 %v4854, %v1896
        %v5066 = vmul.f32 %v4853, %v1900
        %v5067 = vmul.f32 %v4852, %v1904
        %v5068 = vmul.f32 %v4851, %v1908
        %v5069 = vmul.f32 %v4850, %v1912
        %v5070 = vmul.f32 %v4849, %v1916
        %v5071 = vmul.f32 %v4848, %v1920
        %v5072 = vmul.f32 %v4847, %v1924
        %v5073 = vmul.f32 %v4846, %v1928
        %v5074 = vmul.f32 %v4845, %v1932
        %v5075 = vmul.f32 %v4844, %v1936
        %v5076 = vmul.f32 %v4843, %v1940
        %v5077 = vmul.f32 %v4842, %v1944
        %v5078 = vmul.f32 %v4841, %v1948
        %v5079 = vmul.f32 %v4840, %v1952
        %v5080 = vmul.f32 %v4839, %v1956
        %v5081 = vmul.f32 %v4838, %v1960
        %v5082 = vmul.f32 %v4837, %v1964
        %v5083 = vmul.f32 %v4836, %v1968
        %v5084 = vmul.f32 %v4835, %v1972
        %v5085 = vmul.f32 %v4834, %v1976
        %v5086 = vmul.f32 %v4833, %v1980
        %v5087 = vmul.f32 %v4832, %v1984
        %v5088 = vld [vmem:[#allocation5 + $0x100] sm:$0xff]
        %v5089 = vld [vmem:[#allocation5 + $0x108] sm:$0xff]
        %v5090 = vld [vmem:[#allocation5 + $0x110] sm:$0xff]
        %v5091 = vld [vmem:[#allocation5 + $0x118] sm:$0xff]
        %v5092 = vld [vmem:[#allocation5 + $0x120] sm:$0xff]
        %v5093 = vld [vmem:[#allocation5 + $0x128] sm:$0xff]
        %v5094 = vld [vmem:[#allocation5 + $0x130] sm:$0xff]
        %v5095 = vld [vmem:[#allocation5 + $0x138] sm:$0xff]
        %v5096 = vld [vmem:[#allocation5 + $0x140] sm:$0xff]
        %v5097 = vld [vmem:[#allocation5 + $0x148] sm:$0xff]
        %v5098 = vld [vmem:[#allocation5 + $0x150] sm:$0xff]
        %v5099 = vld [vmem:[#allocation5 + $0x158] sm:$0xff]
        %v5100 = vld [vmem:[#allocation5 + $0x160] sm:$0xff]
        %v5101 = vld [vmem:[#allocation5 + $0x168] sm:$0xff]
        %v5102 = vld [vmem:[#allocation5 + $0x170] sm:$0xff]
        %v5103 = vld [vmem:[#allocation5 + $0x178] sm:$0xff]
        %v5104 = vld [vmem:[#allocation5 + $0x180] sm:$0xff]
        %v5105 = vld [vmem:[#allocation5 + $0x188] sm:$0xff]
        %v5106 = vld [vmem:[#allocation5 + $0x190] sm:$0xff]
        %v5107 = vld [vmem:[#allocation5 + $0x198] sm:$0xff]
        %v5108 = vld [vmem:[#allocation5 + $0x1a0] sm:$0xff]
        %v5109 = vld [vmem:[#allocation5 + $0x1a8] sm:$0xff]
        %v5110 = vld [vmem:[#allocation5 + $0x1b0] sm:$0xff]
        %v5111 = vld [vmem:[#allocation5 + $0x1b8] sm:$0xff]
        %v5112 = vld [vmem:[#allocation5 + $0x1c0] sm:$0xff]
        %v5113 = vld [vmem:[#allocation5 + $0x1c8] sm:$0xff]
        %v5114 = vld [vmem:[#allocation5 + $0x1d0] sm:$0xff]
        %v5115 = vld [vmem:[#allocation5 + $0x1d8] sm:$0xff]
        %v5116 = vld [vmem:[#allocation5 + $0x1e0] sm:$0xff]
        %v5117 = vld [vmem:[#allocation5 + $0x1e8] sm:$0xff]
        %v5118 = vld [vmem:[#allocation5 + $0x1f0] sm:$0xff]
        %v5119 = vld [vmem:[#allocation5 + $0x1f8] sm:$0xff]
        %5120 = vmatprep.subr.mxu0 0.0
        %5121 = vmatpush1.msra.mxu0 %v5103
        %5122 = vmatprep.subr.mxu0 0.0
        %5123 = vmatpush1.msra.mxu0 %v5102
        %5124 = vmatprep.subr.mxu0 0.0
        %5125 = vmatpush1.msra.mxu0 %v5101
        %5126 = vmatprep.subr.mxu0 0.0
        %5127 = vmatpush1.msra.mxu0 %v5100
        %5128 = vmatprep.subr.mxu0 0.0
        %5129 = vmatpush1.msra.mxu0 %v5099
        %5130 = vmatprep.subr.mxu0 0.0
        %5131 = vmatpush1.msra.mxu0 %v5098
        %5132 = vmatprep.subr.mxu0 0.0
        %5133 = vmatpush1.msra.mxu0 %v5097
        %5134 = vmatprep.subr.mxu0 0.0
        %5135 = vmatpush1.msra.mxu0 %v5096
        %5136 = vmatprep.subr.mxu0 0.0
        %5137 = vmatpush1.msra.mxu0 %v5095
        %5138 = vmatprep.subr.mxu0 0.0
        %5139 = vmatpush1.msra.mxu0 %v5094
        %5140 = vmatprep.subr.mxu0 0.0
        %5141 = vmatpush1.msra.mxu0 %v5093
        %5142 = vmatprep.subr.mxu0 0.0
        %5143 = vmatpush1.msra.mxu0 %v5092
        %5144 = vmatprep.subr.mxu0 0.0
        %5145 = vmatpush1.msra.mxu0 %v5091
        %5146 = vmatprep.subr.mxu0 0.0
        %5147 = vmatpush1.msra.mxu0 %v5090
        %5148 = vmatprep.subr.mxu0 0.0
        %5149 = vmatpush1.msra.mxu0 %v5089
        %5150 = vmatprep.subr.mxu0 0.0
        %5151 = vmatpush1.msra.mxu0 %v5088
        %5152 = vmatprep.subr.mxu0 0.0
        %5153 = vmatpush2.msra.mxu0 %v5119
        %5154 = vmatprep.subr.mxu0 0.0
        %5155 = vmatpush2.msra.mxu0 %v5118
        %5156 = vmatprep.subr.mxu0 0.0
        %5157 = vmatpush2.msra.mxu0 %v5117
        %5158 = vmatprep.subr.mxu0 0.0
        %5159 = vmatpush2.msra.mxu0 %v5116
        %5160 = vmatprep.subr.mxu0 0.0
        %5161 = vmatpush2.msra.mxu0 %v5115
        %5162 = vmatprep.subr.mxu0 0.0
        %5163 = vmatpush2.msra.mxu0 %v5114
        %5164 = vmatprep.subr.mxu0 0.0
        %5165 = vmatpush2.msra.mxu0 %v5113
        %5166 = vmatprep.subr.mxu0 0.0
        %5167 = vmatpush2.msra.mxu0 %v5112
        %5168 = vmatprep.subr.mxu0 0.0
        %5169 = vmatpush2.msra.mxu0 %v5111
        %5170 = vmatprep.subr.mxu0 0.0
        %5171 = vmatpush2.msra.mxu0 %v5110
        %5172 = vmatprep.subr.mxu0 0.0
        %5173 = vmatpush2.msra.mxu0 %v5109
        %5174 = vmatprep.subr.mxu0 0.0
        %5175 = vmatpush2.msra.mxu0 %v5108
        %5176 = vmatprep.subr.mxu0 0.0
        %5177 = vmatpush2.msra.mxu0 %v5107
        %5178 = vmatprep.subr.mxu0 0.0
        %5179 = vmatpush2.msra.mxu0 %v5106
        %5180 = vmatprep.subr.mxu0 0.0
        %5181 = vmatpush2.msra.mxu0 %v5105
        %5182 = vmatprep.subr.mxu0 0.0
        %5183 = vmatpush2.msra.mxu0 %v5104
        %5184 = vmatprep.mubr.f32.mxu0 %v5056
        %5185 = vmatmul.mubr.f32.gmra.mxu0 %v5024
        %v5186 = vpop.f32.mrf.mxu0
        %v5187 = vadd.f32 0.0, %v5186
        %v5188 = vpop.f32.mrf.mxu0
        %5189 = vmatprep.mubr.f32.mxu0 %v5057
        %5190 = vmatmul.mubr.f32.gmra.mxu0 %v5025
        %v5191 = vpop.f32.mrf.mxu0
        %v5192 = vadd.f32 0.0, %v5191
        %v5193 = vpop.f32.mrf.mxu0
        %5194 = vmatprep.mubr.f32.mxu0 %v5058
        %5195 = vmatmul.mubr.f32.gmra.mxu0 %v5026
        %v5196 = vpop.f32.mrf.mxu0
        %v5197 = vadd.f32 0.0, %v5196
        %v5198 = vpop.f32.mrf.mxu0
        %5199 = vmatprep.mubr.f32.mxu0 %v5059
        %5200 = vmatmul.mubr.f32.gmra.mxu0 %v5027
        %v5201 = vpop.f32.mrf.mxu0
        %v5202 = vadd.f32 0.0, %v5201
        %v5203 = vpop.f32.mrf.mxu0
        %5204 = vmatprep.mubr.f32.mxu0 %v5060
        %5205 = vmatmul.mubr.f32.gmra.mxu0 %v5028
        %v5206 = vpop.f32.mrf.mxu0
        %v5207 = vadd.f32 0.0, %v5206
        %v5208 = vpop.f32.mrf.mxu0
        %5209 = vmatprep.mubr.f32.mxu0 %v5061
        %5210 = vmatmul.mubr.f32.gmra.mxu0 %v5029
        %v5211 = vpop.f32.mrf.mxu0
        %v5212 = vadd.f32 0.0, %v5211
        %v5213 = vpop.f32.mrf.mxu0
        %5214 = vmatprep.mubr.f32.mxu0 %v5062
        %5215 = vmatmul.mubr.f32.gmra.mxu0 %v5030
        %v5216 = vpop.f32.mrf.mxu0
        %v5217 = vadd.f32 0.0, %v5216
        %v5218 = vpop.f32.mrf.mxu0
        %5219 = vmatprep.mubr.f32.mxu0 %v5063
        %5220 = vmatmul.mubr.f32.gmra.mxu0 %v5031
        %v5221 = vpop.f32.mrf.mxu0
        %v5222 = vadd.f32 0.0, %v5221
        %v5223 = vpop.f32.mrf.mxu0
        %5224 = vmatprep.mubr.f32.mxu0 %v5064
        %5225 = vmatmul.mubr.f32.gmra.mxu0 %v5032
        %v5226 = vpop.f32.mrf.mxu0
        %v5227 = vadd.f32 0.0, %v5226
        %v5228 = vpop.f32.mrf.mxu0
        %5229 = vmatprep.mubr.f32.mxu0 %v5065
        %5230 = vmatmul.mubr.f32.gmra.mxu0 %v5033
        %v5231 = vpop.f32.mrf.mxu0
        %v5232 = vadd.f32 0.0, %v5231
        %v5233 = vpop.f32.mrf.mxu0
        %5234 = vmatprep.mubr.f32.mxu0 %v5066
        %5235 = vmatmul.mubr.f32.gmra.mxu0 %v5034
        %v5236 = vpop.f32.mrf.mxu0
        %v5237 = vadd.f32 0.0, %v5236
        %v5238 = vpop.f32.mrf.mxu0
        %5239 = vmatprep.mubr.f32.mxu0 %v5067
        %5240 = vmatmul.mubr.f32.gmra.mxu0 %v5035
        %v5241 = vpop.f32.mrf.mxu0
        %v5242 = vadd.f32 0.0, %v5241
        %v5243 = vpop.f32.mrf.mxu0
        %5244 = vmatprep.mubr.f32.mxu0 %v5068
        %5245 = vmatmul.mubr.f32.gmra.mxu0 %v5036
        %v5246 = vpop.f32.mrf.mxu0
        %v5247 = vadd.f32 0.0, %v5246
        %v5248 = vpop.f32.mrf.mxu0
        %5249 = vmatprep.mubr.f32.mxu0 %v5069
        %5250 = vmatmul.mubr.f32.gmra.mxu0 %v5037
        %v5251 = vpop.f32.mrf.mxu0
        %v5252 = vadd.f32 0.0, %v5251
        %v5253 = vpop.f32.mrf.mxu0
        %5254 = vmatprep.mubr.f32.mxu0 %v5070
        %5255 = vmatmul.mubr.f32.gmra.mxu0 %v5038
        %v5256 = vpop.f32.mrf.mxu0
        %v5257 = vadd.f32 0.0, %v5256
        %v5258 = vpop.f32.mrf.mxu0
        %5259 = vmatprep.mubr.f32.mxu0 %v5071
        %5260 = vmatmul.mubr.f32.gmra.mxu0 %v5039
        %v5261 = vpop.f32.mrf.mxu0
        %v5262 = vadd.f32 0.0, %v5261
        %v5263 = vpop.f32.mrf.mxu0
        %5264 = vmatprep.mubr.f32.mxu0 %v5072
        %5265 = vmatmul.mubr.f32.gmra.mxu0 %v5040
        %v5266 = vpop.f32.mrf.mxu0
        %v5267 = vadd.f32 0.0, %v5266
        %v5268 = vpop.f32.mrf.mxu0
        %5269 = vmatprep.mubr.f32.mxu0 %v5073
        %5270 = vmatmul.mubr.f32.gmra.mxu0 %v5041
        %v5271 = vpop.f32.mrf.mxu0
        %v5272 = vadd.f32 0.0, %v5271
        %v5273 = vpop.f32.mrf.mxu0
        %5274 = vmatprep.mubr.f32.mxu0 %v5074
        %5275 = vmatmul.mubr.f32.gmra.mxu0 %v5042
        %v5276 = vpop.f32.mrf.mxu0
        %v5277 = vadd.f32 0.0, %v5276
        %v5278 = vpop.f32.mrf.mxu0
        %5279 = vmatprep.mubr.f32.mxu0 %v5075
        %5280 = vmatmul.mubr.f32.gmra.mxu0 %v5043
        %v5281 = vpop.f32.mrf.mxu0
        %v5282 = vadd.f32 0.0, %v5281
        %v5283 = vpop.f32.mrf.mxu0
        %5284 = vmatprep.mubr.f32.mxu0 %v5076
        %5285 = vmatmul.mubr.f32.gmra.mxu0 %v5044
        %v5286 = vpop.f32.mrf.mxu0
        %v5287 = vadd.f32 0.0, %v5286
        %v5288 = vpop.f32.mrf.mxu0
        %5289 = vmatprep.mubr.f32.mxu0 %v5077
        %5290 = vmatmul.mubr.f32.gmra.mxu0 %v5045
        %v5291 = vpop.f32.mrf.mxu0
        %v5292 = vadd.f32 0.0, %v5291
        %v5293 = vpop.f32.mrf.mxu0
        %5294 = vmatprep.mubr.f32.mxu0 %v5078
        %5295 = vmatmul.mubr.f32.gmra.mxu0 %v5046
        %v5296 = vpop.f32.mrf.mxu0
        %v5297 = vadd.f32 0.0, %v5296
        %v5298 = vpop.f32.mrf.mxu0
        %5299 = vmatprep.mubr.f32.mxu0 %v5079
        %5300 = vmatmul.mubr.f32.gmra.mxu0 %v5047
        %v5301 = vpop.f32.mrf.mxu0
        %v5302 = vadd.f32 0.0, %v5301
        %v5303 = vpop.f32.mrf.mxu0
        %5304 = vmatprep.mubr.f32.mxu0 %v5080
        %5305 = vmatmul.mubr.f32.gmra.mxu0 %v5048
        %v5306 = vpop.f32.mrf.mxu0
        %v5307 = vadd.f32 0.0, %v5306
        %v5308 = vpop.f32.mrf.mxu0
        %5309 = vmatprep.mubr.f32.mxu0 %v5081
        %5310 = vmatmul.mubr.f32.gmra.mxu0 %v5049
        %v5311 = vpop.f32.mrf.mxu0
        %v5312 = vadd.f32 0.0, %v5311
        %v5313 = vpop.f32.mrf.mxu0
        %5314 = vmatprep.mubr.f32.mxu0 %v5082
        %5315 = vmatmul.mubr.f32.gmra.mxu0 %v5050
        %v5316 = vpop.f32.mrf.mxu0
        %v5317 = vadd.f32 0.0, %v5316
        %v5318 = vpop.f32.mrf.mxu0
        %5319 = vmatprep.mubr.f32.mxu0 %v5083
        %5320 = vmatmul.mubr.f32.gmra.mxu0 %v5051
        %v5321 = vpop.f32.mrf.mxu0
        %v5322 = vadd.f32 0.0, %v5321
        %v5323 = vpop.f32.mrf.mxu0
        %5324 = vmatprep.mubr.f32.mxu0 %v5084
        %5325 = vmatmul.mubr.f32.gmra.mxu0 %v5052
        %v5326 = vpop.f32.mrf.mxu0
        %v5327 = vadd.f32 0.0, %v5326
        %v5328 = vpop.f32.mrf.mxu0
        %5329 = vmatprep.mubr.f32.mxu0 %v5085
        %5330 = vmatmul.mubr.f32.gmra.mxu0 %v5053
        %v5331 = vpop.f32.mrf.mxu0
        %v5332 = vadd.f32 0.0, %v5331
        %v5333 = vpop.f32.mrf.mxu0
        %5334 = vmatprep.mubr.f32.mxu0 %v5086
        %5335 = vmatmul.mubr.f32.gmra.mxu0 %v5054
        %v5336 = vpop.f32.mrf.mxu0
        %v5337 = vadd.f32 0.0, %v5336
        %v5338 = vpop.f32.mrf.mxu0
        %5339 = vmatprep.mubr.f32.mxu0 %v5087
        %5340 = vmatmul.mubr.f32.gmra.mxu0 %v5055
        %v5341 = vpop.f32.mrf.mxu0
        %v5342 = vadd.f32 0.0, %v5341
        %v5343 = vpop.f32.mrf.mxu0
        %5344 = vdwg.mxu0
        %5345 = vmatprep.subr.mxu0 0.0
        %5346 = vmatpush1.msra.mxu0 %v4943
        %5347 = vmatprep.subr.mxu0 0.0
        %5348 = vmatpush1.msra.mxu0 %v4942
        %5349 = vmatprep.subr.mxu0 0.0
        %5350 = vmatpush1.msra.mxu0 %v4941
        %5351 = vmatprep.subr.mxu0 0.0
        %5352 = vmatpush1.msra.mxu0 %v4940
        %5353 = vmatprep.subr.mxu0 0.0
        %5354 = vmatpush1.msra.mxu0 %v4939
        %5355 = vmatprep.subr.mxu0 0.0
        %5356 = vmatpush1.msra.mxu0 %v4938
        %5357 = vmatprep.subr.mxu0 0.0
        %5358 = vmatpush1.msra.mxu0 %v4937
        %5359 = vmatprep.subr.mxu0 0.0
        %5360 = vmatpush1.msra.mxu0 %v4936
        %5361 = vmatprep.subr.mxu0 0.0
        %5362 = vmatpush1.msra.mxu0 %v4935
        %5363 = vmatprep.subr.mxu0 0.0
        %5364 = vmatpush1.msra.mxu0 %v4934
        %5365 = vmatprep.subr.mxu0 0.0
        %5366 = vmatpush1.msra.mxu0 %v4933
        %5367 = vmatprep.subr.mxu0 0.0
        %5368 = vmatpush1.msra.mxu0 %v4932
        %5369 = vmatprep.subr.mxu0 0.0
        %5370 = vmatpush1.msra.mxu0 %v4931
        %5371 = vmatprep.subr.mxu0 0.0
        %5372 = vmatpush1.msra.mxu0 %v4930
        %5373 = vmatprep.subr.mxu0 0.0
        %5374 = vmatpush1.msra.mxu0 %v4929
        %5375 = vmatprep.subr.mxu0 0.0
        %5376 = vmatpush1.msra.mxu0 %v4928
        %5377 = vmatprep.subr.mxu0 0.0
        %5378 = vmatpush2.msra.mxu0 %v4959
        %5379 = vmatprep.subr.mxu0 0.0
        %5380 = vmatpush2.msra.mxu0 %v4958
        %5381 = vmatprep.subr.mxu0 0.0
        %5382 = vmatpush2.msra.mxu0 %v4957
        %5383 = vmatprep.subr.mxu0 0.0
        %5384 = vmatpush2.msra.mxu0 %v4956
        %5385 = vmatprep.subr.mxu0 0.0
        %5386 = vmatpush2.msra.mxu0 %v4955
        %5387 = vmatprep.subr.mxu0 0.0
        %5388 = vmatpush2.msra.mxu0 %v4954
        %5389 = vmatprep.subr.mxu0 0.0
        %5390 = vmatpush2.msra.mxu0 %v4953
        %5391 = vmatprep.subr.mxu0 0.0
        %5392 = vmatpush2.msra.mxu0 %v4952
        %5393 = vmatprep.subr.mxu0 0.0
        %5394 = vmatpush2.msra.mxu0 %v4951
        %5395 = vmatprep.subr.mxu0 0.0
        %5396 = vmatpush2.msra.mxu0 %v4950
        %5397 = vmatprep.subr.mxu0 0.0
        %5398 = vmatpush2.msra.mxu0 %v4949
        %5399 = vmatprep.subr.mxu0 0.0
        %5400 = vmatpush2.msra.mxu0 %v4948
        %5401 = vmatprep.subr.mxu0 0.0
        %5402 = vmatpush2.msra.mxu0 %v4947
        %5403 = vmatprep.subr.mxu0 0.0
        %5404 = vmatpush2.msra.mxu0 %v4946
        %5405 = vmatprep.subr.mxu0 0.0
        %5406 = vmatpush2.msra.mxu0 %v4945
        %5407 = vmatprep.subr.mxu0 0.0
        %5408 = vmatpush2.msra.mxu0 %v4944
        %5409 = vmatprep.mubr.f32.mxu0 %v4896
        %5410 = vmatmul.mubr.f32.gmra.mxu0 %v4864
        %v5411 = vpop.f32.mrf.mxu0
        %v5412 = vadd.f32 %v5187, %v5411
        %v5413 = vpop.f32.mrf.mxu0
        %5414 = vmatprep.mubr.f32.mxu0 %v4897
        %5415 = vmatmul.mubr.f32.gmra.mxu0 %v4865
        %v5416 = vpop.f32.mrf.mxu0
        %v5417 = vadd.f32 %v5192, %v5416
        %v5418 = vpop.f32.mrf.mxu0
        %5419 = vmatprep.mubr.f32.mxu0 %v4898
        %5420 = vmatmul.mubr.f32.gmra.mxu0 %v4866
        %v5421 = vpop.f32.mrf.mxu0
        %v5422 = vadd.f32 %v5197, %v5421
        %v5423 = vpop.f32.mrf.mxu0
        %5424 = vmatprep.mubr.f32.mxu0 %v4899
        %5425 = vmatmul.mubr.f32.gmra.mxu0 %v4867
        %v5426 = vpop.f32.mrf.mxu0
        %v5427 = vadd.f32 %v5202, %v5426
        %v5428 = vpop.f32.mrf.mxu0
        %5429 = vmatprep.mubr.f32.mxu0 %v4900
        %5430 = vmatmul.mubr.f32.gmra.mxu0 %v4868
        %v5431 = vpop.f32.mrf.mxu0
        %v5432 = vadd.f32 %v5207, %v5431
        %v5433 = vpop.f32.mrf.mxu0
        %5434 = vmatprep.mubr.f32.mxu0 %v4901
        %5435 = vmatmul.mubr.f32.gmra.mxu0 %v4869
        %v5436 = vpop.f32.mrf.mxu0
        %v5437 = vadd.f32 %v5212, %v5436
        %v5438 = vpop.f32.mrf.mxu0
        %5439 = vmatprep.mubr.f32.mxu0 %v4902
        %5440 = vmatmul.mubr.f32.gmra.mxu0 %v4870
        %v5441 = vpop.f32.mrf.mxu0
        %v5442 = vadd.f32 %v5217, %v5441
        %v5443 = vpop.f32.mrf.mxu0
        %5444 = vmatprep.mubr.f32.mxu0 %v4903
        %5445 = vmatmul.mubr.f32.gmra.mxu0 %v4871
        %v5446 = vpop.f32.mrf.mxu0
        %v5447 = vadd.f32 %v5222, %v5446
        %v5448 = vpop.f32.mrf.mxu0
        %5449 = vmatprep.mubr.f32.mxu0 %v4904
        %5450 = vmatmul.mubr.f32.gmra.mxu0 %v4872
        %v5451 = vpop.f32.mrf.mxu0
        %v5452 = vadd.f32 %v5227, %v5451
        %v5453 = vpop.f32.mrf.mxu0
        %5454 = vmatprep.mubr.f32.mxu0 %v4905
        %5455 = vmatmul.mubr.f32.gmra.mxu0 %v4873
        %v5456 = vpop.f32.mrf.mxu0
        %v5457 = vadd.f32 %v5232, %v5456
        %v5458 = vpop.f32.mrf.mxu0
        %5459 = vmatprep.mubr.f32.mxu0 %v4906
        %5460 = vmatmul.mubr.f32.gmra.mxu0 %v4874
        %v5461 = vpop.f32.mrf.mxu0
        %v5462 = vadd.f32 %v5237, %v5461
        %v5463 = vpop.f32.mrf.mxu0
        %5464 = vmatprep.mubr.f32.mxu0 %v4907
        %5465 = vmatmul.mubr.f32.gmra.mxu0 %v4875
        %v5466 = vpop.f32.mrf.mxu0
        %v5467 = vadd.f32 %v5242, %v5466
        %v5468 = vpop.f32.mrf.mxu0
        %5469 = vmatprep.mubr.f32.mxu0 %v4908
        %5470 = vmatmul.mubr.f32.gmra.mxu0 %v4876
        %v5471 = vpop.f32.mrf.mxu0
        %v5472 = vadd.f32 %v5247, %v5471
        %v5473 = vpop.f32.mrf.mxu0
        %5474 = vmatprep.mubr.f32.mxu0 %v4909
        %5475 = vmatmul.mubr.f32.gmra.mxu0 %v4877
        %v5476 = vpop.f32.mrf.mxu0
        %v5477 = vadd.f32 %v5252, %v5476
        %v5478 = vpop.f32.mrf.mxu0
        %5479 = vmatprep.mubr.f32.mxu0 %v4910
        %5480 = vmatmul.mubr.f32.gmra.mxu0 %v4878
        %v5481 = vpop.f32.mrf.mxu0
        %v5482 = vadd.f32 %v5257, %v5481
        %v5483 = vpop.f32.mrf.mxu0
        %5484 = vmatprep.mubr.f32.mxu0 %v4911
        %5485 = vmatmul.mubr.f32.gmra.mxu0 %v4879
        %v5486 = vpop.f32.mrf.mxu0
        %v5487 = vadd.f32 %v5262, %v5486
        %v5488 = vpop.f32.mrf.mxu0
        %5489 = vmatprep.mubr.f32.mxu0 %v4912
        %5490 = vmatmul.mubr.f32.gmra.mxu0 %v4880
        %v5491 = vpop.f32.mrf.mxu0
        %v5492 = vadd.f32 %v5267, %v5491
        %v5493 = vpop.f32.mrf.mxu0
        %5494 = vmatprep.mubr.f32.mxu0 %v4913
        %5495 = vmatmul.mubr.f32.gmra.mxu0 %v4881
        %v5496 = vpop.f32.mrf.mxu0
        %v5497 = vadd.f32 %v5272, %v5496
        %v5498 = vpop.f32.mrf.mxu0
        %5499 = vmatprep.mubr.f32.mxu0 %v4914
        %5500 = vmatmul.mubr.f32.gmra.mxu0 %v4882
        %v5501 = vpop.f32.mrf.mxu0
        %v5502 = vadd.f32 %v5277, %v5501
        %v5503 = vpop.f32.mrf.mxu0
        %5504 = vmatprep.mubr.f32.mxu0 %v4915
        %5505 = vmatmul.mubr.f32.gmra.mxu0 %v4883
        %v5506 = vpop.f32.mrf.mxu0
        %v5507 = vadd.f32 %v5282, %v5506
        %v5508 = vpop.f32.mrf.mxu0
        %5509 = vmatprep.mubr.f32.mxu0 %v4916
        %5510 = vmatmul.mubr.f32.gmra.mxu0 %v4884
        %v5511 = vpop.f32.mrf.mxu0
        %v5512 = vadd.f32 %v5287, %v5511
        %v5513 = vpop.f32.mrf.mxu0
        %5514 = vmatprep.mubr.f32.mxu0 %v4917
        %5515 = vmatmul.mubr.f32.gmra.mxu0 %v4885
        %v5516 = vpop.f32.mrf.mxu0
        %v5517 = vadd.f32 %v5292, %v5516
        %v5518 = vpop.f32.mrf.mxu0
        %5519 = vmatprep.mubr.f32.mxu0 %v4918
        %5520 = vmatmul.mubr.f32.gmra.mxu0 %v4886
        %v5521 = vpop.f32.mrf.mxu0
        %v5522 = vadd.f32 %v5297, %v5521
        %v5523 = vpop.f32.mrf.mxu0
        %5524 = vmatprep.mubr.f32.mxu0 %v4919
        %5525 = vmatmul.mubr.f32.gmra.mxu0 %v4887
        %v5526 = vpop.f32.mrf.mxu0
        %v5527 = vadd.f32 %v5302, %v5526
        %v5528 = vpop.f32.mrf.mxu0
        %5529 = vmatprep.mubr.f32.mxu0 %v4920
        %5530 = vmatmul.mubr.f32.gmra.mxu0 %v4888
        %v5531 = vpop.f32.mrf.mxu0
        %v5532 = vadd.f32 %v5307, %v5531
        %v5533 = vpop.f32.mrf.mxu0
        %5534 = vmatprep.mubr.f32.mxu0 %v4921
        %5535 = vmatmul.mubr.f32.gmra.mxu0 %v4889
        %v5536 = vpop.f32.mrf.mxu0
        %v5537 = vadd.f32 %v5312, %v5536
        %v5538 = vpop.f32.mrf.mxu0
        %5539 = vmatprep.mubr.f32.mxu0 %v4922
        %5540 = vmatmul.mubr.f32.gmra.mxu0 %v4890
        %v5541 = vpop.f32.mrf.mxu0
        %v5542 = vadd.f32 %v5317, %v5541
        %v5543 = vpop.f32.mrf.mxu0
        %5544 = vmatprep.mubr.f32.mxu0 %v4923
        %5545 = vmatmul.mubr.f32.gmra.mxu0 %v4891
        %v5546 = vpop.f32.mrf.mxu0
        %v5547 = vadd.f32 %v5322, %v5546
        %v5548 = vpop.f32.mrf.mxu0
        %5549 = vmatprep.mubr.f32.mxu0 %v4924
        %5550 = vmatmul.mubr.f32.gmra.mxu0 %v4892
        %v5551 = vpop.f32.mrf.mxu0
        %v5552 = vadd.f32 %v5327, %v5551
        %v5553 = vpop.f32.mrf.mxu0
        %5554 = vmatprep.mubr.f32.mxu0 %v4925
        %5555 = vmatmul.mubr.f32.gmra.mxu0 %v4893
        %v5556 = vpop.f32.mrf.mxu0
        %v5557 = vadd.f32 %v5332, %v5556
        %v5558 = vpop.f32.mrf.mxu0
        %5559 = vmatprep.mubr.f32.mxu0 %v4926
        %5560 = vmatmul.mubr.f32.gmra.mxu0 %v4894
        %v5561 = vpop.f32.mrf.mxu0
        %v5562 = vadd.f32 %v5337, %v5561
        %v5563 = vpop.f32.mrf.mxu0
        %5564 = vmatprep.mubr.f32.mxu0 %v4927
        %5565 = vmatmul.mubr.f32.gmra.mxu0 %v4895
        %v5566 = vpop.f32.mrf.mxu0
        %v5567 = vadd.f32 %v5342, %v5566
        %v5568 = vpop.f32.mrf.mxu0
        %5569 = vdwg.mxu0
        %v5570 = vmul.f32 %v5022, %v2020
        %v5571 = vmul.f32 %v5021, %v2024
        %v5572 = vmul.f32 %v5020, %v2028
        %v5573 = vmul.f32 %v5019, %v2032
        %v5574 = vmul.f32 %v5018, %v2036
        %v5575 = vmul.f32 %v5017, %v2040
        %v5576 = vmul.f32 %v5016, %v2044
        %v5577 = vmul.f32 %v5015, %v2048
        %v5578 = vmul.f32 %v5014, %v2052
        %v5579 = vmul.f32 %v5013, %v2056
        %v5580 = vmul.f32 %v5012, %v2060
        %v5581 = vmul.f32 %v5011, %v2064
        %v5582 = vmul.f32 %v5010, %v2068
        %v5583 = vmul.f32 %v5009, %v2072
        %v5584 = vmul.f32 %v5008, %v2076
        %v5585 = vmul.f32 %v5007, %v2080
        %v5586 = vmul.f32 %v5006, %v2084
        %v5587 = vmul.f32 %v5005, %v2088
        %v5588 = vmul.f32 %v5004, %v2092
        %v5589 = vmul.f32 %v5003, %v2096
        %v5590 = vmul.f32 %v5002, %v2100
        %v5591 = vmul.f32 %v5001, %v2104
        %v5592 = vmul.f32 %v5000, %v2108
        %v5593 = vmul.f32 %v4999, %v2112
        %v5594 = vmul.f32 %v4998, %v2116
        %v5595 = vmul.f32 %v4997, %v2120
        %v5596 = vmul.f32 %v4996, %v2124
        %v5597 = vmul.f32 %v4995, %v2128
        %v5598 = vmul.f32 %v4994, %v2132
        %v5599 = vmul.f32 %v4993, %v2136
        %v5600 = vmul.f32 %v4992, %v2140
        %v5601 = vmul.f32 %v5023, %v2144
        %v5602 = vld [vmem:[#allocation5 + $0x200] sm:$0xff]
        %v5603 = vld [vmem:[#allocation5 + $0x208] sm:$0xff]
        %v5604 = vld [vmem:[#allocation5 + $0x210] sm:$0xff]
        %v5605 = vld [vmem:[#allocation5 + $0x218] sm:$0xff]
        %v5606 = vld [vmem:[#allocation5 + $0x220] sm:$0xff]
        %v5607 = vld [vmem:[#allocation5 + $0x228] sm:$0xff]
        %v5608 = vld [vmem:[#allocation5 + $0x230] sm:$0xff]
        %v5609 = vld [vmem:[#allocation5 + $0x238] sm:$0xff]
        %v5610 = vld [vmem:[#allocation5 + $0x240] sm:$0xff]
        %v5611 = vld [vmem:[#allocation5 + $0x248] sm:$0xff]
        %v5612 = vld [vmem:[#allocation5 + $0x250] sm:$0xff]
        %v5613 = vld [vmem:[#allocation5 + $0x258] sm:$0xff]
        %v5614 = vld [vmem:[#allocation5 + $0x260] sm:$0xff]
        %v5615 = vld [vmem:[#allocation5 + $0x268] sm:$0xff]
        %v5616 = vld [vmem:[#allocation5 + $0x270] sm:$0xff]
        %v5617 = vld [vmem:[#allocation5 + $0x278] sm:$0xff]
        %v5618 = vld [vmem:[#allocation5 + $0x280] sm:$0xff]
        %v5619 = vld [vmem:[#allocation5 + $0x288] sm:$0xff]
        %v5620 = vld [vmem:[#allocation5 + $0x290] sm:$0xff]
        %v5621 = vld [vmem:[#allocation5 + $0x298] sm:$0xff]
        %v5622 = vld [vmem:[#allocation5 + $0x2a0] sm:$0xff]
        %v5623 = vld [vmem:[#allocation5 + $0x2a8] sm:$0xff]
        %v5624 = vld [vmem:[#allocation5 + $0x2b0] sm:$0xff]
        %v5625 = vld [vmem:[#allocation5 + $0x2b8] sm:$0xff]
        %v5626 = vld [vmem:[#allocation5 + $0x2c0] sm:$0xff]
        %v5627 = vld [vmem:[#allocation5 + $0x2c8] sm:$0xff]
        %v5628 = vld [vmem:[#allocation5 + $0x2d0] sm:$0xff]
        %v5629 = vld [vmem:[#allocation5 + $0x2d8] sm:$0xff]
        %v5630 = vld [vmem:[#allocation5 + $0x2e0] sm:$0xff]
        %v5631 = vld [vmem:[#allocation5 + $0x2e8] sm:$0xff]
        %v5632 = vld [vmem:[#allocation5 + $0x2f0] sm:$0xff]
        %v5633 = vld [vmem:[#allocation5 + $0x2f8] sm:$0xff]
        %5634 = vmatprep.subr.mxu0 0.0
        %5635 = vmatpush1.msra.mxu0 %v5617
        %5636 = vmatprep.subr.mxu0 0.0
        %5637 = vmatpush1.msra.mxu0 %v5616
        %5638 = vmatprep.subr.mxu0 0.0
        %5639 = vmatpush1.msra.mxu0 %v5615
        %5640 = vmatprep.subr.mxu0 0.0
        %5641 = vmatpush1.msra.mxu0 %v5614
        %5642 = vmatprep.subr.mxu0 0.0
        %5643 = vmatpush1.msra.mxu0 %v5613
        %5644 = vmatprep.subr.mxu0 0.0
        %5645 = vmatpush1.msra.mxu0 %v5612
        %5646 = vmatprep.subr.mxu0 0.0
        %5647 = vmatpush1.msra.mxu0 %v5611
        %5648 = vmatprep.subr.mxu0 0.0
        %5649 = vmatpush1.msra.mxu0 %v5610
        %5650 = vmatprep.subr.mxu0 0.0
        %5651 = vmatpush1.msra.mxu0 %v5609
        %5652 = vmatprep.subr.mxu0 0.0
        %5653 = vmatpush1.msra.mxu0 %v5608
        %5654 = vmatprep.subr.mxu0 0.0
        %5655 = vmatpush1.msra.mxu0 %v5607
        %5656 = vmatprep.subr.mxu0 0.0
        %5657 = vmatpush1.msra.mxu0 %v5606
        %5658 = vmatprep.subr.mxu0 0.0
        %5659 = vmatpush1.msra.mxu0 %v5605
        %5660 = vmatprep.subr.mxu0 0.0
        %5661 = vmatpush1.msra.mxu0 %v5604
        %5662 = vmatprep.subr.mxu0 0.0
        %5663 = vmatpush1.msra.mxu0 %v5603
        %5664 = vmatprep.subr.mxu0 0.0
        %5665 = vmatpush1.msra.mxu0 %v5602
        %5666 = vmatprep.subr.mxu0 0.0
        %5667 = vmatpush2.msra.mxu0 %v5633
        %5668 = vmatprep.subr.mxu0 0.0
        %5669 = vmatpush2.msra.mxu0 %v5632
        %5670 = vmatprep.subr.mxu0 0.0
        %5671 = vmatpush2.msra.mxu0 %v5631
        %5672 = vmatprep.subr.mxu0 0.0
        %5673 = vmatpush2.msra.mxu0 %v5630
        %5674 = vmatprep.subr.mxu0 0.0
        %5675 = vmatpush2.msra.mxu0 %v5629
        %5676 = vmatprep.subr.mxu0 0.0
        %5677 = vmatpush2.msra.mxu0 %v5628
        %5678 = vmatprep.subr.mxu0 0.0
        %5679 = vmatpush2.msra.mxu0 %v5627
        %5680 = vmatprep.subr.mxu0 0.0
        %5681 = vmatpush2.msra.mxu0 %v5626
        %5682 = vmatprep.subr.mxu0 0.0
        %5683 = vmatpush2.msra.mxu0 %v5625
        %5684 = vmatprep.subr.mxu0 0.0
        %5685 = vmatpush2.msra.mxu0 %v5624
        %5686 = vmatprep.subr.mxu0 0.0
        %5687 = vmatpush2.msra.mxu0 %v5623
        %5688 = vmatprep.subr.mxu0 0.0
        %5689 = vmatpush2.msra.mxu0 %v5622
        %5690 = vmatprep.subr.mxu0 0.0
        %5691 = vmatpush2.msra.mxu0 %v5621
        %5692 = vmatprep.subr.mxu0 0.0
        %5693 = vmatpush2.msra.mxu0 %v5620
        %5694 = vmatprep.subr.mxu0 0.0
        %5695 = vmatpush2.msra.mxu0 %v5619
        %5696 = vmatprep.subr.mxu0 0.0
        %5697 = vmatpush2.msra.mxu0 %v5618
        %5698 = vmatprep.mubr.f32.mxu0 %v5570
        %5699 = vmatmul.mubr.f32.gmra.mxu0 %v4767
        %v5700 = vpop.f32.mrf.mxu0
        %v5701 = vadd.f32 0.0, %v5700
        %v5702 = vpop.f32.mrf.mxu0
        %5703 = vmatprep.mubr.f32.mxu0 %v5571
        %5704 = vmatmul.mubr.f32.gmra.mxu0 %v4768
        %v5705 = vpop.f32.mrf.mxu0
        %v5706 = vadd.f32 0.0, %v5705
        %v5707 = vpop.f32.mrf.mxu0
        %5708 = vmatprep.mubr.f32.mxu0 %v5572
        %5709 = vmatmul.mubr.f32.gmra.mxu0 %v4769
        %v5710 = vpop.f32.mrf.mxu0
        %v5711 = vadd.f32 0.0, %v5710
        %v5712 = vpop.f32.mrf.mxu0
        %5713 = vmatprep.mubr.f32.mxu0 %v5573
        %5714 = vmatmul.mubr.f32.gmra.mxu0 %v4770
        %v5715 = vpop.f32.mrf.mxu0
        %v5716 = vadd.f32 0.0, %v5715
        %v5717 = vpop.f32.mrf.mxu0
        %5718 = vmatprep.mubr.f32.mxu0 %v5574
        %5719 = vmatmul.mubr.f32.gmra.mxu0 %v4771
        %v5720 = vpop.f32.mrf.mxu0
        %v5721 = vadd.f32 0.0, %v5720
        %v5722 = vpop.f32.mrf.mxu0
        %5723 = vmatprep.mubr.f32.mxu0 %v5575
        %5724 = vmatmul.mubr.f32.gmra.mxu0 %v4772
        %v5725 = vpop.f32.mrf.mxu0
        %v5726 = vadd.f32 0.0, %v5725
        %v5727 = vpop.f32.mrf.mxu0
        %5728 = vmatprep.mubr.f32.mxu0 %v5576
        %5729 = vmatmul.mubr.f32.gmra.mxu0 %v4773
        %v5730 = vpop.f32.mrf.mxu0
        %v5731 = vadd.f32 0.0, %v5730
        %v5732 = vpop.f32.mrf.mxu0
        %5733 = vmatprep.mubr.f32.mxu0 %v5577
        %5734 = vmatmul.mubr.f32.gmra.mxu0 %v4774
        %v5735 = vpop.f32.mrf.mxu0
        %v5736 = vadd.f32 0.0, %v5735
        %v5737 = vpop.f32.mrf.mxu0
        %5738 = vmatprep.mubr.f32.mxu0 %v5578
        %5739 = vmatmul.mubr.f32.gmra.mxu0 %v4775
        %v5740 = vpop.f32.mrf.mxu0
        %v5741 = vadd.f32 0.0, %v5740
        %v5742 = vpop.f32.mrf.mxu0
        %5743 = vmatprep.mubr.f32.mxu0 %v5579
        %5744 = vmatmul.mubr.f32.gmra.mxu0 %v4776
        %v5745 = vpop.f32.mrf.mxu0
        %v5746 = vadd.f32 0.0, %v5745
        %v5747 = vpop.f32.mrf.mxu0
        %5748 = vmatprep.mubr.f32.mxu0 %v5580
        %5749 = vmatmul.mubr.f32.gmra.mxu0 %v4777
        %v5750 = vpop.f32.mrf.mxu0
        %v5751 = vadd.f32 0.0, %v5750
        %v5752 = vpop.f32.mrf.mxu0
        %5753 = vmatprep.mubr.f32.mxu0 %v5581
        %5754 = vmatmul.mubr.f32.gmra.mxu0 %v4778
        %v5755 = vpop.f32.mrf.mxu0
        %v5756 = vadd.f32 0.0, %v5755
        %v5757 = vpop.f32.mrf.mxu0
        %5758 = vmatprep.mubr.f32.mxu0 %v5582
        %5759 = vmatmul.mubr.f32.gmra.mxu0 %v4779
        %v5760 = vpop.f32.mrf.mxu0
        %v5761 = vadd.f32 0.0, %v5760
        %v5762 = vpop.f32.mrf.mxu0
        %5763 = vmatprep.mubr.f32.mxu0 %v5583
        %5764 = vmatmul.mubr.f32.gmra.mxu0 %v4780
        %v5765 = vpop.f32.mrf.mxu0
        %v5766 = vadd.f32 0.0, %v5765
        %v5767 = vpop.f32.mrf.mxu0
        %5768 = vmatprep.mubr.f32.mxu0 %v5584
        %5769 = vmatmul.mubr.f32.gmra.mxu0 %v4781
        %v5770 = vpop.f32.mrf.mxu0
        %v5771 = vadd.f32 0.0, %v5770
        %v5772 = vpop.f32.mrf.mxu0
        %5773 = vmatprep.mubr.f32.mxu0 %v5585
        %5774 = vmatmul.mubr.f32.gmra.mxu0 %v4782
        %v5775 = vpop.f32.mrf.mxu0
        %v5776 = vadd.f32 0.0, %v5775
        %v5777 = vpop.f32.mrf.mxu0
        %5778 = vmatprep.mubr.f32.mxu0 %v5586
        %5779 = vmatmul.mubr.f32.gmra.mxu0 %v4783
        %v5780 = vpop.f32.mrf.mxu0
        %v5781 = vadd.f32 0.0, %v5780
        %v5782 = vpop.f32.mrf.mxu0
        %5783 = vmatprep.mubr.f32.mxu0 %v5587
        %5784 = vmatmul.mubr.f32.gmra.mxu0 %v4784
        %v5785 = vpop.f32.mrf.mxu0
        %v5786 = vadd.f32 0.0, %v5785
        %v5787 = vpop.f32.mrf.mxu0
        %5788 = vmatprep.mubr.f32.mxu0 %v5588
        %5789 = vmatmul.mubr.f32.gmra.mxu0 %v4785
        %v5790 = vpop.f32.mrf.mxu0
        %v5791 = vadd.f32 0.0, %v5790
        %v5792 = vpop.f32.mrf.mxu0
        %5793 = vmatprep.mubr.f32.mxu0 %v5589
        %5794 = vmatmul.mubr.f32.gmra.mxu0 %v4786
        %v5795 = vpop.f32.mrf.mxu0
        %v5796 = vadd.f32 0.0, %v5795
        %v5797 = vpop.f32.mrf.mxu0
        %5798 = vmatprep.mubr.f32.mxu0 %v5590
        %5799 = vmatmul.mubr.f32.gmra.mxu0 %v4787
        %v5800 = vpop.f32.mrf.mxu0
        %v5801 = vadd.f32 0.0, %v5800
        %v5802 = vpop.f32.mrf.mxu0
        %5803 = vmatprep.mubr.f32.mxu0 %v5591
        %5804 = vmatmul.mubr.f32.gmra.mxu0 %v4788
        %v5805 = vpop.f32.mrf.mxu0
        %v5806 = vadd.f32 0.0, %v5805
        %v5807 = vpop.f32.mrf.mxu0
        %5808 = vmatprep.mubr.f32.mxu0 %v5592
        %5809 = vmatmul.mubr.f32.gmra.mxu0 %v4789
        %v5810 = vpop.f32.mrf.mxu0
        %v5811 = vadd.f32 0.0, %v5810
        %v5812 = vpop.f32.mrf.mxu0
        %5813 = vmatprep.mubr.f32.mxu0 %v5593
        %5814 = vmatmul.mubr.f32.gmra.mxu0 %v4790
        %v5815 = vpop.f32.mrf.mxu0
        %v5816 = vadd.f32 0.0, %v5815
        %v5817 = vpop.f32.mrf.mxu0
        %5818 = vmatprep.mubr.f32.mxu0 %v5594
        %5819 = vmatmul.mubr.f32.gmra.mxu0 %v4791
        %v5820 = vpop.f32.mrf.mxu0
        %v5821 = vadd.f32 0.0, %v5820
        %v5822 = vpop.f32.mrf.mxu0
        %5823 = vmatprep.mubr.f32.mxu0 %v5595
        %5824 = vmatmul.mubr.f32.gmra.mxu0 %v4792
        %v5825 = vpop.f32.mrf.mxu0
        %v5826 = vadd.f32 0.0, %v5825
        %v5827 = vpop.f32.mrf.mxu0
        %5828 = vmatprep.mubr.f32.mxu0 %v5596
        %5829 = vmatmul.mubr.f32.gmra.mxu0 %v4793
        %v5830 = vpop.f32.mrf.mxu0
        %v5831 = vadd.f32 0.0, %v5830
        %v5832 = vpop.f32.mrf.mxu0
        %5833 = vmatprep.mubr.f32.mxu0 %v5597
        %5834 = vmatmul.mubr.f32.gmra.mxu0 %v4794
        %v5835 = vpop.f32.mrf.mxu0
        %v5836 = vadd.f32 0.0, %v5835
        %v5837 = vpop.f32.mrf.mxu0
        %5838 = vmatprep.mubr.f32.mxu0 %v5598
        %5839 = vmatmul.mubr.f32.gmra.mxu0 %v4795
        %v5840 = vpop.f32.mrf.mxu0
        %v5841 = vadd.f32 0.0, %v5840
        %v5842 = vpop.f32.mrf.mxu0
        %5843 = vmatprep.mubr.f32.mxu0 %v5599
        %5844 = vmatmul.mubr.f32.gmra.mxu0 %v4796
        %v5845 = vpop.f32.mrf.mxu0
        %v5846 = vadd.f32 0.0, %v5845
        %v5847 = vpop.f32.mrf.mxu0
        %5848 = vmatprep.mubr.f32.mxu0 %v5600
        %5849 = vmatmul.mubr.f32.gmra.mxu0 %v4797
        %v5850 = vpop.f32.mrf.mxu0
        %v5851 = vadd.f32 0.0, %v5850
        %v5852 = vpop.f32.mrf.mxu0
        %5853 = vmatprep.mubr.f32.mxu0 %v5601
        %5854 = vmatmul.mubr.f32.gmra.mxu0 %v4798
        %v5855 = vpop.f32.mrf.mxu0
        %v5856 = vadd.f32 0.0, %v5855
        %v5857 = vpop.f32.mrf.mxu0
        %5858 = vdwg.mxu0
        %v5859 = vadd.f32 %v5412, %v5701
        %v5860 = vadd.f32 %v5417, %v5706
        %v5861 = vadd.f32 %v5422, %v5711
        %v5862 = vadd.f32 %v5427, %v5716
        %v5863 = vadd.f32 %v5432, %v5721
        %v5864 = vadd.f32 %v5437, %v5726
        %v5865 = vadd.f32 %v5442, %v5731
        %v5866 = vadd.f32 %v5447, %v5736
        %v5867 = vadd.f32 %v5452, %v5741
        %v5868 = vadd.f32 %v5457, %v5746
        %v5869 = vadd.f32 %v5462, %v5751
        %v5870 = vadd.f32 %v5467, %v5756
        %v5871 = vadd.f32 %v5472, %v5761
        %v5872 = vadd.f32 %v5477, %v5766
        %v5873 = vadd.f32 %v5482, %v5771
        %v5874 = vadd.f32 %v5487, %v5776
        %v5875 = vadd.f32 %v5492, %v5781
        %v5876 = vadd.f32 %v5497, %v5786
        %v5877 = vadd.f32 %v5502, %v5791
        %v5878 = vadd.f32 %v5507, %v5796
        %v5879 = vadd.f32 %v5512, %v5801
        %v5880 = vadd.f32 %v5517, %v5806
        %v5881 = vadd.f32 %v5522, %v5811
        %v5882 = vadd.f32 %v5527, %v5816
        %v5883 = vadd.f32 %v5532, %v5821
        %v5884 = vadd.f32 %v5537, %v5826
        %v5885 = vadd.f32 %v5542, %v5831
        %v5886 = vadd.f32 %v5547, %v5836
        %v5887 = vadd.f32 %v5552, %v5841
        %v5888 = vadd.f32 %v5557, %v5846
        %v5889 = vadd.f32 %v5562, %v5851
        %v5890 = vadd.f32 %v5567, %v5856
        %v5891 = vmul.f32 %v4861, %v2180
        %v5892 = vmul.f32 %v4860, %v2184
        %v5893 = vmul.f32 %v4859, %v2188
        %v5894 = vmul.f32 %v4858, %v2192
        %v5895 = vmul.f32 %v4857, %v2196
        %v5896 = vmul.f32 %v4856, %v2200
        %v5897 = vmul.f32 %v4855, %v2204
        %v5898 = vmul.f32 %v4854, %v2208
        %v5899 = vmul.f32 %v4853, %v2212
        %v5900 = vmul.f32 %v4852, %v2216
        %v5901 = vmul.f32 %v4851, %v2220
        %v5902 = vmul.f32 %v4850, %v2224
        %v5903 = vmul.f32 %v4849, %v2228
        %v5904 = vmul.f32 %v4848, %v2232
        %v5905 = vmul.f32 %v4847, %v2236
        %v5906 = vmul.f32 %v4846, %v2240
        %v5907 = vmul.f32 %v4845, %v2244
        %v5908 = vmul.f32 %v4844, %v2248
        %v5909 = vmul.f32 %v4843, %v2252
        %v5910 = vmul.f32 %v4842, %v2256
        %v5911 = vmul.f32 %v4841, %v2260
        %v5912 = vmul.f32 %v4840, %v2264
        %v5913 = vmul.f32 %v4839, %v2268
        %v5914 = vmul.f32 %v4838, %v2272
        %v5915 = vmul.f32 %v4837, %v2276
        %v5916 = vmul.f32 %v4836, %v2280
        %v5917 = vmul.f32 %v4835, %v2284
        %v5918 = vmul.f32 %v4834, %v2288
        %v5919 = vmul.f32 %v4833, %v2292
        %v5920 = vmul.f32 %v4832, %v2296
        %v5921 = vmul.f32 %v4863, %v2300
        %v5922 = vmul.f32 %v4862, %v2304
        %v5923 = vmul.f32 %v4769, %v2340
        %v5924 = vmul.f32 %v4770, %v2344
        %v5925 = vmul.f32 %v4771, %v2348
        %v5926 = vmul.f32 %v4772, %v2352
        %v5927 = vmul.f32 %v4773, %v2356
        %v5928 = vmul.f32 %v4774, %v2360
        %v5929 = vmul.f32 %v4775, %v2364
        %v5930 = vmul.f32 %v4776, %v2368
        %v5931 = vmul.f32 %v4777, %v2372
        %v5932 = vmul.f32 %v4778, %v2376
        %v5933 = vmul.f32 %v4779, %v2380
        %v5934 = vmul.f32 %v4780, %v2384
        %v5935 = vmul.f32 %v4781, %v2388
        %v5936 = vmul.f32 %v4782, %v2392
        %v5937 = vmul.f32 %v4783, %v2396
        %v5938 = vmul.f32 %v4784, %v2400
        %v5939 = vmul.f32 %v4785, %v2404
        %v5940 = vmul.f32 %v4786, %v2408
        %v5941 = vmul.f32 %v4787, %v2412
        %v5942 = vmul.f32 %v4788, %v2416
        %v5943 = vmul.f32 %v4789, %v2420
        %v5944 = vmul.f32 %v4790, %v2424
        %v5945 = vmul.f32 %v4791, %v2428
        %v5946 = vmul.f32 %v4792, %v2432
        %v5947 = vmul.f32 %v4793, %v2436
        %v5948 = vmul.f32 %v4794, %v2440
        %v5949 = vmul.f32 %v4795, %v2444
        %v5950 = vmul.f32 %v4796, %v2448
        %v5951 = vmul.f32 %v4797, %v2452
        %v5952 = vmul.f32 %v4798, %v2456
        %v5953 = vmul.f32 %v4767, %v2460
        %v5954 = vmul.f32 %v4768, %v2464
        %v5955 = vld [vmem:[#allocation5 + $0x300] sm:$0xff]
        %v5956 = vld [vmem:[#allocation5 + $0x308] sm:$0xff]
        %v5957 = vld [vmem:[#allocation5 + $0x310] sm:$0xff]
        %v5958 = vld [vmem:[#allocation5 + $0x318] sm:$0xff]
        %v5959 = vld [vmem:[#allocation5 + $0x320] sm:$0xff]
        %v5960 = vld [vmem:[#allocation5 + $0x328] sm:$0xff]
        %v5961 = vld [vmem:[#allocation5 + $0x330] sm:$0xff]
        %v5962 = vld [vmem:[#allocation5 + $0x338] sm:$0xff]
        %v5963 = vld [vmem:[#allocation5 + $0x340] sm:$0xff]
        %v5964 = vld [vmem:[#allocation5 + $0x348] sm:$0xff]
        %v5965 = vld [vmem:[#allocation5 + $0x350] sm:$0xff]
        %v5966 = vld [vmem:[#allocation5 + $0x358] sm:$0xff]
        %v5967 = vld [vmem:[#allocation5 + $0x360] sm:$0xff]
        %v5968 = vld [vmem:[#allocation5 + $0x368] sm:$0xff]
        %v5969 = vld [vmem:[#allocation5 + $0x370] sm:$0xff]
        %v5970 = vld [vmem:[#allocation5 + $0x378] sm:$0xff]
        %v5971 = vld [vmem:[#allocation5 + $0x380] sm:$0xff]
        %v5972 = vld [vmem:[#allocation5 + $0x388] sm:$0xff]
        %v5973 = vld [vmem:[#allocation5 + $0x390] sm:$0xff]
        %v5974 = vld [vmem:[#allocation5 + $0x398] sm:$0xff]
        %v5975 = vld [vmem:[#allocation5 + $0x3a0] sm:$0xff]
        %v5976 = vld [vmem:[#allocation5 + $0x3a8] sm:$0xff]
        %v5977 = vld [vmem:[#allocation5 + $0x3b0] sm:$0xff]
        %v5978 = vld [vmem:[#allocation5 + $0x3b8] sm:$0xff]
        %v5979 = vld [vmem:[#allocation5 + $0x3c0] sm:$0xff]
        %v5980 = vld [vmem:[#allocation5 + $0x3c8] sm:$0xff]
        %v5981 = vld [vmem:[#allocation5 + $0x3d0] sm:$0xff]
        %v5982 = vld [vmem:[#allocation5 + $0x3d8] sm:$0xff]
        %v5983 = vld [vmem:[#allocation5 + $0x3e0] sm:$0xff]
        %v5984 = vld [vmem:[#allocation5 + $0x3e8] sm:$0xff]
        %v5985 = vld [vmem:[#allocation5 + $0x3f0] sm:$0xff]
        %v5986 = vld [vmem:[#allocation5 + $0x3f8] sm:$0xff]
        %5987 = vmatprep.subr.mxu0 0.0
        %5988 = vmatpush1.msra.mxu0 %v5970
        %5989 = vmatprep.subr.mxu0 0.0
        %5990 = vmatpush1.msra.mxu0 %v5969
        %5991 = vmatprep.subr.mxu0 0.0
        %5992 = vmatpush1.msra.mxu0 %v5968
        %5993 = vmatprep.subr.mxu0 0.0
        %5994 = vmatpush1.msra.mxu0 %v5967
        %5995 = vmatprep.subr.mxu0 0.0
        %5996 = vmatpush1.msra.mxu0 %v5966
        %5997 = vmatprep.subr.mxu0 0.0
        %5998 = vmatpush1.msra.mxu0 %v5965
        %5999 = vmatprep.subr.mxu0 0.0
        %6000 = vmatpush1.msra.mxu0 %v5964
        %6001 = vmatprep.subr.mxu0 0.0
        %6002 = vmatpush1.msra.mxu0 %v5963
        %6003 = vmatprep.subr.mxu0 0.0
        %6004 = vmatpush1.msra.mxu0 %v5962
        %6005 = vmatprep.subr.mxu0 0.0
        %6006 = vmatpush1.msra.mxu0 %v5961
        %6007 = vmatprep.subr.mxu0 0.0
        %6008 = vmatpush1.msra.mxu0 %v5960
        %6009 = vmatprep.subr.mxu0 0.0
        %6010 = vmatpush1.msra.mxu0 %v5959
        %6011 = vmatprep.subr.mxu0 0.0
        %6012 = vmatpush1.msra.mxu0 %v5958
        %6013 = vmatprep.subr.mxu0 0.0
        %6014 = vmatpush1.msra.mxu0 %v5957
        %6015 = vmatprep.subr.mxu0 0.0
        %6016 = vmatpush1.msra.mxu0 %v5956
        %6017 = vmatprep.subr.mxu0 0.0
        %6018 = vmatpush1.msra.mxu0 %v5955
        %6019 = vmatprep.subr.mxu0 0.0
        %6020 = vmatpush2.msra.mxu0 %v5986
        %6021 = vmatprep.subr.mxu0 0.0
        %6022 = vmatpush2.msra.mxu0 %v5985
        %6023 = vmatprep.subr.mxu0 0.0
        %6024 = vmatpush2.msra.mxu0 %v5984
        %6025 = vmatprep.subr.mxu0 0.0
        %6026 = vmatpush2.msra.mxu0 %v5983
        %6027 = vmatprep.subr.mxu0 0.0
        %6028 = vmatpush2.msra.mxu0 %v5982
        %6029 = vmatprep.subr.mxu0 0.0
        %6030 = vmatpush2.msra.mxu0 %v5981
        %6031 = vmatprep.subr.mxu0 0.0
        %6032 = vmatpush2.msra.mxu0 %v5980
        %6033 = vmatprep.subr.mxu0 0.0
        %6034 = vmatpush2.msra.mxu0 %v5979
        %6035 = vmatprep.subr.mxu0 0.0
        %6036 = vmatpush2.msra.mxu0 %v5978
        %6037 = vmatprep.subr.mxu0 0.0
        %6038 = vmatpush2.msra.mxu0 %v5977
        %6039 = vmatprep.subr.mxu0 0.0
        %6040 = vmatpush2.msra.mxu0 %v5976
        %6041 = vmatprep.subr.mxu0 0.0
        %6042 = vmatpush2.msra.mxu0 %v5975
        %6043 = vmatprep.subr.mxu0 0.0
        %6044 = vmatpush2.msra.mxu0 %v5974
        %6045 = vmatprep.subr.mxu0 0.0
        %6046 = vmatpush2.msra.mxu0 %v5973
        %6047 = vmatprep.subr.mxu0 0.0
        %6048 = vmatpush2.msra.mxu0 %v5972
        %6049 = vmatprep.subr.mxu0 0.0
        %6050 = vmatpush2.msra.mxu0 %v5971
        %6051 = vmatprep.mubr.f32.mxu0 %v5923
        %6052 = vmatmul.mubr.f32.gmra.mxu0 %v5891
        %v6053 = vpop.f32.mrf.mxu0
        %v6054 = vadd.f32 0.0, %v6053
        %v6055 = vpop.f32.mrf.mxu0
        %6056 = vmatprep.mubr.f32.mxu0 %v5924
        %6057 = vmatmul.mubr.f32.gmra.mxu0 %v5892
        %v6058 = vpop.f32.mrf.mxu0
        %v6059 = vadd.f32 0.0, %v6058
        %v6060 = vpop.f32.mrf.mxu0
        %6061 = vmatprep.mubr.f32.mxu0 %v5925
        %6062 = vmatmul.mubr.f32.gmra.mxu0 %v5893
        %v6063 = vpop.f32.mrf.mxu0
        %v6064 = vadd.f32 0.0, %v6063
        %v6065 = vpop.f32.mrf.mxu0
        %6066 = vmatprep.mubr.f32.mxu0 %v5926
        %6067 = vmatmul.mubr.f32.gmra.mxu0 %v5894
        %v6068 = vpop.f32.mrf.mxu0
        %v6069 = vadd.f32 0.0, %v6068
        %v6070 = vpop.f32.mrf.mxu0
        %6071 = vmatprep.mubr.f32.mxu0 %v5927
        %6072 = vmatmul.mubr.f32.gmra.mxu0 %v5895
        %v6073 = vpop.f32.mrf.mxu0
        %v6074 = vadd.f32 0.0, %v6073
        %v6075 = vpop.f32.mrf.mxu0
        %6076 = vmatprep.mubr.f32.mxu0 %v5928
        %6077 = vmatmul.mubr.f32.gmra.mxu0 %v5896
        %v6078 = vpop.f32.mrf.mxu0
        %v6079 = vadd.f32 0.0, %v6078
        %v6080 = vpop.f32.mrf.mxu0
        %6081 = vmatprep.mubr.f32.mxu0 %v5929
        %6082 = vmatmul.mubr.f32.gmra.mxu0 %v5897
        %v6083 = vpop.f32.mrf.mxu0
        %v6084 = vadd.f32 0.0, %v6083
        %v6085 = vpop.f32.mrf.mxu0
        %6086 = vmatprep.mubr.f32.mxu0 %v5930
        %6087 = vmatmul.mubr.f32.gmra.mxu0 %v5898
        %v6088 = vpop.f32.mrf.mxu0
        %v6089 = vadd.f32 0.0, %v6088
        %v6090 = vpop.f32.mrf.mxu0
        %6091 = vmatprep.mubr.f32.mxu0 %v5931
        %6092 = vmatmul.mubr.f32.gmra.mxu0 %v5899
        %v6093 = vpop.f32.mrf.mxu0
        %v6094 = vadd.f32 0.0, %v6093
        %v6095 = vpop.f32.mrf.mxu0
        %6096 = vmatprep.mubr.f32.mxu0 %v5932
        %6097 = vmatmul.mubr.f32.gmra.mxu0 %v5900
        %v6098 = vpop.f32.mrf.mxu0
        %v6099 = vadd.f32 0.0, %v6098
        %v6100 = vpop.f32.mrf.mxu0
        %6101 = vmatprep.mubr.f32.mxu0 %v5933
        %6102 = vmatmul.mubr.f32.gmra.mxu0 %v5901
        %v6103 = vpop.f32.mrf.mxu0
        %v6104 = vadd.f32 0.0, %v6103
        %v6105 = vpop.f32.mrf.mxu0
        %6106 = vmatprep.mubr.f32.mxu0 %v5934
        %6107 = vmatmul.mubr.f32.gmra.mxu0 %v5902
        %v6108 = vpop.f32.mrf.mxu0
        %v6109 = vadd.f32 0.0, %v6108
        %v6110 = vpop.f32.mrf.mxu0
        %6111 = vmatprep.mubr.f32.mxu0 %v5935
        %6112 = vmatmul.mubr.f32.gmra.mxu0 %v5903
        %v6113 = vpop.f32.mrf.mxu0
        %v6114 = vadd.f32 0.0, %v6113
        %v6115 = vpop.f32.mrf.mxu0
        %6116 = vmatprep.mubr.f32.mxu0 %v5936
        %6117 = vmatmul.mubr.f32.gmra.mxu0 %v5904
        %v6118 = vpop.f32.mrf.mxu0
        %v6119 = vadd.f32 0.0, %v6118
        %v6120 = vpop.f32.mrf.mxu0
        %6121 = vmatprep.mubr.f32.mxu0 %v5937
        %6122 = vmatmul.mubr.f32.gmra.mxu0 %v5905
        %v6123 = vpop.f32.mrf.mxu0
        %v6124 = vadd.f32 0.0, %v6123
        %v6125 = vpop.f32.mrf.mxu0
        %6126 = vmatprep.mubr.f32.mxu0 %v5938
        %6127 = vmatmul.mubr.f32.gmra.mxu0 %v5906
        %v6128 = vpop.f32.mrf.mxu0
        %v6129 = vadd.f32 0.0, %v6128
        %v6130 = vpop.f32.mrf.mxu0
        %6131 = vmatprep.mubr.f32.mxu0 %v5939
        %6132 = vmatmul.mubr.f32.gmra.mxu0 %v5907
        %v6133 = vpop.f32.mrf.mxu0
        %v6134 = vadd.f32 0.0, %v6133
        %v6135 = vpop.f32.mrf.mxu0
        %6136 = vmatprep.mubr.f32.mxu0 %v5940
        %6137 = vmatmul.mubr.f32.gmra.mxu0 %v5908
        %v6138 = vpop.f32.mrf.mxu0
        %v6139 = vadd.f32 0.0, %v6138
        %v6140 = vpop.f32.mrf.mxu0
        %6141 = vmatprep.mubr.f32.mxu0 %v5941
        %6142 = vmatmul.mubr.f32.gmra.mxu0 %v5909
        %v6143 = vpop.f32.mrf.mxu0
        %v6144 = vadd.f32 0.0, %v6143
        %v6145 = vpop.f32.mrf.mxu0
        %6146 = vmatprep.mubr.f32.mxu0 %v5942
        %6147 = vmatmul.mubr.f32.gmra.mxu0 %v5910
        %v6148 = vpop.f32.mrf.mxu0
        %v6149 = vadd.f32 0.0, %v6148
        %v6150 = vpop.f32.mrf.mxu0
        %6151 = vmatprep.mubr.f32.mxu0 %v5943
        %6152 = vmatmul.mubr.f32.gmra.mxu0 %v5911
        %v6153 = vpop.f32.mrf.mxu0
        %v6154 = vadd.f32 0.0, %v6153
        %v6155 = vpop.f32.mrf.mxu0
        %6156 = vmatprep.mubr.f32.mxu0 %v5944
        %6157 = vmatmul.mubr.f32.gmra.mxu0 %v5912
        %v6158 = vpop.f32.mrf.mxu0
        %v6159 = vadd.f32 0.0, %v6158
        %v6160 = vpop.f32.mrf.mxu0
        %6161 = vmatprep.mubr.f32.mxu0 %v5945
        %6162 = vmatmul.mubr.f32.gmra.mxu0 %v5913
        %v6163 = vpop.f32.mrf.mxu0
        %v6164 = vadd.f32 0.0, %v6163
        %v6165 = vpop.f32.mrf.mxu0
        %6166 = vmatprep.mubr.f32.mxu0 %v5946
        %6167 = vmatmul.mubr.f32.gmra.mxu0 %v5914
        %v6168 = vpop.f32.mrf.mxu0
        %v6169 = vadd.f32 0.0, %v6168
        %v6170 = vpop.f32.mrf.mxu0
        %6171 = vmatprep.mubr.f32.mxu0 %v5947
        %6172 = vmatmul.mubr.f32.gmra.mxu0 %v5915
        %v6173 = vpop.f32.mrf.mxu0
        %v6174 = vadd.f32 0.0, %v6173
        %v6175 = vpop.f32.mrf.mxu0
        %6176 = vmatprep.mubr.f32.mxu0 %v5948
        %6177 = vmatmul.mubr.f32.gmra.mxu0 %v5916
        %v6178 = vpop.f32.mrf.mxu0
        %v6179 = vadd.f32 0.0, %v6178
        %v6180 = vpop.f32.mrf.mxu0
        %6181 = vmatprep.mubr.f32.mxu0 %v5949
        %6182 = vmatmul.mubr.f32.gmra.mxu0 %v5917
        %v6183 = vpop.f32.mrf.mxu0
        %v6184 = vadd.f32 0.0, %v6183
        %v6185 = vpop.f32.mrf.mxu0
        %6186 = vmatprep.mubr.f32.mxu0 %v5950
        %6187 = vmatmul.mubr.f32.gmra.mxu0 %v5918
        %v6188 = vpop.f32.mrf.mxu0
        %v6189 = vadd.f32 0.0, %v6188
        %v6190 = vpop.f32.mrf.mxu0
        %6191 = vmatprep.mubr.f32.mxu0 %v5951
        %6192 = vmatmul.mubr.f32.gmra.mxu0 %v5919
        %v6193 = vpop.f32.mrf.mxu0
        %v6194 = vadd.f32 0.0, %v6193
        %v6195 = vpop.f32.mrf.mxu0
        %6196 = vmatprep.mubr.f32.mxu0 %v5952
        %6197 = vmatmul.mubr.f32.gmra.mxu0 %v5920
        %v6198 = vpop.f32.mrf.mxu0
        %v6199 = vadd.f32 0.0, %v6198
        %v6200 = vpop.f32.mrf.mxu0
        %6201 = vmatprep.mubr.f32.mxu0 %v5953
        %6202 = vmatmul.mubr.f32.gmra.mxu0 %v5921
        %v6203 = vpop.f32.mrf.mxu0
        %v6204 = vadd.f32 0.0, %v6203
        %v6205 = vpop.f32.mrf.mxu0
        %6206 = vmatprep.mubr.f32.mxu0 %v5954
        %6207 = vmatmul.mubr.f32.gmra.mxu0 %v5922
        %v6208 = vpop.f32.mrf.mxu0
        %v6209 = vadd.f32 0.0, %v6208
        %v6210 = vpop.f32.mrf.mxu0
        %6211 = vdwg.mxu0
        %v6212 = vadd.f32 %v5859, %v6054
        %v6213 = vadd.f32 %v5860, %v6059
        %v6214 = vadd.f32 %v5861, %v6064
        %v6215 = vadd.f32 %v5862, %v6069
        %v6216 = vadd.f32 %v5863, %v6074
        %v6217 = vadd.f32 %v5864, %v6079
        %v6218 = vadd.f32 %v5865, %v6084
        %v6219 = vadd.f32 %v5866, %v6089
        %v6220 = vadd.f32 %v5867, %v6094
        %v6221 = vadd.f32 %v5868, %v6099
        %v6222 = vadd.f32 %v5869, %v6104
        %v6223 = vadd.f32 %v5870, %v6109
        %v6224 = vadd.f32 %v5871, %v6114
        %v6225 = vadd.f32 %v5872, %v6119
        %v6226 = vadd.f32 %v5873, %v6124
        %v6227 = vadd.f32 %v5874, %v6129
        %v6228 = vadd.f32 %v5875, %v6134
        %v6229 = vadd.f32 %v5876, %v6139
        %v6230 = vadd.f32 %v5877, %v6144
        %v6231 = vadd.f32 %v5878, %v6149
        %v6232 = vadd.f32 %v5879, %v6154
        %v6233 = vadd.f32 %v5880, %v6159
        %v6234 = vadd.f32 %v5881, %v6164
        %v6235 = vadd.f32 %v5882, %v6169
        %v6236 = vadd.f32 %v5883, %v6174
        %v6237 = vadd.f32 %v5884, %v6179
        %v6238 = vadd.f32 %v5885, %v6184
        %v6239 = vadd.f32 %v5886, %v6189
        %v6240 = vadd.f32 %v5887, %v6194
        %v6241 = vadd.f32 %v5888, %v6199
        %v6242 = vadd.f32 %v5889, %v6204
        %v6243 = vadd.f32 %v5890, %v6209
        %v6244 = vmul.f32 %v5020, %v2500
        %v6245 = vmul.f32 %v5019, %v2504
        %v6246 = vmul.f32 %v5018, %v2508
        %v6247 = vmul.f32 %v5017, %v2512
        %v6248 = vmul.f32 %v5016, %v2516
        %v6249 = vmul.f32 %v5015, %v2520
        %v6250 = vmul.f32 %v5014, %v2524
        %v6251 = vmul.f32 %v5013, %v2528
        %v6252 = vmul.f32 %v5012, %v2532
        %v6253 = vmul.f32 %v5011, %v2536
        %v6254 = vmul.f32 %v5010, %v2540
        %v6255 = vmul.f32 %v5009, %v2544
        %v6256 = vmul.f32 %v5008, %v2548
        %v6257 = vmul.f32 %v5007, %v2552
        %v6258 = vmul.f32 %v5006, %v2556
        %v6259 = vmul.f32 %v5005, %v2560
        %v6260 = vmul.f32 %v5004, %v2564
        %v6261 = vmul.f32 %v5003, %v2568
        %v6262 = vmul.f32 %v5002, %v2572
        %v6263 = vmul.f32 %v5001, %v2576
        %v6264 = vmul.f32 %v5000, %v2580
        %v6265 = vmul.f32 %v4999, %v2584
        %v6266 = vmul.f32 %v4998, %v2588
        %v6267 = vmul.f32 %v4997, %v2592
        %v6268 = vmul.f32 %v4996, %v2596
        %v6269 = vmul.f32 %v4995, %v2600
        %v6270 = vmul.f32 %v4994, %v2604
        %v6271 = vmul.f32 %v4993, %v2608
        %v6272 = vmul.f32 %v4992, %v2612
        %v6273 = vmul.f32 %v5023, %v2616
        %v6274 = vmul.f32 %v5022, %v2620
        %v6275 = vmul.f32 %v5021, %v2624
        %v6276 = vld [vmem:[#allocation5 + $0x400] sm:$0xff]
        %v6277 = vld [vmem:[#allocation5 + $0x408] sm:$0xff]
        %v6278 = vld [vmem:[#allocation5 + $0x410] sm:$0xff]
        %v6279 = vld [vmem:[#allocation5 + $0x418] sm:$0xff]
        %v6280 = vld [vmem:[#allocation5 + $0x420] sm:$0xff]
        %v6281 = vld [vmem:[#allocation5 + $0x428] sm:$0xff]
        %v6282 = vld [vmem:[#allocation5 + $0x430] sm:$0xff]
        %v6283 = vld [vmem:[#allocation5 + $0x438] sm:$0xff]
        %v6284 = vld [vmem:[#allocation5 + $0x440] sm:$0xff]
        %v6285 = vld [vmem:[#allocation5 + $0x448] sm:$0xff]
        %v6286 = vld [vmem:[#allocation5 + $0x450] sm:$0xff]
        %v6287 = vld [vmem:[#allocation5 + $0x458] sm:$0xff]
        %v6288 = vld [vmem:[#allocation5 + $0x460] sm:$0xff]
        %v6289 = vld [vmem:[#allocation5 + $0x468] sm:$0xff]
        %v6290 = vld [vmem:[#allocation5 + $0x470] sm:$0xff]
        %v6291 = vld [vmem:[#allocation5 + $0x478] sm:$0xff]
        %v6292 = vld [vmem:[#allocation5 + $0x480] sm:$0xff]
        %v6293 = vld [vmem:[#allocation5 + $0x488] sm:$0xff]
        %v6294 = vld [vmem:[#allocation5 + $0x490] sm:$0xff]
        %v6295 = vld [vmem:[#allocation5 + $0x498] sm:$0xff]
        %v6297 = vsel %vm575, %v501, 0
        %v6300 = vsel %vm575, %v502, 0
        %v6303 = vsel %vm575, %v503, 0
        %v6306 = vsel %vm575, %v504, 0
        %v6309 = vsel %vm575, %v505, 0
        %v6312 = vsel %vm575, %v506, 0
        %v6315 = vsel %vm575, %v507, 0
        %v6318 = vsel %vm575, %v508, 0
        %v6321 = vsel %vm575, %v509, 0
        %v6324 = vsel %vm575, %v510, 0
        %v6327 = vsel %vm575, %v511, 0
        %v6330 = vsel %vm575, %v512, 0
        %v6333 = vsel %vm575, %v513, 0
        %v6336 = vsel %vm575, %v514, 0
        %v6339 = vsel %vm575, %v515, 0
        %v6342 = vsel %vm575, %v516, 0
        %v6345 = vsel %vm575, %v517, 0
        %v6348 = vsel %vm575, %v518, 0
        %v6351 = vsel %vm575, %v519, 0
        %v6354 = vsel %vm575, %v520, 0
        %v6357 = vsel %vm575, %v521, 0
        %v6360 = vsel %vm575, %v522, 0
        %v6363 = vsel %vm575, %v523, 0
        %v6366 = vsel %vm575, %v524, 0
        %v6369 = vsel %vm575, %v525, 0
        %v6372 = vsel %vm575, %v526, 0
        %v6375 = vsel %vm575, %v527, 0
        %v6378 = vsel %vm575, %v528, 0
        %v6381 = vsel %vm575, %v529, 0
        %v6384 = vsel %vm575, %v530, 0
        %v6387 = vsel %vm575, %v531, 0
        %v6390 = vsel %vm575, %v532, 0
        %6392 = vmatprep.subr.mxu0 0.0
        %6393 = vmatpush1.msra.mxu0 %v6291
        %6394 = vmatprep.subr.mxu0 0.0
        %6395 = vmatpush1.msra.mxu0 %v6290
        %6396 = vmatprep.subr.mxu0 0.0
        %6397 = vmatpush1.msra.mxu0 %v6289
        %6398 = vmatprep.subr.mxu0 0.0
        %6399 = vmatpush1.msra.mxu0 %v6288
        %6400 = vmatprep.subr.mxu0 0.0
        %6401 = vmatpush1.msra.mxu0 %v6287
        %6402 = vmatprep.subr.mxu0 0.0
        %6403 = vmatpush1.msra.mxu0 %v6286
        %6404 = vmatprep.subr.mxu0 0.0
        %6405 = vmatpush1.msra.mxu0 %v6285
        %6406 = vmatprep.subr.mxu0 0.0
        %6407 = vmatpush1.msra.mxu0 %v6284
        %6408 = vmatprep.subr.mxu0 0.0
        %6409 = vmatpush1.msra.mxu0 %v6283
        %6410 = vmatprep.subr.mxu0 0.0
        %6411 = vmatpush1.msra.mxu0 %v6282
        %6412 = vmatprep.subr.mxu0 0.0
        %6413 = vmatpush1.msra.mxu0 %v6281
        %6414 = vmatprep.subr.mxu0 0.0
        %6415 = vmatpush1.msra.mxu0 %v6280
        %6416 = vmatprep.subr.mxu0 0.0
        %6417 = vmatpush1.msra.mxu0 %v6279
        %6418 = vmatprep.subr.mxu0 0.0
        %6419 = vmatpush1.msra.mxu0 %v6278
        %6420 = vmatprep.subr.mxu0 0.0
        %6421 = vmatpush1.msra.mxu0 %v6277
        %6422 = vmatprep.subr.mxu0 0.0
        %6423 = vmatpush1.msra.mxu0 %v6276
        %6424 = vmatprep.subr.mxu0 0.0
        %6425 = vmatpush2.msra.mxu0 0.0
        %6426 = vmatprep.subr.mxu0 0.0
        %6427 = vmatpush2.msra.mxu0 0.0
        %6428 = vmatprep.subr.mxu0 0.0
        %6429 = vmatpush2.msra.mxu0 0.0
        %6430 = vmatprep.subr.mxu0 0.0
        %6431 = vmatpush2.msra.mxu0 0.0
        %6432 = vmatprep.subr.mxu0 0.0
        %6433 = vmatpush2.msra.mxu0 0.0
        %6434 = vmatprep.subr.mxu0 0.0
        %6435 = vmatpush2.msra.mxu0 0.0
        %6436 = vmatprep.subr.mxu0 0.0
        %6437 = vmatpush2.msra.mxu0 0.0
        %6438 = vmatprep.subr.mxu0 0.0
        %6439 = vmatpush2.msra.mxu0 0.0
        %6440 = vmatprep.subr.mxu0 0.0
        %6441 = vmatpush2.msra.mxu0 0.0
        %6442 = vmatprep.subr.mxu0 0.0
        %6443 = vmatpush2.msra.mxu0 0.0
        %6444 = vmatprep.subr.mxu0 0.0
        %6445 = vmatpush2.msra.mxu0 0.0
        %6446 = vmatprep.subr.mxu0 0.0
        %6447 = vmatpush2.msra.mxu0 0.0
        %6448 = vmatprep.subr.mxu0 0.0
        %6449 = vmatpush2.msra.mxu0 %v6295
        %6450 = vmatprep.subr.mxu0 0.0
        %6451 = vmatpush2.msra.mxu0 %v6294
        %6452 = vmatprep.subr.mxu0 0.0
        %6453 = vmatpush2.msra.mxu0 %v6293
        %6454 = vmatprep.subr.mxu0 0.0
        %6455 = vmatpush2.msra.mxu0 %v6292
        %6456 = vmatprep.mubr.f32.mxu0 %v6297
        %6457 = vmatmul.mubr.f32.gmra.mxu0 %v6244
        %v6458 = vpop.f32.mrf.mxu0
        %v6459 = vadd.f32 0.0, %v6458
        %v6460 = vpop.f32.mrf.mxu0
        %6461 = vmatprep.mubr.f32.mxu0 %v6300
        %6462 = vmatmul.mubr.f32.gmra.mxu0 %v6245
        %v6463 = vpop.f32.mrf.mxu0
        %v6464 = vadd.f32 0.0, %v6463
        %v6465 = vpop.f32.mrf.mxu0
        %6466 = vmatprep.mubr.f32.mxu0 %v6303
        %6467 = vmatmul.mubr.f32.gmra.mxu0 %v6246
        %v6468 = vpop.f32.mrf.mxu0
        %v6469 = vadd.f32 0.0, %v6468
        %v6470 = vpop.f32.mrf.mxu0
        %6471 = vmatprep.mubr.f32.mxu0 %v6306
        %6472 = vmatmul.mubr.f32.gmra.mxu0 %v6247
        %v6473 = vpop.f32.mrf.mxu0
        %v6474 = vadd.f32 0.0, %v6473
        %v6475 = vpop.f32.mrf.mxu0
        %6476 = vmatprep.mubr.f32.mxu0 %v6309
        %6477 = vmatmul.mubr.f32.gmra.mxu0 %v6248
        %v6478 = vpop.f32.mrf.mxu0
        %v6479 = vadd.f32 0.0, %v6478
        %v6480 = vpop.f32.mrf.mxu0
        %6481 = vmatprep.mubr.f32.mxu0 %v6312
        %6482 = vmatmul.mubr.f32.gmra.mxu0 %v6249
        %v6483 = vpop.f32.mrf.mxu0
        %v6484 = vadd.f32 0.0, %v6483
        %v6485 = vpop.f32.mrf.mxu0
        %6486 = vmatprep.mubr.f32.mxu0 %v6315
        %6487 = vmatmul.mubr.f32.gmra.mxu0 %v6250
        %v6488 = vpop.f32.mrf.mxu0
        %v6489 = vadd.f32 0.0, %v6488
        %v6490 = vpop.f32.mrf.mxu0
        %6491 = vmatprep.mubr.f32.mxu0 %v6318
        %6492 = vmatmul.mubr.f32.gmra.mxu0 %v6251
        %v6493 = vpop.f32.mrf.mxu0
        %v6494 = vadd.f32 0.0, %v6493
        %v6495 = vpop.f32.mrf.mxu0
        %6496 = vmatprep.mubr.f32.mxu0 %v6321
        %6497 = vmatmul.mubr.f32.gmra.mxu0 %v6252
        %v6498 = vpop.f32.mrf.mxu0
        %v6499 = vadd.f32 0.0, %v6498
        %v6500 = vpop.f32.mrf.mxu0
        %6501 = vmatprep.mubr.f32.mxu0 %v6324
        %6502 = vmatmul.mubr.f32.gmra.mxu0 %v6253
        %v6503 = vpop.f32.mrf.mxu0
        %v6504 = vadd.f32 0.0, %v6503
        %v6505 = vpop.f32.mrf.mxu0
        %6506 = vmatprep.mubr.f32.mxu0 %v6327
        %6507 = vmatmul.mubr.f32.gmra.mxu0 %v6254
        %v6508 = vpop.f32.mrf.mxu0
        %v6509 = vadd.f32 0.0, %v6508
        %v6510 = vpop.f32.mrf.mxu0
        %6511 = vmatprep.mubr.f32.mxu0 %v6330
        %6512 = vmatmul.mubr.f32.gmra.mxu0 %v6255
        %v6513 = vpop.f32.mrf.mxu0
        %v6514 = vadd.f32 0.0, %v6513
        %v6515 = vpop.f32.mrf.mxu0
        %6516 = vmatprep.mubr.f32.mxu0 %v6333
        %6517 = vmatmul.mubr.f32.gmra.mxu0 %v6256
        %v6518 = vpop.f32.mrf.mxu0
        %v6519 = vadd.f32 0.0, %v6518
        %v6520 = vpop.f32.mrf.mxu0
        %6521 = vmatprep.mubr.f32.mxu0 %v6336
        %6522 = vmatmul.mubr.f32.gmra.mxu0 %v6257
        %v6523 = vpop.f32.mrf.mxu0
        %v6524 = vadd.f32 0.0, %v6523
        %v6525 = vpop.f32.mrf.mxu0
        %6526 = vmatprep.mubr.f32.mxu0 %v6339
        %6527 = vmatmul.mubr.f32.gmra.mxu0 %v6258
        %v6528 = vpop.f32.mrf.mxu0
        %v6529 = vadd.f32 0.0, %v6528
        %v6530 = vpop.f32.mrf.mxu0
        %6531 = vmatprep.mubr.f32.mxu0 %v6342
        %6532 = vmatmul.mubr.f32.gmra.mxu0 %v6259
        %v6533 = vpop.f32.mrf.mxu0
        %v6534 = vadd.f32 0.0, %v6533
        %v6535 = vpop.f32.mrf.mxu0
        %6536 = vmatprep.mubr.f32.mxu0 %v6345
        %6537 = vmatmul.mubr.f32.gmra.mxu0 %v6260
        %v6538 = vpop.f32.mrf.mxu0
        %v6539 = vadd.f32 0.0, %v6538
        %v6540 = vpop.f32.mrf.mxu0
        %6541 = vmatprep.mubr.f32.mxu0 %v6348
        %6542 = vmatmul.mubr.f32.gmra.mxu0 %v6261
        %v6543 = vpop.f32.mrf.mxu0
        %v6544 = vadd.f32 0.0, %v6543
        %v6545 = vpop.f32.mrf.mxu0
        %6546 = vmatprep.mubr.f32.mxu0 %v6351
        %6547 = vmatmul.mubr.f32.gmra.mxu0 %v6262
        %v6548 = vpop.f32.mrf.mxu0
        %v6549 = vadd.f32 0.0, %v6548
        %v6550 = vpop.f32.mrf.mxu0
        %6551 = vmatprep.mubr.f32.mxu0 %v6354
        %6552 = vmatmul.mubr.f32.gmra.mxu0 %v6263
        %v6553 = vpop.f32.mrf.mxu0
        %v6554 = vadd.f32 0.0, %v6553
        %v6555 = vpop.f32.mrf.mxu0
        %6556 = vmatprep.mubr.f32.mxu0 %v6357
        %6557 = vmatmul.mubr.f32.gmra.mxu0 %v6264
        %v6558 = vpop.f32.mrf.mxu0
        %v6559 = vadd.f32 0.0, %v6558
        %v6560 = vpop.f32.mrf.mxu0
        %6561 = vmatprep.mubr.f32.mxu0 %v6360
        %6562 = vmatmul.mubr.f32.gmra.mxu0 %v6265
        %v6563 = vpop.f32.mrf.mxu0
        %v6564 = vadd.f32 0.0, %v6563
        %v6565 = vpop.f32.mrf.mxu0
        %6566 = vmatprep.mubr.f32.mxu0 %v6363
        %6567 = vmatmul.mubr.f32.gmra.mxu0 %v6266
        %v6568 = vpop.f32.mrf.mxu0
        %v6569 = vadd.f32 0.0, %v6568
        %v6570 = vpop.f32.mrf.mxu0
        %6571 = vmatprep.mubr.f32.mxu0 %v6366
        %6572 = vmatmul.mubr.f32.gmra.mxu0 %v6267
        %v6573 = vpop.f32.mrf.mxu0
        %v6574 = vadd.f32 0.0, %v6573
        %v6575 = vpop.f32.mrf.mxu0
        %6576 = vmatprep.mubr.f32.mxu0 %v6369
        %6577 = vmatmul.mubr.f32.gmra.mxu0 %v6268
        %v6578 = vpop.f32.mrf.mxu0
        %v6579 = vadd.f32 0.0, %v6578
        %v6580 = vpop.f32.mrf.mxu0
        %6581 = vmatprep.mubr.f32.mxu0 %v6372
        %6582 = vmatmul.mubr.f32.gmra.mxu0 %v6269
        %v6583 = vpop.f32.mrf.mxu0
        %v6584 = vadd.f32 0.0, %v6583
        %v6585 = vpop.f32.mrf.mxu0
        %6586 = vmatprep.mubr.f32.mxu0 %v6375
        %6587 = vmatmul.mubr.f32.gmra.mxu0 %v6270
        %v6588 = vpop.f32.mrf.mxu0
        %v6589 = vadd.f32 0.0, %v6588
        %v6590 = vpop.f32.mrf.mxu0
        %6591 = vmatprep.mubr.f32.mxu0 %v6378
        %6592 = vmatmul.mubr.f32.gmra.mxu0 %v6271
        %v6593 = vpop.f32.mrf.mxu0
        %v6594 = vadd.f32 0.0, %v6593
        %v6595 = vpop.f32.mrf.mxu0
        %6596 = vmatprep.mubr.f32.mxu0 %v6381
        %6597 = vmatmul.mubr.f32.gmra.mxu0 %v6272
        %v6598 = vpop.f32.mrf.mxu0
        %v6599 = vadd.f32 0.0, %v6598
        %v6600 = vpop.f32.mrf.mxu0
        %6601 = vmatprep.mubr.f32.mxu0 %v6384
        %6602 = vmatmul.mubr.f32.gmra.mxu0 %v6273
        %v6603 = vpop.f32.mrf.mxu0
        %v6604 = vadd.f32 0.0, %v6603
        %v6605 = vpop.f32.mrf.mxu0
        %6606 = vmatprep.mubr.f32.mxu0 %v6387
        %6607 = vmatmul.mubr.f32.gmra.mxu0 %v6274
        %v6608 = vpop.f32.mrf.mxu0
        %v6609 = vadd.f32 0.0, %v6608
        %v6610 = vpop.f32.mrf.mxu0
        %6611 = vmatprep.mubr.f32.mxu0 %v6390
        %6612 = vmatmul.mubr.f32.gmra.mxu0 %v6275
        %v6613 = vpop.f32.mrf.mxu0
        %v6614 = vadd.f32 0.0, %v6613
        %v6615 = vpop.f32.mrf.mxu0
        %6616 = vdwg.mxu0
        %v6617 = vadd.f32 %v6212, %v6459
        %v6618 = vadd.f32 %v6213, %v6464
        %v6619 = vadd.f32 %v6214, %v6469
        %v6620 = vadd.f32 %v6215, %v6474
        %v6621 = vadd.f32 %v6216, %v6479
        %v6622 = vadd.f32 %v6217, %v6484
        %v6623 = vadd.f32 %v6218, %v6489
        %v6624 = vadd.f32 %v6219, %v6494
        %v6625 = vadd.f32 %v6220, %v6499
        %v6626 = vadd.f32 %v6221, %v6504
        %v6627 = vadd.f32 %v6222, %v6509
        %v6628 = vadd.f32 %v6223, %v6514
        %v6629 = vadd.f32 %v6224, %v6519
        %v6630 = vadd.f32 %v6225, %v6524
        %v6631 = vadd.f32 %v6226, %v6529
        %v6632 = vadd.f32 %v6227, %v6534
        %v6633 = vadd.f32 %v6228, %v6539
        %v6634 = vadd.f32 %v6229, %v6544
        %v6635 = vadd.f32 %v6230, %v6549
        %v6636 = vadd.f32 %v6231, %v6554
        %v6637 = vadd.f32 %v6232, %v6559
        %v6638 = vadd.f32 %v6233, %v6564
        %v6639 = vadd.f32 %v6234, %v6569
        %v6640 = vadd.f32 %v6235, %v6574
        %v6641 = vadd.f32 %v6236, %v6579
        %v6642 = vadd.f32 %v6237, %v6584
        %v6643 = vadd.f32 %v6238, %v6589
        %v6644 = vadd.f32 %v6239, %v6594
        %v6645 = vadd.f32 %v6240, %v6599
        %v6646 = vadd.f32 %v6241, %v6604
        %v6647 = vadd.f32 %v6242, %v6609
        %v6648 = vadd.f32 %v6243, %v6614
        %v6650 = vlaneseq
        %v6651 = vshrl.u32 %v6650, 7
        %v6652 = vsub.s32 0, %v6651
        %v6653 = vrot.slane %v4799, %v6652
        %v6655 = vadd.f32 %v6617, %v6653
        %v6656 = vadd.f32 %v6618, %v6653
        %v6657 = vadd.f32 %v6619, %v6653
        %v6658 = vadd.f32 %v6620, %v6653
        %v6659 = vadd.f32 %v6621, %v6653
        %v6660 = vadd.f32 %v6622, %v6653
        %v6661 = vadd.f32 %v6623, %v6653
        %v6662 = vadd.f32 %v6624, %v6653
        %v6663 = vadd.f32 %v6625, %v6653
        %v6664 = vadd.f32 %v6626, %v6653
        %v6665 = vadd.f32 %v6627, %v6653
        %v6666 = vadd.f32 %v6628, %v6653
        %v6667 = vadd.f32 %v6629, %v6653
        %v6668 = vadd.f32 %v6630, %v6653
        %v6669 = vadd.f32 %v6631, %v6653
        %v6670 = vadd.f32 %v6632, %v6653
        %v6671 = vadd.f32 %v6633, %v6653
        %v6672 = vadd.f32 %v6634, %v6653
        %v6673 = vadd.f32 %v6635, %v6653
        %v6674 = vadd.f32 %v6636, %v6653
        %v6675 = vadd.f32 %v6637, %v6653
        %v6676 = vadd.f32 %v6638, %v6653
        %v6677 = vadd.f32 %v6639, %v6653
        %v6678 = vadd.f32 %v6640, %v6653
        %v6679 = vadd.f32 %v6641, %v6653
        %v6680 = vadd.f32 %v6642, %v6653
        %v6681 = vadd.f32 %v6643, %v6653
        %v6682 = vadd.f32 %v6644, %v6653
        %v6683 = vadd.f32 %v6645, %v6653
        %v6684 = vadd.f32 %v6646, %v6653
        %v6685 = vadd.f32 %v6647, %v6653
        %v6686 = vadd.f32 %v6648, %v6653
        %6687 = vst [vmem:[%s500] sm:$0xff] %v6655
        %6688 = vst [vmem:[%s500 + $0x8] sm:$0xff] %v6656
        %6689 = vst [vmem:[%s500 + $0x10] sm:$0xff] %v6657
        %6690 = vst [vmem:[%s500 + $0x18] sm:$0xff] %v6658
        %6691 = vst [vmem:[%s500 + $0x20] sm:$0xff] %v6659
        %6692 = vst [vmem:[%s500 + $0x28] sm:$0xff] %v6660
        %6693 = vst [vmem:[%s500 + $0x30] sm:$0xff] %v6661
        %6694 = vst [vmem:[%s500 + $0x38] sm:$0xff] %v6662
        %6695 = vst [vmem:[%s500 + $0x40] sm:$0xff] %v6663
        %6696 = vst [vmem:[%s500 + $0x48] sm:$0xff] %v6664
        %6697 = vst [vmem:[%s500 + $0x50] sm:$0xff] %v6665
        %6698 = vst [vmem:[%s500 + $0x58] sm:$0xff] %v6666
        %6699 = vst [vmem:[%s500 + $0x60] sm:$0xff] %v6667
        %6700 = vst [vmem:[%s500 + $0x68] sm:$0xff] %v6668
        %6701 = vst [vmem:[%s500 + $0x70] sm:$0xff] %v6669
        %6702 = vst [vmem:[%s500 + $0x78] sm:$0xff] %v6670
        %6703 = vst [vmem:[%s500 + $0x80] sm:$0xff] %v6671
        %6704 = vst [vmem:[%s500 + $0x88] sm:$0xff] %v6672
        %6705 = vst [vmem:[%s500 + $0x90] sm:$0xff] %v6673
        %6706 = vst [vmem:[%s500 + $0x98] sm:$0xff] %v6674
        %6707 = vst [vmem:[%s500 + $0xa0] sm:$0xff] %v6675
        %6708 = vst [vmem:[%s500 + $0xa8] sm:$0xff] %v6676
        %6709 = vst [vmem:[%s500 + $0xb0] sm:$0xff] %v6677
        %6710 = vst [vmem:[%s500 + $0xb8] sm:$0xff] %v6678
        %6711 = vst [vmem:[%s500 + $0xc0] sm:$0xff] %v6679
        %6712 = vst [vmem:[%s500 + $0xc8] sm:$0xff] %v6680
        %6713 = vst [vmem:[%s500 + $0xd0] sm:$0xff] %v6681
        %6714 = vst [vmem:[%s500 + $0xd8] sm:$0xff] %v6682
        %6715 = vst [vmem:[%s500 + $0xe0] sm:$0xff] %v6683
        %6716 = vst [vmem:[%s500 + $0xe8] sm:$0xff] %v6684
        %6717 = vst [vmem:[%s500 + $0xf0] sm:$0xff] %v6685
        %6718 = vst [vmem:[%s500 + $0xf8] sm:$0xff] %v6686
        %s6719 = sand.u32 %s339, 1
        %s6720 = scalar_lea.sflag [#allocation4], %s6719
        %s6721 = sand.u32 %s339, 1
        %s6722 = smul.addr %s6721, 256
        %s6723 = scalar_lea.vmem [#allocation7], %s6722
        // Predicated region
        $region85: #{resblock_encoder_forward.1} parent=75 // pred_check
          %p6724 = pneg %p349
        $region86: #{resblock_encoder_forward.1} parent=75 // pred_check_branch
          %6726 = sbr.rel (%p6724) target = $region88
        $region87: #{resblock_encoder_forward.1} parent=75 // pred_region
          %s6728 = ssub.s32 4096, 4096
          %6729 = vsyncadd %s6720, %s6728
          %s6730 = smul.addr %s32, 32
          %s6731 = smul.addr %s6730, 128
          %s6732 = scalar_lea.hbm %s14, %s6731
          %s6733 = sshll.u32 %s6723, 4
          %s6734 = int_to_ptr.vmem [resolvable:$true] %s6733
          %6739 = dma.vmem_to_hbm [thread:$0]  %s6734, 4096, %s6732, %s6720, 128, 128, 8
        $region88: #{resblock_encoder_forward.1} parent=75 // pred_fallthru
          _
      $region76: #{resblock_encoder_forward.1} parent=5 // pred_fallthru
        _
      %p6740 = scmp.le.s32.totalorder 2, %s27
      // Predicated region
      $region89: #{resblock_encoder_forward.1} parent=5 // pred_check
        %p6741 = pneg %p6740
      $region90: #{resblock_encoder_forward.1} parent=5 // pred_check_branch
        %6743 = sbr.rel (%p6741) target = $region92
      $region91: #{resblock_encoder_forward.1} parent=5 // pred_region
        %s6744 = ssub.s32 %s27, 2
        // Predicated region
        $region93: #{resblock_encoder_forward.1} parent=91 // pred_check
          %p6745 = pneg %p355
        $region94: #{resblock_encoder_forward.1} parent=91 // pred_check_branch
          %6747 = sbr.rel (%p6745) target = $region96
        $region95: #{resblock_encoder_forward.1} parent=91 // pred_region
          %s6748 = sand.u32 %s340, 1
          %s6749 = scalar_lea.sflag [#allocation4], %s6748
          %s6750 = sand.u32 %s340, 1
          %s6751 = smul.addr %s6750, 256
          %s6752 = scalar_lea.vmem [#allocation7], %s6751
          %6753 = dma.done %s6749, 4096
        $region96: #{resblock_encoder_forward.1} parent=91 // pred_fallthru
          _
      $region92: #{resblock_encoder_forward.1} parent=5 // pred_fallthru
        _
    $region6: #{resblock_encoder_forward.1} parent=1 // loop_footer
      %s31 = sadd.s32 1, %s27
    $region7: #{resblock_encoder_forward.1} parent=1 // loop_footer_branch
      %26 = sbr.rel target = $region3
    $region8: #{resblock_encoder_forward.1} parent=1 // loop_exit
      _
    %6754 = vsyncpa [#allocation3], 1
    %s6755 = scalar_lea.sflag [#allocation3], 1
    %6756 = vsyncpa %s6755, 1
    %6757 = vsyncpa [#allocation6], 1
    %6758 = vsyncpa [#allocation4], 1
    %s6759 = scalar_lea.sflag [#allocation4], 1
    %6760 = vsyncpa %s6759, 1

</llo_original>
